<compile_context>
chip_gen: v7x
topology: tpu7x:2x2x1
jax: 0.10.0
libtpu: 0.0.40
codegen_flags: <defaults>
</compile_context>

<pallas_src>
import math
import numpy as np
import jax
import jax.numpy as jnp
from jax import lax
from jax.experimental import pallas as pl
from jax.experimental.pallas import tpu as pltpu

# ----------------------------- configuration (the `args` dict of the module) --
ARGS = dict(dropout=0.0, decoder_layers=2, vocab_size=64, start_token_id=1)

D_MODEL = 64                      # `dim`
N_HEADS = 16                      # hard-coded in the module
D_HEAD = D_MODEL // N_HEADS       # 4
SEQ_LEN = 8                       # decoder length L
ENC_LEN = 8                       # encoder length E (packing tricks assume E == L)
BSZ = 2
D_INNER = 4 * D_MODEL             # ffn = 4 * dim
VOCAB = ARGS['vocab_size']
N_LAYERS = ARGS['decoder_layers']
HL = N_HEADS * SEQ_LEN            # 128 packed (head, key) lanes per batch element
BHL = BSZ * HL                    # 256 packed lanes for the fused batch
BL = BSZ * SEQ_LEN                # 16 stacked decoder tokens
BE = BSZ * ENC_LEN                # 16 stacked encoder tokens
LN_EPS = 1e-5                     # layer_norm_epsilon in the sub-modules
EPSILON = 1e-6                    # XLDecoder.epsilon
NEG_INF = -1e30

# ---- row offsets inside the packed slabs (all segment starts sublane-aligned) -
# f32, width 64
_C64_DEC_OH = 0
_C64_ENC = 16
_C64_EMB = 32
_C64_ENC_OH = 96
_C64_TGT_OH = 112
_C64_WOUT = 128
_C64_WCOPY = 192
_C64_HVEC = 256            # rows: b_out, b_copy, w_mode, b_mode(broadcast)  (+4 pad)
_C64_HMASK_T = 264
# f32, width 256
_C256_HMASK = 0
_C256_SELF_BIAS = 64
_C256_INTER_BIAS = 80
# bf16, width 256
_CBF_SPREAD = 0
_CBF_BLOCKSUM = 16
# per-layer bf16, width 64
_W_WQ, _W_WK, _W_WV, _W_WO = 0, 64, 128, 192
_W_WIQ, _W_WIK, _W_WIV, _W_WIO = 256, 320, 384, 448
_W_FFN2 = 512
# per-layer bf16, width 256
_WIDE_FFN1 = 0
_WIDE_RK = 64
# per-layer f32 vector slab rows
(_V_RWB, _V_RRB, _V_LN1G, _V_LN1B, _V_LN2G, _V_LN2B,
 _V_LN3G, _V_LN3B, _V_FFNB2) = range(9)


# ----------------------------- small in-kernel math helpers -------------------
def _erf(x):
    # Abramowitz & Stegun 7.1.26 (max abs err ~1.5e-7): matches torch's exact
    # erf-based nn.GELU to f32 precision using only Mosaic-supported ops.
    a1, a2, a3, a4, a5 = 0.254829592, -0.284496736, 1.421413741, -1.453152027, 1.061405429
    p = 0.3275911
    s = jnp.where(x >= 0.0, 1.0, -1.0)
    ax = jnp.abs(x)
    t = 1.0 / (1.0 + p * ax)
    poly = ((((a5 * t + a4) * t + a3) * t + a2) * t + a1) * t
    return s * (1.0 - poly * jnp.exp(-ax * ax))


def _gelu(x):
    return 0.5 * x * (1.0 + _erf(x * (1.0 / math.sqrt(2.0))))


# ----------------------------- the single fused kernel ------------------------
def xl_decoder_kernel(c64_ref, c256_ref, cbf_ref, spread_t_ref, copy_bias_ref,
                      wbf_ref, wide_ref, vecf_ref, ffnb1_ref, out_ref):
    f32, bf16 = jnp.float32, jnp.bfloat16
    scale = 1.0 / math.sqrt(D_HEAD)

    def mm_bf(a, b):
        return jnp.dot(a.astype(bf16), b.astype(bf16), preferred_element_type=f32)

    def mm_f32(a, b):
        return jnp.dot(a, b, preferred_element_type=f32)

    def dot_nt_f32(a, b):
        # a: (m, d), b: (n, d) -> (m, n) without materialising a transpose.
        return lax.dot_general(a, b, (((1,), (1,)), ((), ())),
                               preferred_element_type=f32)

    def dot_tn_bf(wt, x):
        # wt: (d_in, d_out), x: (rows, d_in) -> (d_out, rows)   (== (x @ wt).T)
        return lax.dot_general(wt.astype(bf16), x.astype(bf16),
                               (((0,), (1,)), ((), ())), preferred_element_type=f32)

    def layer_norm(x, g, b):
        mu = jnp.mean(x, axis=-1, keepdims=True)
        xc = x - mu
        var = jnp.mean(xc * xc, axis=-1, keepdims=True)
        return xc * lax.rsqrt(var + LN_EPS) * g + b

    def block_softmax(scores):
        # per-(batch, head) softmax over the 8 key lanes of each packed block;
        # off-batch / causally-masked lanes carry -1e30 and underflow to exact 0.
        m = jnp.max(scores, axis=-1, keepdims=True)
        e = jnp.exp(scores - m)
        denom = mm_bf(e, cbf_ref[_CBF_BLOCKSUM:_CBF_BLOCKSUM + BHL, :])
        return e * pl.reciprocal(jnp.maximum(denom, 1e-30), approx=True)

    def softmax_last(x):
        m = jnp.max(x, axis=-1, keepdims=True)
        e = jnp.exp(x - m)
        return e / jnp.sum(e, axis=-1, keepdims=True)

    # ---- word embedding lookup (exact f32 one-hot matmul) --------------------
    x = mm_f32(c64_ref[_C64_DEC_OH:_C64_DEC_OH + BL, :],
               c64_ref[_C64_EMB:_C64_EMB + VOCAB, :])              # (BL, D)
    enc = c64_ref[_C64_ENC:_C64_ENC + BE, :]                       # (BE, D)

    # ---- decoder layers (unrolled, N_LAYERS == 2) -----------------------------
    for l in range(N_LAYERS):
        spread = cbf_ref[_CBF_SPREAD:_CBF_SPREAD + BL, :]          # (BL, BHL) bf16
        head_mask = c256_ref[_C256_HMASK:_C256_HMASK + D_MODEL, :]  # (D, BHL)
        head_mask_t = c64_ref[_C64_HMASK_T:_C64_HMASK_T + BHL, :]   # (BHL, D)
        rwb = vecf_ref[l, _V_RWB:_V_RWB + 1, :]
        rrb = vecf_ref[l, _V_RRB:_V_RRB + 1, :]

        # -- masked self-attention with Transformer-XL relative position bias --
        q_all = mm_bf(x, wbf_ref[l, _W_WQ:_W_WQ + D_MODEL, :])      # (BL, D)
        v_all = mm_bf(x, wbf_ref[l, _W_WV:_W_WV + D_MODEL, :])
        k_all_t = dot_tn_bf(wbf_ref[l, _W_WK:_W_WK + D_MODEL, :], x)   # (D, BL)
        k_exp = mm_bf(k_all_t, spread) * head_mask                  # (D, BHL)
        ac = mm_bf(q_all + rwb, k_exp)                              # (BL, BHL)
        bd_pre = mm_bf(q_all + rrb, wide_ref[l, _WIDE_RK:_WIDE_RK + D_MODEL, :])
        # rel-shift: row (b*L + i) must read packed lane c + (L-1-i) of its own
        # 128-lane batch half -> one strided lane rotate per half (np.roll
        # convention: row r rotates by (base + r); rows of the other batch pick
        # up garbage that the additive causal/batch mask kills below).
        bd_lo = pltpu.roll(bd_pre[:, :HL], HL - (SEQ_LEN - 1),
                           axis=1, stride=1, stride_axis=0)
        bd_hi = pltpu.roll(bd_pre[:, HL:], HL - (SEQ_LEN - 1) - SEQ_LEN,
                           axis=1, stride=1, stride_axis=0)
        bd = jnp.concatenate([bd_lo, bd_hi], axis=1)                # (BL, BHL)
        scores = (ac + bd) * scale + \
            c256_ref[_C256_SELF_BIAS:_C256_SELF_BIAS + BL, :]
        prob = block_softmax(scores)                                # (BL, BHL)
        v_big = mm_bf(spread_t_ref[...], v_all) * head_mask_t       # (BHL, D)
        attn_vec = mm_bf(prob, v_big)                               # (BL, D)
        attn_out = mm_bf(attn_vec, wbf_ref[l, _W_WO:_W_WO + D_MODEL, :])
        mask_attn_out = layer_norm(x + attn_out,
                                   vecf_ref[l, _V_LN1G:_V_LN1G + 1, :],
                                   vecf_ref[l, _V_LN1B:_V_LN1B + 1, :])

        # -- encoder-decoder interaction attention ------------------------------
        q_int = mm_bf(mask_attn_out, wbf_ref[l, _W_WIQ:_W_WIQ + D_MODEL, :])
        v_int = mm_bf(enc, wbf_ref[l, _W_WIV:_W_WIV + D_MODEL, :])
        k_int_t = dot_tn_bf(wbf_ref[l, _W_WIK:_W_WIK + D_MODEL, :], enc)  # (D, BE)
        k_exp_i = mm_bf(k_int_t, spread) * head_mask                # (D, BHL)
        scores_i = mm_bf(q_int, k_exp_i) * scale + \
            c256_ref[_C256_INTER_BIAS:_C256_INTER_BIAS + BL, :]
        prob_i = block_softmax(scores_i)
        v_big_i = mm_bf(spread_t_ref[...], v_int) * head_mask_t
        inter_vec = mm_bf(prob_i, v_big_i)                          # (BL, D)
        inter_out = mm_bf(inter_vec, wbf_ref[l, _W_WIO:_W_WIO + D_MODEL, :])
        interaction = layer_norm(inter_out + mask_attn_out,
                                 vecf_ref[l, _V_LN2G:_V_LN2G + 1, :],
                                 vecf_ref[l, _V_LN2B:_V_LN2B + 1, :])

        # -- position-wise FFN ----------------------------------------------------
        h = mm_bf(interaction, wide_ref[l, _WIDE_FFN1:_WIDE_FFN1 + D_MODEL, :]) \
            + ffnb1_ref[l]
        h = _gelu(h)
        core = mm_bf(h, wbf_ref[l, _W_FFN2:_W_FFN2 + D_INNER, :]) \
            + vecf_ref[l, _V_FFNB2:_V_FFNB2 + 1, :]
        x = layer_norm(interaction + core,
                       vecf_ref[l, _V_LN3G:_V_LN3G + 1, :],
                       vecf_ref[l, _V_LN3B:_V_LN3B + 1, :])

    # ---- output / copy / mode head + NLL loss (float32 for parity) -----------
    core = x                                                        # (BL, D)
    emb = c64_ref[_C64_EMB:_C64_EMB + VOCAB, :]
    hv = c64_ref[_C64_HVEC:_C64_HVEC + 4, :]                        # b_out/b_copy/w_mode/b_mode
    out = mm_f32(core, c64_ref[_C64_WOUT:_C64_WOUT + D_MODEL, :]) + hv[0:1, :]
    vocab_prob = softmax_last(dot_nt_f32(out, emb))                 # (BL, V)
    cp = mm_f32(core, c64_ref[_C64_WCOPY:_C64_WCOPY + D_MODEL, :]) + hv[1:2, :]
    mode = jax.nn.sigmoid(jnp.sum(core * hv[2:3, :], axis=-1, keepdims=True)
                          + hv[3:4, 0:1])                           # (BL, 1)
    vocab_prob = vocab_prob * mode

    # copy mechanism: scatter_add over the vocab as a one-hot matmul; copy_bias
    # kills cross-batch quadrants and padded encoder positions exactly.
    il = dot_nt_f32(cp, enc) + copy_bias_ref[...]                   # (BL, BE)
    src = (1.0 - mode) * softmax_last(il)                           # (BL, BE)
    vocab_prob = vocab_prob + mm_f32(src, c64_ref[_C64_ENC_OH:_C64_ENC_OH + BE, :])

    # negative log-likelihood over non-pad targets
    tgt_onehot = c64_ref[_C64_TGT_OH:_C64_TGT_OH + BL, :]           # (BL, V)
    predict = jnp.sum(vocab_prob * tgt_onehot, axis=-1, keepdims=True)
    nonpad = 1.0 - tgt_onehot[:, 0:1]                               # (target != 0)
    total = jnp.sum(-jnp.log(predict + EPSILON) * nonpad, axis=0, keepdims=True)
    count = jnp.sum(nonpad, axis=0, keepdims=True)
    # guard only changes the degenerate all-pad case (torch would divide by 0)
    loss = total / jnp.maximum(count, 1.0)                          # (1, 1)
    out_ref[...] = jnp.broadcast_to(loss, out_ref.shape)            # lane-dense (1, 128)


# ----------------------------- host-side constant / slab construction ---------
def _make_pos_embed():
    L, D = SEQ_LEN, D_MODEL
    pos_seq = jnp.arange(L - 1, -1, -1, dtype=jnp.float32)
    inv_freq = 1.0 / (10000.0 ** (jnp.arange(0.0, D, 2.0, dtype=jnp.float32) / D))
    sinusoid = pos_seq[:, None] * inv_freq[None, :]
    return jnp.concatenate([jnp.sin(sinusoid), jnp.cos(sinusoid)], axis=-1)   # (L, D)


def _build_selectors():
    """0/1 selector matrices for the packed (batch, head, key) lane layout."""
    L, D, Dh = SEQ_LEN, D_MODEL, D_HEAD
    r = np.arange(BL)
    c = np.arange(BHL)
    m = np.arange(D)
    r_b, r_p = r // L, r % L
    c_b, c_h, c_k = c // HL, (c % HL) // L, c % L
    spread = ((r_b[:, None] == c_b[None, :]) &
              (r_p[:, None] == c_k[None, :])).astype(np.float32)          # (BL, BHL)
    head_mask = (m[:, None] // Dh == c_h[None, :]).astype(np.float32)     # (D, BHL)
    block_sum = (c[:, None] // L == c[None, :] // L).astype(np.float32)   # (BHL, BHL)
    causal_ok = (c_b[None, :] == r_b[:, None]) & (c_k[None, :] <= r_p[:, None])
    self_bias = np.where(causal_ok, 0.0, NEG_INF).astype(np.float32)      # (BL, BHL)
    hm_single = (m[:, None] // Dh ==
                 (np.arange(HL) // L)[None, :]).astype(np.float32)        # (D, HL)
    return spread, head_mask, block_sum, self_bias, hm_single


def xl_decoder_forward(params, input_ids, encoder_rep, input_mask,
                       decode_input, decode_target,
                       use_beam_search=False, beam_width=None):
    # TODO(synk): greedy-decode / beam-search branches (decode_input is None) use
    # host-side Python loops, list sorts and deepcopy; not expressible as a kernel.
    del use_beam_search, beam_width
    f32, bf16 = jnp.float32, jnp.bfloat16
    bsz = input_ids.shape[0]
    B, L, E, D, V = BSZ, SEQ_LEN, ENC_LEN, D_MODEL, VOCAB

    spread_np, head_mask_np, block_sum_np, self_bias_np, hm_single_np = _build_selectors()

    # ---- data + head params packed into one f32 width-64 slab ----------------
    emb = params['embedding'].astype(f32)
    enc = encoder_rep.reshape(B * E, D).astype(f32)
    dec_oh = jax.nn.one_hot(decode_input.reshape(-1), V, dtype=f32)
    enc_oh = jax.nn.one_hot(input_ids.reshape(-1), V, dtype=f32)
    tgt_oh = jax.nn.one_hot(decode_target.reshape(-1), V, dtype=f32)
    head_vecs = jnp.concatenate([
        params['b_out'].astype(f32), params['b_copy'].astype(f32),
        params['w_mode'].astype(f32),
        jnp.broadcast_to(params['b_mode'].astype(f32), (1, D))], axis=0)   # (4, D)
    c64 = jnp.concatenate([
        dec_oh, enc, emb, enc_oh, tgt_oh,
        params['w_out_t'].astype(f32), params['w_copy_t'].astype(f32),
        head_vecs, jnp.zeros((4, D), f32),
        jnp.asarray(head_mask_np.T)], axis=0)                              # (520, D)

    # ---- padding mask -> additive biases (hoisted out of the kernel) ---------
    em = input_mask.astype(f32)                                            # (B, E)
    pad_hl = jnp.tile(em[:, None, :], (1, N_HEADS, 1)).reshape(B, HL)
    neg = jnp.float32(NEG_INF)
    inter_rows, copy_rows = [], []
    for b in range(B):
        hl_parts = [(1.0 - pad_hl[b2]) * neg if b2 == b
                    else jnp.full((HL,), neg, f32) for b2 in range(B)]
        inter_rows.append(jnp.tile(jnp.concatenate(hl_parts)[None, :], (L, 1)))
        e_parts = [(1.0 - em[b2]) * neg if b2 == b
                   else jnp.full((E,), neg, f32) for b2 in range(B)]
        copy_rows.append(jnp.tile(jnp.concatenate(e_parts)[None, :], (L, 1)))
    inter_bias = jnp.concatenate(inter_rows, axis=0)                       # (BL, BHL)
    copy_bias = jnp.concatenate(copy_rows, axis=0)                         # (BL, BE)

    c256 = jnp.concatenate([jnp.asarray(head_mask_np),
                            jnp.asarray(self_bias_np), inter_bias], axis=0)   # (96, 256)
    cbf = jnp.concatenate([jnp.asarray(spread_np),
                           jnp.asarray(block_sum_np)], axis=0).astype(bf16)   # (272, 256)
    spread_t = jnp.asarray(spread_np.T).astype(bf16)                          # (BHL, BL)

    # ---- per-layer weights packed into bf16 / f32 slabs -----------------------
    pos_embed = _make_pos_embed()                                          # (L, D)
    col_key = np.arange(HL) % L
    wbf_l, wide_l, vec_l, b1_l = [], [], [], []
    for lp in params['layers']:
        qkv = lp['w_qkv_t'].astype(f32)
        kv = lp['w_kv_t'].astype(f32)
        rk = pos_embed @ lp['w_r_t'].astype(f32)                           # (L, D)
        rk_exp = rk.T[:, col_key] * jnp.asarray(hm_single_np)              # (D, HL)
        rk_exp_full = jnp.tile(rk_exp, (1, B))                             # (D, BHL)
        wbf_l.append(jnp.concatenate([
            qkv[:, :D], qkv[:, D:2 * D], qkv[:, 2 * D:],                   # wq, wk, wv
            lp['w_o_t'].astype(f32),
            lp['w_q_t'].astype(f32),                                       # interaction q
            kv[:, :D], kv[:, D:],                                          # interaction k, v
            lp['w_io_t'].astype(f32),
            lp['ffn_w2_t'].astype(f32)], axis=0).astype(bf16))             # (768, D)
        wide_l.append(jnp.concatenate([lp['ffn_w1_t'].astype(f32),
                                       rk_exp_full], axis=0).astype(bf16))  # (128, BHL)
        vec_l.append(jnp.concatenate([
            lp['r_w_bias'].reshape(1, D).astype(f32),
            lp['r_r_bias'].reshape(1, D).astype(f32),
            lp['ln1_g'].astype(f32), lp['ln1_b'].astype(f32),
            lp['ln2_g'].astype(f32), lp['ln2_b'].astype(f32),
            lp['ln3_g'].astype(f32), lp['ln3_b'].astype(f32),
            lp['ffn_b2'].astype(f32)], axis=0))                            # (9, D)
        b1_l.append(lp['ffn_b1'].astype(f32))                              # (1, D_INNER)
    wbf = jnp.stack(wbf_l)
    wide = jnp.stack(wide_l)
    vecf = jnp.stack(vec_l)
    ffnb1 = jnp.stack(b1_l)

    inputs = [c64, c256, cbf, spread_t, copy_bias, wbf, wide, vecf, ffnb1]
    vmem = pltpu.MemorySpace.VMEM
    out = pl.pallas_call(
        xl_decoder_kernel,
        in_specs=[pl.BlockSpec(memory_space=vmem) for _ in inputs],
        out_specs=pl.BlockSpec(memory_space=vmem),
        out_shape=jax.ShapeDtypeStruct((1, 128), jnp.float32),
    )(*inputs)
    loss = out[0, 0]
    return jnp.broadcast_to(loss, (bsz,))


# ----------------------------- deterministic parameter init -------------------
def init_params(key):
    n_layers = N_LAYERS
    V, D, H, Dh, F = VOCAB, D_MODEL, N_HEADS, D_HEAD, D_INNER
    keys = iter(jax.random.split(key, 16 + n_layers * 16))

    def nrm(shape, scale=0.02):
        return scale * jax.random.normal(next(keys), shape, dtype=jnp.float32)

    # note: *_t weights are the torch nn.Linear weights pre-transposed to (in, out)
    params = {
        'embedding': nrm((V, D)),
        'w_out_t': nrm((D, D)), 'b_out': nrm((1, D)),
        'w_copy_t': nrm((D, D)), 'b_copy': nrm((1, D)),
        'w_mode': nrm((1, D)), 'b_mode': nrm((1, 1)),
        'layers': [],
    }
    for _ in range(n_layers):
        params['layers'].append({
            'w_qkv_t': nrm((D, 3 * D)),
            'w_r_t': nrm((D, D)),
            'r_w_bias': nrm((H, Dh)),
            'r_r_bias': nrm((H, Dh)),
            'w_o_t': nrm((D, D)),
            'ln1_g': jnp.ones((1, D), jnp.float32), 'ln1_b': jnp.zeros((1, D), jnp.float32),
            'w_kv_t': nrm((D, 2 * D)),
            'w_q_t': nrm((D, D)),
            'w_io_t': nrm((D, D)),
            'ln2_g': jnp.ones((1, D), jnp.float32), 'ln2_b': jnp.zeros((1, D), jnp.float32),
            'ffn_w1_t': nrm((D, F)), 'ffn_b1': nrm((1, F)),
            'ffn_w2_t': nrm((F, D)), 'ffn_b2': nrm((1, D)),
            'ln3_g': jnp.ones((1, D), jnp.float32), 'ln3_b': jnp.zeros((1, D), jnp.float32),
        })
    return params


# ----------------------------- main --------------------------------------------
if __name__ == "__main__":
    root = jax.random.PRNGKey(0)
    kp, k1, k2, k3, k4 = jax.random.split(root, 5)

    params = init_params(kp)

    input_ids = jax.random.randint(k1, (BSZ, ENC_LEN), 0, VOCAB, dtype=jnp.int32)
    encoder_rep = jax.random.normal(k2, (BSZ, ENC_LEN, D_MODEL), dtype=jnp.float32)
    input_mask = jnp.ones((BSZ, ENC_LEN), jnp.float32).at[1, -2:].set(0.0)
    decode_input = jax.random.randint(k3, (BSZ, SEQ_LEN), 1, VOCAB, dtype=jnp.int32)
    decode_target = jax.random.randint(k4, (BSZ, SEQ_LEN), 0, VOCAB, dtype=jnp.int32)
    decode_target = decode_target.at[0, 0].set(5)   # ensure at least one non-pad target

    fwd = jax.jit(xl_decoder_forward)
    loss = fwd(params, input_ids, encoder_rep, input_mask, decode_input, decode_target)
    jax.block_until_ready(loss)
    assert loss.shape == (BSZ,) and bool(jnp.all(jnp.isfinite(loss)))
    print("KERNEL_OK")
</pallas_src>

<mosaic_0001>
module attributes {stable_mosaic.version = 11 : i64} {
  func.func @xl_decoder_kernel(%arg0: memref<520x64xf32, #tpu.memory_space<vmem>>, %arg1: memref<96x256xf32, #tpu.memory_space<vmem>>, %arg2: memref<272x256xbf16, #tpu.memory_space<vmem>>, %arg3: memref<256x16xbf16, #tpu.memory_space<vmem>>, %arg4: memref<16x16xf32, #tpu.memory_space<vmem>>, %arg5: memref<2x768x64xbf16, #tpu.memory_space<vmem>>, %arg6: memref<2x128x256xbf16, #tpu.memory_space<vmem>>, %arg7: memref<2x9x64xf32, #tpu.memory_space<vmem>>, %arg8: memref<2x1x256xf32, #tpu.memory_space<vmem>>, %arg9: memref<1x128xf32, #tpu.memory_space<vmem>>) attributes {dimension_semantics = [], scalar_prefetch = 0 : i64, scratch_operands = 0 : i64, tpu.core_type = #tpu.core_type<tc>} {
    %c0 = arith.constant 0 : index
    %c0_0 = arith.constant 0 : index
    %0 = vector.load %arg0[%c0, %c0_0] : memref<520x64xf32, #tpu.memory_space<vmem>>, vector<16x64xf32>
    %c32 = arith.constant 32 : index
    %c0_1 = arith.constant 0 : index
    %1 = vector.load %arg0[%c32, %c0_1] : memref<520x64xf32, #tpu.memory_space<vmem>>, vector<64x64xf32>
    %cst = arith.constant dense<0.000000e+00> : vector<16x64xf32>
    %2 = tpu.matmul %0, %1, %cst {dimension_numbers = #tpu.dot_dimension_numbers<[1], [0], [0], [1], [0, 0, 1, 1], [], []>} : vector<16x64xf32>, vector<64x64xf32>, vector<16x64xf32> -> vector<16x64xf32>
    %c16 = arith.constant 16 : index
    %c0_2 = arith.constant 0 : index
    %3 = vector.load %arg0[%c16, %c0_2] : memref<520x64xf32, #tpu.memory_space<vmem>>, vector<16x64xf32>
    %c0_3 = arith.constant 0 : index
    %c0_4 = arith.constant 0 : index
    %4 = vector.load %arg2[%c0_3, %c0_4] : memref<272x256xbf16, #tpu.memory_space<vmem>>, vector<16x256xbf16>
    %c0_5 = arith.constant 0 : index
    %c0_6 = arith.constant 0 : index
    %5 = vector.load %arg1[%c0_5, %c0_6] : memref<96x256xf32, #tpu.memory_space<vmem>>, vector<64x256xf32>
    %c264 = arith.constant 264 : index
    %c0_7 = arith.constant 0 : index
    %6 = vector.load %arg0[%c264, %c0_7] : memref<520x64xf32, #tpu.memory_space<vmem>>, vector<256x64xf32>
    %c0_8 = arith.constant 0 : index
    %c0_9 = arith.constant 0 : index
    %c0_10 = arith.constant 0 : index
    %7 = vector.load %arg7[%c0_8, %c0_9, %c0_10] : memref<2x9x64xf32, #tpu.memory_space<vmem>>, vector<1x1x64xf32>
    %8 = vector.shape_cast %7 : vector<1x1x64xf32> to vector<1x64xf32>
    %c0_11 = arith.constant 0 : index
    %c1 = arith.constant 1 : index
    %c0_12 = arith.constant 0 : index
    %9 = vector.load %arg7[%c0_11, %c1, %c0_12] : memref<2x9x64xf32, #tpu.memory_space<vmem>>, vector<1x1x64xf32>
    %10 = vector.shape_cast %9 : vector<1x1x64xf32> to vector<1x64xf32>
    %c0_13 = arith.constant 0 : index
    %c0_14 = arith.constant 0 : index
    %c0_15 = arith.constant 0 : index
    %11 = vector.load %arg5[%c0_13, %c0_14, %c0_15] : memref<2x768x64xbf16, #tpu.memory_space<vmem>>, vector<1x64x64xbf16>
    %12 = vector.shape_cast %11 : vector<1x64x64xbf16> to vector<64x64xbf16>
    %13 = arith.truncf %2 : vector<16x64xf32> to vector<16x64xbf16>
    %cst_16 = arith.constant dense<0.000000e+00> : vector<16x64xf32>
    %14 = tpu.matmul %13, %12, %cst_16 {dimension_numbers = #tpu.dot_dimension_numbers<[1], [0], [0], [1], [0, 0, 1, 1], [], []>} : vector<16x64xbf16>, vector<64x64xbf16>, vector<16x64xf32> -> vector<16x64xf32>
    %c0_17 = arith.constant 0 : index
    %c128 = arith.constant 128 : index
    %c0_18 = arith.constant 0 : index
    %15 = vector.load %arg5[%c0_17, %c128, %c0_18] : memref<2x768x64xbf16, #tpu.memory_space<vmem>>, vector<1x64x64xbf16>
    %16 = vector.shape_cast %15 : vector<1x64x64xbf16> to vector<64x64xbf16>
    %17 = arith.truncf %2 : vector<16x64xf32> to vector<16x64xbf16>
    %cst_19 = arith.constant dense<0.000000e+00> : vector<16x64xf32>
    %18 = tpu.matmul %17, %16, %cst_19 {dimension_numbers = #tpu.dot_dimension_numbers<[1], [0], [0], [1], [0, 0, 1, 1], [], []>} : vector<16x64xbf16>, vector<64x64xbf16>, vector<16x64xf32> -> vector<16x64xf32>
    %c0_20 = arith.constant 0 : index
    %c64 = arith.constant 64 : index
    %c0_21 = arith.constant 0 : index
    %19 = vector.load %arg5[%c0_20, %c64, %c0_21] : memref<2x768x64xbf16, #tpu.memory_space<vmem>>, vector<1x64x64xbf16>
    %20 = vector.shape_cast %19 : vector<1x64x64xbf16> to vector<64x64xbf16>
    %21 = arith.truncf %2 : vector<16x64xf32> to vector<16x64xbf16>
    %cst_22 = arith.constant dense<0.000000e+00> : vector<64x16xf32>
    %22 = tpu.matmul %20, %21, %cst_22 {dimension_numbers = #tpu.dot_dimension_numbers<[0], [1], [1], [0], [0, 1, 1, 0], [], []>} : vector<64x64xbf16>, vector<16x64xbf16>, vector<64x16xf32> -> vector<64x16xf32>
    %23 = arith.truncf %22 : vector<64x16xf32> to vector<64x16xbf16>
    %cst_23 = arith.constant dense<0.000000e+00> : vector<64x256xf32>
    %24 = tpu.matmul %23, %4, %cst_23 {dimension_numbers = #tpu.dot_dimension_numbers<[1], [0], [0], [1], [0, 0, 1, 1], [], []>} : vector<64x16xbf16>, vector<16x256xbf16>, vector<64x256xf32> -> vector<64x256xf32>
    %25 = arith.mulf %24, %5 : vector<64x256xf32>
    %26 = vector.broadcast %8 : vector<1x64xf32> to vector<16x64xf32>
    %27 = arith.addf %14, %26 : vector<16x64xf32>
    %28 = arith.truncf %27 : vector<16x64xf32> to vector<16x64xbf16>
    %29 = arith.truncf %25 : vector<64x256xf32> to vector<64x256xbf16>
    %cst_24 = arith.constant dense<0.000000e+00> : vector<16x256xf32>
    %30 = tpu.matmul %28, %29, %cst_24 {dimension_numbers = #tpu.dot_dimension_numbers<[1], [0], [0], [1], [0, 0, 1, 1], [], []>} : vector<16x64xbf16>, vector<64x256xbf16>, vector<16x256xf32> -> vector<16x256xf32>
    %31 = vector.broadcast %10 : vector<1x64xf32> to vector<16x64xf32>
    %32 = arith.addf %14, %31 : vector<16x64xf32>
    %c0_25 = arith.constant 0 : index
    %c64_26 = arith.constant 64 : index
    %c0_27 = arith.constant 0 : index
    %33 = vector.load %arg6[%c0_25, %c64_26, %c0_27] : memref<2x128x256xbf16, #tpu.memory_space<vmem>>, vector<1x64x256xbf16>
    %34 = vector.shape_cast %33 : vector<1x64x256xbf16> to vector<64x256xbf16>
    %35 = arith.truncf %32 : vector<16x64xf32> to vector<16x64xbf16>
    %cst_28 = arith.constant dense<0.000000e+00> : vector<16x256xf32>
    %36 = tpu.matmul %35, %34, %cst_28 {dimension_numbers = #tpu.dot_dimension_numbers<[1], [0], [0], [1], [0, 0, 1, 1], [], []>} : vector<16x64xbf16>, vector<64x256xbf16>, vector<16x256xf32> -> vector<16x256xf32>
    %37 = vector.extract_strided_slice %36 {offsets = [0, 0], sizes = [16, 128], strides = [1, 1]} : vector<16x256xf32> to vector<16x128xf32>
    %c121_i32 = arith.constant 121 : i32
    %38 = tpu.dynamic_rotate %37 by %c121_i32 dim 1 {stride = 1 : si32, stride_dimension = 0 : si32} : vector<16x128xf32>, i32 -> vector<16x128xf32>
    %39 = vector.extract_strided_slice %36 {offsets = [0, 128], sizes = [16, 128], strides = [1, 1]} : vector<16x256xf32> to vector<16x128xf32>
    %c113_i32 = arith.constant 113 : i32
    %40 = tpu.dynamic_rotate %39 by %c113_i32 dim 1 {stride = 1 : si32, stride_dimension = 0 : si32} : vector<16x128xf32>, i32 -> vector<16x128xf32>
    %41 = tpu.concatenate %38, %40 in 1 : vector<16x128xf32>, vector<16x128xf32> -> vector<16x256xf32>
    %42 = arith.addf %30, %41 : vector<16x256xf32>
    %cst_29 = arith.constant 5.000000e-01 : f32
    %43 = vector.broadcast %cst_29 : f32 to vector<16x256xf32>
    %44 = arith.mulf %42, %43 : vector<16x256xf32>
    %c64_30 = arith.constant 64 : index
    %c0_31 = arith.constant 0 : index
    %45 = vector.load %arg1[%c64_30, %c0_31] : memref<96x256xf32, #tpu.memory_space<vmem>>, vector<16x256xf32>
    %46 = arith.addf %44, %45 : vector<16x256xf32>
    %cst_32 = arith.constant dense<0xFF800000> : vector<16xf32>
    %47 = vector.multi_reduction <maximumf>, %46, %cst_32 [1] : vector<16x256xf32> to vector<16xf32>
    %48 = vector.shape_cast %47 : vector<16xf32> to vector<16x1xf32>
    %49 = vector.broadcast %48 : vector<16x1xf32> to vector<16x256xf32>
    %50 = arith.subf %46, %49 : vector<16x256xf32>
    %51 = math.exp %50 : vector<16x256xf32>
    %c16_33 = arith.constant 16 : index
    %c0_34 = arith.constant 0 : index
    %52 = vector.load %arg2[%c16_33, %c0_34] : memref<272x256xbf16, #tpu.memory_space<vmem>>, vector<256x256xbf16>
    %53 = arith.truncf %51 : vector<16x256xf32> to vector<16x256xbf16>
    %cst_35 = arith.constant dense<0.000000e+00> : vector<16x256xf32>
    %54 = tpu.matmul %53, %52, %cst_35 {dimension_numbers = #tpu.dot_dimension_numbers<[1], [0], [0], [1], [0, 0, 1, 1], [], []>} : vector<16x256xbf16>, vector<256x256xbf16>, vector<16x256xf32> -> vector<16x256xf32>
    %cst_36 = arith.constant 1.000000e-30 : f32
    %55 = vector.broadcast %cst_36 : f32 to vector<16x256xf32>
    %56 = arith.maximumf %54, %55 : vector<16x256xf32>
    %57 = tpu.reciprocal %56 {approx = true} : vector<16x256xf32> -> vector<16x256xf32>
    %58 = arith.mulf %51, %57 : vector<16x256xf32>
    %c0_37 = arith.constant 0 : index
    %c0_38 = arith.constant 0 : index
    %59 = vector.load %arg3[%c0_37, %c0_38] : memref<256x16xbf16, #tpu.memory_space<vmem>>, vector<256x16xbf16>
    %60 = arith.truncf %18 : vector<16x64xf32> to vector<16x64xbf16>
    %cst_39 = arith.constant dense<0.000000e+00> : vector<256x64xf32>
    %61 = tpu.matmul %59, %60, %cst_39 {dimension_numbers = #tpu.dot_dimension_numbers<[1], [0], [0], [1], [0, 0, 1, 1], [], []>} : vector<256x16xbf16>, vector<16x64xbf16>, vector<256x64xf32> -> vector<256x64xf32>
    %62 = arith.mulf %61, %6 : vector<256x64xf32>
    %63 = arith.truncf %58 : vector<16x256xf32> to vector<16x256xbf16>
    %64 = arith.truncf %62 : vector<256x64xf32> to vector<256x64xbf16>
    %cst_40 = arith.constant dense<0.000000e+00> : vector<16x64xf32>
    %65 = tpu.matmul %63, %64, %cst_40 {dimension_numbers = #tpu.dot_dimension_numbers<[1], [0], [0], [1], [0, 0, 1, 1], [], []>} : vector<16x256xbf16>, vector<256x64xbf16>, vector<16x64xf32> -> vector<16x64xf32>
    %c0_41 = arith.constant 0 : index
    %c192 = arith.constant 192 : index
    %c0_42 = arith.constant 0 : index
    %66 = vector.load %arg5[%c0_41, %c192, %c0_42] : memref<2x768x64xbf16, #tpu.memory_space<vmem>>, vector<1x64x64xbf16>
    %67 = vector.shape_cast %66 : vector<1x64x64xbf16> to vector<64x64xbf16>
    %68 = arith.truncf %65 : vector<16x64xf32> to vector<16x64xbf16>
    %cst_43 = arith.constant dense<0.000000e+00> : vector<16x64xf32>
    %69 = tpu.matmul %68, %67, %cst_43 {dimension_numbers = #tpu.dot_dimension_numbers<[1], [0], [0], [1], [0, 0, 1, 1], [], []>} : vector<16x64xbf16>, vector<64x64xbf16>, vector<16x64xf32> -> vector<16x64xf32>
    %70 = arith.addf %2, %69 : vector<16x64xf32>
    %c0_44 = arith.constant 0 : index
    %c2 = arith.constant 2 : index
    %c0_45 = arith.constant 0 : index
    %71 = vector.load %arg7[%c0_44, %c2, %c0_45] : memref<2x9x64xf32, #tpu.memory_space<vmem>>, vector<1x1x64xf32>
    %72 = vector.shape_cast %71 : vector<1x1x64xf32> to vector<1x64xf32>
    %c0_46 = arith.constant 0 : index
    %c3 = arith.constant 3 : index
    %c0_47 = arith.constant 0 : index
    %73 = vector.load %arg7[%c0_46, %c3, %c0_47] : memref<2x9x64xf32, #tpu.memory_space<vmem>>, vector<1x1x64xf32>
    %74 = vector.shape_cast %73 : vector<1x1x64xf32> to vector<1x64xf32>
    %cst_48 = arith.constant dense<0.000000e+00> : vector<16xf32>
    %75 = vector.multi_reduction <add>, %70, %cst_48 [1] : vector<16x64xf32> to vector<16xf32>
    %76 = vector.shape_cast %75 : vector<16xf32> to vector<16x1xf32>
    %cst_49 = arith.constant 6.400000e+01 : f32
    %77 = vector.broadcast %cst_49 : f32 to vector<16x1xf32>
    %78 = arith.divf %76, %77 : vector<16x1xf32>
    %79 = vector.broadcast %78 : vector<16x1xf32> to vector<16x64xf32>
    %80 = arith.subf %70, %79 : vector<16x64xf32>
    %81 = arith.mulf %80, %80 : vector<16x64xf32>
    %cst_50 = arith.constant dense<0.000000e+00> : vector<16xf32>
    %82 = vector.multi_reduction <add>, %81, %cst_50 [1] : vector<16x64xf32> to vector<16xf32>
    %83 = vector.shape_cast %82 : vector<16xf32> to vector<16x1xf32>
    %cst_51 = arith.constant 6.400000e+01 : f32
    %84 = vector.broadcast %cst_51 : f32 to vector<16x1xf32>
    %85 = arith.divf %83, %84 : vector<16x1xf32>
    %cst_52 = arith.constant 9.99999974E-6 : f32
    %86 = vector.broadcast %cst_52 : f32 to vector<16x1xf32>
    %87 = arith.addf %85, %86 : vector<16x1xf32>
    %88 = math.rsqrt %87 : vector<16x1xf32>
    %89 = vector.broadcast %88 : vector<16x1xf32> to vector<16x64xf32>
    %90 = arith.mulf %80, %89 : vector<16x64xf32>
    %91 = vector.broadcast %72 : vector<1x64xf32> to vector<16x64xf32>
    %92 = arith.mulf %90, %91 : vector<16x64xf32>
    %93 = vector.broadcast %74 : vector<1x64xf32> to vector<16x64xf32>
    %94 = arith.addf %92, %93 : vector<16x64xf32>
    %c0_53 = arith.constant 0 : index
    %c256 = arith.constant 256 : index
    %c0_54 = arith.constant 0 : index
    %95 = vector.load %arg5[%c0_53, %c256, %c0_54] : memref<2x768x64xbf16, #tpu.memory_space<vmem>>, vector<1x64x64xbf16>
    %96 = vector.shape_cast %95 : vector<1x64x64xbf16> to vector<64x64xbf16>
    %97 = arith.truncf %94 : vector<16x64xf32> to vector<16x64xbf16>
    %cst_55 = arith.constant dense<0.000000e+00> : vector<16x64xf32>
    %98 = tpu.matmul %97, %96, %cst_55 {dimension_numbers = #tpu.dot_dimension_numbers<[1], [0], [0], [1], [0, 0, 1, 1], [], []>} : vector<16x64xbf16>, vector<64x64xbf16>, vector<16x64xf32> -> vector<16x64xf32>
    %c0_56 = arith.constant 0 : index
    %c384 = arith.constant 384 : index
    %c0_57 = arith.constant 0 : index
    %99 = vector.load %arg5[%c0_56, %c384, %c0_57] : memref<2x768x64xbf16, #tpu.memory_space<vmem>>, vector<1x64x64xbf16>
    %100 = vector.shape_cast %99 : vector<1x64x64xbf16> to vector<64x64xbf16>
    %101 = arith.truncf %3 : vector<16x64xf32> to vector<16x64xbf16>
    %cst_58 = arith.constant dense<0.000000e+00> : vector<16x64xf32>
    %102 = tpu.matmul %101, %100, %cst_58 {dimension_numbers = #tpu.dot_dimension_numbers<[1], [0], [0], [1], [0, 0, 1, 1], [], []>} : vector<16x64xbf16>, vector<64x64xbf16>, vector<16x64xf32> -> vector<16x64xf32>
    %c0_59 = arith.constant 0 : index
    %c320 = arith.constant 320 : index
    %c0_60 = arith.constant 0 : index
    %103 = vector.load %arg5[%c0_59, %c320, %c0_60] : memref<2x768x64xbf16, #tpu.memory_space<vmem>>, vector<1x64x64xbf16>
    %104 = vector.shape_cast %103 : vector<1x64x64xbf16> to vector<64x64xbf16>
    %105 = arith.truncf %3 : vector<16x64xf32> to vector<16x64xbf16>
    %cst_61 = arith.constant dense<0.000000e+00> : vector<64x16xf32>
    %106 = tpu.matmul %104, %105, %cst_61 {dimension_numbers = #tpu.dot_dimension_numbers<[0], [1], [1], [0], [0, 1, 1, 0], [], []>} : vector<64x64xbf16>, vector<16x64xbf16>, vector<64x16xf32> -> vector<64x16xf32>
    %107 = arith.truncf %106 : vector<64x16xf32> to vector<64x16xbf16>
    %cst_62 = arith.constant dense<0.000000e+00> : vector<64x256xf32>
    %108 = tpu.matmul %107, %4, %cst_62 {dimension_numbers = #tpu.dot_dimension_numbers<[1], [0], [0], [1], [0, 0, 1, 1], [], []>} : vector<64x16xbf16>, vector<16x256xbf16>, vector<64x256xf32> -> vector<64x256xf32>
    %109 = arith.mulf %108, %5 : vector<64x256xf32>
    %110 = arith.truncf %98 : vector<16x64xf32> to vector<16x64xbf16>
    %111 = arith.truncf %109 : vector<64x256xf32> to vector<64x256xbf16>
    %cst_63 = arith.constant dense<0.000000e+00> : vector<16x256xf32>
    %112 = tpu.matmul %110, %111, %cst_63 {dimension_numbers = #tpu.dot_dimension_numbers<[1], [0], [0], [1], [0, 0, 1, 1], [], []>} : vector<16x64xbf16>, vector<64x256xbf16>, vector<16x256xf32> -> vector<16x256xf32>
    %cst_64 = arith.constant 5.000000e-01 : f32
    %113 = vector.broadcast %cst_64 : f32 to vector<16x256xf32>
    %114 = arith.mulf %112, %113 : vector<16x256xf32>
    %c80 = arith.constant 80 : index
    %c0_65 = arith.constant 0 : index
    %115 = vector.load %arg1[%c80, %c0_65] : memref<96x256xf32, #tpu.memory_space<vmem>>, vector<16x256xf32>
    %116 = arith.addf %114, %115 : vector<16x256xf32>
    %cst_66 = arith.constant dense<0xFF800000> : vector<16xf32>
    %117 = vector.multi_reduction <maximumf>, %116, %cst_66 [1] : vector<16x256xf32> to vector<16xf32>
    %118 = vector.shape_cast %117 : vector<16xf32> to vector<16x1xf32>
    %119 = vector.broadcast %118 : vector<16x1xf32> to vector<16x256xf32>
    %120 = arith.subf %116, %119 : vector<16x256xf32>
    %121 = math.exp %120 : vector<16x256xf32>
    %c16_67 = arith.constant 16 : index
    %c0_68 = arith.constant 0 : index
    %122 = vector.load %arg2[%c16_67, %c0_68] : memref<272x256xbf16, #tpu.memory_space<vmem>>, vector<256x256xbf16>
    %123 = arith.truncf %121 : vector<16x256xf32> to vector<16x256xbf16>
    %cst_69 = arith.constant dense<0.000000e+00> : vector<16x256xf32>
    %124 = tpu.matmul %123, %122, %cst_69 {dimension_numbers = #tpu.dot_dimension_numbers<[1], [0], [0], [1], [0, 0, 1, 1], [], []>} : vector<16x256xbf16>, vector<256x256xbf16>, vector<16x256xf32> -> vector<16x256xf32>
    %cst_70 = arith.constant 1.000000e-30 : f32
    %125 = vector.broadcast %cst_70 : f32 to vector<16x256xf32>
    %126 = arith.maximumf %124, %125 : vector<16x256xf32>
    %127 = tpu.reciprocal %126 {approx = true} : vector<16x256xf32> -> vector<16x256xf32>
    %128 = arith.mulf %121, %127 : vector<16x256xf32>
    %c0_71 = arith.constant 0 : index
    %c0_72 = arith.constant 0 : index
    %129 = vector.load %arg3[%c0_71, %c0_72] : memref<256x16xbf16, #tpu.memory_space<vmem>>, vector<256x16xbf16>
    %130 = arith.truncf %102 : vector<16x64xf32> to vector<16x64xbf16>
    %cst_73 = arith.constant dense<0.000000e+00> : vector<256x64xf32>
    %131 = tpu.matmul %129, %130, %cst_73 {dimension_numbers = #tpu.dot_dimension_numbers<[1], [0], [0], [1], [0, 0, 1, 1], [], []>} : vector<256x16xbf16>, vector<16x64xbf16>, vector<256x64xf32> -> vector<256x64xf32>
    %132 = arith.mulf %131, %6 : vector<256x64xf32>
    %133 = arith.truncf %128 : vector<16x256xf32> to vector<16x256xbf16>
    %134 = arith.truncf %132 : vector<256x64xf32> to vector<256x64xbf16>
    %cst_74 = arith.constant dense<0.000000e+00> : vector<16x64xf32>
    %135 = tpu.matmul %133, %134, %cst_74 {dimension_numbers = #tpu.dot_dimension_numbers<[1], [0], [0], [1], [0, 0, 1, 1], [], []>} : vector<16x256xbf16>, vector<256x64xbf16>, vector<16x64xf32> -> vector<16x64xf32>
    %c0_75 = arith.constant 0 : index
    %c448 = arith.constant 448 : index
    %c0_76 = arith.constant 0 : index
    %136 = vector.load %arg5[%c0_75, %c448, %c0_76] : memref<2x768x64xbf16, #tpu.memory_space<vmem>>, vector<1x64x64xbf16>
    %137 = vector.shape_cast %136 : vector<1x64x64xbf16> to vector<64x64xbf16>
    %138 = arith.truncf %135 : vector<16x64xf32> to vector<16x64xbf16>
    %cst_77 = arith.constant dense<0.000000e+00> : vector<16x64xf32>
    %139 = tpu.matmul %138, %137, %cst_77 {dimension_numbers = #tpu.dot_dimension_numbers<[1], [0], [0], [1], [0, 0, 1, 1], [], []>} : vector<16x64xbf16>, vector<64x64xbf16>, vector<16x64xf32> -> vector<16x64xf32>
    %140 = arith.addf %139, %94 : vector<16x64xf32>
    %c0_78 = arith.constant 0 : index
    %c4 = arith.constant 4 : index
    %c0_79 = arith.constant 0 : index
    %141 = vector.load %arg7[%c0_78, %c4, %c0_79] : memref<2x9x64xf32, #tpu.memory_space<vmem>>, vector<1x1x64xf32>
    %142 = vector.shape_cast %141 : vector<1x1x64xf32> to vector<1x64xf32>
    %c0_80 = arith.constant 0 : index
    %c5 = arith.constant 5 : index
    %c0_81 = arith.constant 0 : index
    %143 = vector.load %arg7[%c0_80, %c5, %c0_81] : memref<2x9x64xf32, #tpu.memory_space<vmem>>, vector<1x1x64xf32>
    %144 = vector.shape_cast %143 : vector<1x1x64xf32> to vector<1x64xf32>
    %cst_82 = arith.constant dense<0.000000e+00> : vector<16xf32>
    %145 = vector.multi_reduction <add>, %140, %cst_82 [1] : vector<16x64xf32> to vector<16xf32>
    %146 = vector.shape_cast %145 : vector<16xf32> to vector<16x1xf32>
    %cst_83 = arith.constant 6.400000e+01 : f32
    %147 = vector.broadcast %cst_83 : f32 to vector<16x1xf32>
    %148 = arith.divf %146, %147 : vector<16x1xf32>
    %149 = vector.broadcast %148 : vector<16x1xf32> to vector<16x64xf32>
    %150 = arith.subf %140, %149 : vector<16x64xf32>
    %151 = arith.mulf %150, %150 : vector<16x64xf32>
    %cst_84 = arith.constant dense<0.000000e+00> : vector<16xf32>
    %152 = vector.multi_reduction <add>, %151, %cst_84 [1] : vector<16x64xf32> to vector<16xf32>
    %153 = vector.shape_cast %152 : vector<16xf32> to vector<16x1xf32>
    %cst_85 = arith.constant 6.400000e+01 : f32
    %154 = vector.broadcast %cst_85 : f32 to vector<16x1xf32>
    %155 = arith.divf %153, %154 : vector<16x1xf32>
    %cst_86 = arith.constant 9.99999974E-6 : f32
    %156 = vector.broadcast %cst_86 : f32 to vector<16x1xf32>
    %157 = arith.addf %155, %156 : vector<16x1xf32>
    %158 = math.rsqrt %157 : vector<16x1xf32>
    %159 = vector.broadcast %158 : vector<16x1xf32> to vector<16x64xf32>
    %160 = arith.mulf %150, %159 : vector<16x64xf32>
    %161 = vector.broadcast %142 : vector<1x64xf32> to vector<16x64xf32>
    %162 = arith.mulf %160, %161 : vector<16x64xf32>
    %163 = vector.broadcast %144 : vector<1x64xf32> to vector<16x64xf32>
    %164 = arith.addf %162, %163 : vector<16x64xf32>
    %c0_87 = arith.constant 0 : index
    %c0_88 = arith.constant 0 : index
    %c0_89 = arith.constant 0 : index
    %165 = vector.load %arg6[%c0_87, %c0_88, %c0_89] : memref<2x128x256xbf16, #tpu.memory_space<vmem>>, vector<1x64x256xbf16>
    %166 = vector.shape_cast %165 : vector<1x64x256xbf16> to vector<64x256xbf16>
    %167 = arith.truncf %164 : vector<16x64xf32> to vector<16x64xbf16>
    %cst_90 = arith.constant dense<0.000000e+00> : vector<16x256xf32>
    %168 = tpu.matmul %167, %166, %cst_90 {dimension_numbers = #tpu.dot_dimension_numbers<[1], [0], [0], [1], [0, 0, 1, 1], [], []>} : vector<16x64xbf16>, vector<64x256xbf16>, vector<16x256xf32> -> vector<16x256xf32>
    %c0_91 = arith.constant 0 : index
    %c0_92 = arith.constant 0 : index
    %c0_93 = arith.constant 0 : index
    %169 = vector.load %arg8[%c0_91, %c0_92, %c0_93] : memref<2x1x256xf32, #tpu.memory_space<vmem>>, vector<1x1x256xf32>
    %170 = vector.shape_cast %169 : vector<1x1x256xf32> to vector<1x256xf32>
    %171 = vector.broadcast %170 : vector<1x256xf32> to vector<16x256xf32>
    %172 = arith.addf %168, %171 : vector<16x256xf32>
    %cst_94 = arith.constant 5.000000e-01 : f32
    %173 = vector.broadcast %cst_94 : f32 to vector<16x256xf32>
    %174 = arith.mulf %173, %172 : vector<16x256xf32>
    %cst_95 = arith.constant 0.707106769 : f32
    %175 = vector.broadcast %cst_95 : f32 to vector<16x256xf32>
    %176 = arith.mulf %172, %175 : vector<16x256xf32>
    %cst_96 = arith.constant 0.000000e+00 : f32
    %177 = vector.broadcast %cst_96 : f32 to vector<16x256xf32>
    %178 = arith.cmpf oge, %176, %177 : vector<16x256xf32>
    %cst_97 = arith.constant 1.000000e+00 : f32
    %cst_98 = arith.constant -1.000000e+00 : f32
    %179 = vector.broadcast %cst_97 : f32 to vector<16x256xf32>
    %180 = vector.broadcast %cst_98 : f32 to vector<16x256xf32>
    %181 = arith.select %178, %179, %180 : vector<16x256xi1>, vector<16x256xf32>
    %182 = math.absf %176 : vector<16x256xf32>
    %cst_99 = arith.constant 0.327591091 : f32
    %183 = vector.broadcast %cst_99 : f32 to vector<16x256xf32>
    %184 = arith.mulf %183, %182 : vector<16x256xf32>
    %cst_100 = arith.constant 1.000000e+00 : f32
    %185 = vector.broadcast %cst_100 : f32 to vector<16x256xf32>
    %186 = arith.addf %185, %184 : vector<16x256xf32>
    %cst_101 = arith.constant 1.000000e+00 : f32
    %187 = vector.broadcast %cst_101 : f32 to vector<16x256xf32>
    %188 = arith.divf %187, %186 : vector<16x256xf32>
    %cst_102 = arith.constant 1.06140542 : f32
    %189 = vector.broadcast %cst_102 : f32 to vector<16x256xf32>
    %190 = arith.mulf %189, %188 : vector<16x256xf32>
    %cst_103 = arith.constant -1.45315206 : f32
    %191 = vector.broadcast %cst_103 : f32 to vector<16x256xf32>
    %192 = arith.addf %190, %191 : vector<16x256xf32>
    %193 = arith.mulf %192, %188 : vector<16x256xf32>
    %cst_104 = arith.constant 1.42141378 : f32
    %194 = vector.broadcast %cst_104 : f32 to vector<16x256xf32>
    %195 = arith.addf %193, %194 : vector<16x256xf32>
    %196 = arith.mulf %195, %188 : vector<16x256xf32>
    %cst_105 = arith.constant -0.284496725 : f32
    %197 = vector.broadcast %cst_105 : f32 to vector<16x256xf32>
    %198 = arith.addf %196, %197 : vector<16x256xf32>
    %199 = arith.mulf %198, %188 : vector<16x256xf32>
    %cst_106 = arith.constant 0.254829586 : f32
    %200 = vector.broadcast %cst_106 : f32 to vector<16x256xf32>
    %201 = arith.addf %199, %200 : vector<16x256xf32>
    %202 = arith.mulf %201, %188 : vector<16x256xf32>
    %cst_107 = arith.constant 0.000000e+00 : f32
    %203 = vector.broadcast %cst_107 : f32 to vector<16x256xf32>
    %204 = arith.subf %203, %182 : vector<16x256xf32>
    %205 = arith.mulf %204, %182 : vector<16x256xf32>
    %206 = math.exp %205 : vector<16x256xf32>
    %207 = arith.mulf %202, %206 : vector<16x256xf32>
    %cst_108 = arith.constant 1.000000e+00 : f32
    %208 = vector.broadcast %cst_108 : f32 to vector<16x256xf32>
    %209 = arith.subf %208, %207 : vector<16x256xf32>
    %210 = arith.mulf %181, %209 : vector<16x256xf32>
    %cst_109 = arith.constant 1.000000e+00 : f32
    %211 = vector.broadcast %cst_109 : f32 to vector<16x256xf32>
    %212 = arith.addf %211, %210 : vector<16x256xf32>
    %213 = arith.mulf %174, %212 : vector<16x256xf32>
    %c0_110 = arith.constant 0 : index
    %c512 = arith.constant 512 : index
    %c0_111 = arith.constant 0 : index
    %214 = vector.load %arg5[%c0_110, %c512, %c0_111] : memref<2x768x64xbf16, #tpu.memory_space<vmem>>, vector<1x256x64xbf16>
    %215 = vector.shape_cast %214 : vector<1x256x64xbf16> to vector<256x64xbf16>
    %216 = arith.truncf %213 : vector<16x256xf32> to vector<16x256xbf16>
    %cst_112 = arith.constant dense<0.000000e+00> : vector<16x64xf32>
    %217 = tpu.matmul %216, %215, %cst_112 {dimension_numbers = #tpu.dot_dimension_numbers<[1], [0], [0], [1], [0, 0, 1, 1], [], []>} : vector<16x256xbf16>, vector<256x64xbf16>, vector<16x64xf32> -> vector<16x64xf32>
    %c0_113 = arith.constant 0 : index
    %c8 = arith.constant 8 : index
    %c0_114 = arith.constant 0 : index
    %218 = vector.load %arg7[%c0_113, %c8, %c0_114] : memref<2x9x64xf32, #tpu.memory_space<vmem>>, vector<1x1x64xf32>
    %219 = vector.shape_cast %218 : vector<1x1x64xf32> to vector<1x64xf32>
    %220 = vector.broadcast %219 : vector<1x64xf32> to vector<16x64xf32>
    %221 = arith.addf %217, %220 : vector<16x64xf32>
    %222 = arith.addf %164, %221 : vector<16x64xf32>
    %c0_115 = arith.constant 0 : index
    %c6 = arith.constant 6 : index
    %c0_116 = arith.constant 0 : index
    %223 = vector.load %arg7[%c0_115, %c6, %c0_116] : memref<2x9x64xf32, #tpu.memory_space<vmem>>, vector<1x1x64xf32>
    %224 = vector.shape_cast %223 : vector<1x1x64xf32> to vector<1x64xf32>
    %c0_117 = arith.constant 0 : index
    %c7 = arith.constant 7 : index
    %c0_118 = arith.constant 0 : index
    %225 = vector.load %arg7[%c0_117, %c7, %c0_118] : memref<2x9x64xf32, #tpu.memory_space<vmem>>, vector<1x1x64xf32>
    %226 = vector.shape_cast %225 : vector<1x1x64xf32> to vector<1x64xf32>
    %cst_119 = arith.constant dense<0.000000e+00> : vector<16xf32>
    %227 = vector.multi_reduction <add>, %222, %cst_119 [1] : vector<16x64xf32> to vector<16xf32>
    %228 = vector.shape_cast %227 : vector<16xf32> to vector<16x1xf32>
    %cst_120 = arith.constant 6.400000e+01 : f32
    %229 = vector.broadcast %cst_120 : f32 to vector<16x1xf32>
    %230 = arith.divf %228, %229 : vector<16x1xf32>
    %231 = vector.broadcast %230 : vector<16x1xf32> to vector<16x64xf32>
    %232 = arith.subf %222, %231 : vector<16x64xf32>
    %233 = arith.mulf %232, %232 : vector<16x64xf32>
    %cst_121 = arith.constant dense<0.000000e+00> : vector<16xf32>
    %234 = vector.multi_reduction <add>, %233, %cst_121 [1] : vector<16x64xf32> to vector<16xf32>
    %235 = vector.shape_cast %234 : vector<16xf32> to vector<16x1xf32>
    %cst_122 = arith.constant 6.400000e+01 : f32
    %236 = vector.broadcast %cst_122 : f32 to vector<16x1xf32>
    %237 = arith.divf %235, %236 : vector<16x1xf32>
    %cst_123 = arith.constant 9.99999974E-6 : f32
    %238 = vector.broadcast %cst_123 : f32 to vector<16x1xf32>
    %239 = arith.addf %237, %238 : vector<16x1xf32>
    %240 = math.rsqrt %239 : vector<16x1xf32>
    %241 = vector.broadcast %240 : vector<16x1xf32> to vector<16x64xf32>
    %242 = arith.mulf %232, %241 : vector<16x64xf32>
    %243 = vector.broadcast %224 : vector<1x64xf32> to vector<16x64xf32>
    %244 = arith.mulf %242, %243 : vector<16x64xf32>
    %245 = vector.broadcast %226 : vector<1x64xf32> to vector<16x64xf32>
    %246 = arith.addf %244, %245 : vector<16x64xf32>
    %c0_124 = arith.constant 0 : index
    %c0_125 = arith.constant 0 : index
    %247 = vector.load %arg2[%c0_124, %c0_125] : memref<272x256xbf16, #tpu.memory_space<vmem>>, vector<16x256xbf16>
    %c0_126 = arith.constant 0 : index
    %c0_127 = arith.constant 0 : index
    %248 = vector.load %arg1[%c0_126, %c0_127] : memref<96x256xf32, #tpu.memory_space<vmem>>, vector<64x256xf32>
    %c264_128 = arith.constant 264 : index
    %c0_129 = arith.constant 0 : index
    %249 = vector.load %arg0[%c264_128, %c0_129] : memref<520x64xf32, #tpu.memory_space<vmem>>, vector<256x64xf32>
    %c1_130 = arith.constant 1 : index
    %c0_131 = arith.constant 0 : index
    %c0_132 = arith.constant 0 : index
    %250 = vector.load %arg7[%c1_130, %c0_131, %c0_132] : memref<2x9x64xf32, #tpu.memory_space<vmem>>, vector<1x1x64xf32>
    %251 = vector.shape_cast %250 : vector<1x1x64xf32> to vector<1x64xf32>
    %c1_133 = arith.constant 1 : index
    %c1_134 = arith.constant 1 : index
    %c0_135 = arith.constant 0 : index
    %252 = vector.load %arg7[%c1_133, %c1_134, %c0_135] : memref<2x9x64xf32, #tpu.memory_space<vmem>>, vector<1x1x64xf32>
    %253 = vector.shape_cast %252 : vector<1x1x64xf32> to vector<1x64xf32>
    %c1_136 = arith.constant 1 : index
    %c0_137 = arith.constant 0 : index
    %c0_138 = arith.constant 0 : index
    %254 = vector.load %arg5[%c1_136, %c0_137, %c0_138] : memref<2x768x64xbf16, #tpu.memory_space<vmem>>, vector<1x64x64xbf16>
    %255 = vector.shape_cast %254 : vector<1x64x64xbf16> to vector<64x64xbf16>
    %256 = arith.truncf %246 : vector<16x64xf32> to vector<16x64xbf16>
    %cst_139 = arith.constant dense<0.000000e+00> : vector<16x64xf32>
    %257 = tpu.matmul %256, %255, %cst_139 {dimension_numbers = #tpu.dot_dimension_numbers<[1], [0], [0], [1], [0, 0, 1, 1], [], []>} : vector<16x64xbf16>, vector<64x64xbf16>, vector<16x64xf32> -> vector<16x64xf32>
    %c1_140 = arith.constant 1 : index
    %c128_141 = arith.constant 128 : index
    %c0_142 = arith.constant 0 : index
    %258 = vector.load %arg5[%c1_140, %c128_141, %c0_142] : memref<2x768x64xbf16, #tpu.memory_space<vmem>>, vector<1x64x64xbf16>
    %259 = vector.shape_cast %258 : vector<1x64x64xbf16> to vector<64x64xbf16>
    %260 = arith.truncf %246 : vector<16x64xf32> to vector<16x64xbf16>
    %cst_143 = arith.constant dense<0.000000e+00> : vector<16x64xf32>
    %261 = tpu.matmul %260, %259, %cst_143 {dimension_numbers = #tpu.dot_dimension_numbers<[1], [0], [0], [1], [0, 0, 1, 1], [], []>} : vector<16x64xbf16>, vector<64x64xbf16>, vector<16x64xf32> -> vector<16x64xf32>
    %c1_144 = arith.constant 1 : index
    %c64_145 = arith.constant 64 : index
    %c0_146 = arith.constant 0 : index
    %262 = vector.load %arg5[%c1_144, %c64_145, %c0_146] : memref<2x768x64xbf16, #tpu.memory_space<vmem>>, vector<1x64x64xbf16>
    %263 = vector.shape_cast %262 : vector<1x64x64xbf16> to vector<64x64xbf16>
    %264 = arith.truncf %246 : vector<16x64xf32> to vector<16x64xbf16>
    %cst_147 = arith.constant dense<0.000000e+00> : vector<64x16xf32>
    %265 = tpu.matmul %263, %264, %cst_147 {dimension_numbers = #tpu.dot_dimension_numbers<[0], [1], [1], [0], [0, 1, 1, 0], [], []>} : vector<64x64xbf16>, vector<16x64xbf16>, vector<64x16xf32> -> vector<64x16xf32>
    %266 = arith.truncf %265 : vector<64x16xf32> to vector<64x16xbf16>
    %cst_148 = arith.constant dense<0.000000e+00> : vector<64x256xf32>
    %267 = tpu.matmul %266, %247, %cst_148 {dimension_numbers = #tpu.dot_dimension_numbers<[1], [0], [0], [1], [0, 0, 1, 1], [], []>} : vector<64x16xbf16>, vector<16x256xbf16>, vector<64x256xf32> -> vector<64x256xf32>
    %268 = arith.mulf %267, %248 : vector<64x256xf32>
    %269 = vector.broadcast %251 : vector<1x64xf32> to vector<16x64xf32>
    %270 = arith.addf %257, %269 : vector<16x64xf32>
    %271 = arith.truncf %270 : vector<16x64xf32> to vector<16x64xbf16>
    %272 = arith.truncf %268 : vector<64x256xf32> to vector<64x256xbf16>
    %cst_149 = arith.constant dense<0.000000e+00> : vector<16x256xf32>
    %273 = tpu.matmul %271, %272, %cst_149 {dimension_numbers = #tpu.dot_dimension_numbers<[1], [0], [0], [1], [0, 0, 1, 1], [], []>} : vector<16x64xbf16>, vector<64x256xbf16>, vector<16x256xf32> -> vector<16x256xf32>
    %274 = vector.broadcast %253 : vector<1x64xf32> to vector<16x64xf32>
    %275 = arith.addf %257, %274 : vector<16x64xf32>
    %c1_150 = arith.constant 1 : index
    %c64_151 = arith.constant 64 : index
    %c0_152 = arith.constant 0 : index
    %276 = vector.load %arg6[%c1_150, %c64_151, %c0_152] : memref<2x128x256xbf16, #tpu.memory_space<vmem>>, vector<1x64x256xbf16>
    %277 = vector.shape_cast %276 : vector<1x64x256xbf16> to vector<64x256xbf16>
    %278 = arith.truncf %275 : vector<16x64xf32> to vector<16x64xbf16>
    %cst_153 = arith.constant dense<0.000000e+00> : vector<16x256xf32>
    %279 = tpu.matmul %278, %277, %cst_153 {dimension_numbers = #tpu.dot_dimension_numbers<[1], [0], [0], [1], [0, 0, 1, 1], [], []>} : vector<16x64xbf16>, vector<64x256xbf16>, vector<16x256xf32> -> vector<16x256xf32>
    %280 = vector.extract_strided_slice %279 {offsets = [0, 0], sizes = [16, 128], strides = [1, 1]} : vector<16x256xf32> to vector<16x128xf32>
    %c121_i32_154 = arith.constant 121 : i32
    %281 = tpu.dynamic_rotate %280 by %c121_i32_154 dim 1 {stride = 1 : si32, stride_dimension = 0 : si32} : vector<16x128xf32>, i32 -> vector<16x128xf32>
    %282 = vector.extract_strided_slice %279 {offsets = [0, 128], sizes = [16, 128], strides = [1, 1]} : vector<16x256xf32> to vector<16x128xf32>
    %c113_i32_155 = arith.constant 113 : i32
    %283 = tpu.dynamic_rotate %282 by %c113_i32_155 dim 1 {stride = 1 : si32, stride_dimension = 0 : si32} : vector<16x128xf32>, i32 -> vector<16x128xf32>
    %284 = tpu.concatenate %281, %283 in 1 : vector<16x128xf32>, vector<16x128xf32> -> vector<16x256xf32>
    %285 = arith.addf %273, %284 : vector<16x256xf32>
    %cst_156 = arith.constant 5.000000e-01 : f32
    %286 = vector.broadcast %cst_156 : f32 to vector<16x256xf32>
    %287 = arith.mulf %285, %286 : vector<16x256xf32>
    %c64_157 = arith.constant 64 : index
    %c0_158 = arith.constant 0 : index
    %288 = vector.load %arg1[%c64_157, %c0_158] : memref<96x256xf32, #tpu.memory_space<vmem>>, vector<16x256xf32>
    %289 = arith.addf %287, %288 : vector<16x256xf32>
    %cst_159 = arith.constant dense<0xFF800000> : vector<16xf32>
    %290 = vector.multi_reduction <maximumf>, %289, %cst_159 [1] : vector<16x256xf32> to vector<16xf32>
    %291 = vector.shape_cast %290 : vector<16xf32> to vector<16x1xf32>
    %292 = vector.broadcast %291 : vector<16x1xf32> to vector<16x256xf32>
    %293 = arith.subf %289, %292 : vector<16x256xf32>
    %294 = math.exp %293 : vector<16x256xf32>
    %c16_160 = arith.constant 16 : index
    %c0_161 = arith.constant 0 : index
    %295 = vector.load %arg2[%c16_160, %c0_161] : memref<272x256xbf16, #tpu.memory_space<vmem>>, vector<256x256xbf16>
    %296 = arith.truncf %294 : vector<16x256xf32> to vector<16x256xbf16>
    %cst_162 = arith.constant dense<0.000000e+00> : vector<16x256xf32>
    %297 = tpu.matmul %296, %295, %cst_162 {dimension_numbers = #tpu.dot_dimension_numbers<[1], [0], [0], [1], [0, 0, 1, 1], [], []>} : vector<16x256xbf16>, vector<256x256xbf16>, vector<16x256xf32> -> vector<16x256xf32>
    %cst_163 = arith.constant 1.000000e-30 : f32
    %298 = vector.broadcast %cst_163 : f32 to vector<16x256xf32>
    %299 = arith.maximumf %297, %298 : vector<16x256xf32>
    %300 = tpu.reciprocal %299 {approx = true} : vector<16x256xf32> -> vector<16x256xf32>
    %301 = arith.mulf %294, %300 : vector<16x256xf32>
    %c0_164 = arith.constant 0 : index
    %c0_165 = arith.constant 0 : index
    %302 = vector.load %arg3[%c0_164, %c0_165] : memref<256x16xbf16, #tpu.memory_space<vmem>>, vector<256x16xbf16>
    %303 = arith.truncf %261 : vector<16x64xf32> to vector<16x64xbf16>
    %cst_166 = arith.constant dense<0.000000e+00> : vector<256x64xf32>
    %304 = tpu.matmul %302, %303, %cst_166 {dimension_numbers = #tpu.dot_dimension_numbers<[1], [0], [0], [1], [0, 0, 1, 1], [], []>} : vector<256x16xbf16>, vector<16x64xbf16>, vector<256x64xf32> -> vector<256x64xf32>
    %305 = arith.mulf %304, %249 : vector<256x64xf32>
    %306 = arith.truncf %301 : vector<16x256xf32> to vector<16x256xbf16>
    %307 = arith.truncf %305 : vector<256x64xf32> to vector<256x64xbf16>
    %cst_167 = arith.constant dense<0.000000e+00> : vector<16x64xf32>
    %308 = tpu.matmul %306, %307, %cst_167 {dimension_numbers = #tpu.dot_dimension_numbers<[1], [0], [0], [1], [0, 0, 1, 1], [], []>} : vector<16x256xbf16>, vector<256x64xbf16>, vector<16x64xf32> -> vector<16x64xf32>
    %c1_168 = arith.constant 1 : index
    %c192_169 = arith.constant 192 : index
    %c0_170 = arith.constant 0 : index
    %309 = vector.load %arg5[%c1_168, %c192_169, %c0_170] : memref<2x768x64xbf16, #tpu.memory_space<vmem>>, vector<1x64x64xbf16>
    %310 = vector.shape_cast %309 : vector<1x64x64xbf16> to vector<64x64xbf16>
    %311 = arith.truncf %308 : vector<16x64xf32> to vector<16x64xbf16>
    %cst_171 = arith.constant dense<0.000000e+00> : vector<16x64xf32>
    %312 = tpu.matmul %311, %310, %cst_171 {dimension_numbers = #tpu.dot_dimension_numbers<[1], [0], [0], [1], [0, 0, 1, 1], [], []>} : vector<16x64xbf16>, vector<64x64xbf16>, vector<16x64xf32> -> vector<16x64xf32>
    %313 = arith.addf %246, %312 : vector<16x64xf32>
    %c1_172 = arith.constant 1 : index
    %c2_173 = arith.constant 2 : index
    %c0_174 = arith.constant 0 : index
    %314 = vector.load %arg7[%c1_172, %c2_173, %c0_174] : memref<2x9x64xf32, #tpu.memory_space<vmem>>, vector<1x1x64xf32>
    %315 = vector.shape_cast %314 : vector<1x1x64xf32> to vector<1x64xf32>
    %c1_175 = arith.constant 1 : index
    %c3_176 = arith.constant 3 : index
    %c0_177 = arith.constant 0 : index
    %316 = vector.load %arg7[%c1_175, %c3_176, %c0_177] : memref<2x9x64xf32, #tpu.memory_space<vmem>>, vector<1x1x64xf32>
    %317 = vector.shape_cast %316 : vector<1x1x64xf32> to vector<1x64xf32>
    %cst_178 = arith.constant dense<0.000000e+00> : vector<16xf32>
    %318 = vector.multi_reduction <add>, %313, %cst_178 [1] : vector<16x64xf32> to vector<16xf32>
    %319 = vector.shape_cast %318 : vector<16xf32> to vector<16x1xf32>
    %cst_179 = arith.constant 6.400000e+01 : f32
    %320 = vector.broadcast %cst_179 : f32 to vector<16x1xf32>
    %321 = arith.divf %319, %320 : vector<16x1xf32>
    %322 = vector.broadcast %321 : vector<16x1xf32> to vector<16x64xf32>
    %323 = arith.subf %313, %322 : vector<16x64xf32>
    %324 = arith.mulf %323, %323 : vector<16x64xf32>
    %cst_180 = arith.constant dense<0.000000e+00> : vector<16xf32>
    %325 = vector.multi_reduction <add>, %324, %cst_180 [1] : vector<16x64xf32> to vector<16xf32>
    %326 = vector.shape_cast %325 : vector<16xf32> to vector<16x1xf32>
    %cst_181 = arith.constant 6.400000e+01 : f32
    %327 = vector.broadcast %cst_181 : f32 to vector<16x1xf32>
    %328 = arith.divf %326, %327 : vector<16x1xf32>
    %cst_182 = arith.constant 9.99999974E-6 : f32
    %329 = vector.broadcast %cst_182 : f32 to vector<16x1xf32>
    %330 = arith.addf %328, %329 : vector<16x1xf32>
    %331 = math.rsqrt %330 : vector<16x1xf32>
    %332 = vector.broadcast %331 : vector<16x1xf32> to vector<16x64xf32>
    %333 = arith.mulf %323, %332 : vector<16x64xf32>
    %334 = vector.broadcast %315 : vector<1x64xf32> to vector<16x64xf32>
    %335 = arith.mulf %333, %334 : vector<16x64xf32>
    %336 = vector.broadcast %317 : vector<1x64xf32> to vector<16x64xf32>
    %337 = arith.addf %335, %336 : vector<16x64xf32>
    %c1_183 = arith.constant 1 : index
    %c256_184 = arith.constant 256 : index
    %c0_185 = arith.constant 0 : index
    %338 = vector.load %arg5[%c1_183, %c256_184, %c0_185] : memref<2x768x64xbf16, #tpu.memory_space<vmem>>, vector<1x64x64xbf16>
    %339 = vector.shape_cast %338 : vector<1x64x64xbf16> to vector<64x64xbf16>
    %340 = arith.truncf %337 : vector<16x64xf32> to vector<16x64xbf16>
    %cst_186 = arith.constant dense<0.000000e+00> : vector<16x64xf32>
    %341 = tpu.matmul %340, %339, %cst_186 {dimension_numbers = #tpu.dot_dimension_numbers<[1], [0], [0], [1], [0, 0, 1, 1], [], []>} : vector<16x64xbf16>, vector<64x64xbf16>, vector<16x64xf32> -> vector<16x64xf32>
    %c1_187 = arith.constant 1 : index
    %c384_188 = arith.constant 384 : index
    %c0_189 = arith.constant 0 : index
    %342 = vector.load %arg5[%c1_187, %c384_188, %c0_189] : memref<2x768x64xbf16, #tpu.memory_space<vmem>>, vector<1x64x64xbf16>
    %343 = vector.shape_cast %342 : vector<1x64x64xbf16> to vector<64x64xbf16>
    %344 = arith.truncf %3 : vector<16x64xf32> to vector<16x64xbf16>
    %cst_190 = arith.constant dense<0.000000e+00> : vector<16x64xf32>
    %345 = tpu.matmul %344, %343, %cst_190 {dimension_numbers = #tpu.dot_dimension_numbers<[1], [0], [0], [1], [0, 0, 1, 1], [], []>} : vector<16x64xbf16>, vector<64x64xbf16>, vector<16x64xf32> -> vector<16x64xf32>
    %c1_191 = arith.constant 1 : index
    %c320_192 = arith.constant 320 : index
    %c0_193 = arith.constant 0 : index
    %346 = vector.load %arg5[%c1_191, %c320_192, %c0_193] : memref<2x768x64xbf16, #tpu.memory_space<vmem>>, vector<1x64x64xbf16>
    %347 = vector.shape_cast %346 : vector<1x64x64xbf16> to vector<64x64xbf16>
    %348 = arith.truncf %3 : vector<16x64xf32> to vector<16x64xbf16>
    %cst_194 = arith.constant dense<0.000000e+00> : vector<64x16xf32>
    %349 = tpu.matmul %347, %348, %cst_194 {dimension_numbers = #tpu.dot_dimension_numbers<[0], [1], [1], [0], [0, 1, 1, 0], [], []>} : vector<64x64xbf16>, vector<16x64xbf16>, vector<64x16xf32> -> vector<64x16xf32>
    %350 = arith.truncf %349 : vector<64x16xf32> to vector<64x16xbf16>
    %cst_195 = arith.constant dense<0.000000e+00> : vector<64x256xf32>
    %351 = tpu.matmul %350, %247, %cst_195 {dimension_numbers = #tpu.dot_dimension_numbers<[1], [0], [0], [1], [0, 0, 1, 1], [], []>} : vector<64x16xbf16>, vector<16x256xbf16>, vector<64x256xf32> -> vector<64x256xf32>
    %352 = arith.mulf %351, %248 : vector<64x256xf32>
    %353 = arith.truncf %341 : vector<16x64xf32> to vector<16x64xbf16>
    %354 = arith.truncf %352 : vector<64x256xf32> to vector<64x256xbf16>
    %cst_196 = arith.constant dense<0.000000e+00> : vector<16x256xf32>
    %355 = tpu.matmul %353, %354, %cst_196 {dimension_numbers = #tpu.dot_dimension_numbers<[1], [0], [0], [1], [0, 0, 1, 1], [], []>} : vector<16x64xbf16>, vector<64x256xbf16>, vector<16x256xf32> -> vector<16x256xf32>
    %cst_197 = arith.constant 5.000000e-01 : f32
    %356 = vector.broadcast %cst_197 : f32 to vector<16x256xf32>
    %357 = arith.mulf %355, %356 : vector<16x256xf32>
    %c80_198 = arith.constant 80 : index
    %c0_199 = arith.constant 0 : index
    %358 = vector.load %arg1[%c80_198, %c0_199] : memref<96x256xf32, #tpu.memory_space<vmem>>, vector<16x256xf32>
    %359 = arith.addf %357, %358 : vector<16x256xf32>
    %cst_200 = arith.constant dense<0xFF800000> : vector<16xf32>
    %360 = vector.multi_reduction <maximumf>, %359, %cst_200 [1] : vector<16x256xf32> to vector<16xf32>
    %361 = vector.shape_cast %360 : vector<16xf32> to vector<16x1xf32>
    %362 = vector.broadcast %361 : vector<16x1xf32> to vector<16x256xf32>
    %363 = arith.subf %359, %362 : vector<16x256xf32>
    %364 = math.exp %363 : vector<16x256xf32>
    %c16_201 = arith.constant 16 : index
    %c0_202 = arith.constant 0 : index
    %365 = vector.load %arg2[%c16_201, %c0_202] : memref<272x256xbf16, #tpu.memory_space<vmem>>, vector<256x256xbf16>
    %366 = arith.truncf %364 : vector<16x256xf32> to vector<16x256xbf16>
    %cst_203 = arith.constant dense<0.000000e+00> : vector<16x256xf32>
    %367 = tpu.matmul %366, %365, %cst_203 {dimension_numbers = #tpu.dot_dimension_numbers<[1], [0], [0], [1], [0, 0, 1, 1], [], []>} : vector<16x256xbf16>, vector<256x256xbf16>, vector<16x256xf32> -> vector<16x256xf32>
    %cst_204 = arith.constant 1.000000e-30 : f32
    %368 = vector.broadcast %cst_204 : f32 to vector<16x256xf32>
    %369 = arith.maximumf %367, %368 : vector<16x256xf32>
    %370 = tpu.reciprocal %369 {approx = true} : vector<16x256xf32> -> vector<16x256xf32>
    %371 = arith.mulf %364, %370 : vector<16x256xf32>
    %c0_205 = arith.constant 0 : index
    %c0_206 = arith.constant 0 : index
    %372 = vector.load %arg3[%c0_205, %c0_206] : memref<256x16xbf16, #tpu.memory_space<vmem>>, vector<256x16xbf16>
    %373 = arith.truncf %345 : vector<16x64xf32> to vector<16x64xbf16>
    %cst_207 = arith.constant dense<0.000000e+00> : vector<256x64xf32>
    %374 = tpu.matmul %372, %373, %cst_207 {dimension_numbers = #tpu.dot_dimension_numbers<[1], [0], [0], [1], [0, 0, 1, 1], [], []>} : vector<256x16xbf16>, vector<16x64xbf16>, vector<256x64xf32> -> vector<256x64xf32>
    %375 = arith.mulf %374, %249 : vector<256x64xf32>
    %376 = arith.truncf %371 : vector<16x256xf32> to vector<16x256xbf16>
    %377 = arith.truncf %375 : vector<256x64xf32> to vector<256x64xbf16>
    %cst_208 = arith.constant dense<0.000000e+00> : vector<16x64xf32>
    %378 = tpu.matmul %376, %377, %cst_208 {dimension_numbers = #tpu.dot_dimension_numbers<[1], [0], [0], [1], [0, 0, 1, 1], [], []>} : vector<16x256xbf16>, vector<256x64xbf16>, vector<16x64xf32> -> vector<16x64xf32>
    %c1_209 = arith.constant 1 : index
    %c448_210 = arith.constant 448 : index
    %c0_211 = arith.constant 0 : index
    %379 = vector.load %arg5[%c1_209, %c448_210, %c0_211] : memref<2x768x64xbf16, #tpu.memory_space<vmem>>, vector<1x64x64xbf16>
    %380 = vector.shape_cast %379 : vector<1x64x64xbf16> to vector<64x64xbf16>
    %381 = arith.truncf %378 : vector<16x64xf32> to vector<16x64xbf16>
    %cst_212 = arith.constant dense<0.000000e+00> : vector<16x64xf32>
    %382 = tpu.matmul %381, %380, %cst_212 {dimension_numbers = #tpu.dot_dimension_numbers<[1], [0], [0], [1], [0, 0, 1, 1], [], []>} : vector<16x64xbf16>, vector<64x64xbf16>, vector<16x64xf32> -> vector<16x64xf32>
    %383 = arith.addf %382, %337 : vector<16x64xf32>
    %c1_213 = arith.constant 1 : index
    %c4_214 = arith.constant 4 : index
    %c0_215 = arith.constant 0 : index
    %384 = vector.load %arg7[%c1_213, %c4_214, %c0_215] : memref<2x9x64xf32, #tpu.memory_space<vmem>>, vector<1x1x64xf32>
    %385 = vector.shape_cast %384 : vector<1x1x64xf32> to vector<1x64xf32>
    %c1_216 = arith.constant 1 : index
    %c5_217 = arith.constant 5 : index
    %c0_218 = arith.constant 0 : index
    %386 = vector.load %arg7[%c1_216, %c5_217, %c0_218] : memref<2x9x64xf32, #tpu.memory_space<vmem>>, vector<1x1x64xf32>
    %387 = vector.shape_cast %386 : vector<1x1x64xf32> to vector<1x64xf32>
    %cst_219 = arith.constant dense<0.000000e+00> : vector<16xf32>
    %388 = vector.multi_reduction <add>, %383, %cst_219 [1] : vector<16x64xf32> to vector<16xf32>
    %389 = vector.shape_cast %388 : vector<16xf32> to vector<16x1xf32>
    %cst_220 = arith.constant 6.400000e+01 : f32
    %390 = vector.broadcast %cst_220 : f32 to vector<16x1xf32>
    %391 = arith.divf %389, %390 : vector<16x1xf32>
    %392 = vector.broadcast %391 : vector<16x1xf32> to vector<16x64xf32>
    %393 = arith.subf %383, %392 : vector<16x64xf32>
    %394 = arith.mulf %393, %393 : vector<16x64xf32>
    %cst_221 = arith.constant dense<0.000000e+00> : vector<16xf32>
    %395 = vector.multi_reduction <add>, %394, %cst_221 [1] : vector<16x64xf32> to vector<16xf32>
    %396 = vector.shape_cast %395 : vector<16xf32> to vector<16x1xf32>
    %cst_222 = arith.constant 6.400000e+01 : f32
    %397 = vector.broadcast %cst_222 : f32 to vector<16x1xf32>
    %398 = arith.divf %396, %397 : vector<16x1xf32>
    %cst_223 = arith.constant 9.99999974E-6 : f32
    %399 = vector.broadcast %cst_223 : f32 to vector<16x1xf32>
    %400 = arith.addf %398, %399 : vector<16x1xf32>
    %401 = math.rsqrt %400 : vector<16x1xf32>
    %402 = vector.broadcast %401 : vector<16x1xf32> to vector<16x64xf32>
    %403 = arith.mulf %393, %402 : vector<16x64xf32>
    %404 = vector.broadcast %385 : vector<1x64xf32> to vector<16x64xf32>
    %405 = arith.mulf %403, %404 : vector<16x64xf32>
    %406 = vector.broadcast %387 : vector<1x64xf32> to vector<16x64xf32>
    %407 = arith.addf %405, %406 : vector<16x64xf32>
    %c1_224 = arith.constant 1 : index
    %c0_225 = arith.constant 0 : index
    %c0_226 = arith.constant 0 : index
    %408 = vector.load %arg6[%c1_224, %c0_225, %c0_226] : memref<2x128x256xbf16, #tpu.memory_space<vmem>>, vector<1x64x256xbf16>
    %409 = vector.shape_cast %408 : vector<1x64x256xbf16> to vector<64x256xbf16>
    %410 = arith.truncf %407 : vector<16x64xf32> to vector<16x64xbf16>
    %cst_227 = arith.constant dense<0.000000e+00> : vector<16x256xf32>
    %411 = tpu.matmul %410, %409, %cst_227 {dimension_numbers = #tpu.dot_dimension_numbers<[1], [0], [0], [1], [0, 0, 1, 1], [], []>} : vector<16x64xbf16>, vector<64x256xbf16>, vector<16x256xf32> -> vector<16x256xf32>
    %c1_228 = arith.constant 1 : index
    %c0_229 = arith.constant 0 : index
    %c0_230 = arith.constant 0 : index
    %412 = vector.load %arg8[%c1_228, %c0_229, %c0_230] : memref<2x1x256xf32, #tpu.memory_space<vmem>>, vector<1x1x256xf32>
    %413 = vector.shape_cast %412 : vector<1x1x256xf32> to vector<1x256xf32>
    %414 = vector.broadcast %413 : vector<1x256xf32> to vector<16x256xf32>
    %415 = arith.addf %411, %414 : vector<16x256xf32>
    %cst_231 = arith.constant 5.000000e-01 : f32
    %416 = vector.broadcast %cst_231 : f32 to vector<16x256xf32>
    %417 = arith.mulf %416, %415 : vector<16x256xf32>
    %cst_232 = arith.constant 0.707106769 : f32
    %418 = vector.broadcast %cst_232 : f32 to vector<16x256xf32>
    %419 = arith.mulf %415, %418 : vector<16x256xf32>
    %cst_233 = arith.constant 0.000000e+00 : f32
    %420 = vector.broadcast %cst_233 : f32 to vector<16x256xf32>
    %421 = arith.cmpf oge, %419, %420 : vector<16x256xf32>
    %cst_234 = arith.constant 1.000000e+00 : f32
    %cst_235 = arith.constant -1.000000e+00 : f32
    %422 = vector.broadcast %cst_234 : f32 to vector<16x256xf32>
    %423 = vector.broadcast %cst_235 : f32 to vector<16x256xf32>
    %424 = arith.select %421, %422, %423 : vector<16x256xi1>, vector<16x256xf32>
    %425 = math.absf %419 : vector<16x256xf32>
    %cst_236 = arith.constant 0.327591091 : f32
    %426 = vector.broadcast %cst_236 : f32 to vector<16x256xf32>
    %427 = arith.mulf %426, %425 : vector<16x256xf32>
    %cst_237 = arith.constant 1.000000e+00 : f32
    %428 = vector.broadcast %cst_237 : f32 to vector<16x256xf32>
    %429 = arith.addf %428, %427 : vector<16x256xf32>
    %cst_238 = arith.constant 1.000000e+00 : f32
    %430 = vector.broadcast %cst_238 : f32 to vector<16x256xf32>
    %431 = arith.divf %430, %429 : vector<16x256xf32>
    %cst_239 = arith.constant 1.06140542 : f32
    %432 = vector.broadcast %cst_239 : f32 to vector<16x256xf32>
    %433 = arith.mulf %432, %431 : vector<16x256xf32>
    %cst_240 = arith.constant -1.45315206 : f32
    %434 = vector.broadcast %cst_240 : f32 to vector<16x256xf32>
    %435 = arith.addf %433, %434 : vector<16x256xf32>
    %436 = arith.mulf %435, %431 : vector<16x256xf32>
    %cst_241 = arith.constant 1.42141378 : f32
    %437 = vector.broadcast %cst_241 : f32 to vector<16x256xf32>
    %438 = arith.addf %436, %437 : vector<16x256xf32>
    %439 = arith.mulf %438, %431 : vector<16x256xf32>
    %cst_242 = arith.constant -0.284496725 : f32
    %440 = vector.broadcast %cst_242 : f32 to vector<16x256xf32>
    %441 = arith.addf %439, %440 : vector<16x256xf32>
    %442 = arith.mulf %441, %431 : vector<16x256xf32>
    %cst_243 = arith.constant 0.254829586 : f32
    %443 = vector.broadcast %cst_243 : f32 to vector<16x256xf32>
    %444 = arith.addf %442, %443 : vector<16x256xf32>
    %445 = arith.mulf %444, %431 : vector<16x256xf32>
    %cst_244 = arith.constant 0.000000e+00 : f32
    %446 = vector.broadcast %cst_244 : f32 to vector<16x256xf32>
    %447 = arith.subf %446, %425 : vector<16x256xf32>
    %448 = arith.mulf %447, %425 : vector<16x256xf32>
    %449 = math.exp %448 : vector<16x256xf32>
    %450 = arith.mulf %445, %449 : vector<16x256xf32>
    %cst_245 = arith.constant 1.000000e+00 : f32
    %451 = vector.broadcast %cst_245 : f32 to vector<16x256xf32>
    %452 = arith.subf %451, %450 : vector<16x256xf32>
    %453 = arith.mulf %424, %452 : vector<16x256xf32>
    %cst_246 = arith.constant 1.000000e+00 : f32
    %454 = vector.broadcast %cst_246 : f32 to vector<16x256xf32>
    %455 = arith.addf %454, %453 : vector<16x256xf32>
    %456 = arith.mulf %417, %455 : vector<16x256xf32>
    %c1_247 = arith.constant 1 : index
    %c512_248 = arith.constant 512 : index
    %c0_249 = arith.constant 0 : index
    %457 = vector.load %arg5[%c1_247, %c512_248, %c0_249] : memref<2x768x64xbf16, #tpu.memory_space<vmem>>, vector<1x256x64xbf16>
    %458 = vector.shape_cast %457 : vector<1x256x64xbf16> to vector<256x64xbf16>
    %459 = arith.truncf %456 : vector<16x256xf32> to vector<16x256xbf16>
    %cst_250 = arith.constant dense<0.000000e+00> : vector<16x64xf32>
    %460 = tpu.matmul %459, %458, %cst_250 {dimension_numbers = #tpu.dot_dimension_numbers<[1], [0], [0], [1], [0, 0, 1, 1], [], []>} : vector<16x256xbf16>, vector<256x64xbf16>, vector<16x64xf32> -> vector<16x64xf32>
    %c1_251 = arith.constant 1 : index
    %c8_252 = arith.constant 8 : index
    %c0_253 = arith.constant 0 : index
    %461 = vector.load %arg7[%c1_251, %c8_252, %c0_253] : memref<2x9x64xf32, #tpu.memory_space<vmem>>, vector<1x1x64xf32>
    %462 = vector.shape_cast %461 : vector<1x1x64xf32> to vector<1x64xf32>
    %463 = vector.broadcast %462 : vector<1x64xf32> to vector<16x64xf32>
    %464 = arith.addf %460, %463 : vector<16x64xf32>
    %465 = arith.addf %407, %464 : vector<16x64xf32>
    %c1_254 = arith.constant 1 : index
    %c6_255 = arith.constant 6 : index
    %c0_256 = arith.constant 0 : index
    %466 = vector.load %arg7[%c1_254, %c6_255, %c0_256] : memref<2x9x64xf32, #tpu.memory_space<vmem>>, vector<1x1x64xf32>
    %467 = vector.shape_cast %466 : vector<1x1x64xf32> to vector<1x64xf32>
    %c1_257 = arith.constant 1 : index
    %c7_258 = arith.constant 7 : index
    %c0_259 = arith.constant 0 : index
    %468 = vector.load %arg7[%c1_257, %c7_258, %c0_259] : memref<2x9x64xf32, #tpu.memory_space<vmem>>, vector<1x1x64xf32>
    %469 = vector.shape_cast %468 : vector<1x1x64xf32> to vector<1x64xf32>
    %cst_260 = arith.constant dense<0.000000e+00> : vector<16xf32>
    %470 = vector.multi_reduction <add>, %465, %cst_260 [1] : vector<16x64xf32> to vector<16xf32>
    %471 = vector.shape_cast %470 : vector<16xf32> to vector<16x1xf32>
    %cst_261 = arith.constant 6.400000e+01 : f32
    %472 = vector.broadcast %cst_261 : f32 to vector<16x1xf32>
    %473 = arith.divf %471, %472 : vector<16x1xf32>
    %474 = vector.broadcast %473 : vector<16x1xf32> to vector<16x64xf32>
    %475 = arith.subf %465, %474 : vector<16x64xf32>
    %476 = arith.mulf %475, %475 : vector<16x64xf32>
    %cst_262 = arith.constant dense<0.000000e+00> : vector<16xf32>
    %477 = vector.multi_reduction <add>, %476, %cst_262 [1] : vector<16x64xf32> to vector<16xf32>
    %478 = vector.shape_cast %477 : vector<16xf32> to vector<16x1xf32>
    %cst_263 = arith.constant 6.400000e+01 : f32
    %479 = vector.broadcast %cst_263 : f32 to vector<16x1xf32>
    %480 = arith.divf %478, %479 : vector<16x1xf32>
    %cst_264 = arith.constant 9.99999974E-6 : f32
    %481 = vector.broadcast %cst_264 : f32 to vector<16x1xf32>
    %482 = arith.addf %480, %481 : vector<16x1xf32>
    %483 = math.rsqrt %482 : vector<16x1xf32>
    %484 = vector.broadcast %483 : vector<16x1xf32> to vector<16x64xf32>
    %485 = arith.mulf %475, %484 : vector<16x64xf32>
    %486 = vector.broadcast %467 : vector<1x64xf32> to vector<16x64xf32>
    %487 = arith.mulf %485, %486 : vector<16x64xf32>
    %488 = vector.broadcast %469 : vector<1x64xf32> to vector<16x64xf32>
    %489 = arith.addf %487, %488 : vector<16x64xf32>
    %c32_265 = arith.constant 32 : index
    %c0_266 = arith.constant 0 : index
    %490 = vector.load %arg0[%c32_265, %c0_266] : memref<520x64xf32, #tpu.memory_space<vmem>>, vector<64x64xf32>
    %c256_267 = arith.constant 256 : index
    %c0_268 = arith.constant 0 : index
    %491 = vector.load %arg0[%c256_267, %c0_268] : memref<520x64xf32, #tpu.memory_space<vmem>>, vector<4x64xf32>
    %c128_269 = arith.constant 128 : index
    %c0_270 = arith.constant 0 : index
    %492 = vector.load %arg0[%c128_269, %c0_270] : memref<520x64xf32, #tpu.memory_space<vmem>>, vector<64x64xf32>
    %cst_271 = arith.constant dense<0.000000e+00> : vector<16x64xf32>
    %493 = tpu.matmul %489, %492, %cst_271 {dimension_numbers = #tpu.dot_dimension_numbers<[1], [0], [0], [1], [0, 0, 1, 1], [], []>} : vector<16x64xf32>, vector<64x64xf32>, vector<16x64xf32> -> vector<16x64xf32>
    %494 = vector.extract_strided_slice %491 {offsets = [0, 0], sizes = [1, 64], strides = [1, 1]} : vector<4x64xf32> to vector<1x64xf32>
    %495 = vector.broadcast %494 : vector<1x64xf32> to vector<16x64xf32>
    %496 = arith.addf %493, %495 : vector<16x64xf32>
    %cst_272 = arith.constant dense<0.000000e+00> : vector<16x64xf32>
    %497 = tpu.matmul %496, %490, %cst_272 {dimension_numbers = #tpu.dot_dimension_numbers<[1], [1], [0], [0], [0, 0, 1, 0], [], []>} : vector<16x64xf32>, vector<64x64xf32>, vector<16x64xf32> -> vector<16x64xf32>
    %cst_273 = arith.constant dense<0xFF800000> : vector<16xf32>
    %498 = vector.multi_reduction <maximumf>, %497, %cst_273 [1] : vector<16x64xf32> to vector<16xf32>
    %499 = vector.shape_cast %498 : vector<16xf32> to vector<16x1xf32>
    %500 = vector.broadcast %499 : vector<16x1xf32> to vector<16x64xf32>
    %501 = arith.subf %497, %500 : vector<16x64xf32>
    %502 = math.exp %501 : vector<16x64xf32>
    %cst_274 = arith.constant dense<0.000000e+00> : vector<16xf32>
    %503 = vector.multi_reduction <add>, %502, %cst_274 [1] : vector<16x64xf32> to vector<16xf32>
    %504 = vector.shape_cast %503 : vector<16xf32> to vector<16x1xf32>
    %505 = vector.broadcast %504 : vector<16x1xf32> to vector<16x64xf32>
    %506 = arith.divf %502, %505 : vector<16x64xf32>
    %c192_275 = arith.constant 192 : index
    %c0_276 = arith.constant 0 : index
    %507 = vector.load %arg0[%c192_275, %c0_276] : memref<520x64xf32, #tpu.memory_space<vmem>>, vector<64x64xf32>
    %cst_277 = arith.constant dense<0.000000e+00> : vector<16x64xf32>
    %508 = tpu.matmul %489, %507, %cst_277 {dimension_numbers = #tpu.dot_dimension_numbers<[1], [0], [0], [1], [0, 0, 1, 1], [], []>} : vector<16x64xf32>, vector<64x64xf32>, vector<16x64xf32> -> vector<16x64xf32>
    %509 = vector.extract_strided_slice %491 {offsets = [1, 0], sizes = [1, 64], strides = [1, 1]} : vector<4x64xf32> to vector<1x64xf32>
    %510 = vector.broadcast %509 : vector<1x64xf32> to vector<16x64xf32>
    %511 = arith.addf %508, %510 : vector<16x64xf32>
    %512 = vector.extract_strided_slice %491 {offsets = [2, 0], sizes = [1, 64], strides = [1, 1]} : vector<4x64xf32> to vector<1x64xf32>
    %513 = vector.broadcast %512 : vector<1x64xf32> to vector<16x64xf32>
    %514 = arith.mulf %489, %513 : vector<16x64xf32>
    %cst_278 = arith.constant dense<0.000000e+00> : vector<16xf32>
    %515 = vector.multi_reduction <add>, %514, %cst_278 [1] : vector<16x64xf32> to vector<16xf32>
    %516 = vector.shape_cast %515 : vector<16xf32> to vector<16x1xf32>
    %517 = vector.extract_strided_slice %491 {offsets = [3, 0], sizes = [1, 1], strides = [1, 1]} : vector<4x64xf32> to vector<1x1xf32>
    %518 = vector.broadcast %517 : vector<1x1xf32> to vector<16x1xf32>
    %519 = arith.addf %516, %518 : vector<16x1xf32>
    %520 = arith.negf %519 : vector<16x1xf32>
    %521 = math.exp %520 : vector<16x1xf32>
    %cst_279 = arith.constant 1.000000e+00 : f32
    %522 = vector.broadcast %cst_279 : f32 to vector<16x1xf32>
    %523 = arith.addf %522, %521 : vector<16x1xf32>
    %524 = arith.divf %522, %523 : vector<16x1xf32>
    %525 = vector.broadcast %524 : vector<16x1xf32> to vector<16x64xf32>
    %526 = arith.mulf %506, %525 : vector<16x64xf32>
    %cst_280 = arith.constant dense<0.000000e+00> : vector<16x16xf32>
    %527 = tpu.matmul %511, %3, %cst_280 {dimension_numbers = #tpu.dot_dimension_numbers<[1], [1], [0], [0], [0, 0, 1, 0], [], []>} : vector<16x64xf32>, vector<16x64xf32>, vector<16x16xf32> -> vector<16x16xf32>
    %c0_281 = arith.constant 0 : index
    %c0_282 = arith.constant 0 : index
    %528 = vector.load %arg4[%c0_281, %c0_282] : memref<16x16xf32, #tpu.memory_space<vmem>>, vector<16x16xf32>
    %529 = arith.addf %527, %528 : vector<16x16xf32>
    %cst_283 = arith.constant 1.000000e+00 : f32
    %530 = vector.broadcast %cst_283 : f32 to vector<16x1xf32>
    %531 = arith.subf %530, %524 : vector<16x1xf32>
    %cst_284 = arith.constant dense<0xFF800000> : vector<16xf32>
    %532 = vector.multi_reduction <maximumf>, %529, %cst_284 [1] : vector<16x16xf32> to vector<16xf32>
    %533 = vector.shape_cast %532 : vector<16xf32> to vector<16x1xf32>
    %534 = vector.broadcast %533 : vector<16x1xf32> to vector<16x16xf32>
    %535 = arith.subf %529, %534 : vector<16x16xf32>
    %536 = math.exp %535 : vector<16x16xf32>
    %cst_285 = arith.constant dense<0.000000e+00> : vector<16xf32>
    %537 = vector.multi_reduction <add>, %536, %cst_285 [1] : vector<16x16xf32> to vector<16xf32>
    %538 = vector.shape_cast %537 : vector<16xf32> to vector<16x1xf32>
    %539 = vector.broadcast %538 : vector<16x1xf32> to vector<16x16xf32>
    %540 = arith.divf %536, %539 : vector<16x16xf32>
    %541 = vector.broadcast %531 : vector<16x1xf32> to vector<16x16xf32>
    %542 = arith.mulf %541, %540 : vector<16x16xf32>
    %c96 = arith.constant 96 : index
    %c0_286 = arith.constant 0 : index
    %543 = vector.load %arg0[%c96, %c0_286] : memref<520x64xf32, #tpu.memory_space<vmem>>, vector<16x64xf32>
    %cst_287 = arith.constant dense<0.000000e+00> : vector<16x64xf32>
    %544 = tpu.matmul %542, %543, %cst_287 {dimension_numbers = #tpu.dot_dimension_numbers<[1], [0], [0], [1], [0, 0, 1, 1], [], []>} : vector<16x16xf32>, vector<16x64xf32>, vector<16x64xf32> -> vector<16x64xf32>
    %545 = arith.addf %526, %544 : vector<16x64xf32>
    %c112 = arith.constant 112 : index
    %c0_288 = arith.constant 0 : index
    %546 = vector.load %arg0[%c112, %c0_288] : memref<520x64xf32, #tpu.memory_space<vmem>>, vector<16x64xf32>
    %547 = arith.mulf %545, %546 : vector<16x64xf32>
    %cst_289 = arith.constant dense<0.000000e+00> : vector<16xf32>
    %548 = vector.multi_reduction <add>, %547, %cst_289 [1] : vector<16x64xf32> to vector<16xf32>
    %549 = vector.shape_cast %548 : vector<16xf32> to vector<16x1xf32>
    %550 = vector.extract_strided_slice %546 {offsets = [0, 0], sizes = [16, 1], strides = [1, 1]} : vector<16x64xf32> to vector<16x1xf32>
    %cst_290 = arith.constant 1.000000e+00 : f32
    %551 = vector.broadcast %cst_290 : f32 to vector<16x1xf32>
    %552 = arith.subf %551, %550 : vector<16x1xf32>
    %cst_291 = arith.constant 9.99999997E-7 : f32
    %553 = vector.broadcast %cst_291 : f32 to vector<16x1xf32>
    %554 = arith.addf %549, %553 : vector<16x1xf32>
    %555 = math.log %554 : vector<16x1xf32>
    %cst_292 = arith.constant 0.000000e+00 : f32
    %556 = vector.broadcast %cst_292 : f32 to vector<16x1xf32>
    %557 = arith.subf %556, %555 : vector<16x1xf32>
    %558 = arith.mulf %557, %552 : vector<16x1xf32>
    %cst_293 = arith.constant dense<0.000000e+00> : vector<1xf32>
    %559 = vector.multi_reduction <add>, %558, %cst_293 [0] : vector<16x1xf32> to vector<1xf32>
    %560 = vector.shape_cast %559 : vector<1xf32> to vector<1x1xf32>
    %cst_294 = arith.constant dense<0.000000e+00> : vector<1xf32>
    %561 = vector.multi_reduction <add>, %552, %cst_294 [0] : vector<16x1xf32> to vector<1xf32>
    %562 = vector.shape_cast %561 : vector<1xf32> to vector<1x1xf32>
    %cst_295 = arith.constant 1.000000e+00 : f32
    %563 = vector.broadcast %cst_295 : f32 to vector<1x1xf32>
    %564 = arith.maximumf %562, %563 : vector<1x1xf32>
    %565 = arith.divf %560, %564 : vector<1x1xf32>
    %566 = vector.shape_cast %565 : vector<1x1xf32> to vector<1x1xf32>
    %567 = vector.broadcast %566 : vector<1x1xf32> to vector<1x128xf32>
    %c0_296 = arith.constant 0 : index
    %c0_297 = arith.constant 0 : index
    %568 = vector.load %arg9[%c0_296, %c0_297] : memref<1x128xf32, #tpu.memory_space<vmem>>, vector<1x128xf32>
    tpu.vector_store %arg9[%c0_296, %c0_297], %567 {strides = array<i32>} : memref<1x128xf32, #tpu.memory_space<vmem>>, vector<1x128xf32>,
    return
  }
}

</mosaic_0001>

<llo_original>
// kernel: eq.1
$region0: #{eq.1}
  %s0 = inlined_call_operand.vmem [shape: s32[2,8], index: 0, kind: input, shape index: {}]
  %s1 = inlined_call_operand.vmem [shape: s32[16], index: 1, kind: output, shape index: {}]
  $region1: #{eq.1} parent=0
    #allocation0 [shape = 'u8[4096]{0}', space=vmem, size = 0x1000, scoped, tag = 'scoped mem for output reshape']
    #allocation1 [shape = 'u8[4096]{0}', space=vmem, size = 0x1000, scoped, tag = 'scoped mem for input reshape']
    %s3 = sshllo.u32 0, 2
    %v4 = vld [vmem:[%s0] sm:%s3]
    %5 = vst [vmem:[#allocation1] sm:%s3] %v4
    %v6 = vld [vmem:[#allocation1] sm:$0x1]
    %vm7 = vcmask 64512
    %8 = vst.msk [vmem:[#allocation0] sm:$0x1] %vm7, %v6
    %s9 = scalar_lea.vmem [#allocation1], 1
    %v10 = vld [vmem:[%s9] sm:$0x1]
    %11 = vrot.lane.b32.xlu0 %v10, 8
    %v12 = vpop.permute.xlu0 %11
    %vm13 = vcmask 130112
    %14 = vst.msk [vmem:[#allocation0] sm:$0x1] %vm13, %v12
    %s16 = sshllo.u32 0, 1
    %v18 = vld [vmem:[#allocation0] sm:%s16]
    %s19 = sshllo.u32 0, 1
    %20 = vst [vmem:[%s1] sm:%s19] %v18

// kernel: tile.33
$region0: #{tile.33}
  %s0 = inlined_call_operand.vmem [shape: f32[2,16,1,1,8], index: 0, kind: input, shape index: {}]
  %s1 = inlined_call_operand.vmem [shape: f32[2,128], index: 1, kind: output, shape index: {}]
  $region1: #{tile.33} parent=0
    #allocation0 [shape = 'u8[4096]{0}', space=vmem, size = 0x1000, scoped, tag = 'scoped mem for output reshape']
    %s2 = smov 3
    %v3 = vld [vmem:[%s0] ss:$16 sm:%s2]
    %vm4 = vcmask 64512
    %5 = vst.msk [vmem:[#allocation0] sm:$0x3] %vm4, %v3
    %s6 = scalar_lea.vmem %s0, 15
    %s7 = smov 3
    %v8 = vld [vmem:[%s6] ss:$16 sm:%s7]
    %9 = vrot.lane.b32.xlu0 %v8, 120
    %v10 = vpop.permute.xlu0 %9
    %vm11 = vcmask 1048512
    %12 = vst.msk [vmem:[#allocation0] sm:$0x3] %vm11, %v10
    %s13 = scalar_lea.vmem %s0, 14
    %s14 = smov 3
    %v15 = vld [vmem:[%s13] ss:$16 sm:%s14]
    %16 = vrot.lane.b32.xlu0 %v15, 112
    %v17 = vpop.permute.xlu0 %16
    %vm18 = vcmask 982912
    %19 = vst.msk [vmem:[#allocation0] sm:$0x3] %vm18, %v17
    %s20 = scalar_lea.vmem %s0, 13
    %s21 = smov 3
    %v22 = vld [vmem:[%s20] ss:$16 sm:%s21]
    %23 = vrot.lane.b32.xlu0 %v22, 104
    %v24 = vpop.permute.xlu0 %23
    %vm25 = vcmask 917312
    %26 = vst.msk [vmem:[#allocation0] sm:$0x3] %vm25, %v24
    %s27 = scalar_lea.vmem %s0, 12
    %s28 = smov 3
    %v29 = vld [vmem:[%s27] ss:$16 sm:%s28]
    %30 = vrot.lane.b32.xlu0 %v29, 96
    %v31 = vpop.permute.xlu0 %30
    %vm32 = vcmask 851712
    %33 = vst.msk [vmem:[#allocation0] sm:$0x3] %vm32, %v31
    %s34 = scalar_lea.vmem %s0, 11
    %s35 = smov 3
    %v36 = vld [vmem:[%s34] ss:$16 sm:%s35]
    %37 = vrot.lane.b32.xlu0 %v36, 88
    %v38 = vpop.permute.xlu0 %37
    %vm39 = vcmask 786112
    %40 = vst.msk [vmem:[#allocation0] sm:$0x3] %vm39, %v38
    %s41 = scalar_lea.vmem %s0, 10
    %s42 = smov 3
    %v43 = vld [vmem:[%s41] ss:$16 sm:%s42]
    %44 = vrot.lane.b32.xlu0 %v43, 80
    %v45 = vpop.permute.xlu0 %44
    %vm46 = vcmask 720512
    %47 = vst.msk [vmem:[#allocation0] sm:$0x3] %vm46, %v45
    %s48 = scalar_lea.vmem %s0, 9
    %s49 = smov 3
    %v50 = vld [vmem:[%s48] ss:$16 sm:%s49]
    %51 = vrot.lane.b32.xlu0 %v50, 72
    %v52 = vpop.permute.xlu0 %51
    %vm53 = vcmask 654912
    %54 = vst.msk [vmem:[#allocation0] sm:$0x3] %vm53, %v52
    %s55 = scalar_lea.vmem %s0, 8
    %s56 = smov 3
    %v57 = vld [vmem:[%s55] ss:$16 sm:%s56]
    %58 = vrot.lane.b32.xlu0 %v57, 64
    %v59 = vpop.permute.xlu0 %58
    %vm60 = vcmask 589312
    %61 = vst.msk [vmem:[#allocation0] sm:$0x3] %vm60, %v59
    %s62 = scalar_lea.vmem %s0, 7
    %s63 = smov 3
    %v64 = vld [vmem:[%s62] ss:$16 sm:%s63]
    %65 = vrot.lane.b32.xlu0 %v64, 56
    %v66 = vpop.permute.xlu0 %65
    %vm67 = vcmask 523712
    %68 = vst.msk [vmem:[#allocation0] sm:$0x3] %vm67, %v66
    %s69 = scalar_lea.vmem %s0, 6
    %s70 = smov 3
    %v71 = vld [vmem:[%s69] ss:$16 sm:%s70]
    %72 = vrot.lane.b32.xlu0 %v71, 48
    %v73 = vpop.permute.xlu0 %72
    %vm74 = vcmask 458112
    %75 = vst.msk [vmem:[#allocation0] sm:$0x3] %vm74, %v73
    %s76 = scalar_lea.vmem %s0, 5
    %s77 = smov 3
    %v78 = vld [vmem:[%s76] ss:$16 sm:%s77]
    %79 = vrot.lane.b32.xlu0 %v78, 40
    %v80 = vpop.permute.xlu0 %79
    %vm81 = vcmask 392512
    %82 = vst.msk [vmem:[#allocation0] sm:$0x3] %vm81, %v80
    %s83 = scalar_lea.vmem %s0, 4
    %s84 = smov 3
    %v85 = vld [vmem:[%s83] ss:$16 sm:%s84]
    %86 = vrot.lane.b32.xlu0 %v85, 32
    %v87 = vpop.permute.xlu0 %86
    %vm88 = vcmask 326912
    %89 = vst.msk [vmem:[#allocation0] sm:$0x3] %vm88, %v87
    %s90 = scalar_lea.vmem %s0, 3
    %s91 = smov 3
    %v92 = vld [vmem:[%s90] ss:$16 sm:%s91]
    %93 = vrot.lane.b32.xlu0 %v92, 24
    %v94 = vpop.permute.xlu0 %93
    %vm95 = vcmask 261312
    %96 = vst.msk [vmem:[#allocation0] sm:$0x3] %vm95, %v94
    %s97 = scalar_lea.vmem %s0, 2
    %s98 = smov 3
    %v99 = vld [vmem:[%s97] ss:$16 sm:%s98]
    %100 = vrot.lane.b32.xlu0 %v99, 16
    %v101 = vpop.permute.xlu0 %100
    %vm102 = vcmask 195712
    %103 = vst.msk [vmem:[#allocation0] sm:$0x3] %vm102, %v101
    %s104 = scalar_lea.vmem %s0, 1
    %s105 = smov 3
    %v106 = vld [vmem:[%s104] ss:$16 sm:%s105]
    %107 = vrot.lane.b32.xlu0 %v106, 8
    %v108 = vpop.permute.xlu0 %107
    %vm109 = vcmask 130112
    %110 = vst.msk [vmem:[#allocation0] sm:$0x3] %vm109, %v108
    %s112 = sshllo.u32 0, 2
    %v114 = vld [vmem:[#allocation0] sm:%s112]
    %s115 = sshllo.u32 0, 2
    %116 = vst [vmem:[%s1] sm:%s115] %v114

// kernel: xl_decoder_forward.1
$region0: #{xl_decoder_forward.1}
  #allocation0 [shape = 'u32[]', space=smem, size = 0x4, offset = 0x4, fixed_abs, tag = 'smem constant byte address 0x4 - core index']
  #allocation1 [shape = 'u32[144,128]{1,0:T(1,128)}', space=vmem, size = 0x12000, scoped, tag = 'internal scratch']
  %s0 = inlined_call_operand.vmem [shape: f32[520,64], index: 0, kind: input, shape index: {}]
  %s1 = inlined_call_operand.vmem [shape: f32[96,256], index: 1, kind: input, shape index: {}]
  %s2 = inlined_call_operand.vmem [shape: bf16[272,256], index: 2, kind: input, shape index: {}]
  %s3 = inlined_call_operand.vmem [shape: bf16[256,16], index: 3, kind: input, shape index: {}]
  %s4 = inlined_call_operand.vmem [shape: f32[16,16], index: 4, kind: input, shape index: {}]
  %s5 = inlined_call_operand.vmem [shape: bf16[2,768,64], index: 5, kind: input, shape index: {}]
  %s6 = inlined_call_operand.vmem [shape: bf16[2,128,256], index: 6, kind: input, shape index: {}]
  %s7 = inlined_call_operand.vmem [shape: f32[2,9,64], index: 7, kind: input, shape index: {}]
  %s8 = inlined_call_operand.vmem [shape: f32[2,1,256], index: 8, kind: input, shape index: {}]
  %s9 = inlined_call_operand.vmem [shape: f32[1,128], index: 9, kind: output, shape index: {}]
  %s10 = sld [smem:[#allocation0]]
  $region46: #{xl_decoder_forward.1} parent=0
    _
  %s12 = ssub.s32 1, %s10
  %s13 = scalar_select 0, %s12, %s10
  // Predicated region
  $region2: #{xl_decoder_forward.1} parent=0 // pred_check
    _
  $region3: #{xl_decoder_forward.1} parent=0 // pred_check_branch
    %15 = sbr.rel (0) target = $region5
  $region4: #{xl_decoder_forward.1} parent=0 // pred_region
    _
  $region5: #{xl_decoder_forward.1} parent=0 // pred_fallthru
    _
  // Predicated region
  $region6: #{xl_decoder_forward.1} parent=0 // pred_check
    _
  $region7: #{xl_decoder_forward.1} parent=0 // pred_check_branch
    %17 = sbr.rel (0) target = $region9
  $region8: #{xl_decoder_forward.1} parent=0 // pred_region
    _
  $region9: #{xl_decoder_forward.1} parent=0 // pred_fallthru
    _
  // Predicated region
  $region10: #{xl_decoder_forward.1} parent=0 // pred_check
    _
  $region11: #{xl_decoder_forward.1} parent=0 // pred_check_branch
    %19 = sbr.rel (0) target = $region13
  $region12: #{xl_decoder_forward.1} parent=0 // pred_region
    _
  $region13: #{xl_decoder_forward.1} parent=0 // pred_fallthru
    _
  // Predicated region
  $region14: #{xl_decoder_forward.1} parent=0 // pred_check
    _
  $region15: #{xl_decoder_forward.1} parent=0 // pred_check_branch
    %21 = sbr.rel (0) target = $region17
  $region16: #{xl_decoder_forward.1} parent=0 // pred_region
    _
  $region17: #{xl_decoder_forward.1} parent=0 // pred_fallthru
    _
  // Predicated region
  $region18: #{xl_decoder_forward.1} parent=0 // pred_check
    _
  $region19: #{xl_decoder_forward.1} parent=0 // pred_check_branch
    %23 = sbr.rel (0) target = $region21
  $region20: #{xl_decoder_forward.1} parent=0 // pred_region
    _
  $region21: #{xl_decoder_forward.1} parent=0 // pred_fallthru
    _
  // Predicated region
  $region22: #{xl_decoder_forward.1} parent=0 // pred_check
    _
  $region23: #{xl_decoder_forward.1} parent=0 // pred_check_branch
    %25 = sbr.rel (0) target = $region25
  $region24: #{xl_decoder_forward.1} parent=0 // pred_region
    _
  $region25: #{xl_decoder_forward.1} parent=0 // pred_fallthru
    _
  // Predicated region
  $region26: #{xl_decoder_forward.1} parent=0 // pred_check
    _
  $region27: #{xl_decoder_forward.1} parent=0 // pred_check_branch
    %27 = sbr.rel (0) target = $region29
  $region28: #{xl_decoder_forward.1} parent=0 // pred_region
    _
  $region29: #{xl_decoder_forward.1} parent=0 // pred_fallthru
    _
  // Predicated region
  $region30: #{xl_decoder_forward.1} parent=0 // pred_check
    _
  $region31: #{xl_decoder_forward.1} parent=0 // pred_check_branch
    %29 = sbr.rel (0) target = $region33
  $region32: #{xl_decoder_forward.1} parent=0 // pred_region
    _
  $region33: #{xl_decoder_forward.1} parent=0 // pred_fallthru
    _
  // Predicated region
  $region34: #{xl_decoder_forward.1} parent=0 // pred_check
    _
  $region35: #{xl_decoder_forward.1} parent=0 // pred_check_branch
    %31 = sbr.rel (0) target = $region37
  $region36: #{xl_decoder_forward.1} parent=0 // pred_region
    _
  $region37: #{xl_decoder_forward.1} parent=0 // pred_fallthru
    _
  %v33 = vld [vmem:[%s0] sm:$0xff]
  %v34 = vld [vmem:[%s0 + $0x8] sm:$0xff]
  %v35 = vld [vmem:[%s0 + $0x20] sm:$0xff]
  %v36 = vld [vmem:[%s0 + $0x28] sm:$0xff]
  %v37 = vld [vmem:[%s0 + $0x30] sm:$0xff]
  %v38 = vld [vmem:[%s0 + $0x38] sm:$0xff]
  %v39 = vld [vmem:[%s0 + $0x40] sm:$0xff]
  %v40 = vld [vmem:[%s0 + $0x48] sm:$0xff]
  %v41 = vld [vmem:[%s0 + $0x50] sm:$0xff]
  %v42 = vld [vmem:[%s0 + $0x58] sm:$0xff]
  %vm43 = vcmask 523264
  %v45 = vsel %vm43, %v33, 0
  %v48 = vsel %vm43, %v34, 0
  %50 = vmatprep.subr.mxu0 0.0
  %51 = vmatpush1.msra.mxu0 %v35
  %52 = vmatprep.subr.mxu0 0.0
  %53 = vmatpush1.msra.mxu0 %v36
  %54 = vmatprep.subr.mxu0 0.0
  %55 = vmatpush1.msra.mxu0 %v37
  %56 = vmatprep.subr.mxu0 0.0
  %57 = vmatpush1.msra.mxu0 %v38
  %58 = vmatprep.subr.mxu0 0.0
  %59 = vmatpush1.msra.mxu0 %v39
  %60 = vmatprep.subr.mxu0 0.0
  %61 = vmatpush1.msra.mxu0 %v40
  %62 = vmatprep.subr.mxu0 0.0
  %63 = vmatpush1.msra.mxu0 %v41
  %64 = vmatprep.subr.mxu0 0.0
  %65 = vmatpush1.msra.mxu0 %v42
  %66 = vmatprep.subr.mxu0 0.0
  %67 = vmatpush1.msra.mxu0 0.0
  %68 = vmatprep.subr.mxu0 0.0
  %69 = vmatpush1.msra.mxu0 0.0
  %70 = vmatprep.subr.mxu0 0.0
  %71 = vmatpush1.msra.mxu0 0.0
  %72 = vmatprep.subr.mxu0 0.0
  %73 = vmatpush1.msra.mxu0 0.0
  %74 = vmatprep.subr.mxu0 0.0
  %75 = vmatpush1.msra.mxu0 0.0
  %76 = vmatprep.subr.mxu0 0.0
  %77 = vmatpush1.msra.mxu0 0.0
  %78 = vmatprep.subr.mxu0 0.0
  %79 = vmatpush1.msra.mxu0 0.0
  %80 = vmatprep.subr.mxu0 0.0
  %81 = vmatpush1.msra.mxu0 0.0
  %82 = vmatprep.subr.mxu0 0.0
  %83 = vmatpush1.msra.mxu0 0.0
  %84 = vmatprep.subr.mxu0 0.0
  %85 = vmatpush1.msra.mxu0 0.0
  %86 = vmatprep.subr.mxu0 0.0
  %87 = vmatpush1.msra.mxu0 0.0
  %88 = vmatprep.subr.mxu0 0.0
  %89 = vmatpush1.msra.mxu0 0.0
  %90 = vmatprep.subr.mxu0 0.0
  %91 = vmatpush1.msra.mxu0 0.0
  %92 = vmatprep.subr.mxu0 0.0
  %93 = vmatpush1.msra.mxu0 0.0
  %94 = vmatprep.subr.mxu0 0.0
  %95 = vmatpush1.msra.mxu0 0.0
  %96 = vmatprep.subr.mxu0 0.0
  %97 = vmatpush1.msra.mxu0 0.0
  %98 = vmatprep.subr.mxu0 0.0
  %99 = vmatpush1.msra.mxu0 0.0
  %100 = vmatprep.subr.mxu0 0.0
  %101 = vmatpush1.msra.mxu0 0.0
  %102 = vmatprep.subr.mxu0 0.0
  %103 = vmatpush1.msra.mxu0 0.0
  %104 = vmatprep.subr.mxu0 0.0
  %105 = vmatpush1.msra.mxu0 0.0
  %106 = vmatprep.subr.mxu0 0.0
  %107 = vmatpush1.msra.mxu0 0.0
  %108 = vmatprep.subr.mxu0 0.0
  %109 = vmatpush1.msra.mxu0 0.0
  %110 = vmatprep.subr.mxu0 0.0
  %111 = vmatpush1.msra.mxu0 0.0
  %112 = vmatprep.subr.mxu0 0.0
  %113 = vmatpush1.msra.mxu0 0.0
  %114 = vmatprep.mubr.f32.mxu0 0.0
  %115 = vmatmul.mubr.f32.gmra.mrb[0].mxu0 %v45
  %v116 = vpop.f32.mrb[0].mxu0
  %v117 = vadd.f32 0.0, %v116
  %v118 = vpop.f32.mrb[0].mxu0
  %119 = vmatprep.mubr.f32.mxu0 0.0
  %120 = vmatmul.mubr.f32.gmra.mrb[0].mxu0 %v48
  %v121 = vpop.f32.mrb[0].mxu0
  %v122 = vadd.f32 0.0, %v121
  %v123 = vpop.f32.mrb[0].mxu0
  %124 = vdwg.mxu0
  %v125 = vld [vmem:[%s0 + $0x10] sm:$0xff]
  %v126 = vld [vmem:[%s0 + $0x18] sm:$0xff]
  %v127 = vld [vmem:[%s2] sm:$0xff]
  %v128 = vld [vmem:[%s2 + $0x8] sm:$0xff]
  %v129 = vld [vmem:[%s1] sm:$0xff]
  %v130 = vld [vmem:[%s1 + $0x8] sm:$0xff]
  %v131 = vld [vmem:[%s1 + $0x10] sm:$0xff]
  %v132 = vld [vmem:[%s1 + $0x18] sm:$0xff]
  %v133 = vld [vmem:[%s1 + $0x20] sm:$0xff]
  %v134 = vld [vmem:[%s1 + $0x28] sm:$0xff]
  %v135 = vld [vmem:[%s1 + $0x30] sm:$0xff]
  %v136 = vld [vmem:[%s1 + $0x38] sm:$0xff]
  %v137 = vld [vmem:[%s1 + $0x40] sm:$0xff]
  %v138 = vld [vmem:[%s1 + $0x48] sm:$0xff]
  %v139 = vld [vmem:[%s1 + $0x50] sm:$0xff]
  %v140 = vld [vmem:[%s1 + $0x58] sm:$0xff]
  %v141 = vld [vmem:[%s1 + $0x60] sm:$0xff]
  %v142 = vld [vmem:[%s1 + $0x68] sm:$0xff]
  %v143 = vld [vmem:[%s1 + $0x70] sm:$0xff]
  %v144 = vld [vmem:[%s1 + $0x78] sm:$0xff]
  %v145 = vld [vmem:[%s0 + $0x108] sm:$0xff]
  %v146 = vld [vmem:[%s0 + $0x110] sm:$0xff]
  %v147 = vld [vmem:[%s0 + $0x118] sm:$0xff]
  %v148 = vld [vmem:[%s0 + $0x120] sm:$0xff]
  %v149 = vld [vmem:[%s0 + $0x128] sm:$0xff]
  %v150 = vld [vmem:[%s0 + $0x130] sm:$0xff]
  %v151 = vld [vmem:[%s0 + $0x138] sm:$0xff]
  %v152 = vld [vmem:[%s0 + $0x140] sm:$0xff]
  %v153 = vld [vmem:[%s0 + $0x148] sm:$0xff]
  %v154 = vld [vmem:[%s0 + $0x150] sm:$0xff]
  %v155 = vld [vmem:[%s0 + $0x158] sm:$0xff]
  %v156 = vld [vmem:[%s0 + $0x160] sm:$0xff]
  %v157 = vld [vmem:[%s0 + $0x168] sm:$0xff]
  %v158 = vld [vmem:[%s0 + $0x170] sm:$0xff]
  %v159 = vld [vmem:[%s0 + $0x178] sm:$0xff]
  %v160 = vld [vmem:[%s0 + $0x180] sm:$0xff]
  %v161 = vld [vmem:[%s0 + $0x188] sm:$0xff]
  %v162 = vld [vmem:[%s0 + $0x190] sm:$0xff]
  %v163 = vld [vmem:[%s0 + $0x198] sm:$0xff]
  %v164 = vld [vmem:[%s0 + $0x1a0] sm:$0xff]
  %v165 = vld [vmem:[%s0 + $0x1a8] sm:$0xff]
  %v166 = vld [vmem:[%s0 + $0x1b0] sm:$0xff]
  %v167 = vld [vmem:[%s0 + $0x1b8] sm:$0xff]
  %v168 = vld [vmem:[%s0 + $0x1c0] sm:$0xff]
  %v169 = vld [vmem:[%s0 + $0x1c8] sm:$0xff]
  %v170 = vld [vmem:[%s0 + $0x1d0] sm:$0xff]
  %v171 = vld [vmem:[%s0 + $0x1d8] sm:$0xff]
  %v172 = vld [vmem:[%s0 + $0x1e0] sm:$0xff]
  %v173 = vld [vmem:[%s0 + $0x1e8] sm:$0xff]
  %v174 = vld [vmem:[%s0 + $0x1f0] sm:$0xff]
  %v175 = vld [vmem:[%s0 + $0x1f8] sm:$0xff]
  %v176 = vld [vmem:[%s0 + $0x200] sm:$0xff]
  %v177 = vld [vmem:[%s7] sm:$0x1]
  %v178 = vld [vmem:[%s7 + $0x1] sm:$0x1]
  %v179 = vld [vmem:[%s5] sm:$0xf]
  %v180 = vld [vmem:[%s5 + $0x4] sm:$0xf]
  %v181 = vld [vmem:[%s5 + $0x8] sm:$0xf]
  %v182 = vld [vmem:[%s5 + $0xc] sm:$0xf]
  %v183 = vld [vmem:[%s5 + $0x10] sm:$0xf]
  %v184 = vld [vmem:[%s5 + $0x14] sm:$0xf]
  %v185 = vld [vmem:[%s5 + $0x18] sm:$0xf]
  %v186 = vld [vmem:[%s5 + $0x1c] sm:$0xf]
  %v187 = vpack.c.bf16 %v122, %v117
  %v196 = vunpack.c.l.b16 %v179
  %v197 = vunpack.c.l.b16 %v180
  %v198 = vunpack.c.l.b16 %v181
  %v199 = vunpack.c.l.b16 %v182
  %v200 = vunpack.c.l.b16 %v183
  %v201 = vunpack.c.l.b16 %v184
  %v202 = vunpack.c.l.b16 %v185
  %v203 = vunpack.c.l.b16 %v186
  %v204 = vpack.c.b16 %v197, %v196
  %v205 = vpack.c.b16 %v199, %v198
  %v206 = vpack.c.b16 %v201, %v200
  %v207 = vpack.c.b16 %v203, %v202
  %v213 = vsel %vm43, %v187, 0
  %215 = vmatprep.subr.bf16.mxu0 0
  %216 = vmatpush1.bf16.msra.mxu0 %v204
  %217 = vmatprep.subr.bf16.mxu0 0
  %218 = vmatpush1.bf16.msra.mxu0 %v205
  %219 = vmatprep.subr.bf16.mxu0 0
  %220 = vmatpush1.bf16.msra.mxu0 %v206
  %221 = vmatprep.subr.bf16.mxu0 0
  %222 = vmatpush1.bf16.msra.mxu0 %v207
  %223 = vmatprep.subr.bf16.mxu0 0
  %224 = vmatpush1.bf16.msra.mxu0 0
  %225 = vmatprep.subr.bf16.mxu0 0
  %226 = vmatpush1.bf16.msra.mxu0 0
  %227 = vmatprep.subr.bf16.mxu0 0
  %228 = vmatpush1.bf16.msra.mxu0 0
  %229 = vmatprep.subr.bf16.mxu0 0
  %230 = vmatpush1.bf16.msra.mxu0 0
  %231 = vmatprep.subr.bf16.mxu0 0
  %232 = vmatpush1.bf16.msra.mxu0 0
  %233 = vmatprep.subr.bf16.mxu0 0
  %234 = vmatpush1.bf16.msra.mxu0 0
  %235 = vmatprep.subr.bf16.mxu0 0
  %236 = vmatpush1.bf16.msra.mxu0 0
  %237 = vmatprep.subr.bf16.mxu0 0
  %238 = vmatpush1.bf16.msra.mxu0 0
  %239 = vmatprep.subr.bf16.mxu0 0
  %240 = vmatpush1.bf16.msra.mxu0 0
  %241 = vmatprep.subr.bf16.mxu0 0
  %242 = vmatpush1.bf16.msra.mxu0 0
  %243 = vmatprep.subr.bf16.mxu0 0
  %244 = vmatpush1.bf16.msra.mxu0 0
  %245 = vmatprep.subr.bf16.mxu0 0
  %246 = vmatpush1.bf16.msra.mxu0 0
  %247 = vmatprep.mubr.bf16.mxu0 0
  %248 = vmatmul.mubr.bf16.gmra.mrb[0].mxu0 %v213
  %v249 = vpop.f32.mrb[0].mxu0
  %v250 = vadd.f32 0.0, %v249
  %v251 = vpop.f32.mrb[0].mxu0
  %v252 = vpop.f32.mrb[0].mxu0
  %v253 = vadd.f32 0.0, %v252
  %v254 = vpop.f32.mrb[0].mxu0
  %255 = vdwg.mxu0
  %v256 = vld [vmem:[%s5 + $0x40] sm:$0xf]
  %v257 = vld [vmem:[%s5 + $0x44] sm:$0xf]
  %v258 = vld [vmem:[%s5 + $0x48] sm:$0xf]
  %v259 = vld [vmem:[%s5 + $0x4c] sm:$0xf]
  %v260 = vld [vmem:[%s5 + $0x50] sm:$0xf]
  %v261 = vld [vmem:[%s5 + $0x54] sm:$0xf]
  %v262 = vld [vmem:[%s5 + $0x58] sm:$0xf]
  %v263 = vld [vmem:[%s5 + $0x5c] sm:$0xf]
  %v272 = vunpack.c.l.b16 %v256
  %v273 = vunpack.c.l.b16 %v257
  %v274 = vunpack.c.l.b16 %v258
  %v275 = vunpack.c.l.b16 %v259
  %v276 = vunpack.c.l.b16 %v260
  %v277 = vunpack.c.l.b16 %v261
  %v278 = vunpack.c.l.b16 %v262
  %v279 = vunpack.c.l.b16 %v263
  %v280 = vpack.c.b16 %v273, %v272
  %v281 = vpack.c.b16 %v275, %v274
  %v282 = vpack.c.b16 %v277, %v276
  %v283 = vpack.c.b16 %v279, %v278
  %288 = vmatprep.subr.bf16.mxu0 0
  %289 = vmatpush1.bf16.msra.mxu0 %v280
  %290 = vmatprep.subr.bf16.mxu0 0
  %291 = vmatpush1.bf16.msra.mxu0 %v281
  %292 = vmatprep.subr.bf16.mxu0 0
  %293 = vmatpush1.bf16.msra.mxu0 %v282
  %294 = vmatprep.subr.bf16.mxu0 0
  %295 = vmatpush1.bf16.msra.mxu0 %v283
  %296 = vmatprep.subr.bf16.mxu0 0
  %297 = vmatpush1.bf16.msra.mxu0 0
  %298 = vmatprep.subr.bf16.mxu0 0
  %299 = vmatpush1.bf16.msra.mxu0 0
  %300 = vmatprep.subr.bf16.mxu0 0
  %301 = vmatpush1.bf16.msra.mxu0 0
  %302 = vmatprep.subr.bf16.mxu0 0
  %303 = vmatpush1.bf16.msra.mxu0 0
  %304 = vmatprep.subr.bf16.mxu0 0
  %305 = vmatpush1.bf16.msra.mxu0 0
  %306 = vmatprep.subr.bf16.mxu0 0
  %307 = vmatpush1.bf16.msra.mxu0 0
  %308 = vmatprep.subr.bf16.mxu0 0
  %309 = vmatpush1.bf16.msra.mxu0 0
  %310 = vmatprep.subr.bf16.mxu0 0
  %311 = vmatpush1.bf16.msra.mxu0 0
  %312 = vmatprep.subr.bf16.mxu0 0
  %313 = vmatpush1.bf16.msra.mxu0 0
  %314 = vmatprep.subr.bf16.mxu0 0
  %315 = vmatpush1.bf16.msra.mxu0 0
  %316 = vmatprep.subr.bf16.mxu0 0
  %317 = vmatpush1.bf16.msra.mxu0 0
  %318 = vmatprep.subr.bf16.mxu0 0
  %319 = vmatpush1.bf16.msra.mxu0 0
  %320 = vmatprep.mubr.bf16.mxu0 0
  %321 = vmatmul.mubr.bf16.gmra.mrb[0].mxu0 %v213
  %v322 = vpop.f32.mrb[0].mxu0
  %v323 = vadd.f32 0.0, %v322
  %v324 = vpop.f32.mrb[0].mxu0
  %v325 = vpop.f32.mrb[0].mxu0
  %v326 = vadd.f32 0.0, %v325
  %v327 = vpop.f32.mrb[0].mxu0
  %328 = vdwg.mxu0
  %v329 = vld [vmem:[%s5 + $0x20] sm:$0xf]
  %v330 = vld [vmem:[%s5 + $0x24] sm:$0xf]
  %v331 = vld [vmem:[%s5 + $0x28] sm:$0xf]
  %v332 = vld [vmem:[%s5 + $0x2c] sm:$0xf]
  %v333 = vld [vmem:[%s5 + $0x30] sm:$0xf]
  %v334 = vld [vmem:[%s5 + $0x34] sm:$0xf]
  %v335 = vld [vmem:[%s5 + $0x38] sm:$0xf]
  %v336 = vld [vmem:[%s5 + $0x3c] sm:$0xf]
  %v345 = vunpack.c.l.b16 %v329
  %v346 = vunpack.c.l.b16 %v330
  %v347 = vunpack.c.l.b16 %v331
  %v348 = vunpack.c.l.b16 %v332
  %v349 = vunpack.c.l.b16 %v333
  %v350 = vunpack.c.l.b16 %v334
  %v351 = vunpack.c.l.b16 %v335
  %v352 = vunpack.c.l.b16 %v336
  %v353 = vpack.c.b16 %v346, %v345
  %v354 = vpack.c.b16 %v348, %v347
  %v355 = vpack.c.b16 %v350, %v349
  %v356 = vpack.c.b16 %v352, %v351
  %361 = vxpose.xlu0.c.b16.start [1/8] %v353, 128
  %362 = vxpose.xlu0.c.b16.cont [2/8] %v354, 128
  %363 = vxpose.xlu0.c.b16.cont [3/8] %v355, 128
  %364 = vxpose.xlu0.c.b16.cont [4/8] %v356, 128
  %365 = vxpose.xlu0.c.b16.cont [5/8] 0, 128
  %366 = vxpose.xlu0.c.b16.cont [6/8] 0, 128
  %367 = vxpose.xlu0.c.b16.cont [7/8] 0, 128
  %368 = vxpose.xlu0.c.b16.end [8/8] 0, 128
  %v369 = vpop.trf.xlu0
  %v370 = vpop.trf.xlu0
  %v371 = vpop.trf.xlu0
  %v372 = vpop.trf.xlu0
  %v373 = vpop.trf.xlu0
  %v374 = vpop.trf.xlu0
  %v375 = vpop.trf.xlu0
  %v376 = vpop.trf.xlu0
  %v378 = vsel %vm43, %v369, 0
  %v381 = vsel %vm43, %v370, 0
  %v384 = vsel %vm43, %v371, 0
  %v387 = vsel %vm43, %v372, 0
  %389 = vmatprep.subr.bf16.mxu0 0
  %390 = vmatpush1.bf16.xpose.msra.mxu0 %v213
  %391 = vmatprep.subr.bf16.mxu0 0
  %392 = vmatpush1.bf16.xpose.msra.mxu0 0
  %393 = vmatprep.subr.bf16.mxu0 0
  %394 = vmatpush1.bf16.xpose.msra.mxu0 0
  %395 = vmatprep.subr.bf16.mxu0 0
  %396 = vmatpush1.bf16.xpose.msra.mxu0 0
  %397 = vmatprep.subr.bf16.mxu0 0
  %398 = vmatpush1.bf16.xpose.msra.mxu0 0
  %399 = vmatprep.subr.bf16.mxu0 0
  %400 = vmatpush1.bf16.xpose.msra.mxu0 0
  %401 = vmatprep.subr.bf16.mxu0 0
  %402 = vmatpush1.bf16.xpose.msra.mxu0 0
  %403 = vmatprep.subr.bf16.mxu0 0
  %404 = vmatpush1.bf16.xpose.msra.mxu0 0
  %405 = vmatprep.subr.bf16.mxu0 0
  %406 = vmatpush1.bf16.xpose.msra.mxu0 0
  %407 = vmatprep.subr.bf16.mxu0 0
  %408 = vmatpush1.bf16.xpose.msra.mxu0 0
  %409 = vmatprep.subr.bf16.mxu0 0
  %410 = vmatpush1.bf16.xpose.msra.mxu0 0
  %411 = vmatprep.subr.bf16.mxu0 0
  %412 = vmatpush1.bf16.xpose.msra.mxu0 0
  %413 = vmatprep.subr.bf16.mxu0 0
  %414 = vmatpush1.bf16.xpose.msra.mxu0 0
  %415 = vmatprep.subr.bf16.mxu0 0
  %416 = vmatpush1.bf16.xpose.msra.mxu0 0
  %417 = vmatprep.subr.bf16.mxu0 0
  %418 = vmatpush1.bf16.xpose.msra.mxu0 0
  %419 = vmatprep.subr.bf16.mxu0 0
  %420 = vmatpush1.bf16.xpose.msra.mxu0 0
  %421 = vmatprep.mubr.bf16.mxu0 0
  %422 = vmatmul.mubr.bf16.gmra.mrb[0].mxu0 %v378
  %v423 = vpop.f32.mrb[0].mxu0
  %v424 = vadd.f32 0.0, %v423
  %v425 = vpop.f32.mrb[0].mxu0
  %v426 = vpop.f32.mrb[0].mxu0
  %v427 = vadd.f32 0.0, %v426
  %v428 = vpop.f32.mrb[0].mxu0
  %429 = vmatprep.mubr.bf16.mxu0 0
  %430 = vmatmul.mubr.bf16.gmra.mrb[0].mxu0 %v381
  %v431 = vpop.f32.mrb[0].mxu0
  %v432 = vadd.f32 0.0, %v431
  %v433 = vpop.f32.mrb[0].mxu0
  %v434 = vpop.f32.mrb[0].mxu0
  %v435 = vadd.f32 0.0, %v434
  %v436 = vpop.f32.mrb[0].mxu0
  %437 = vmatprep.mubr.bf16.mxu0 0
  %438 = vmatmul.mubr.bf16.gmra.mrb[0].mxu0 %v384
  %v439 = vpop.f32.mrb[0].mxu0
  %v440 = vadd.f32 0.0, %v439
  %v441 = vpop.f32.mrb[0].mxu0
  %v442 = vpop.f32.mrb[0].mxu0
  %v443 = vadd.f32 0.0, %v442
  %v444 = vpop.f32.mrb[0].mxu0
  %445 = vmatprep.mubr.bf16.mxu0 0
  %446 = vmatmul.mubr.bf16.gmra.mrb[0].mxu0 %v387
  %v447 = vpop.f32.mrb[0].mxu0
  %v448 = vadd.f32 0.0, %v447
  %v449 = vpop.f32.mrb[0].mxu0
  %v450 = vpop.f32.mrb[0].mxu0
  %v451 = vadd.f32 0.0, %v450
  %v452 = vpop.f32.mrb[0].mxu0
  %453 = vdwg.mxu0
  %v454 = vpack.c.bf16 %v427, %v424
  %v455 = vpack.c.bf16 %v435, %v432
  %v456 = vpack.c.bf16 %v443, %v440
  %v457 = vpack.c.bf16 %v451, %v448
  %v460 = vunpack.c.l.b16 %v127
  %v461 = vunpack.c.h.b16 %v127
  %v462 = vunpack.c.l.b16 %v128
  %v463 = vunpack.c.h.b16 %v128
  %v464 = vpack.c.b16 %v462, %v460
  %v465 = vpack.c.b16 %v463, %v461
  %vm468 = vcmask 130048
  %v470 = vsel %vm468, %v454, 0
  %v473 = vsel %vm468, %v455, 0
  %v476 = vsel %vm468, %v456, 0
  %v479 = vsel %vm468, %v457, 0
  %481 = vmatprep.subr.bf16.mxu0 %v465
  %482 = vmatpush1.bf16.msra.mxu0 %v464
  %483 = vmatprep.subr.bf16.mxu0 0
  %484 = vmatpush1.bf16.msra.mxu0 0
  %485 = vmatprep.subr.bf16.mxu0 0
  %486 = vmatpush1.bf16.msra.mxu0 0
  %487 = vmatprep.subr.bf16.mxu0 0
  %488 = vmatpush1.bf16.msra.mxu0 0
  %489 = vmatprep.subr.bf16.mxu0 0
  %490 = vmatpush1.bf16.msra.mxu0 0
  %491 = vmatprep.subr.bf16.mxu0 0
  %492 = vmatpush1.bf16.msra.mxu0 0
  %493 = vmatprep.subr.bf16.mxu0 0
  %494 = vmatpush1.bf16.msra.mxu0 0
  %495 = vmatprep.subr.bf16.mxu0 0
  %496 = vmatpush1.bf16.msra.mxu0 0
  %497 = vmatprep.subr.bf16.mxu0 0
  %498 = vmatpush1.bf16.msra.mxu0 0
  %499 = vmatprep.subr.bf16.mxu0 0
  %500 = vmatpush1.bf16.msra.mxu0 0
  %501 = vmatprep.subr.bf16.mxu0 0
  %502 = vmatpush1.bf16.msra.mxu0 0
  %503 = vmatprep.subr.bf16.mxu0 0
  %504 = vmatpush1.bf16.msra.mxu0 0
  %505 = vmatprep.subr.bf16.mxu0 0
  %506 = vmatpush1.bf16.msra.mxu0 0
  %507 = vmatprep.subr.bf16.mxu0 0
  %508 = vmatpush1.bf16.msra.mxu0 0
  %509 = vmatprep.subr.bf16.mxu0 0
  %510 = vmatpush1.bf16.msra.mxu0 0
  %511 = vmatprep.subr.bf16.mxu0 0
  %512 = vmatpush1.bf16.msra.mxu0 0
  %513 = vmatprep.mubr.bf16.mxu0 0
  %514 = vmatmul.mubr.bf16.gmra.mrb[0].mxu0 %v470
  %v515 = vpop.f32.mrb[0].mxu0
  %v516 = vadd.f32 0.0, %v515
  %v517 = vpop.f32.mrb[0].mxu0
  %v518 = vadd.f32 0.0, %v517
  %v519 = vpop.f32.mrb[0].mxu0
  %v520 = vadd.f32 0.0, %v519
  %v521 = vpop.f32.mrb[0].mxu0
  %v522 = vadd.f32 0.0, %v521
  %523 = vmatprep.mubr.bf16.mxu0 0
  %524 = vmatmul.mubr.bf16.gmra.mrb[0].mxu0 %v473
  %v525 = vpop.f32.mrb[0].mxu0
  %v526 = vadd.f32 0.0, %v525
  %v527 = vpop.f32.mrb[0].mxu0
  %v528 = vadd.f32 0.0, %v527
  %v529 = vpop.f32.mrb[0].mxu0
  %v530 = vadd.f32 0.0, %v529
  %v531 = vpop.f32.mrb[0].mxu0
  %v532 = vadd.f32 0.0, %v531
  %533 = vmatprep.mubr.bf16.mxu0 0
  %534 = vmatmul.mubr.bf16.gmra.mrb[0].mxu0 %v476
  %v535 = vpop.f32.mrb[0].mxu0
  %v536 = vadd.f32 0.0, %v535
  %v537 = vpop.f32.mrb[0].mxu0
  %v538 = vadd.f32 0.0, %v537
  %v539 = vpop.f32.mrb[0].mxu0
  %v540 = vadd.f32 0.0, %v539
  %v541 = vpop.f32.mrb[0].mxu0
  %v542 = vadd.f32 0.0, %v541
  %543 = vmatprep.mubr.bf16.mxu0 0
  %544 = vmatmul.mubr.bf16.gmra.mrb[0].mxu0 %v479
  %v545 = vpop.f32.mrb[0].mxu0
  %v546 = vadd.f32 0.0, %v545
  %v547 = vpop.f32.mrb[0].mxu0
  %v548 = vadd.f32 0.0, %v547
  %v549 = vpop.f32.mrb[0].mxu0
  %v550 = vadd.f32 0.0, %v549
  %v551 = vpop.f32.mrb[0].mxu0
  %v552 = vadd.f32 0.0, %v551
  %553 = vdwg.mxu0
  %v554 = vmul.f32 %v516, %v129
  %v555 = vmul.f32 %v518, %v130
  %v556 = vmul.f32 %v520, %v131
  %v557 = vmul.f32 %v522, %v132
  %v558 = vmul.f32 %v526, %v133
  %v559 = vmul.f32 %v528, %v134
  %v560 = vmul.f32 %v530, %v135
  %v561 = vmul.f32 %v532, %v136
  %v562 = vmul.f32 %v536, %v137
  %v563 = vmul.f32 %v538, %v138
  %v564 = vmul.f32 %v540, %v139
  %v565 = vmul.f32 %v542, %v140
  %v566 = vmul.f32 %v546, %v141
  %v567 = vmul.f32 %v548, %v142
  %v568 = vmul.f32 %v550, %v143
  %v569 = vmul.f32 %v552, %v144
  %v570 = vlaneseq
  %v571 = vshrl.u32 %v570, 7
  %v572 = vsub.s32 0, %v571
  %v573 = vrot.slane %v177, %v572
  %v574 = vadd.f32 %v250, %v573
  %v575 = vadd.f32 %v253, %v573
  %v576 = vpack.c.bf16 %v575, %v574
  %v577 = vpack.c.bf16 %v556, %v554
  %v578 = vpack.c.bf16 %v557, %v555
  %v579 = vpack.c.bf16 %v560, %v558
  %v580 = vpack.c.bf16 %v561, %v559
  %v581 = vpack.c.bf16 %v564, %v562
  %v582 = vpack.c.bf16 %v565, %v563
  %v583 = vpack.c.bf16 %v568, %v566
  %v584 = vpack.c.bf16 %v569, %v567
  %v585 = vlaneseq
  %v586 = vshrl.u32 %v585, 7
  %v587 = vsub.s32 0, %v586
  %v588 = vrot.slane %v178, %v587
  %v589 = vadd.f32 %v250, %v588
  %v590 = vadd.f32 %v253, %v588
  %v591 = vld [vmem:[%s6 + $0x40] sm:$0xff]
  %v592 = vld [vmem:[%s6 + $0x48] sm:$0xff]
  %v593 = vld [vmem:[%s6 + $0x50] sm:$0xff]
  %v594 = vld [vmem:[%s6 + $0x58] sm:$0xff]
  %v595 = vld [vmem:[%s6 + $0x60] sm:$0xff]
  %v596 = vld [vmem:[%s6 + $0x68] sm:$0xff]
  %v597 = vld [vmem:[%s6 + $0x70] sm:$0xff]
  %v598 = vld [vmem:[%s6 + $0x78] sm:$0xff]
  %v599 = vpack.c.bf16 %v590, %v589
  %v608 = vunpack.c.l.b16 %v591
  %v609 = vunpack.c.h.b16 %v591
  %v610 = vunpack.c.l.b16 %v592
  %v611 = vunpack.c.h.b16 %v592
  %v612 = vunpack.c.l.b16 %v593
  %v613 = vunpack.c.h.b16 %v593
  %v614 = vunpack.c.l.b16 %v594
  %v615 = vunpack.c.h.b16 %v594
  %v616 = vunpack.c.l.b16 %v595
  %v617 = vunpack.c.h.b16 %v595
  %v618 = vunpack.c.l.b16 %v596
  %v619 = vunpack.c.h.b16 %v596
  %v620 = vunpack.c.l.b16 %v597
  %v621 = vunpack.c.h.b16 %v597
  %v622 = vunpack.c.l.b16 %v598
  %v623 = vunpack.c.h.b16 %v598
  %v624 = vpack.c.b16 %v610, %v608
  %v625 = vpack.c.b16 %v611, %v609
  %v626 = vpack.c.b16 %v614, %v612
  %v627 = vpack.c.b16 %v615, %v613
  %v628 = vpack.c.b16 %v618, %v616
  %v629 = vpack.c.b16 %v619, %v617
  %v630 = vpack.c.b16 %v622, %v620
  %v631 = vpack.c.b16 %v623, %v621
  %v641 = vsel %vm43, %v599, 0
  %643 = vmatprep.subr.bf16.mxu0 %v625
  %644 = vmatpush1.bf16.msra.mxu0 %v624
  %645 = vmatprep.subr.bf16.mxu0 %v627
  %646 = vmatpush1.bf16.msra.mxu0 %v626
  %647 = vmatprep.subr.bf16.mxu0 %v629
  %648 = vmatpush1.bf16.msra.mxu0 %v628
  %649 = vmatprep.subr.bf16.mxu0 %v631
  %650 = vmatpush1.bf16.msra.mxu0 %v630
  %651 = vmatprep.subr.bf16.mxu0 0
  %652 = vmatpush1.bf16.msra.mxu0 0
  %653 = vmatprep.subr.bf16.mxu0 0
  %654 = vmatpush1.bf16.msra.mxu0 0
  %655 = vmatprep.subr.bf16.mxu0 0
  %656 = vmatpush1.bf16.msra.mxu0 0
  %657 = vmatprep.subr.bf16.mxu0 0
  %658 = vmatpush1.bf16.msra.mxu0 0
  %659 = vmatprep.subr.bf16.mxu0 0
  %660 = vmatpush1.bf16.msra.mxu0 0
  %661 = vmatprep.subr.bf16.mxu0 0
  %662 = vmatpush1.bf16.msra.mxu0 0
  %663 = vmatprep.subr.bf16.mxu0 0
  %664 = vmatpush1.bf16.msra.mxu0 0
  %665 = vmatprep.subr.bf16.mxu0 0
  %666 = vmatpush1.bf16.msra.mxu0 0
  %667 = vmatprep.subr.bf16.mxu0 0
  %668 = vmatpush1.bf16.msra.mxu0 0
  %669 = vmatprep.subr.bf16.mxu0 0
  %670 = vmatpush1.bf16.msra.mxu0 0
  %671 = vmatprep.subr.bf16.mxu0 0
  %672 = vmatpush1.bf16.msra.mxu0 0
  %673 = vmatprep.subr.bf16.mxu0 0
  %674 = vmatpush1.bf16.msra.mxu0 0
  %675 = vmatprep.mubr.bf16.mxu0 0
  %676 = vmatmul.mubr.bf16.gmra.mrb[0].mxu0 %v641
  %v677 = vpop.f32.mrb[0].mxu0
  %v678 = vadd.f32 0.0, %v677
  %v679 = vpop.f32.mrb[0].mxu0
  %v680 = vadd.f32 0.0, %v679
  %v681 = vpop.f32.mrb[0].mxu0
  %v682 = vadd.f32 0.0, %v681
  %v683 = vpop.f32.mrb[0].mxu0
  %v684 = vadd.f32 0.0, %v683
  %685 = vdwg.mxu0
  %s687 = sor.u32 256, 121
  %688 = vrot.lane.b32.xlu0 %v678, %s687
  %v689 = vpop.permute.xlu0 %688
  %s691 = sor.u32 256, 1
  %692 = vrot.lane.b32.xlu0 %v682, %s691
  %v693 = vpop.permute.xlu0 %692
  %s695 = sor.u32 256, 113
  %696 = vrot.lane.b32.xlu0 %v680, %s695
  %v697 = vpop.permute.xlu0 %696
  %s699 = sor.u32 256, 121
  %700 = vrot.lane.b32.xlu0 %v684, %s699
  %v701 = vpop.permute.xlu0 %700
  %v703 = vsel %vm43, %v576, 0
  %705 = vmatprep.subr.bf16.mxu0 %v578
  %706 = vmatpush1.bf16.msra.mxu0 %v577
  %707 = vmatprep.subr.bf16.mxu0 %v580
  %708 = vmatpush1.bf16.msra.mxu0 %v579
  %709 = vmatprep.subr.bf16.mxu0 %v582
  %710 = vmatpush1.bf16.msra.mxu0 %v581
  %711 = vmatprep.subr.bf16.mxu0 %v584
  %712 = vmatpush1.bf16.msra.mxu0 %v583
  %713 = vmatprep.subr.bf16.mxu0 0
  %714 = vmatpush1.bf16.msra.mxu0 0
  %715 = vmatprep.subr.bf16.mxu0 0
  %716 = vmatpush1.bf16.msra.mxu0 0
  %717 = vmatprep.subr.bf16.mxu0 0
  %718 = vmatpush1.bf16.msra.mxu0 0
  %719 = vmatprep.subr.bf16.mxu0 0
  %720 = vmatpush1.bf16.msra.mxu0 0
  %721 = vmatprep.subr.bf16.mxu0 0
  %722 = vmatpush1.bf16.msra.mxu0 0
  %723 = vmatprep.subr.bf16.mxu0 0
  %724 = vmatpush1.bf16.msra.mxu0 0
  %725 = vmatprep.subr.bf16.mxu0 0
  %726 = vmatpush1.bf16.msra.mxu0 0
  %727 = vmatprep.subr.bf16.mxu0 0
  %728 = vmatpush1.bf16.msra.mxu0 0
  %729 = vmatprep.subr.bf16.mxu0 0
  %730 = vmatpush1.bf16.msra.mxu0 0
  %731 = vmatprep.subr.bf16.mxu0 0
  %732 = vmatpush1.bf16.msra.mxu0 0
  %733 = vmatprep.subr.bf16.mxu0 0
  %734 = vmatpush1.bf16.msra.mxu0 0
  %735 = vmatprep.subr.bf16.mxu0 0
  %736 = vmatpush1.bf16.msra.mxu0 0
  %737 = vmatprep.mubr.bf16.mxu0 0
  %738 = vmatmul.mubr.bf16.gmra.mrb[0].mxu0 %v703
  %v739 = vpop.f32.mrb[0].mxu0
  %v740 = vadd.f32 %v689, %v739
  %v741 = vpop.f32.mrb[0].mxu0
  %v742 = vadd.f32 %v697, %v741
  %v743 = vpop.f32.mrb[0].mxu0
  %v744 = vadd.f32 %v693, %v743
  %v745 = vpop.f32.mrb[0].mxu0
  %v746 = vadd.f32 %v701, %v745
  %747 = vdwg.mxu0
  %v748 = vmul.f32 %v740, 0.5
  %v749 = vmul.f32 %v742, 0.5
  %v750 = vmul.f32 %v744, 0.5
  %v751 = vmul.f32 %v746, 0.5
  %v752 = vld [vmem:[%s1 + $0x80] sm:$0xff]
  %v753 = vld [vmem:[%s1 + $0x88] sm:$0xff]
  %v754 = vld [vmem:[%s1 + $0x90] sm:$0xff]
  %v755 = vld [vmem:[%s1 + $0x98] sm:$0xff]
  %v756 = vadd.f32 %v748, %v752
  %v757 = vadd.f32 %v749, %v753
  %v758 = vadd.f32 %v750, %v754
  %v759 = vadd.f32 %v751, %v755
  %v760 = vmax.f32 %v756, %v757
  %761 = vmax.xlane.f32.xlu0 %v760
  %v762 = vpop.xlane.xlu0 %761
  %v763 = vmax.f32 %v758, %v759
  %764 = vmax.xlane.f32.xlu0 %v763
  %v765 = vpop.xlane.xlu0 %764
  %v766 = vsub.f32 %v756, %v762
  %v767 = vsub.f32 %v757, %v762
  %v768 = vsub.f32 %v758, %v765
  %v769 = vsub.f32 %v759, %v765
  %v770 = vmul.f32 %v766, 1.442695
  %v771 = vpow.pop %v770
  %v772 = vmul.f32 %v767, 1.442695
  %v773 = vpow.pop %v772
  %v774 = vmul.f32 %v768, 1.442695
  %v775 = vpow.pop %v774
  %v776 = vmul.f32 %v769, 1.442695
  %v777 = vpow.pop %v776
  %v778 = vld [vmem:[%s2 + $0x10] sm:$0xff]
  %v779 = vld [vmem:[%s2 + $0x18] sm:$0xff]
  %v780 = vld [vmem:[%s2 + $0x20] sm:$0xff]
  %v781 = vld [vmem:[%s2 + $0x28] sm:$0xff]
  %v782 = vld [vmem:[%s2 + $0x30] sm:$0xff]
  %v783 = vld [vmem:[%s2 + $0x38] sm:$0xff]
  %v784 = vld [vmem:[%s2 + $0x40] sm:$0xff]
  %v785 = vld [vmem:[%s2 + $0x48] sm:$0xff]
  %v786 = vld [vmem:[%s2 + $0x50] sm:$0xff]
  %v787 = vld [vmem:[%s2 + $0x58] sm:$0xff]
  %v788 = vld [vmem:[%s2 + $0x60] sm:$0xff]
  %v789 = vld [vmem:[%s2 + $0x68] sm:$0xff]
  %v790 = vld [vmem:[%s2 + $0x70] sm:$0xff]
  %v791 = vld [vmem:[%s2 + $0x78] sm:$0xff]
  %v792 = vld [vmem:[%s2 + $0x80] sm:$0xff]
  %v793 = vld [vmem:[%s2 + $0x88] sm:$0xff]
  %v794 = vld [vmem:[%s2 + $0x90] sm:$0xff]
  %v795 = vld [vmem:[%s2 + $0x98] sm:$0xff]
  %v796 = vld [vmem:[%s2 + $0xa0] sm:$0xff]
  %v797 = vld [vmem:[%s2 + $0xa8] sm:$0xff]
  %v798 = vld [vmem:[%s2 + $0xb0] sm:$0xff]
  %v799 = vld [vmem:[%s2 + $0xb8] sm:$0xff]
  %v800 = vld [vmem:[%s2 + $0xc0] sm:$0xff]
  %v801 = vld [vmem:[%s2 + $0xc8] sm:$0xff]
  %v802 = vld [vmem:[%s2 + $0xd0] sm:$0xff]
  %v803 = vld [vmem:[%s2 + $0xd8] sm:$0xff]
  %v804 = vld [vmem:[%s2 + $0xe0] sm:$0xff]
  %v805 = vld [vmem:[%s2 + $0xe8] sm:$0xff]
  %v806 = vld [vmem:[%s2 + $0xf0] sm:$0xff]
  %v807 = vld [vmem:[%s2 + $0xf8] sm:$0xff]
  %v808 = vld [vmem:[%s2 + $0x100] sm:$0xff]
  %v809 = vld [vmem:[%s2 + $0x108] sm:$0xff]
  %v810 = vpack.c.bf16 %v775, %v771
  %v811 = vpack.c.bf16 %v777, %v773
  %v844 = vunpack.c.l.b16 %v778
  %v845 = vunpack.c.h.b16 %v778
  %v846 = vunpack.c.l.b16 %v779
  %v847 = vunpack.c.h.b16 %v779
  %v848 = vunpack.c.l.b16 %v780
  %v849 = vunpack.c.h.b16 %v780
  %v850 = vunpack.c.l.b16 %v781
  %v851 = vunpack.c.h.b16 %v781
  %v852 = vunpack.c.l.b16 %v782
  %v853 = vunpack.c.h.b16 %v782
  %v854 = vunpack.c.l.b16 %v783
  %v855 = vunpack.c.h.b16 %v783
  %v856 = vunpack.c.l.b16 %v784
  %v857 = vunpack.c.h.b16 %v784
  %v858 = vunpack.c.l.b16 %v785
  %v859 = vunpack.c.h.b16 %v785
  %v860 = vunpack.c.l.b16 %v786
  %v861 = vunpack.c.h.b16 %v786
  %v862 = vunpack.c.l.b16 %v787
  %v863 = vunpack.c.h.b16 %v787
  %v864 = vunpack.c.l.b16 %v788
  %v865 = vunpack.c.h.b16 %v788
  %v866 = vunpack.c.l.b16 %v789
  %v867 = vunpack.c.h.b16 %v789
  %v868 = vunpack.c.l.b16 %v790
  %v869 = vunpack.c.h.b16 %v790
  %v870 = vunpack.c.l.b16 %v791
  %v871 = vunpack.c.h.b16 %v791
  %v872 = vunpack.c.l.b16 %v792
  %v873 = vunpack.c.h.b16 %v792
  %v874 = vunpack.c.l.b16 %v793
  %v875 = vunpack.c.h.b16 %v793
  %v876 = vunpack.c.l.b16 %v794
  %v877 = vunpack.c.h.b16 %v794
  %v878 = vunpack.c.l.b16 %v795
  %v879 = vunpack.c.h.b16 %v795
  %v880 = vunpack.c.l.b16 %v796
  %v881 = vunpack.c.h.b16 %v796
  %v882 = vunpack.c.l.b16 %v797
  %v883 = vunpack.c.h.b16 %v797
  %v884 = vunpack.c.l.b16 %v798
  %v885 = vunpack.c.h.b16 %v798
  %v886 = vunpack.c.l.b16 %v799
  %v887 = vunpack.c.h.b16 %v799
  %v888 = vunpack.c.l.b16 %v800
  %v889 = vunpack.c.h.b16 %v800
  %v890 = vunpack.c.l.b16 %v801
  %v891 = vunpack.c.h.b16 %v801
  %v892 = vunpack.c.l.b16 %v802
  %v893 = vunpack.c.h.b16 %v802
  %v894 = vunpack.c.l.b16 %v803
  %v895 = vunpack.c.h.b16 %v803
  %v896 = vunpack.c.l.b16 %v804
  %v897 = vunpack.c.h.b16 %v804
  %v898 = vunpack.c.l.b16 %v805
  %v899 = vunpack.c.h.b16 %v805
  %v900 = vunpack.c.l.b16 %v806
  %v901 = vunpack.c.h.b16 %v806
  %v902 = vunpack.c.l.b16 %v807
  %v903 = vunpack.c.h.b16 %v807
  %v904 = vunpack.c.l.b16 %v808
  %v905 = vunpack.c.h.b16 %v808
  %v906 = vunpack.c.l.b16 %v809
  %v907 = vunpack.c.h.b16 %v809
  %v908 = vpack.c.b16 %v846, %v844
  %v909 = vpack.c.b16 %v847, %v845
  %v910 = vpack.c.b16 %v850, %v848
  %v911 = vpack.c.b16 %v851, %v849
  %v912 = vpack.c.b16 %v854, %v852
  %v913 = vpack.c.b16 %v855, %v853
  %v914 = vpack.c.b16 %v858, %v856
  %v915 = vpack.c.b16 %v859, %v857
  %v916 = vpack.c.b16 %v862, %v860
  %v917 = vpack.c.b16 %v863, %v861
  %v918 = vpack.c.b16 %v866, %v864
  %v919 = vpack.c.b16 %v867, %v865
  %v920 = vpack.c.b16 %v870, %v868
  %v921 = vpack.c.b16 %v871, %v869
  %v922 = vpack.c.b16 %v874, %v872
  %v923 = vpack.c.b16 %v875, %v873
  %v924 = vpack.c.b16 %v878, %v876
  %v925 = vpack.c.b16 %v879, %v877
  %v926 = vpack.c.b16 %v882, %v880
  %v927 = vpack.c.b16 %v883, %v881
  %v928 = vpack.c.b16 %v886, %v884
  %v929 = vpack.c.b16 %v887, %v885
  %v930 = vpack.c.b16 %v890, %v888
  %v931 = vpack.c.b16 %v891, %v889
  %v932 = vpack.c.b16 %v894, %v892
  %v933 = vpack.c.b16 %v895, %v893
  %v934 = vpack.c.b16 %v898, %v896
  %v935 = vpack.c.b16 %v899, %v897
  %v936 = vpack.c.b16 %v902, %v900
  %v937 = vpack.c.b16 %v903, %v901
  %v938 = vpack.c.b16 %v906, %v904
  %v939 = vpack.c.b16 %v907, %v905
  %972 = vmatprep.subr.bf16.mxu0 %v909
  %973 = vmatpush1.bf16.msra.mxu0 %v908
  %974 = vmatprep.subr.bf16.mxu0 %v911
  %975 = vmatpush1.bf16.msra.mxu0 %v910
  %976 = vmatprep.subr.bf16.mxu0 %v913
  %977 = vmatpush1.bf16.msra.mxu0 %v912
  %978 = vmatprep.subr.bf16.mxu0 %v915
  %979 = vmatpush1.bf16.msra.mxu0 %v914
  %980 = vmatprep.subr.bf16.mxu0 %v917
  %981 = vmatpush1.bf16.msra.mxu0 %v916
  %982 = vmatprep.subr.bf16.mxu0 %v919
  %983 = vmatpush1.bf16.msra.mxu0 %v918
  %984 = vmatprep.subr.bf16.mxu0 %v921
  %985 = vmatpush1.bf16.msra.mxu0 %v920
  %986 = vmatprep.subr.bf16.mxu0 %v923
  %987 = vmatpush1.bf16.msra.mxu0 %v922
  %988 = vmatprep.subr.bf16.mxu0 %v925
  %989 = vmatpush1.bf16.msra.mxu0 %v924
  %990 = vmatprep.subr.bf16.mxu0 %v927
  %991 = vmatpush1.bf16.msra.mxu0 %v926
  %992 = vmatprep.subr.bf16.mxu0 %v929
  %993 = vmatpush1.bf16.msra.mxu0 %v928
  %994 = vmatprep.subr.bf16.mxu0 %v931
  %995 = vmatpush1.bf16.msra.mxu0 %v930
  %996 = vmatprep.subr.bf16.mxu0 %v933
  %997 = vmatpush1.bf16.msra.mxu0 %v932
  %998 = vmatprep.subr.bf16.mxu0 %v935
  %999 = vmatpush1.bf16.msra.mxu0 %v934
  %1000 = vmatprep.subr.bf16.mxu0 %v937
  %1001 = vmatpush1.bf16.msra.mxu0 %v936
  %1002 = vmatprep.subr.bf16.mxu0 %v939
  %1003 = vmatpush1.bf16.msra.mxu0 %v938
  %1004 = vmatprep.mubr.bf16.mxu0 %v811
  %1005 = vmatmul.mubr.bf16.gmra.mrb[0].mxu0 %v810
  %v1006 = vpop.f32.mrb[0].mxu0
  %v1007 = vadd.f32 0.0, %v1006
  %v1008 = vpop.f32.mrb[0].mxu0
  %v1009 = vadd.f32 0.0, %v1008
  %v1010 = vpop.f32.mrb[0].mxu0
  %v1011 = vadd.f32 0.0, %v1010
  %v1012 = vpop.f32.mrb[0].mxu0
  %v1013 = vadd.f32 0.0, %v1012
  %1014 = vdwg.mxu0
  %v1015 = vmax.f32 %v1007, 1e-30
  %v1016 = vmax.f32 %v1009, 1e-30
  %v1017 = vmax.f32 %v1011, 1e-30
  %v1018 = vmax.f32 %v1013, 1e-30
  %v1019 = vrcp.pop %v1015
  %v1020 = vrcp.pop %v1016
  %v1021 = vrcp.pop %v1017
  %v1022 = vrcp.pop %v1018
  %v1023 = vmul.f32 %v771, %v1019
  %v1024 = vmul.f32 %v773, %v1020
  %v1025 = vmul.f32 %v775, %v1021
  %v1026 = vmul.f32 %v777, %v1022
  %v1027 = vld [vmem:[%s3] sm:$0xf]
  %v1028 = vld [vmem:[%s3 + $0x4] sm:$0xf]
  %v1029 = vld [vmem:[%s3 + $0x8] sm:$0xf]
  %v1030 = vld [vmem:[%s3 + $0xc] sm:$0xf]
  %v1031 = vld [vmem:[%s3 + $0x10] sm:$0xf]
  %v1032 = vld [vmem:[%s3 + $0x14] sm:$0xf]
  %v1033 = vld [vmem:[%s3 + $0x18] sm:$0xf]
  %v1034 = vld [vmem:[%s3 + $0x1c] sm:$0xf]
  %v1035 = vld [vmem:[%s3 + $0x20] sm:$0xf]
  %v1036 = vld [vmem:[%s3 + $0x24] sm:$0xf]
  %v1037 = vld [vmem:[%s3 + $0x28] sm:$0xf]
  %v1038 = vld [vmem:[%s3 + $0x2c] sm:$0xf]
  %v1039 = vld [vmem:[%s3 + $0x30] sm:$0xf]
  %v1040 = vld [vmem:[%s3 + $0x34] sm:$0xf]
  %v1041 = vld [vmem:[%s3 + $0x38] sm:$0xf]
  %v1042 = vld [vmem:[%s3 + $0x3c] sm:$0xf]
  %v1043 = vld [vmem:[%s3 + $0x40] sm:$0xf]
  %v1044 = vld [vmem:[%s3 + $0x44] sm:$0xf]
  %v1045 = vld [vmem:[%s3 + $0x48] sm:$0xf]
  %v1046 = vld [vmem:[%s3 + $0x4c] sm:$0xf]
  %v1047 = vld [vmem:[%s3 + $0x50] sm:$0xf]
  %v1048 = vld [vmem:[%s3 + $0x54] sm:$0xf]
  %v1049 = vld [vmem:[%s3 + $0x58] sm:$0xf]
  %v1050 = vld [vmem:[%s3 + $0x5c] sm:$0xf]
  %v1051 = vld [vmem:[%s3 + $0x60] sm:$0xf]
  %v1052 = vld [vmem:[%s3 + $0x64] sm:$0xf]
  %v1053 = vld [vmem:[%s3 + $0x68] sm:$0xf]
  %v1054 = vld [vmem:[%s3 + $0x6c] sm:$0xf]
  %v1055 = vld [vmem:[%s3 + $0x70] sm:$0xf]
  %v1056 = vld [vmem:[%s3 + $0x74] sm:$0xf]
  %v1057 = vld [vmem:[%s3 + $0x78] sm:$0xf]
  %v1058 = vld [vmem:[%s3 + $0x7c] sm:$0xf]
  %v1059 = vpack.c.bf16 %v326, %v323
  %v1092 = vunpack.c.l.b16 %v1027
  %v1093 = vunpack.c.l.b16 %v1028
  %v1094 = vunpack.c.l.b16 %v1029
  %v1095 = vunpack.c.l.b16 %v1030
  %v1096 = vunpack.c.l.b16 %v1031
  %v1097 = vunpack.c.l.b16 %v1032
  %v1098 = vunpack.c.l.b16 %v1033
  %v1099 = vunpack.c.l.b16 %v1034
  %v1100 = vunpack.c.l.b16 %v1035
  %v1101 = vunpack.c.l.b16 %v1036
  %v1102 = vunpack.c.l.b16 %v1037
  %v1103 = vunpack.c.l.b16 %v1038
  %v1104 = vunpack.c.l.b16 %v1039
  %v1105 = vunpack.c.l.b16 %v1040
  %v1106 = vunpack.c.l.b16 %v1041
  %v1107 = vunpack.c.l.b16 %v1042
  %v1108 = vunpack.c.l.b16 %v1043
  %v1109 = vunpack.c.l.b16 %v1044
  %v1110 = vunpack.c.l.b16 %v1045
  %v1111 = vunpack.c.l.b16 %v1046
  %v1112 = vunpack.c.l.b16 %v1047
  %v1113 = vunpack.c.l.b16 %v1048
  %v1114 = vunpack.c.l.b16 %v1049
  %v1115 = vunpack.c.l.b16 %v1050
  %v1116 = vunpack.c.l.b16 %v1051
  %v1117 = vunpack.c.l.b16 %v1052
  %v1118 = vunpack.c.l.b16 %v1053
  %v1119 = vunpack.c.l.b16 %v1054
  %v1120 = vunpack.c.l.b16 %v1055
  %v1121 = vunpack.c.l.b16 %v1056
  %v1122 = vunpack.c.l.b16 %v1057
  %v1123 = vunpack.c.l.b16 %v1058
  %v1124 = vpack.c.b16 %v1093, %v1092
  %v1125 = vpack.c.b16 %v1095, %v1094
  %v1126 = vpack.c.b16 %v1097, %v1096
  %v1127 = vpack.c.b16 %v1099, %v1098
  %v1128 = vpack.c.b16 %v1101, %v1100
  %v1129 = vpack.c.b16 %v1103, %v1102
  %v1130 = vpack.c.b16 %v1105, %v1104
  %v1131 = vpack.c.b16 %v1107, %v1106
  %v1132 = vpack.c.b16 %v1109, %v1108
  %v1133 = vpack.c.b16 %v1111, %v1110
  %v1134 = vpack.c.b16 %v1113, %v1112
  %v1135 = vpack.c.b16 %v1115, %v1114
  %v1136 = vpack.c.b16 %v1117, %v1116
  %v1137 = vpack.c.b16 %v1119, %v1118
  %v1138 = vpack.c.b16 %v1121, %v1120
  %v1139 = vpack.c.b16 %v1123, %v1122
  %v1141 = vsel %vm468, %v1124, 0
  %v1144 = vsel %vm468, %v1125, 0
  %v1147 = vsel %vm468, %v1126, 0
  %v1150 = vsel %vm468, %v1127, 0
  %v1153 = vsel %vm468, %v1128, 0
  %v1156 = vsel %vm468, %v1129, 0
  %v1159 = vsel %vm468, %v1130, 0
  %v1162 = vsel %vm468, %v1131, 0
  %v1165 = vsel %vm468, %v1132, 0
  %v1168 = vsel %vm468, %v1133, 0
  %v1171 = vsel %vm468, %v1134, 0
  %v1174 = vsel %vm468, %v1135, 0
  %v1177 = vsel %vm468, %v1136, 0
  %v1180 = vsel %vm468, %v1137, 0
  %v1183 = vsel %vm468, %v1138, 0
  %v1186 = vsel %vm468, %v1139, 0
  %1188 = vmatprep.subr.bf16.mxu0 0
  %1189 = vmatpush1.bf16.msra.mxu0 %v1059
  %1190 = vmatprep.subr.bf16.mxu0 0
  %1191 = vmatpush1.bf16.msra.mxu0 0
  %1192 = vmatprep.subr.bf16.mxu0 0
  %1193 = vmatpush1.bf16.msra.mxu0 0
  %1194 = vmatprep.subr.bf16.mxu0 0
  %1195 = vmatpush1.bf16.msra.mxu0 0
  %1196 = vmatprep.subr.bf16.mxu0 0
  %1197 = vmatpush1.bf16.msra.mxu0 0
  %1198 = vmatprep.subr.bf16.mxu0 0
  %1199 = vmatpush1.bf16.msra.mxu0 0
  %1200 = vmatprep.subr.bf16.mxu0 0
  %1201 = vmatpush1.bf16.msra.mxu0 0
  %1202 = vmatprep.subr.bf16.mxu0 0
  %1203 = vmatpush1.bf16.msra.mxu0 0
  %1204 = vmatprep.subr.bf16.mxu0 0
  %1205 = vmatpush1.bf16.msra.mxu0 0
  %1206 = vmatprep.subr.bf16.mxu0 0
  %1207 = vmatpush1.bf16.msra.mxu0 0
  %1208 = vmatprep.subr.bf16.mxu0 0
  %1209 = vmatpush1.bf16.msra.mxu0 0
  %1210 = vmatprep.subr.bf16.mxu0 0
  %1211 = vmatpush1.bf16.msra.mxu0 0
  %1212 = vmatprep.subr.bf16.mxu0 0
  %1213 = vmatpush1.bf16.msra.mxu0 0
  %1214 = vmatprep.subr.bf16.mxu0 0
  %1215 = vmatpush1.bf16.msra.mxu0 0
  %1216 = vmatprep.subr.bf16.mxu0 0
  %1217 = vmatpush1.bf16.msra.mxu0 0
  %1218 = vmatprep.subr.bf16.mxu0 0
  %1219 = vmatpush1.bf16.msra.mxu0 0
  %1220 = vmatprep.mubr.bf16.mxu0 0
  %1221 = vmatmul.mubr.bf16.gmra.mrb[0].mxu0 %v1141
  %v1222 = vpop.f32.mrb[0].mxu0
  %v1223 = vadd.f32 0.0, %v1222
  %v1224 = vpop.f32.mrb[0].mxu0
  %v1225 = vpop.f32.mrb[0].mxu0
  %v1226 = vadd.f32 0.0, %v1225
  %v1227 = vpop.f32.mrb[0].mxu0
  %1228 = vmatprep.mubr.bf16.mxu0 0
  %1229 = vmatmul.mubr.bf16.gmra.mrb[0].mxu0 %v1144
  %v1230 = vpop.f32.mrb[0].mxu0
  %v1231 = vadd.f32 0.0, %v1230
  %v1232 = vpop.f32.mrb[0].mxu0
  %v1233 = vpop.f32.mrb[0].mxu0
  %v1234 = vadd.f32 0.0, %v1233
  %v1235 = vpop.f32.mrb[0].mxu0
  %1236 = vmatprep.mubr.bf16.mxu0 0
  %1237 = vmatmul.mubr.bf16.gmra.mrb[0].mxu0 %v1147
  %v1238 = vpop.f32.mrb[0].mxu0
  %v1239 = vadd.f32 0.0, %v1238
  %v1240 = vpop.f32.mrb[0].mxu0
  %v1241 = vpop.f32.mrb[0].mxu0
  %v1242 = vadd.f32 0.0, %v1241
  %v1243 = vpop.f32.mrb[0].mxu0
  %1244 = vmatprep.mubr.bf16.mxu0 0
  %1245 = vmatmul.mubr.bf16.gmra.mrb[0].mxu0 %v1150
  %v1246 = vpop.f32.mrb[0].mxu0
  %v1247 = vadd.f32 0.0, %v1246
  %v1248 = vpop.f32.mrb[0].mxu0
  %v1249 = vpop.f32.mrb[0].mxu0
  %v1250 = vadd.f32 0.0, %v1249
  %v1251 = vpop.f32.mrb[0].mxu0
  %1252 = vmatprep.mubr.bf16.mxu0 0
  %1253 = vmatmul.mubr.bf16.gmra.mrb[0].mxu0 %v1153
  %v1254 = vpop.f32.mrb[0].mxu0
  %v1255 = vadd.f32 0.0, %v1254
  %v1256 = vpop.f32.mrb[0].mxu0
  %v1257 = vpop.f32.mrb[0].mxu0
  %v1258 = vadd.f32 0.0, %v1257
  %v1259 = vpop.f32.mrb[0].mxu0
  %1260 = vmatprep.mubr.bf16.mxu0 0
  %1261 = vmatmul.mubr.bf16.gmra.mrb[0].mxu0 %v1156
  %v1262 = vpop.f32.mrb[0].mxu0
  %v1263 = vadd.f32 0.0, %v1262
  %v1264 = vpop.f32.mrb[0].mxu0
  %v1265 = vpop.f32.mrb[0].mxu0
  %v1266 = vadd.f32 0.0, %v1265
  %v1267 = vpop.f32.mrb[0].mxu0
  %1268 = vmatprep.mubr.bf16.mxu0 0
  %1269 = vmatmul.mubr.bf16.gmra.mrb[0].mxu0 %v1159
  %v1270 = vpop.f32.mrb[0].mxu0
  %v1271 = vadd.f32 0.0, %v1270
  %v1272 = vpop.f32.mrb[0].mxu0
  %v1273 = vpop.f32.mrb[0].mxu0
  %v1274 = vadd.f32 0.0, %v1273
  %v1275 = vpop.f32.mrb[0].mxu0
  %1276 = vmatprep.mubr.bf16.mxu0 0
  %1277 = vmatmul.mubr.bf16.gmra.mrb[0].mxu0 %v1162
  %v1278 = vpop.f32.mrb[0].mxu0
  %v1279 = vadd.f32 0.0, %v1278
  %v1280 = vpop.f32.mrb[0].mxu0
  %v1281 = vpop.f32.mrb[0].mxu0
  %v1282 = vadd.f32 0.0, %v1281
  %v1283 = vpop.f32.mrb[0].mxu0
  %1284 = vmatprep.mubr.bf16.mxu0 0
  %1285 = vmatmul.mubr.bf16.gmra.mrb[0].mxu0 %v1165
  %v1286 = vpop.f32.mrb[0].mxu0
  %v1287 = vadd.f32 0.0, %v1286
  %v1288 = vpop.f32.mrb[0].mxu0
  %v1289 = vpop.f32.mrb[0].mxu0
  %v1290 = vadd.f32 0.0, %v1289
  %v1291 = vpop.f32.mrb[0].mxu0
  %1292 = vmatprep.mubr.bf16.mxu0 0
  %1293 = vmatmul.mubr.bf16.gmra.mrb[0].mxu0 %v1168
  %v1294 = vpop.f32.mrb[0].mxu0
  %v1295 = vadd.f32 0.0, %v1294
  %v1296 = vpop.f32.mrb[0].mxu0
  %v1297 = vpop.f32.mrb[0].mxu0
  %v1298 = vadd.f32 0.0, %v1297
  %v1299 = vpop.f32.mrb[0].mxu0
  %1300 = vmatprep.mubr.bf16.mxu0 0
  %1301 = vmatmul.mubr.bf16.gmra.mrb[0].mxu0 %v1171
  %v1302 = vpop.f32.mrb[0].mxu0
  %v1303 = vadd.f32 0.0, %v1302
  %v1304 = vpop.f32.mrb[0].mxu0
  %v1305 = vpop.f32.mrb[0].mxu0
  %v1306 = vadd.f32 0.0, %v1305
  %v1307 = vpop.f32.mrb[0].mxu0
  %1308 = vmatprep.mubr.bf16.mxu0 0
  %1309 = vmatmul.mubr.bf16.gmra.mrb[0].mxu0 %v1174
  %v1310 = vpop.f32.mrb[0].mxu0
  %v1311 = vadd.f32 0.0, %v1310
  %v1312 = vpop.f32.mrb[0].mxu0
  %v1313 = vpop.f32.mrb[0].mxu0
  %v1314 = vadd.f32 0.0, %v1313
  %v1315 = vpop.f32.mrb[0].mxu0
  %1316 = vmatprep.mubr.bf16.mxu0 0
  %1317 = vmatmul.mubr.bf16.gmra.mrb[0].mxu0 %v1177
  %v1318 = vpop.f32.mrb[0].mxu0
  %v1319 = vadd.f32 0.0, %v1318
  %v1320 = vpop.f32.mrb[0].mxu0
  %v1321 = vpop.f32.mrb[0].mxu0
  %v1322 = vadd.f32 0.0, %v1321
  %v1323 = vpop.f32.mrb[0].mxu0
  %1324 = vmatprep.mubr.bf16.mxu0 0
  %1325 = vmatmul.mubr.bf16.gmra.mrb[0].mxu0 %v1180
  %v1326 = vpop.f32.mrb[0].mxu0
  %v1327 = vadd.f32 0.0, %v1326
  %v1328 = vpop.f32.mrb[0].mxu0
  %v1329 = vpop.f32.mrb[0].mxu0
  %v1330 = vadd.f32 0.0, %v1329
  %v1331 = vpop.f32.mrb[0].mxu0
  %1332 = vmatprep.mubr.bf16.mxu0 0
  %1333 = vmatmul.mubr.bf16.gmra.mrb[0].mxu0 %v1183
  %v1334 = vpop.f32.mrb[0].mxu0
  %v1335 = vadd.f32 0.0, %v1334
  %v1336 = vpop.f32.mrb[0].mxu0
  %v1337 = vpop.f32.mrb[0].mxu0
  %v1338 = vadd.f32 0.0, %v1337
  %v1339 = vpop.f32.mrb[0].mxu0
  %1340 = vmatprep.mubr.bf16.mxu0 0
  %1341 = vmatmul.mubr.bf16.gmra.mrb[0].mxu0 %v1186
  %v1342 = vpop.f32.mrb[0].mxu0
  %v1343 = vadd.f32 0.0, %v1342
  %v1344 = vpop.f32.mrb[0].mxu0
  %v1345 = vpop.f32.mrb[0].mxu0
  %v1346 = vadd.f32 0.0, %v1345
  %v1347 = vpop.f32.mrb[0].mxu0
  %1348 = vdwg.mxu0
  %v1349 = vmul.f32 %v1223, %v145
  %v1350 = vmul.f32 %v1226, %v146
  %v1351 = vmul.f32 %v1231, %v147
  %v1352 = vmul.f32 %v1234, %v148
  %v1353 = vmul.f32 %v1239, %v149
  %v1354 = vmul.f32 %v1242, %v150
  %v1355 = vmul.f32 %v1247, %v151
  %v1356 = vmul.f32 %v1250, %v152
  %v1357 = vmul.f32 %v1255, %v153
  %v1358 = vmul.f32 %v1258, %v154
  %v1359 = vmul.f32 %v1263, %v155
  %v1360 = vmul.f32 %v1266, %v156
  %v1361 = vmul.f32 %v1271, %v157
  %v1362 = vmul.f32 %v1274, %v158
  %v1363 = vmul.f32 %v1279, %v159
  %v1364 = vmul.f32 %v1282, %v160
  %v1365 = vmul.f32 %v1287, %v161
  %v1366 = vmul.f32 %v1290, %v162
  %v1367 = vmul.f32 %v1295, %v163
  %v1368 = vmul.f32 %v1298, %v164
  %v1369 = vmul.f32 %v1303, %v165
  %v1370 = vmul.f32 %v1306, %v166
  %v1371 = vmul.f32 %v1311, %v167
  %v1372 = vmul.f32 %v1314, %v168
  %v1373 = vmul.f32 %v1319, %v169
  %v1374 = vmul.f32 %v1322, %v170
  %v1375 = vmul.f32 %v1327, %v171
  %v1376 = vmul.f32 %v1330, %v172
  %v1377 = vmul.f32 %v1335, %v173
  %v1378 = vmul.f32 %v1338, %v174
  %v1379 = vmul.f32 %v1343, %v175
  %v1380 = vmul.f32 %v1346, %v176
  %v1381 = vpack.c.bf16 %v1025, %v1023
  %v1382 = vpack.c.bf16 %v1026, %v1024
  %v1383 = vpack.c.bf16 %v1350, %v1349
  %v1384 = vpack.c.bf16 %v1352, %v1351
  %v1385 = vpack.c.bf16 %v1354, %v1353
  %v1386 = vpack.c.bf16 %v1356, %v1355
  %v1387 = vpack.c.bf16 %v1358, %v1357
  %v1388 = vpack.c.bf16 %v1360, %v1359
  %v1389 = vpack.c.bf16 %v1362, %v1361
  %v1390 = vpack.c.bf16 %v1364, %v1363
  %v1391 = vpack.c.bf16 %v1366, %v1365
  %v1392 = vpack.c.bf16 %v1368, %v1367
  %v1393 = vpack.c.bf16 %v1370, %v1369
  %v1394 = vpack.c.bf16 %v1372, %v1371
  %v1395 = vpack.c.bf16 %v1374, %v1373
  %v1396 = vpack.c.bf16 %v1376, %v1375
  %v1397 = vpack.c.bf16 %v1378, %v1377
  %v1398 = vpack.c.bf16 %v1380, %v1379
  %1399 = vmatprep.subr.bf16.mxu0 0
  %1400 = vmatpush1.bf16.msra.mxu0 %v1383
  %1401 = vmatprep.subr.bf16.mxu0 0
  %1402 = vmatpush1.bf16.msra.mxu0 %v1384
  %1403 = vmatprep.subr.bf16.mxu0 0
  %1404 = vmatpush1.bf16.msra.mxu0 %v1385
  %1405 = vmatprep.subr.bf16.mxu0 0
  %1406 = vmatpush1.bf16.msra.mxu0 %v1386
  %1407 = vmatprep.subr.bf16.mxu0 0
  %1408 = vmatpush1.bf16.msra.mxu0 %v1387
  %1409 = vmatprep.subr.bf16.mxu0 0
  %1410 = vmatpush1.bf16.msra.mxu0 %v1388
  %1411 = vmatprep.subr.bf16.mxu0 0
  %1412 = vmatpush1.bf16.msra.mxu0 %v1389
  %1413 = vmatprep.subr.bf16.mxu0 0
  %1414 = vmatpush1.bf16.msra.mxu0 %v1390
  %1415 = vmatprep.subr.bf16.mxu0 0
  %1416 = vmatpush1.bf16.msra.mxu0 %v1391
  %1417 = vmatprep.subr.bf16.mxu0 0
  %1418 = vmatpush1.bf16.msra.mxu0 %v1392
  %1419 = vmatprep.subr.bf16.mxu0 0
  %1420 = vmatpush1.bf16.msra.mxu0 %v1393
  %1421 = vmatprep.subr.bf16.mxu0 0
  %1422 = vmatpush1.bf16.msra.mxu0 %v1394
  %1423 = vmatprep.subr.bf16.mxu0 0
  %1424 = vmatpush1.bf16.msra.mxu0 %v1395
  %1425 = vmatprep.subr.bf16.mxu0 0
  %1426 = vmatpush1.bf16.msra.mxu0 %v1396
  %1427 = vmatprep.subr.bf16.mxu0 0
  %1428 = vmatpush1.bf16.msra.mxu0 %v1397
  %1429 = vmatprep.subr.bf16.mxu0 0
  %1430 = vmatpush1.bf16.msra.mxu0 %v1398
  %1431 = vmatprep.mubr.bf16.mxu0 %v1382
  %1432 = vmatmul.mubr.bf16.gmra.mrb[0].mxu0 %v1381
  %v1433 = vpop.f32.mrb[0].mxu0
  %v1434 = vadd.f32 0.0, %v1433
  %v1435 = vpop.f32.mrb[0].mxu0
  %v1436 = vpop.f32.mrb[0].mxu0
  %v1437 = vadd.f32 0.0, %v1436
  %v1438 = vpop.f32.mrb[0].mxu0
  %1439 = vdwg.mxu0
  %v1440 = vld [vmem:[%s5 + $0x60] sm:$0xf]
  %v1441 = vld [vmem:[%s5 + $0x64] sm:$0xf]
  %v1442 = vld [vmem:[%s5 + $0x68] sm:$0xf]
  %v1443 = vld [vmem:[%s5 + $0x6c] sm:$0xf]
  %v1444 = vld [vmem:[%s5 + $0x70] sm:$0xf]
  %v1445 = vld [vmem:[%s5 + $0x74] sm:$0xf]
  %v1446 = vld [vmem:[%s5 + $0x78] sm:$0xf]
  %v1447 = vld [vmem:[%s5 + $0x7c] sm:$0xf]
  %v1448 = vpack.c.bf16 %v1437, %v1434
  %v1457 = vunpack.c.l.b16 %v1440
  %v1458 = vunpack.c.l.b16 %v1441
  %v1459 = vunpack.c.l.b16 %v1442
  %v1460 = vunpack.c.l.b16 %v1443
  %v1461 = vunpack.c.l.b16 %v1444
  %v1462 = vunpack.c.l.b16 %v1445
  %v1463 = vunpack.c.l.b16 %v1446
  %v1464 = vunpack.c.l.b16 %v1447
  %v1465 = vpack.c.b16 %v1458, %v1457
  %v1466 = vpack.c.b16 %v1460, %v1459
  %v1467 = vpack.c.b16 %v1462, %v1461
  %v1468 = vpack.c.b16 %v1464, %v1463
  %v1474 = vsel %vm43, %v1448, 0
  %1476 = vmatprep.subr.bf16.mxu0 0
  %1477 = vmatpush1.bf16.msra.mxu0 %v1465
  %1478 = vmatprep.subr.bf16.mxu0 0
  %1479 = vmatpush1.bf16.msra.mxu0 %v1466
  %1480 = vmatprep.subr.bf16.mxu0 0
  %1481 = vmatpush1.bf16.msra.mxu0 %v1467
  %1482 = vmatprep.subr.bf16.mxu0 0
  %1483 = vmatpush1.bf16.msra.mxu0 %v1468
  %1484 = vmatprep.subr.bf16.mxu0 0
  %1485 = vmatpush1.bf16.msra.mxu0 0
  %1486 = vmatprep.subr.bf16.mxu0 0
  %1487 = vmatpush1.bf16.msra.mxu0 0
  %1488 = vmatprep.subr.bf16.mxu0 0
  %1489 = vmatpush1.bf16.msra.mxu0 0
  %1490 = vmatprep.subr.bf16.mxu0 0
  %1491 = vmatpush1.bf16.msra.mxu0 0
  %1492 = vmatprep.subr.bf16.mxu0 0
  %1493 = vmatpush1.bf16.msra.mxu0 0
  %1494 = vmatprep.subr.bf16.mxu0 0
  %1495 = vmatpush1.bf16.msra.mxu0 0
  %1496 = vmatprep.subr.bf16.mxu0 0
  %1497 = vmatpush1.bf16.msra.mxu0 0
  %1498 = vmatprep.subr.bf16.mxu0 0
  %1499 = vmatpush1.bf16.msra.mxu0 0
  %1500 = vmatprep.subr.bf16.mxu0 0
  %1501 = vmatpush1.bf16.msra.mxu0 0
  %1502 = vmatprep.subr.bf16.mxu0 0
  %1503 = vmatpush1.bf16.msra.mxu0 0
  %1504 = vmatprep.subr.bf16.mxu0 0
  %1505 = vmatpush1.bf16.msra.mxu0 0
  %1506 = vmatprep.subr.bf16.mxu0 0
  %1507 = vmatpush1.bf16.msra.mxu0 0
  %1508 = vmatprep.mubr.bf16.mxu0 0
  %1509 = vmatmul.mubr.bf16.gmra.mrb[0].mxu0 %v1474
  %v1510 = vpop.f32.mrb[0].mxu0
  %v1511 = vadd.f32 0.0, %v1510
  %v1512 = vpop.f32.mrb[0].mxu0
  %v1513 = vpop.f32.mrb[0].mxu0
  %v1514 = vadd.f32 0.0, %v1513
  %v1515 = vpop.f32.mrb[0].mxu0
  %1516 = vdwg.mxu0
  %v1517 = vadd.f32 %v117, %v1511
  %v1518 = vadd.f32 %v122, %v1514
  %v1519 = vld [vmem:[%s7 + $0x2] sm:$0x1]
  %v1520 = vld [vmem:[%s7 + $0x3] sm:$0x1]
  %v1521 = vsel %vm43, %v1517, 0.0
  %1522 = vadd.xlane.f32.xlu0 %v1521
  %v1523 = vpop.xlane.xlu0 %1522
  %v1524 = vsel %vm43, %v1518, 0.0
  %1525 = vadd.xlane.f32.xlu0 %v1524
  %v1526 = vpop.xlane.xlu0 %1525
  %v1527 = vrcp.pop 64.0
  %v1528 = vmul.f32 %v1523, %v1527
  %v1529 = vmul.f32 %v1526, %v1527
  %v1530 = vsub.f32 %v1517, %v1528
  %v1531 = vsub.f32 %v1518, %v1529
  %v1532 = vmul.f32 %v1530, %v1530
  %v1533 = vmul.f32 %v1531, %v1531
  %v1534 = vsel %vm43, %v1532, 0.0
  %1535 = vadd.xlane.f32.xlu0 %v1534
  %v1536 = vpop.xlane.xlu0 %1535
  %v1537 = vsel %vm43, %v1533, 0.0
  %1538 = vadd.xlane.f32.xlu0 %v1537
  %v1539 = vpop.xlane.xlu0 %1538
  %v1540 = vmul.f32 %v1536, %v1527
  %v1541 = vmul.f32 %v1539, %v1527
  %v1542 = vadd.f32 %v1540, 1e-05
  %v1543 = vadd.f32 %v1541, 1e-05
  %v1544 = vrsqrt.pop %v1542
  %v1545 = vrsqrt.pop %v1543
  %v1546 = vmul.f32 %v1530, %v1544
  %v1547 = vmul.f32 %v1531, %v1545
  %v1548 = vlaneseq
  %v1549 = vshrl.u32 %v1548, 7
  %v1550 = vsub.s32 0, %v1549
  %v1551 = vrot.slane %v1519, %v1550
  %v1552 = vmul.f32 %v1546, %v1551
  %v1553 = vmul.f32 %v1547, %v1551
  %v1554 = vlaneseq
  %v1555 = vshrl.u32 %v1554, 7
  %v1556 = vsub.s32 0, %v1555
  %v1557 = vrot.slane %v1520, %v1556
  %v1558 = vadd.f32 %v1552, %v1557
  %v1559 = vadd.f32 %v1553, %v1557
  %v1560 = vld [vmem:[%s5 + $0x80] sm:$0xf]
  %v1561 = vld [vmem:[%s5 + $0x84] sm:$0xf]
  %v1562 = vld [vmem:[%s5 + $0x88] sm:$0xf]
  %v1563 = vld [vmem:[%s5 + $0x8c] sm:$0xf]
  %v1564 = vld [vmem:[%s5 + $0x90] sm:$0xf]
  %v1565 = vld [vmem:[%s5 + $0x94] sm:$0xf]
  %v1566 = vld [vmem:[%s5 + $0x98] sm:$0xf]
  %v1567 = vld [vmem:[%s5 + $0x9c] sm:$0xf]
  %v1568 = vpack.c.bf16 %v1559, %v1558
  %v1577 = vunpack.c.l.b16 %v1560
  %v1578 = vunpack.c.l.b16 %v1561
  %v1579 = vunpack.c.l.b16 %v1562
  %v1580 = vunpack.c.l.b16 %v1563
  %v1581 = vunpack.c.l.b16 %v1564
  %v1582 = vunpack.c.l.b16 %v1565
  %v1583 = vunpack.c.l.b16 %v1566
  %v1584 = vunpack.c.l.b16 %v1567
  %v1585 = vpack.c.b16 %v1578, %v1577
  %v1586 = vpack.c.b16 %v1580, %v1579
  %v1587 = vpack.c.b16 %v1582, %v1581
  %v1588 = vpack.c.b16 %v1584, %v1583
  %v1594 = vsel %vm43, %v1568, 0
  %1596 = vmatprep.subr.bf16.mxu0 0
  %1597 = vmatpush1.bf16.msra.mxu0 %v1585
  %1598 = vmatprep.subr.bf16.mxu0 0
  %1599 = vmatpush1.bf16.msra.mxu0 %v1586
  %1600 = vmatprep.subr.bf16.mxu0 0
  %1601 = vmatpush1.bf16.msra.mxu0 %v1587
  %1602 = vmatprep.subr.bf16.mxu0 0
  %1603 = vmatpush1.bf16.msra.mxu0 %v1588
  %1604 = vmatprep.subr.bf16.mxu0 0
  %1605 = vmatpush1.bf16.msra.mxu0 0
  %1606 = vmatprep.subr.bf16.mxu0 0
  %1607 = vmatpush1.bf16.msra.mxu0 0
  %1608 = vmatprep.subr.bf16.mxu0 0
  %1609 = vmatpush1.bf16.msra.mxu0 0
  %1610 = vmatprep.subr.bf16.mxu0 0
  %1611 = vmatpush1.bf16.msra.mxu0 0
  %1612 = vmatprep.subr.bf16.mxu0 0
  %1613 = vmatpush1.bf16.msra.mxu0 0
  %1614 = vmatprep.subr.bf16.mxu0 0
  %1615 = vmatpush1.bf16.msra.mxu0 0
  %1616 = vmatprep.subr.bf16.mxu0 0
  %1617 = vmatpush1.bf16.msra.mxu0 0
  %1618 = vmatprep.subr.bf16.mxu0 0
  %1619 = vmatpush1.bf16.msra.mxu0 0
  %1620 = vmatprep.subr.bf16.mxu0 0
  %1621 = vmatpush1.bf16.msra.mxu0 0
  %1622 = vmatprep.subr.bf16.mxu0 0
  %1623 = vmatpush1.bf16.msra.mxu0 0
  %1624 = vmatprep.subr.bf16.mxu0 0
  %1625 = vmatpush1.bf16.msra.mxu0 0
  %1626 = vmatprep.subr.bf16.mxu0 0
  %1627 = vmatpush1.bf16.msra.mxu0 0
  %1628 = vmatprep.mubr.bf16.mxu0 0
  %1629 = vmatmul.mubr.bf16.gmra.mrb[0].mxu0 %v1594
  %v1630 = vpop.f32.mrb[0].mxu0
  %v1631 = vadd.f32 0.0, %v1630
  %v1632 = vpop.f32.mrb[0].mxu0
  %v1633 = vpop.f32.mrb[0].mxu0
  %v1634 = vadd.f32 0.0, %v1633
  %v1635 = vpop.f32.mrb[0].mxu0
  %1636 = vdwg.mxu0
  %v1637 = vld [vmem:[%s5 + $0xc0] sm:$0xf]
  %v1638 = vld [vmem:[%s5 + $0xc4] sm:$0xf]
  %v1639 = vld [vmem:[%s5 + $0xc8] sm:$0xf]
  %v1640 = vld [vmem:[%s5 + $0xcc] sm:$0xf]
  %v1641 = vld [vmem:[%s5 + $0xd0] sm:$0xf]
  %v1642 = vld [vmem:[%s5 + $0xd4] sm:$0xf]
  %v1643 = vld [vmem:[%s5 + $0xd8] sm:$0xf]
  %v1644 = vld [vmem:[%s5 + $0xdc] sm:$0xf]
  %v1645 = vpack.c.bf16 %v126, %v125
  %v1654 = vunpack.c.l.b16 %v1637
  %v1655 = vunpack.c.l.b16 %v1638
  %v1656 = vunpack.c.l.b16 %v1639
  %v1657 = vunpack.c.l.b16 %v1640
  %v1658 = vunpack.c.l.b16 %v1641
  %v1659 = vunpack.c.l.b16 %v1642
  %v1660 = vunpack.c.l.b16 %v1643
  %v1661 = vunpack.c.l.b16 %v1644
  %v1662 = vpack.c.b16 %v1655, %v1654
  %v1663 = vpack.c.b16 %v1657, %v1656
  %v1664 = vpack.c.b16 %v1659, %v1658
  %v1665 = vpack.c.b16 %v1661, %v1660
  %v1671 = vsel %vm43, %v1645, 0
  %1673 = vmatprep.subr.bf16.mxu0 0
  %1674 = vmatpush1.bf16.msra.mxu0 %v1662
  %1675 = vmatprep.subr.bf16.mxu0 0
  %1676 = vmatpush1.bf16.msra.mxu0 %v1663
  %1677 = vmatprep.subr.bf16.mxu0 0
  %1678 = vmatpush1.bf16.msra.mxu0 %v1664
  %1679 = vmatprep.subr.bf16.mxu0 0
  %1680 = vmatpush1.bf16.msra.mxu0 %v1665
  %1681 = vmatprep.subr.bf16.mxu0 0
  %1682 = vmatpush1.bf16.msra.mxu0 0
  %1683 = vmatprep.subr.bf16.mxu0 0
  %1684 = vmatpush1.bf16.msra.mxu0 0
  %1685 = vmatprep.subr.bf16.mxu0 0
  %1686 = vmatpush1.bf16.msra.mxu0 0
  %1687 = vmatprep.subr.bf16.mxu0 0
  %1688 = vmatpush1.bf16.msra.mxu0 0
  %1689 = vmatprep.subr.bf16.mxu0 0
  %1690 = vmatpush1.bf16.msra.mxu0 0
  %1691 = vmatprep.subr.bf16.mxu0 0
  %1692 = vmatpush1.bf16.msra.mxu0 0
  %1693 = vmatprep.subr.bf16.mxu0 0
  %1694 = vmatpush1.bf16.msra.mxu0 0
  %1695 = vmatprep.subr.bf16.mxu0 0
  %1696 = vmatpush1.bf16.msra.mxu0 0
  %1697 = vmatprep.subr.bf16.mxu0 0
  %1698 = vmatpush1.bf16.msra.mxu0 0
  %1699 = vmatprep.subr.bf16.mxu0 0
  %1700 = vmatpush1.bf16.msra.mxu0 0
  %1701 = vmatprep.subr.bf16.mxu0 0
  %1702 = vmatpush1.bf16.msra.mxu0 0
  %1703 = vmatprep.subr.bf16.mxu0 0
  %1704 = vmatpush1.bf16.msra.mxu0 0
  %1705 = vmatprep.mubr.bf16.mxu0 0
  %1706 = vmatmul.mubr.bf16.gmra.mrb[0].mxu0 %v1671
  %v1707 = vpop.f32.mrb[0].mxu0
  %v1708 = vadd.f32 0.0, %v1707
  %v1709 = vpop.f32.mrb[0].mxu0
  %v1710 = vpop.f32.mrb[0].mxu0
  %v1711 = vadd.f32 0.0, %v1710
  %v1712 = vpop.f32.mrb[0].mxu0
  %1713 = vdwg.mxu0
  %v1714 = vld [vmem:[%s5 + $0xa0] sm:$0xf]
  %v1715 = vld [vmem:[%s5 + $0xa4] sm:$0xf]
  %v1716 = vld [vmem:[%s5 + $0xa8] sm:$0xf]
  %v1717 = vld [vmem:[%s5 + $0xac] sm:$0xf]
  %v1718 = vld [vmem:[%s5 + $0xb0] sm:$0xf]
  %v1719 = vld [vmem:[%s5 + $0xb4] sm:$0xf]
  %v1720 = vld [vmem:[%s5 + $0xb8] sm:$0xf]
  %v1721 = vld [vmem:[%s5 + $0xbc] sm:$0xf]
  %v1730 = vunpack.c.l.b16 %v1714
  %v1731 = vunpack.c.l.b16 %v1715
  %v1732 = vunpack.c.l.b16 %v1716
  %v1733 = vunpack.c.l.b16 %v1717
  %v1734 = vunpack.c.l.b16 %v1718
  %v1735 = vunpack.c.l.b16 %v1719
  %v1736 = vunpack.c.l.b16 %v1720
  %v1737 = vunpack.c.l.b16 %v1721
  %v1738 = vpack.c.b16 %v1731, %v1730
  %v1739 = vpack.c.b16 %v1733, %v1732
  %v1740 = vpack.c.b16 %v1735, %v1734
  %v1741 = vpack.c.b16 %v1737, %v1736
  %1746 = vxpose.xlu0.c.b16.start [1/8] %v1738, 128
  %1747 = vxpose.xlu0.c.b16.cont [2/8] %v1739, 128
  %1748 = vxpose.xlu0.c.b16.cont [3/8] %v1740, 128
  %1749 = vxpose.xlu0.c.b16.cont [4/8] %v1741, 128
  %1750 = vxpose.xlu0.c.b16.cont [5/8] 0, 128
  %1751 = vxpose.xlu0.c.b16.cont [6/8] 0, 128
  %1752 = vxpose.xlu0.c.b16.cont [7/8] 0, 128
  %1753 = vxpose.xlu0.c.b16.end [8/8] 0, 128
  %v1754 = vpop.trf.xlu0
  %v1755 = vpop.trf.xlu0
  %v1756 = vpop.trf.xlu0
  %v1757 = vpop.trf.xlu0
  %v1758 = vpop.trf.xlu0
  %v1759 = vpop.trf.xlu0
  %v1760 = vpop.trf.xlu0
  %v1761 = vpop.trf.xlu0
  %v1763 = vsel %vm43, %v1754, 0
  %v1766 = vsel %vm43, %v1755, 0
  %v1769 = vsel %vm43, %v1756, 0
  %v1772 = vsel %vm43, %v1757, 0
  %1774 = vmatprep.subr.bf16.mxu0 0
  %1775 = vmatpush1.bf16.xpose.msra.mxu0 %v1671
  %1776 = vmatprep.subr.bf16.mxu0 0
  %1777 = vmatpush1.bf16.xpose.msra.mxu0 0
  %1778 = vmatprep.subr.bf16.mxu0 0
  %1779 = vmatpush1.bf16.xpose.msra.mxu0 0
  %1780 = vmatprep.subr.bf16.mxu0 0
  %1781 = vmatpush1.bf16.xpose.msra.mxu0 0
  %1782 = vmatprep.subr.bf16.mxu0 0
  %1783 = vmatpush1.bf16.xpose.msra.mxu0 0
  %1784 = vmatprep.subr.bf16.mxu0 0
  %1785 = vmatpush1.bf16.xpose.msra.mxu0 0
  %1786 = vmatprep.subr.bf16.mxu0 0
  %1787 = vmatpush1.bf16.xpose.msra.mxu0 0
  %1788 = vmatprep.subr.bf16.mxu0 0
  %1789 = vmatpush1.bf16.xpose.msra.mxu0 0
  %1790 = vmatprep.subr.bf16.mxu0 0
  %1791 = vmatpush1.bf16.xpose.msra.mxu0 0
  %1792 = vmatprep.subr.bf16.mxu0 0
  %1793 = vmatpush1.bf16.xpose.msra.mxu0 0
  %1794 = vmatprep.subr.bf16.mxu0 0
  %1795 = vmatpush1.bf16.xpose.msra.mxu0 0
  %1796 = vmatprep.subr.bf16.mxu0 0
  %1797 = vmatpush1.bf16.xpose.msra.mxu0 0
  %1798 = vmatprep.subr.bf16.mxu0 0
  %1799 = vmatpush1.bf16.xpose.msra.mxu0 0
  %1800 = vmatprep.subr.bf16.mxu0 0
  %1801 = vmatpush1.bf16.xpose.msra.mxu0 0
  %1802 = vmatprep.subr.bf16.mxu0 0
  %1803 = vmatpush1.bf16.xpose.msra.mxu0 0
  %1804 = vmatprep.subr.bf16.mxu0 0
  %1805 = vmatpush1.bf16.xpose.msra.mxu0 0
  %1806 = vmatprep.mubr.bf16.mxu0 0
  %1807 = vmatmul.mubr.bf16.gmra.mrb[0].mxu0 %v1763
  %v1808 = vpop.f32.mrb[0].mxu0
  %v1809 = vadd.f32 0.0, %v1808
  %v1810 = vpop.f32.mrb[0].mxu0
  %v1811 = vpop.f32.mrb[0].mxu0
  %v1812 = vadd.f32 0.0, %v1811
  %v1813 = vpop.f32.mrb[0].mxu0
  %1814 = vmatprep.mubr.bf16.mxu0 0
  %1815 = vmatmul.mubr.bf16.gmra.mrb[0].mxu0 %v1766
  %v1816 = vpop.f32.mrb[0].mxu0
  %v1817 = vadd.f32 0.0, %v1816
  %v1818 = vpop.f32.mrb[0].mxu0
  %v1819 = vpop.f32.mrb[0].mxu0
  %v1820 = vadd.f32 0.0, %v1819
  %v1821 = vpop.f32.mrb[0].mxu0
  %1822 = vmatprep.mubr.bf16.mxu0 0
  %1823 = vmatmul.mubr.bf16.gmra.mrb[0].mxu0 %v1769
  %v1824 = vpop.f32.mrb[0].mxu0
  %v1825 = vadd.f32 0.0, %v1824
  %v1826 = vpop.f32.mrb[0].mxu0
  %v1827 = vpop.f32.mrb[0].mxu0
  %v1828 = vadd.f32 0.0, %v1827
  %v1829 = vpop.f32.mrb[0].mxu0
  %1830 = vmatprep.mubr.bf16.mxu0 0
  %1831 = vmatmul.mubr.bf16.gmra.mrb[0].mxu0 %v1772
  %v1832 = vpop.f32.mrb[0].mxu0
  %v1833 = vadd.f32 0.0, %v1832
  %v1834 = vpop.f32.mrb[0].mxu0
  %v1835 = vpop.f32.mrb[0].mxu0
  %v1836 = vadd.f32 0.0, %v1835
  %v1837 = vpop.f32.mrb[0].mxu0
  %1838 = vdwg.mxu0
  %v1839 = vpack.c.bf16 %v1812, %v1809
  %v1840 = vpack.c.bf16 %v1820, %v1817
  %v1841 = vpack.c.bf16 %v1828, %v1825
  %v1842 = vpack.c.bf16 %v1836, %v1833
  %v1844 = vsel %vm468, %v1839, 0
  %v1847 = vsel %vm468, %v1840, 0
  %v1850 = vsel %vm468, %v1841, 0
  %v1853 = vsel %vm468, %v1842, 0
  %1855 = vmatprep.subr.bf16.mxu0 %v465
  %1856 = vmatpush1.bf16.msra.mxu0 %v464
  %1857 = vmatprep.subr.bf16.mxu0 0
  %1858 = vmatpush1.bf16.msra.mxu0 0
  %1859 = vmatprep.subr.bf16.mxu0 0
  %1860 = vmatpush1.bf16.msra.mxu0 0
  %1861 = vmatprep.subr.bf16.mxu0 0
  %1862 = vmatpush1.bf16.msra.mxu0 0
  %1863 = vmatprep.subr.bf16.mxu0 0
  %1864 = vmatpush1.bf16.msra.mxu0 0
  %1865 = vmatprep.subr.bf16.mxu0 0
  %1866 = vmatpush1.bf16.msra.mxu0 0
  %1867 = vmatprep.subr.bf16.mxu0 0
  %1868 = vmatpush1.bf16.msra.mxu0 0
  %1869 = vmatprep.subr.bf16.mxu0 0
  %1870 = vmatpush1.bf16.msra.mxu0 0
  %1871 = vmatprep.subr.bf16.mxu0 0
  %1872 = vmatpush1.bf16.msra.mxu0 0
  %1873 = vmatprep.subr.bf16.mxu0 0
  %1874 = vmatpush1.bf16.msra.mxu0 0
  %1875 = vmatprep.subr.bf16.mxu0 0
  %1876 = vmatpush1.bf16.msra.mxu0 0
  %1877 = vmatprep.subr.bf16.mxu0 0
  %1878 = vmatpush1.bf16.msra.mxu0 0
  %1879 = vmatprep.subr.bf16.mxu0 0
  %1880 = vmatpush1.bf16.msra.mxu0 0
  %1881 = vmatprep.subr.bf16.mxu0 0
  %1882 = vmatpush1.bf16.msra.mxu0 0
  %1883 = vmatprep.subr.bf16.mxu0 0
  %1884 = vmatpush1.bf16.msra.mxu0 0
  %1885 = vmatprep.subr.bf16.mxu0 0
  %1886 = vmatpush1.bf16.msra.mxu0 0
  %1887 = vmatprep.mubr.bf16.mxu0 0
  %1888 = vmatmul.mubr.bf16.gmra.mrb[0].mxu0 %v1844
  %v1889 = vpop.f32.mrb[0].mxu0
  %v1890 = vadd.f32 0.0, %v1889
  %v1891 = vpop.f32.mrb[0].mxu0
  %v1892 = vadd.f32 0.0, %v1891
  %v1893 = vpop.f32.mrb[0].mxu0
  %v1894 = vadd.f32 0.0, %v1893
  %v1895 = vpop.f32.mrb[0].mxu0
  %v1896 = vadd.f32 0.0, %v1895
  %1897 = vmatprep.mubr.bf16.mxu0 0
  %1898 = vmatmul.mubr.bf16.gmra.mrb[0].mxu0 %v1847
  %v1899 = vpop.f32.mrb[0].mxu0
  %v1900 = vadd.f32 0.0, %v1899
  %v1901 = vpop.f32.mrb[0].mxu0
  %v1902 = vadd.f32 0.0, %v1901
  %v1903 = vpop.f32.mrb[0].mxu0
  %v1904 = vadd.f32 0.0, %v1903
  %v1905 = vpop.f32.mrb[0].mxu0
  %v1906 = vadd.f32 0.0, %v1905
  %1907 = vmatprep.mubr.bf16.mxu0 0
  %1908 = vmatmul.mubr.bf16.gmra.mrb[0].mxu0 %v1850
  %v1909 = vpop.f32.mrb[0].mxu0
  %v1910 = vadd.f32 0.0, %v1909
  %v1911 = vpop.f32.mrb[0].mxu0
  %v1912 = vadd.f32 0.0, %v1911
  %v1913 = vpop.f32.mrb[0].mxu0
  %v1914 = vadd.f32 0.0, %v1913
  %v1915 = vpop.f32.mrb[0].mxu0
  %v1916 = vadd.f32 0.0, %v1915
  %1917 = vmatprep.mubr.bf16.mxu0 0
  %1918 = vmatmul.mubr.bf16.gmra.mrb[0].mxu0 %v1853
  %v1919 = vpop.f32.mrb[0].mxu0
  %v1920 = vadd.f32 0.0, %v1919
  %v1921 = vpop.f32.mrb[0].mxu0
  %v1922 = vadd.f32 0.0, %v1921
  %v1923 = vpop.f32.mrb[0].mxu0
  %v1924 = vadd.f32 0.0, %v1923
  %v1925 = vpop.f32.mrb[0].mxu0
  %v1926 = vadd.f32 0.0, %v1925
  %1927 = vdwg.mxu0
  %v1928 = vmul.f32 %v1890, %v129
  %v1929 = vmul.f32 %v1892, %v130
  %v1930 = vmul.f32 %v1894, %v131
  %v1931 = vmul.f32 %v1896, %v132
  %v1932 = vmul.f32 %v1900, %v133
  %v1933 = vmul.f32 %v1902, %v134
  %v1934 = vmul.f32 %v1904, %v135
  %v1935 = vmul.f32 %v1906, %v136
  %v1936 = vmul.f32 %v1910, %v137
  %v1937 = vmul.f32 %v1912, %v138
  %v1938 = vmul.f32 %v1914, %v139
  %v1939 = vmul.f32 %v1916, %v140
  %v1940 = vmul.f32 %v1920, %v141
  %v1941 = vmul.f32 %v1922, %v142
  %v1942 = vmul.f32 %v1924, %v143
  %v1943 = vmul.f32 %v1926, %v144
  %v1944 = vpack.c.bf16 %v1634, %v1631
  %v1945 = vpack.c.bf16 %v1930, %v1928
  %v1946 = vpack.c.bf16 %v1931, %v1929
  %v1947 = vpack.c.bf16 %v1934, %v1932
  %v1948 = vpack.c.bf16 %v1935, %v1933
  %v1949 = vpack.c.bf16 %v1938, %v1936
  %v1950 = vpack.c.bf16 %v1939, %v1937
  %v1951 = vpack.c.bf16 %v1942, %v1940
  %v1952 = vpack.c.bf16 %v1943, %v1941
  %v1954 = vsel %vm43, %v1944, 0
  %1956 = vmatprep.subr.bf16.mxu0 %v1946
  %1957 = vmatpush1.bf16.msra.mxu0 %v1945
  %1958 = vmatprep.subr.bf16.mxu0 %v1948
  %1959 = vmatpush1.bf16.msra.mxu0 %v1947
  %1960 = vmatprep.subr.bf16.mxu0 %v1950
  %1961 = vmatpush1.bf16.msra.mxu0 %v1949
  %1962 = vmatprep.subr.bf16.mxu0 %v1952
  %1963 = vmatpush1.bf16.msra.mxu0 %v1951
  %1964 = vmatprep.subr.bf16.mxu0 0
  %1965 = vmatpush1.bf16.msra.mxu0 0
  %1966 = vmatprep.subr.bf16.mxu0 0
  %1967 = vmatpush1.bf16.msra.mxu0 0
  %1968 = vmatprep.subr.bf16.mxu0 0
  %1969 = vmatpush1.bf16.msra.mxu0 0
  %1970 = vmatprep.subr.bf16.mxu0 0
  %1971 = vmatpush1.bf16.msra.mxu0 0
  %1972 = vmatprep.subr.bf16.mxu0 0
  %1973 = vmatpush1.bf16.msra.mxu0 0
  %1974 = vmatprep.subr.bf16.mxu0 0
  %1975 = vmatpush1.bf16.msra.mxu0 0
  %1976 = vmatprep.subr.bf16.mxu0 0
  %1977 = vmatpush1.bf16.msra.mxu0 0
  %1978 = vmatprep.subr.bf16.mxu0 0
  %1979 = vmatpush1.bf16.msra.mxu0 0
  %1980 = vmatprep.subr.bf16.mxu0 0
  %1981 = vmatpush1.bf16.msra.mxu0 0
  %1982 = vmatprep.subr.bf16.mxu0 0
  %1983 = vmatpush1.bf16.msra.mxu0 0
  %1984 = vmatprep.subr.bf16.mxu0 0
  %1985 = vmatpush1.bf16.msra.mxu0 0
  %1986 = vmatprep.subr.bf16.mxu0 0
  %1987 = vmatpush1.bf16.msra.mxu0 0
  %1988 = vmatprep.mubr.bf16.mxu0 0
  %1989 = vmatmul.mubr.bf16.gmra.mrb[0].mxu0 %v1954
  %v1990 = vpop.f32.mrb[0].mxu0
  %v1991 = vadd.f32 0.0, %v1990
  %v1992 = vpop.f32.mrb[0].mxu0
  %v1993 = vadd.f32 0.0, %v1992
  %v1994 = vpop.f32.mrb[0].mxu0
  %v1995 = vadd.f32 0.0, %v1994
  %v1996 = vpop.f32.mrb[0].mxu0
  %v1997 = vadd.f32 0.0, %v1996
  %1998 = vdwg.mxu0
  %v1999 = vmul.f32 %v1991, 0.5
  %v2000 = vmul.f32 %v1993, 0.5
  %v2001 = vmul.f32 %v1995, 0.5
  %v2002 = vmul.f32 %v1997, 0.5
  %v2003 = vld [vmem:[%s1 + $0xa0] sm:$0xff]
  %v2004 = vld [vmem:[%s1 + $0xa8] sm:$0xff]
  %v2005 = vld [vmem:[%s1 + $0xb0] sm:$0xff]
  %v2006 = vld [vmem:[%s1 + $0xb8] sm:$0xff]
  %v2007 = vadd.f32 %v1999, %v2003
  %v2008 = vadd.f32 %v2000, %v2004
  %v2009 = vadd.f32 %v2001, %v2005
  %v2010 = vadd.f32 %v2002, %v2006
  %v2011 = vmax.f32 %v2007, %v2008
  %2012 = vmax.xlane.f32.xlu0 %v2011
  %v2013 = vpop.xlane.xlu0 %2012
  %v2014 = vmax.f32 %v2009, %v2010
  %2015 = vmax.xlane.f32.xlu0 %v2014
  %v2016 = vpop.xlane.xlu0 %2015
  %v2017 = vsub.f32 %v2007, %v2013
  %v2018 = vsub.f32 %v2008, %v2013
  %v2019 = vsub.f32 %v2009, %v2016
  %v2020 = vsub.f32 %v2010, %v2016
  %v2021 = vmul.f32 %v2017, 1.442695
  %v2022 = vpow.pop %v2021
  %v2023 = vmul.f32 %v2018, 1.442695
  %v2024 = vpow.pop %v2023
  %v2025 = vmul.f32 %v2019, 1.442695
  %v2026 = vpow.pop %v2025
  %v2027 = vmul.f32 %v2020, 1.442695
  %v2028 = vpow.pop %v2027
  %v2029 = vpack.c.bf16 %v2026, %v2022
  %v2030 = vpack.c.bf16 %v2028, %v2024
  %2031 = vmatprep.subr.bf16.mxu0 %v909
  %2032 = vmatpush1.bf16.msra.mxu0 %v908
  %2033 = vmatprep.subr.bf16.mxu0 %v911
  %2034 = vmatpush1.bf16.msra.mxu0 %v910
  %2035 = vmatprep.subr.bf16.mxu0 %v913
  %2036 = vmatpush1.bf16.msra.mxu0 %v912
  %2037 = vmatprep.subr.bf16.mxu0 %v915
  %2038 = vmatpush1.bf16.msra.mxu0 %v914
  %2039 = vmatprep.subr.bf16.mxu0 %v917
  %2040 = vmatpush1.bf16.msra.mxu0 %v916
  %2041 = vmatprep.subr.bf16.mxu0 %v919
  %2042 = vmatpush1.bf16.msra.mxu0 %v918
  %2043 = vmatprep.subr.bf16.mxu0 %v921
  %2044 = vmatpush1.bf16.msra.mxu0 %v920
  %2045 = vmatprep.subr.bf16.mxu0 %v923
  %2046 = vmatpush1.bf16.msra.mxu0 %v922
  %2047 = vmatprep.subr.bf16.mxu0 %v925
  %2048 = vmatpush1.bf16.msra.mxu0 %v924
  %2049 = vmatprep.subr.bf16.mxu0 %v927
  %2050 = vmatpush1.bf16.msra.mxu0 %v926
  %2051 = vmatprep.subr.bf16.mxu0 %v929
  %2052 = vmatpush1.bf16.msra.mxu0 %v928
  %2053 = vmatprep.subr.bf16.mxu0 %v931
  %2054 = vmatpush1.bf16.msra.mxu0 %v930
  %2055 = vmatprep.subr.bf16.mxu0 %v933
  %2056 = vmatpush1.bf16.msra.mxu0 %v932
  %2057 = vmatprep.subr.bf16.mxu0 %v935
  %2058 = vmatpush1.bf16.msra.mxu0 %v934
  %2059 = vmatprep.subr.bf16.mxu0 %v937
  %2060 = vmatpush1.bf16.msra.mxu0 %v936
  %2061 = vmatprep.subr.bf16.mxu0 %v939
  %2062 = vmatpush1.bf16.msra.mxu0 %v938
  %2063 = vmatprep.mubr.bf16.mxu0 %v2030
  %2064 = vmatmul.mubr.bf16.gmra.mrb[0].mxu0 %v2029
  %v2065 = vpop.f32.mrb[0].mxu0
  %v2066 = vadd.f32 0.0, %v2065
  %v2067 = vpop.f32.mrb[0].mxu0
  %v2068 = vadd.f32 0.0, %v2067
  %v2069 = vpop.f32.mrb[0].mxu0
  %v2070 = vadd.f32 0.0, %v2069
  %v2071 = vpop.f32.mrb[0].mxu0
  %v2072 = vadd.f32 0.0, %v2071
  %2073 = vdwg.mxu0
  %v2074 = vmax.f32 %v2066, 1e-30
  %v2075 = vmax.f32 %v2068, 1e-30
  %v2076 = vmax.f32 %v2070, 1e-30
  %v2077 = vmax.f32 %v2072, 1e-30
  %v2078 = vrcp.pop %v2074
  %v2079 = vrcp.pop %v2075
  %v2080 = vrcp.pop %v2076
  %v2081 = vrcp.pop %v2077
  %v2082 = vmul.f32 %v2022, %v2078
  %v2083 = vmul.f32 %v2024, %v2079
  %v2084 = vmul.f32 %v2026, %v2080
  %v2085 = vmul.f32 %v2028, %v2081
  %v2086 = vpack.c.bf16 %v1711, %v1708
  %2087 = vmatprep.subr.bf16.mxu0 0
  %2088 = vmatpush1.bf16.msra.mxu0 %v2086
  %2089 = vmatprep.subr.bf16.mxu0 0
  %2090 = vmatpush1.bf16.msra.mxu0 0
  %2091 = vmatprep.subr.bf16.mxu0 0
  %2092 = vmatpush1.bf16.msra.mxu0 0
  %2093 = vmatprep.subr.bf16.mxu0 0
  %2094 = vmatpush1.bf16.msra.mxu0 0
  %2095 = vmatprep.subr.bf16.mxu0 0
  %2096 = vmatpush1.bf16.msra.mxu0 0
  %2097 = vmatprep.subr.bf16.mxu0 0
  %2098 = vmatpush1.bf16.msra.mxu0 0
  %2099 = vmatprep.subr.bf16.mxu0 0
  %2100 = vmatpush1.bf16.msra.mxu0 0
  %2101 = vmatprep.subr.bf16.mxu0 0
  %2102 = vmatpush1.bf16.msra.mxu0 0
  %2103 = vmatprep.subr.bf16.mxu0 0
  %2104 = vmatpush1.bf16.msra.mxu0 0
  %2105 = vmatprep.subr.bf16.mxu0 0
  %2106 = vmatpush1.bf16.msra.mxu0 0
  %2107 = vmatprep.subr.bf16.mxu0 0
  %2108 = vmatpush1.bf16.msra.mxu0 0
  %2109 = vmatprep.subr.bf16.mxu0 0
  %2110 = vmatpush1.bf16.msra.mxu0 0
  %2111 = vmatprep.subr.bf16.mxu0 0
  %2112 = vmatpush1.bf16.msra.mxu0 0
  %2113 = vmatprep.subr.bf16.mxu0 0
  %2114 = vmatpush1.bf16.msra.mxu0 0
  %2115 = vmatprep.subr.bf16.mxu0 0
  %2116 = vmatpush1.bf16.msra.mxu0 0
  %2117 = vmatprep.subr.bf16.mxu0 0
  %2118 = vmatpush1.bf16.msra.mxu0 0
  %2119 = vmatprep.mubr.bf16.mxu0 0
  %2120 = vmatmul.mubr.bf16.gmra.mrb[0].mxu0 %v1141
  %v2121 = vpop.f32.mrb[0].mxu0
  %v2122 = vadd.f32 0.0, %v2121
  %v2123 = vpop.f32.mrb[0].mxu0
  %v2124 = vpop.f32.mrb[0].mxu0
  %v2125 = vadd.f32 0.0, %v2124
  %v2126 = vpop.f32.mrb[0].mxu0
  %2127 = vmatprep.mubr.bf16.mxu0 0
  %2128 = vmatmul.mubr.bf16.gmra.mrb[0].mxu0 %v1144
  %v2129 = vpop.f32.mrb[0].mxu0
  %v2130 = vadd.f32 0.0, %v2129
  %v2131 = vpop.f32.mrb[0].mxu0
  %v2132 = vpop.f32.mrb[0].mxu0
  %v2133 = vadd.f32 0.0, %v2132
  %v2134 = vpop.f32.mrb[0].mxu0
  %2135 = vmatprep.mubr.bf16.mxu0 0
  %2136 = vmatmul.mubr.bf16.gmra.mrb[0].mxu0 %v1147
  %v2137 = vpop.f32.mrb[0].mxu0
  %v2138 = vadd.f32 0.0, %v2137
  %v2139 = vpop.f32.mrb[0].mxu0
  %v2140 = vpop.f32.mrb[0].mxu0
  %v2141 = vadd.f32 0.0, %v2140
  %v2142 = vpop.f32.mrb[0].mxu0
  %2143 = vmatprep.mubr.bf16.mxu0 0
  %2144 = vmatmul.mubr.bf16.gmra.mrb[0].mxu0 %v1150
  %v2145 = vpop.f32.mrb[0].mxu0
  %v2146 = vadd.f32 0.0, %v2145
  %v2147 = vpop.f32.mrb[0].mxu0
  %v2148 = vpop.f32.mrb[0].mxu0
  %v2149 = vadd.f32 0.0, %v2148
  %v2150 = vpop.f32.mrb[0].mxu0
  %2151 = vmatprep.mubr.bf16.mxu0 0
  %2152 = vmatmul.mubr.bf16.gmra.mrb[0].mxu0 %v1153
  %v2153 = vpop.f32.mrb[0].mxu0
  %v2154 = vadd.f32 0.0, %v2153
  %v2155 = vpop.f32.mrb[0].mxu0
  %v2156 = vpop.f32.mrb[0].mxu0
  %v2157 = vadd.f32 0.0, %v2156
  %v2158 = vpop.f32.mrb[0].mxu0
  %2159 = vmatprep.mubr.bf16.mxu0 0
  %2160 = vmatmul.mubr.bf16.gmra.mrb[0].mxu0 %v1156
  %v2161 = vpop.f32.mrb[0].mxu0
  %v2162 = vadd.f32 0.0, %v2161
  %v2163 = vpop.f32.mrb[0].mxu0
  %v2164 = vpop.f32.mrb[0].mxu0
  %v2165 = vadd.f32 0.0, %v2164
  %v2166 = vpop.f32.mrb[0].mxu0
  %2167 = vmatprep.mubr.bf16.mxu0 0
  %2168 = vmatmul.mubr.bf16.gmra.mrb[0].mxu0 %v1159
  %v2169 = vpop.f32.mrb[0].mxu0
  %v2170 = vadd.f32 0.0, %v2169
  %v2171 = vpop.f32.mrb[0].mxu0
  %v2172 = vpop.f32.mrb[0].mxu0
  %v2173 = vadd.f32 0.0, %v2172
  %v2174 = vpop.f32.mrb[0].mxu0
  %2175 = vmatprep.mubr.bf16.mxu0 0
  %2176 = vmatmul.mubr.bf16.gmra.mrb[0].mxu0 %v1162
  %v2177 = vpop.f32.mrb[0].mxu0
  %v2178 = vadd.f32 0.0, %v2177
  %v2179 = vpop.f32.mrb[0].mxu0
  %v2180 = vpop.f32.mrb[0].mxu0
  %v2181 = vadd.f32 0.0, %v2180
  %v2182 = vpop.f32.mrb[0].mxu0
  %2183 = vmatprep.mubr.bf16.mxu0 0
  %2184 = vmatmul.mubr.bf16.gmra.mrb[0].mxu0 %v1165
  %v2185 = vpop.f32.mrb[0].mxu0
  %v2186 = vadd.f32 0.0, %v2185
  %v2187 = vpop.f32.mrb[0].mxu0
  %v2188 = vpop.f32.mrb[0].mxu0
  %v2189 = vadd.f32 0.0, %v2188
  %v2190 = vpop.f32.mrb[0].mxu0
  %2191 = vmatprep.mubr.bf16.mxu0 0
  %2192 = vmatmul.mubr.bf16.gmra.mrb[0].mxu0 %v1168
  %v2193 = vpop.f32.mrb[0].mxu0
  %v2194 = vadd.f32 0.0, %v2193
  %v2195 = vpop.f32.mrb[0].mxu0
  %v2196 = vpop.f32.mrb[0].mxu0
  %v2197 = vadd.f32 0.0, %v2196
  %v2198 = vpop.f32.mrb[0].mxu0
  %2199 = vmatprep.mubr.bf16.mxu0 0
  %2200 = vmatmul.mubr.bf16.gmra.mrb[0].mxu0 %v1171
  %v2201 = vpop.f32.mrb[0].mxu0
  %v2202 = vadd.f32 0.0, %v2201
  %v2203 = vpop.f32.mrb[0].mxu0
  %v2204 = vpop.f32.mrb[0].mxu0
  %v2205 = vadd.f32 0.0, %v2204
  %v2206 = vpop.f32.mrb[0].mxu0
  %2207 = vmatprep.mubr.bf16.mxu0 0
  %2208 = vmatmul.mubr.bf16.gmra.mrb[0].mxu0 %v1174
  %v2209 = vpop.f32.mrb[0].mxu0
  %v2210 = vadd.f32 0.0, %v2209
  %v2211 = vpop.f32.mrb[0].mxu0
  %v2212 = vpop.f32.mrb[0].mxu0
  %v2213 = vadd.f32 0.0, %v2212
  %v2214 = vpop.f32.mrb[0].mxu0
  %2215 = vmatprep.mubr.bf16.mxu0 0
  %2216 = vmatmul.mubr.bf16.gmra.mrb[0].mxu0 %v1177
  %v2217 = vpop.f32.mrb[0].mxu0
  %v2218 = vadd.f32 0.0, %v2217
  %v2219 = vpop.f32.mrb[0].mxu0
  %v2220 = vpop.f32.mrb[0].mxu0
  %v2221 = vadd.f32 0.0, %v2220
  %v2222 = vpop.f32.mrb[0].mxu0
  %2223 = vmatprep.mubr.bf16.mxu0 0
  %2224 = vmatmul.mubr.bf16.gmra.mrb[0].mxu0 %v1180
  %v2225 = vpop.f32.mrb[0].mxu0
  %v2226 = vadd.f32 0.0, %v2225
  %v2227 = vpop.f32.mrb[0].mxu0
  %v2228 = vpop.f32.mrb[0].mxu0
  %v2229 = vadd.f32 0.0, %v2228
  %v2230 = vpop.f32.mrb[0].mxu0
  %2231 = vmatprep.mubr.bf16.mxu0 0
  %2232 = vmatmul.mubr.bf16.gmra.mrb[0].mxu0 %v1183
  %v2233 = vpop.f32.mrb[0].mxu0
  %v2234 = vadd.f32 0.0, %v2233
  %v2235 = vpop.f32.mrb[0].mxu0
  %v2236 = vpop.f32.mrb[0].mxu0
  %v2237 = vadd.f32 0.0, %v2236
  %v2238 = vpop.f32.mrb[0].mxu0
  %2239 = vmatprep.mubr.bf16.mxu0 0
  %2240 = vmatmul.mubr.bf16.gmra.mrb[0].mxu0 %v1186
  %v2241 = vpop.f32.mrb[0].mxu0
  %v2242 = vadd.f32 0.0, %v2241
  %v2243 = vpop.f32.mrb[0].mxu0
  %v2244 = vpop.f32.mrb[0].mxu0
  %v2245 = vadd.f32 0.0, %v2244
  %v2246 = vpop.f32.mrb[0].mxu0
  %2247 = vdwg.mxu0
  %v2248 = vmul.f32 %v2122, %v145
  %v2249 = vmul.f32 %v2125, %v146
  %v2250 = vmul.f32 %v2130, %v147
  %v2251 = vmul.f32 %v2133, %v148
  %v2252 = vmul.f32 %v2138, %v149
  %v2253 = vmul.f32 %v2141, %v150
  %v2254 = vmul.f32 %v2146, %v151
  %v2255 = vmul.f32 %v2149, %v152
  %v2256 = vmul.f32 %v2154, %v153
  %v2257 = vmul.f32 %v2157, %v154
  %v2258 = vmul.f32 %v2162, %v155
  %v2259 = vmul.f32 %v2165, %v156
  %v2260 = vmul.f32 %v2170, %v157
  %v2261 = vmul.f32 %v2173, %v158
  %v2262 = vmul.f32 %v2178, %v159
  %v2263 = vmul.f32 %v2181, %v160
  %v2264 = vmul.f32 %v2186, %v161
  %v2265 = vmul.f32 %v2189, %v162
  %v2266 = vmul.f32 %v2194, %v163
  %v2267 = vmul.f32 %v2197, %v164
  %v2268 = vmul.f32 %v2202, %v165
  %v2269 = vmul.f32 %v2205, %v166
  %v2270 = vmul.f32 %v2210, %v167
  %v2271 = vmul.f32 %v2213, %v168
  %v2272 = vmul.f32 %v2218, %v169
  %v2273 = vmul.f32 %v2221, %v170
  %v2274 = vmul.f32 %v2226, %v171
  %v2275 = vmul.f32 %v2229, %v172
  %v2276 = vmul.f32 %v2234, %v173
  %v2277 = vmul.f32 %v2237, %v174
  %v2278 = vmul.f32 %v2242, %v175
  %v2279 = vmul.f32 %v2245, %v176
  %v2280 = vpack.c.bf16 %v2084, %v2082
  %v2281 = vpack.c.bf16 %v2085, %v2083
  %v2282 = vpack.c.bf16 %v2249, %v2248
  %v2283 = vpack.c.bf16 %v2251, %v2250
  %v2284 = vpack.c.bf16 %v2253, %v2252
  %v2285 = vpack.c.bf16 %v2255, %v2254
  %v2286 = vpack.c.bf16 %v2257, %v2256
  %v2287 = vpack.c.bf16 %v2259, %v2258
  %v2288 = vpack.c.bf16 %v2261, %v2260
  %v2289 = vpack.c.bf16 %v2263, %v2262
  %v2290 = vpack.c.bf16 %v2265, %v2264
  %v2291 = vpack.c.bf16 %v2267, %v2266
  %v2292 = vpack.c.bf16 %v2269, %v2268
  %v2293 = vpack.c.bf16 %v2271, %v2270
  %v2294 = vpack.c.bf16 %v2273, %v2272
  %v2295 = vpack.c.bf16 %v2275, %v2274
  %v2296 = vpack.c.bf16 %v2277, %v2276
  %v2297 = vpack.c.bf16 %v2279, %v2278
  %2298 = vmatprep.subr.bf16.mxu0 0
  %2299 = vmatpush1.bf16.msra.mxu0 %v2282
  %2300 = vmatprep.subr.bf16.mxu0 0
  %2301 = vmatpush1.bf16.msra.mxu0 %v2283
  %2302 = vmatprep.subr.bf16.mxu0 0
  %2303 = vmatpush1.bf16.msra.mxu0 %v2284
  %2304 = vmatprep.subr.bf16.mxu0 0
  %2305 = vmatpush1.bf16.msra.mxu0 %v2285
  %2306 = vmatprep.subr.bf16.mxu0 0
  %2307 = vmatpush1.bf16.msra.mxu0 %v2286
  %2308 = vmatprep.subr.bf16.mxu0 0
  %2309 = vmatpush1.bf16.msra.mxu0 %v2287
  %2310 = vmatprep.subr.bf16.mxu0 0
  %2311 = vmatpush1.bf16.msra.mxu0 %v2288
  %2312 = vmatprep.subr.bf16.mxu0 0
  %2313 = vmatpush1.bf16.msra.mxu0 %v2289
  %2314 = vmatprep.subr.bf16.mxu0 0
  %2315 = vmatpush1.bf16.msra.mxu0 %v2290
  %2316 = vmatprep.subr.bf16.mxu0 0
  %2317 = vmatpush1.bf16.msra.mxu0 %v2291
  %2318 = vmatprep.subr.bf16.mxu0 0
  %2319 = vmatpush1.bf16.msra.mxu0 %v2292
  %2320 = vmatprep.subr.bf16.mxu0 0
  %2321 = vmatpush1.bf16.msra.mxu0 %v2293
  %2322 = vmatprep.subr.bf16.mxu0 0
  %2323 = vmatpush1.bf16.msra.mxu0 %v2294
  %2324 = vmatprep.subr.bf16.mxu0 0
  %2325 = vmatpush1.bf16.msra.mxu0 %v2295
  %2326 = vmatprep.subr.bf16.mxu0 0
  %2327 = vmatpush1.bf16.msra.mxu0 %v2296
  %2328 = vmatprep.subr.bf16.mxu0 0
  %2329 = vmatpush1.bf16.msra.mxu0 %v2297
  %2330 = vmatprep.mubr.bf16.mxu0 %v2281
  %2331 = vmatmul.mubr.bf16.gmra.mrb[0].mxu0 %v2280
  %v2332 = vpop.f32.mrb[0].mxu0
  %v2333 = vadd.f32 0.0, %v2332
  %v2334 = vpop.f32.mrb[0].mxu0
  %v2335 = vpop.f32.mrb[0].mxu0
  %v2336 = vadd.f32 0.0, %v2335
  %v2337 = vpop.f32.mrb[0].mxu0
  %2338 = vdwg.mxu0
  %v2339 = vld [vmem:[%s5 + $0xe0] sm:$0xf]
  %v2340 = vld [vmem:[%s5 + $0xe4] sm:$0xf]
  %v2341 = vld [vmem:[%s5 + $0xe8] sm:$0xf]
  %v2342 = vld [vmem:[%s5 + $0xec] sm:$0xf]
  %v2343 = vld [vmem:[%s5 + $0xf0] sm:$0xf]
  %v2344 = vld [vmem:[%s5 + $0xf4] sm:$0xf]
  %v2345 = vld [vmem:[%s5 + $0xf8] sm:$0xf]
  %v2346 = vld [vmem:[%s5 + $0xfc] sm:$0xf]
  %v2347 = vpack.c.bf16 %v2336, %v2333
  %v2356 = vunpack.c.l.b16 %v2339
  %v2357 = vunpack.c.l.b16 %v2340
  %v2358 = vunpack.c.l.b16 %v2341
  %v2359 = vunpack.c.l.b16 %v2342
  %v2360 = vunpack.c.l.b16 %v2343
  %v2361 = vunpack.c.l.b16 %v2344
  %v2362 = vunpack.c.l.b16 %v2345
  %v2363 = vunpack.c.l.b16 %v2346
  %v2364 = vpack.c.b16 %v2357, %v2356
  %v2365 = vpack.c.b16 %v2359, %v2358
  %v2366 = vpack.c.b16 %v2361, %v2360
  %v2367 = vpack.c.b16 %v2363, %v2362
  %v2373 = vsel %vm43, %v2347, 0
  %2375 = vmatprep.subr.bf16.mxu0 0
  %2376 = vmatpush1.bf16.msra.mxu0 %v2364
  %2377 = vmatprep.subr.bf16.mxu0 0
  %2378 = vmatpush1.bf16.msra.mxu0 %v2365
  %2379 = vmatprep.subr.bf16.mxu0 0
  %2380 = vmatpush1.bf16.msra.mxu0 %v2366
  %2381 = vmatprep.subr.bf16.mxu0 0
  %2382 = vmatpush1.bf16.msra.mxu0 %v2367
  %2383 = vmatprep.subr.bf16.mxu0 0
  %2384 = vmatpush1.bf16.msra.mxu0 0
  %2385 = vmatprep.subr.bf16.mxu0 0
  %2386 = vmatpush1.bf16.msra.mxu0 0
  %2387 = vmatprep.subr.bf16.mxu0 0
  %2388 = vmatpush1.bf16.msra.mxu0 0
  %2389 = vmatprep.subr.bf16.mxu0 0
  %2390 = vmatpush1.bf16.msra.mxu0 0
  %2391 = vmatprep.subr.bf16.mxu0 0
  %2392 = vmatpush1.bf16.msra.mxu0 0
  %2393 = vmatprep.subr.bf16.mxu0 0
  %2394 = vmatpush1.bf16.msra.mxu0 0
  %2395 = vmatprep.subr.bf16.mxu0 0
  %2396 = vmatpush1.bf16.msra.mxu0 0
  %2397 = vmatprep.subr.bf16.mxu0 0
  %2398 = vmatpush1.bf16.msra.mxu0 0
  %2399 = vmatprep.subr.bf16.mxu0 0
  %2400 = vmatpush1.bf16.msra.mxu0 0
  %2401 = vmatprep.subr.bf16.mxu0 0
  %2402 = vmatpush1.bf16.msra.mxu0 0
  %2403 = vmatprep.subr.bf16.mxu0 0
  %2404 = vmatpush1.bf16.msra.mxu0 0
  %2405 = vmatprep.subr.bf16.mxu0 0
  %2406 = vmatpush1.bf16.msra.mxu0 0
  %2407 = vmatprep.mubr.bf16.mxu0 0
  %2408 = vmatmul.mubr.bf16.gmra.mrb[0].mxu0 %v2373
  %v2409 = vpop.f32.mrb[0].mxu0
  %v2410 = vadd.f32 %v1558, %v2409
  %v2411 = vpop.f32.mrb[0].mxu0
  %v2412 = vpop.f32.mrb[0].mxu0
  %v2413 = vadd.f32 %v1559, %v2412
  %v2414 = vpop.f32.mrb[0].mxu0
  %2415 = vdwg.mxu0
  %v2416 = vld [vmem:[%s7 + $0x4] sm:$0x1]
  %v2417 = vld [vmem:[%s7 + $0x5] sm:$0x1]
  %v2418 = vsel %vm43, %v2410, 0.0
  %2419 = vadd.xlane.f32.xlu0 %v2418
  %v2420 = vpop.xlane.xlu0 %2419
  %v2421 = vsel %vm43, %v2413, 0.0
  %2422 = vadd.xlane.f32.xlu0 %v2421
  %v2423 = vpop.xlane.xlu0 %2422
  %v2424 = vmul.f32 %v2420, %v1527
  %v2425 = vmul.f32 %v2423, %v1527
  %v2426 = vsub.f32 %v2410, %v2424
  %v2427 = vsub.f32 %v2413, %v2425
  %v2428 = vmul.f32 %v2426, %v2426
  %v2429 = vmul.f32 %v2427, %v2427
  %v2430 = vsel %vm43, %v2428, 0.0
  %2431 = vadd.xlane.f32.xlu0 %v2430
  %v2432 = vpop.xlane.xlu0 %2431
  %v2433 = vsel %vm43, %v2429, 0.0
  %2434 = vadd.xlane.f32.xlu0 %v2433
  %v2435 = vpop.xlane.xlu0 %2434
  %v2436 = vmul.f32 %v2432, %v1527
  %v2437 = vmul.f32 %v2435, %v1527
  %v2438 = vadd.f32 %v2436, 1e-05
  %v2439 = vadd.f32 %v2437, 1e-05
  %v2440 = vrsqrt.pop %v2438
  %v2441 = vrsqrt.pop %v2439
  %v2442 = vmul.f32 %v2426, %v2440
  %v2443 = vmul.f32 %v2427, %v2441
  %v2444 = vlaneseq
  %v2445 = vshrl.u32 %v2444, 7
  %v2446 = vsub.s32 0, %v2445
  %v2447 = vrot.slane %v2416, %v2446
  %v2448 = vmul.f32 %v2442, %v2447
  %v2449 = vmul.f32 %v2443, %v2447
  %v2450 = vlaneseq
  %v2451 = vshrl.u32 %v2450, 7
  %v2452 = vsub.s32 0, %v2451
  %v2453 = vrot.slane %v2417, %v2452
  %v2454 = vadd.f32 %v2448, %v2453
  %v2455 = vadd.f32 %v2449, %v2453
  %v2456 = vld [vmem:[%s6] sm:$0xff]
  %v2457 = vld [vmem:[%s6 + $0x8] sm:$0xff]
  %v2458 = vld [vmem:[%s6 + $0x10] sm:$0xff]
  %v2459 = vld [vmem:[%s6 + $0x18] sm:$0xff]
  %v2460 = vld [vmem:[%s6 + $0x20] sm:$0xff]
  %v2461 = vld [vmem:[%s6 + $0x28] sm:$0xff]
  %v2462 = vld [vmem:[%s6 + $0x30] sm:$0xff]
  %v2463 = vld [vmem:[%s6 + $0x38] sm:$0xff]
  %v2464 = vpack.c.bf16 %v2455, %v2454
  %v2465 = vld [vmem:[%s8] sm:$0x3]
  %v2467 = vlaneseq
  %v2468 = vshrl.u32 %v2467, 7
  %v2469 = vsub.s32 0, %v2468
  %v2470 = vrot.slane %v2465, %v2469
  %v2471 = vlaneseq
  %v2472 = vshrl.u32 %v2471, 7
  %v2473 = vsub.s32 1, %v2472
  %v2474 = vrot.slane %v2465, %v2473
  %v2485 = vunpack.c.l.b16 %v2456
  %v2486 = vunpack.c.h.b16 %v2456
  %v2487 = vunpack.c.l.b16 %v2457
  %v2488 = vunpack.c.h.b16 %v2457
  %v2489 = vunpack.c.l.b16 %v2458
  %v2490 = vunpack.c.h.b16 %v2458
  %v2491 = vunpack.c.l.b16 %v2459
  %v2492 = vunpack.c.h.b16 %v2459
  %v2493 = vunpack.c.l.b16 %v2460
  %v2494 = vunpack.c.h.b16 %v2460
  %v2495 = vunpack.c.l.b16 %v2461
  %v2496 = vunpack.c.h.b16 %v2461
  %v2497 = vunpack.c.l.b16 %v2462
  %v2498 = vunpack.c.h.b16 %v2462
  %v2499 = vunpack.c.l.b16 %v2463
  %v2500 = vunpack.c.h.b16 %v2463
  %v2501 = vpack.c.b16 %v2487, %v2485
  %v2502 = vpack.c.b16 %v2488, %v2486
  %v2503 = vpack.c.b16 %v2491, %v2489
  %v2504 = vpack.c.b16 %v2492, %v2490
  %v2505 = vpack.c.b16 %v2495, %v2493
  %v2506 = vpack.c.b16 %v2496, %v2494
  %v2507 = vpack.c.b16 %v2499, %v2497
  %v2508 = vpack.c.b16 %v2500, %v2498
  %v2518 = vsel %vm43, %v2464, 0
  %2520 = vmatprep.subr.bf16.mxu0 %v2502
  %2521 = vmatpush1.bf16.msra.mxu0 %v2501
  %2522 = vmatprep.subr.bf16.mxu0 %v2504
  %2523 = vmatpush1.bf16.msra.mxu0 %v2503
  %2524 = vmatprep.subr.bf16.mxu0 %v2506
  %2525 = vmatpush1.bf16.msra.mxu0 %v2505
  %2526 = vmatprep.subr.bf16.mxu0 %v2508
  %2527 = vmatpush1.bf16.msra.mxu0 %v2507
  %2528 = vmatprep.subr.bf16.mxu0 0
  %2529 = vmatpush1.bf16.msra.mxu0 0
  %2530 = vmatprep.subr.bf16.mxu0 0
  %2531 = vmatpush1.bf16.msra.mxu0 0
  %2532 = vmatprep.subr.bf16.mxu0 0
  %2533 = vmatpush1.bf16.msra.mxu0 0
  %2534 = vmatprep.subr.bf16.mxu0 0
  %2535 = vmatpush1.bf16.msra.mxu0 0
  %2536 = vmatprep.subr.bf16.mxu0 0
  %2537 = vmatpush1.bf16.msra.mxu0 0
  %2538 = vmatprep.subr.bf16.mxu0 0
  %2539 = vmatpush1.bf16.msra.mxu0 0
  %2540 = vmatprep.subr.bf16.mxu0 0
  %2541 = vmatpush1.bf16.msra.mxu0 0
  %2542 = vmatprep.subr.bf16.mxu0 0
  %2543 = vmatpush1.bf16.msra.mxu0 0
  %2544 = vmatprep.subr.bf16.mxu0 0
  %2545 = vmatpush1.bf16.msra.mxu0 0
  %2546 = vmatprep.subr.bf16.mxu0 0
  %2547 = vmatpush1.bf16.msra.mxu0 0
  %2548 = vmatprep.subr.bf16.mxu0 0
  %2549 = vmatpush1.bf16.msra.mxu0 0
  %2550 = vmatprep.subr.bf16.mxu0 0
  %2551 = vmatpush1.bf16.msra.mxu0 0
  %2552 = vmatprep.mubr.bf16.mxu0 0
  %2553 = vmatmul.mubr.bf16.gmra.mrb[0].mxu0 %v2518
  %v2554 = vpop.f32.mrb[0].mxu0
  %v2555 = vadd.f32 %v2470, %v2554
  %v2556 = vpop.f32.mrb[0].mxu0
  %v2557 = vadd.f32 %v2474, %v2556
  %v2558 = vpop.f32.mrb[0].mxu0
  %v2559 = vadd.f32 %v2470, %v2558
  %v2560 = vpop.f32.mrb[0].mxu0
  %v2561 = vadd.f32 %v2474, %v2560
  %2562 = vdwg.mxu0
  %v2563 = vmul.f32 %v2555, 0.5
  %v2564 = vmul.f32 %v2557, 0.5
  %v2565 = vmul.f32 %v2559, 0.5
  %v2566 = vmul.f32 %v2561, 0.5
  %v2567 = vmul.f32 %v2555, 0.70710677
  %v2568 = vmul.f32 %v2557, 0.70710677
  %v2569 = vmul.f32 %v2559, 0.70710677
  %v2570 = vmul.f32 %v2561, 0.70710677
  %vm2571 = vcmp.ge.f32.partialorder %v2567, 0.0
  %vm2572 = vcmp.ge.f32.partialorder %v2568, 0.0
  %vm2573 = vcmp.ge.f32.partialorder %v2569, 0.0
  %vm2574 = vcmp.ge.f32.partialorder %v2570, 0.0
  %v2575 = vsel %vm2571, 1.0, -1.0
  %v2576 = vsel %vm2572, 1.0, -1.0
  %v2577 = vsel %vm2573, 1.0, -1.0
  %v2578 = vsel %vm2574, 1.0, -1.0
  %v2579 = vand.u32 2147483647, %v2567
  %v2580 = vand.u32 2147483647, %v2568
  %v2581 = vand.u32 2147483647, %v2569
  %v2582 = vand.u32 2147483647, %v2570
  %v2583 = vmul.f32 %v2579, 0.3275911
  %v2584 = vmul.f32 %v2580, 0.3275911
  %v2585 = vmul.f32 %v2581, 0.3275911
  %v2586 = vmul.f32 %v2582, 0.3275911
  %v2587 = vadd.f32 %v2583, 1.0
  %v2588 = vadd.f32 %v2584, 1.0
  %v2589 = vadd.f32 %v2585, 1.0
  %v2590 = vadd.f32 %v2586, 1.0
  %v2591 = vrcp.pop %v2587
  %v2592 = vmul.f32 1.0, %v2591
  %v2593 = vrcp.pop %v2588
  %v2594 = vmul.f32 1.0, %v2593
  %v2595 = vrcp.pop %v2589
  %v2596 = vmul.f32 1.0, %v2595
  %v2597 = vrcp.pop %v2590
  %v2598 = vmul.f32 1.0, %v2597
  %v2599 = vmul.f32 %v2592, 1.0614054
  %v2600 = vmul.f32 %v2594, 1.0614054
  %v2601 = vmul.f32 %v2596, 1.0614054
  %v2602 = vmul.f32 %v2598, 1.0614054
  %v2603 = vadd.f32 %v2599, -1.4531521
  %v2604 = vadd.f32 %v2600, -1.4531521
  %v2605 = vadd.f32 %v2601, -1.4531521
  %v2606 = vadd.f32 %v2602, -1.4531521
  %v2607 = vmul.f32 %v2603, %v2592
  %v2608 = vmul.f32 %v2604, %v2594
  %v2609 = vmul.f32 %v2605, %v2596
  %v2610 = vmul.f32 %v2606, %v2598
  %v2611 = vadd.f32 %v2607, 1.4214138
  %v2612 = vadd.f32 %v2608, 1.4214138
  %v2613 = vadd.f32 %v2609, 1.4214138
  %v2614 = vadd.f32 %v2610, 1.4214138
  %v2615 = vmul.f32 %v2611, %v2592
  %v2616 = vmul.f32 %v2612, %v2594
  %v2617 = vmul.f32 %v2613, %v2596
  %v2618 = vmul.f32 %v2614, %v2598
  %v2619 = vadd.f32 %v2615, -0.28449672
  %v2620 = vadd.f32 %v2616, -0.28449672
  %v2621 = vadd.f32 %v2617, -0.28449672
  %v2622 = vadd.f32 %v2618, -0.28449672
  %v2623 = vmul.f32 %v2619, %v2592
  %v2624 = vmul.f32 %v2620, %v2594
  %v2625 = vmul.f32 %v2621, %v2596
  %v2626 = vmul.f32 %v2622, %v2598
  %v2627 = vadd.f32 %v2623, 0.2548296
  %v2628 = vadd.f32 %v2624, 0.2548296
  %v2629 = vadd.f32 %v2625, 0.2548296
  %v2630 = vadd.f32 %v2626, 0.2548296
  %v2631 = vmul.f32 %v2627, %v2592
  %v2632 = vmul.f32 %v2628, %v2594
  %v2633 = vmul.f32 %v2629, %v2596
  %v2634 = vmul.f32 %v2630, %v2598
  %v2635 = vsub.f32 0.0, %v2579
  %v2636 = vsub.f32 0.0, %v2580
  %v2637 = vsub.f32 0.0, %v2581
  %v2638 = vsub.f32 0.0, %v2582
  %v2639 = vmul.f32 %v2635, %v2579
  %v2640 = vmul.f32 %v2636, %v2580
  %v2641 = vmul.f32 %v2637, %v2581
  %v2642 = vmul.f32 %v2638, %v2582
  %v2643 = vmul.f32 %v2639, 1.442695
  %v2644 = vpow.pop %v2643
  %v2645 = vmul.f32 %v2640, 1.442695
  %v2646 = vpow.pop %v2645
  %v2647 = vmul.f32 %v2641, 1.442695
  %v2648 = vpow.pop %v2647
  %v2649 = vmul.f32 %v2642, 1.442695
  %v2650 = vpow.pop %v2649
  %v2651 = vmul.f32 %v2631, %v2644
  %v2652 = vmul.f32 %v2632, %v2646
  %v2653 = vmul.f32 %v2633, %v2648
  %v2654 = vmul.f32 %v2634, %v2650
  %v2655 = vsub.f32 1.0, %v2651
  %v2656 = vsub.f32 1.0, %v2652
  %v2657 = vsub.f32 1.0, %v2653
  %v2658 = vsub.f32 1.0, %v2654
  %v2659 = vmul.f32 %v2575, %v2655
  %v2660 = vmul.f32 %v2576, %v2656
  %v2661 = vmul.f32 %v2577, %v2657
  %v2662 = vmul.f32 %v2578, %v2658
  %v2663 = vadd.f32 %v2659, 1.0
  %v2664 = vadd.f32 %v2660, 1.0
  %v2665 = vadd.f32 %v2661, 1.0
  %v2666 = vadd.f32 %v2662, 1.0
  %v2667 = vmul.f32 %v2563, %v2663
  %v2668 = vmul.f32 %v2564, %v2664
  %v2669 = vmul.f32 %v2565, %v2665
  %v2670 = vmul.f32 %v2566, %v2666
  %v2671 = vld [vmem:[%s5 + $0x100] sm:$0xf]
  %v2672 = vld [vmem:[%s5 + $0x104] sm:$0xf]
  %v2673 = vld [vmem:[%s5 + $0x108] sm:$0xf]
  %v2674 = vld [vmem:[%s5 + $0x10c] sm:$0xf]
  %v2675 = vld [vmem:[%s5 + $0x110] sm:$0xf]
  %v2676 = vld [vmem:[%s5 + $0x114] sm:$0xf]
  %v2677 = vld [vmem:[%s5 + $0x118] sm:$0xf]
  %v2678 = vld [vmem:[%s5 + $0x11c] sm:$0xf]
  %v2679 = vld [vmem:[%s5 + $0x120] sm:$0xf]
  %v2680 = vld [vmem:[%s5 + $0x124] sm:$0xf]
  %v2681 = vld [vmem:[%s5 + $0x128] sm:$0xf]
  %v2682 = vld [vmem:[%s5 + $0x12c] sm:$0xf]
  %v2683 = vld [vmem:[%s5 + $0x130] sm:$0xf]
  %v2684 = vld [vmem:[%s5 + $0x134] sm:$0xf]
  %v2685 = vld [vmem:[%s5 + $0x138] sm:$0xf]
  %v2686 = vld [vmem:[%s5 + $0x13c] sm:$0xf]
  %v2687 = vld [vmem:[%s5 + $0x140] sm:$0xf]
  %v2688 = vld [vmem:[%s5 + $0x144] sm:$0xf]
  %v2689 = vld [vmem:[%s5 + $0x148] sm:$0xf]
  %v2690 = vld [vmem:[%s5 + $0x14c] sm:$0xf]
  %v2691 = vld [vmem:[%s5 + $0x150] sm:$0xf]
  %v2692 = vld [vmem:[%s5 + $0x154] sm:$0xf]
  %v2693 = vld [vmem:[%s5 + $0x158] sm:$0xf]
  %v2694 = vld [vmem:[%s5 + $0x15c] sm:$0xf]
  %v2695 = vld [vmem:[%s5 + $0x160] sm:$0xf]
  %v2696 = vld [vmem:[%s5 + $0x164] sm:$0xf]
  %v2697 = vld [vmem:[%s5 + $0x168] sm:$0xf]
  %v2698 = vld [vmem:[%s5 + $0x16c] sm:$0xf]
  %v2699 = vld [vmem:[%s5 + $0x170] sm:$0xf]
  %v2700 = vld [vmem:[%s5 + $0x174] sm:$0xf]
  %v2701 = vld [vmem:[%s5 + $0x178] sm:$0xf]
  %v2702 = vld [vmem:[%s5 + $0x17c] sm:$0xf]
  %v2703 = vpack.c.bf16 %v2669, %v2667
  %v2704 = vpack.c.bf16 %v2670, %v2668
  %v2705 = vld [vmem:[%s7 + $0x8] sm:$0x1]
  %v2706 = vlaneseq
  %v2707 = vshrl.u32 %v2706, 7
  %v2708 = vsub.s32 0, %v2707
  %v2709 = vrot.slane %v2705, %v2708
  %v2742 = vunpack.c.l.b16 %v2671
  %v2743 = vunpack.c.l.b16 %v2672
  %v2744 = vunpack.c.l.b16 %v2673
  %v2745 = vunpack.c.l.b16 %v2674
  %v2746 = vunpack.c.l.b16 %v2675
  %v2747 = vunpack.c.l.b16 %v2676
  %v2748 = vunpack.c.l.b16 %v2677
  %v2749 = vunpack.c.l.b16 %v2678
  %v2750 = vunpack.c.l.b16 %v2679
  %v2751 = vunpack.c.l.b16 %v2680
  %v2752 = vunpack.c.l.b16 %v2681
  %v2753 = vunpack.c.l.b16 %v2682
  %v2754 = vunpack.c.l.b16 %v2683
  %v2755 = vunpack.c.l.b16 %v2684
  %v2756 = vunpack.c.l.b16 %v2685
  %v2757 = vunpack.c.l.b16 %v2686
  %v2758 = vunpack.c.l.b16 %v2687
  %v2759 = vunpack.c.l.b16 %v2688
  %v2760 = vunpack.c.l.b16 %v2689
  %v2761 = vunpack.c.l.b16 %v2690
  %v2762 = vunpack.c.l.b16 %v2691
  %v2763 = vunpack.c.l.b16 %v2692
  %v2764 = vunpack.c.l.b16 %v2693
  %v2765 = vunpack.c.l.b16 %v2694
  %v2766 = vunpack.c.l.b16 %v2695
  %v2767 = vunpack.c.l.b16 %v2696
  %v2768 = vunpack.c.l.b16 %v2697
  %v2769 = vunpack.c.l.b16 %v2698
  %v2770 = vunpack.c.l.b16 %v2699
  %v2771 = vunpack.c.l.b16 %v2700
  %v2772 = vunpack.c.l.b16 %v2701
  %v2773 = vunpack.c.l.b16 %v2702
  %v2774 = vpack.c.b16 %v2743, %v2742
  %v2775 = vpack.c.b16 %v2745, %v2744
  %v2776 = vpack.c.b16 %v2747, %v2746
  %v2777 = vpack.c.b16 %v2749, %v2748
  %v2778 = vpack.c.b16 %v2751, %v2750
  %v2779 = vpack.c.b16 %v2753, %v2752
  %v2780 = vpack.c.b16 %v2755, %v2754
  %v2781 = vpack.c.b16 %v2757, %v2756
  %v2782 = vpack.c.b16 %v2759, %v2758
  %v2783 = vpack.c.b16 %v2761, %v2760
  %v2784 = vpack.c.b16 %v2763, %v2762
  %v2785 = vpack.c.b16 %v2765, %v2764
  %v2786 = vpack.c.b16 %v2767, %v2766
  %v2787 = vpack.c.b16 %v2769, %v2768
  %v2788 = vpack.c.b16 %v2771, %v2770
  %v2789 = vpack.c.b16 %v2773, %v2772
  %2806 = vmatprep.subr.bf16.mxu0 0
  %2807 = vmatpush1.bf16.msra.mxu0 %v2774
  %2808 = vmatprep.subr.bf16.mxu0 0
  %2809 = vmatpush1.bf16.msra.mxu0 %v2775
  %2810 = vmatprep.subr.bf16.mxu0 0
  %2811 = vmatpush1.bf16.msra.mxu0 %v2776
  %2812 = vmatprep.subr.bf16.mxu0 0
  %2813 = vmatpush1.bf16.msra.mxu0 %v2777
  %2814 = vmatprep.subr.bf16.mxu0 0
  %2815 = vmatpush1.bf16.msra.mxu0 %v2778
  %2816 = vmatprep.subr.bf16.mxu0 0
  %2817 = vmatpush1.bf16.msra.mxu0 %v2779
  %2818 = vmatprep.subr.bf16.mxu0 0
  %2819 = vmatpush1.bf16.msra.mxu0 %v2780
  %2820 = vmatprep.subr.bf16.mxu0 0
  %2821 = vmatpush1.bf16.msra.mxu0 %v2781
  %2822 = vmatprep.subr.bf16.mxu0 0
  %2823 = vmatpush1.bf16.msra.mxu0 %v2782
  %2824 = vmatprep.subr.bf16.mxu0 0
  %2825 = vmatpush1.bf16.msra.mxu0 %v2783
  %2826 = vmatprep.subr.bf16.mxu0 0
  %2827 = vmatpush1.bf16.msra.mxu0 %v2784
  %2828 = vmatprep.subr.bf16.mxu0 0
  %2829 = vmatpush1.bf16.msra.mxu0 %v2785
  %2830 = vmatprep.subr.bf16.mxu0 0
  %2831 = vmatpush1.bf16.msra.mxu0 %v2786
  %2832 = vmatprep.subr.bf16.mxu0 0
  %2833 = vmatpush1.bf16.msra.mxu0 %v2787
  %2834 = vmatprep.subr.bf16.mxu0 0
  %2835 = vmatpush1.bf16.msra.mxu0 %v2788
  %2836 = vmatprep.subr.bf16.mxu0 0
  %2837 = vmatpush1.bf16.msra.mxu0 %v2789
  %2838 = vmatprep.mubr.bf16.mxu0 %v2704
  %2839 = vmatmul.mubr.bf16.gmra.mrb[0].mxu0 %v2703
  %v2840 = vpop.f32.mrb[0].mxu0
  %v2841 = vadd.f32 %v2709, %v2840
  %v2842 = vpop.f32.mrb[0].mxu0
  %v2843 = vpop.f32.mrb[0].mxu0
  %v2844 = vadd.f32 %v2709, %v2843
  %v2845 = vpop.f32.mrb[0].mxu0
  %2846 = vdwg.mxu0
  %v2847 = vadd.f32 %v2454, %v2841
  %v2848 = vadd.f32 %v2455, %v2844
  %v2849 = vld [vmem:[%s7 + $0x6] sm:$0x1]
  %v2850 = vld [vmem:[%s7 + $0x7] sm:$0x1]
  %v2851 = vsel %vm43, %v2847, 0.0
  %2852 = vadd.xlane.f32.xlu0 %v2851
  %v2853 = vpop.xlane.xlu0 %2852
  %v2854 = vsel %vm43, %v2848, 0.0
  %2855 = vadd.xlane.f32.xlu0 %v2854
  %v2856 = vpop.xlane.xlu0 %2855
  %v2857 = vmul.f32 %v2853, %v1527
  %v2858 = vmul.f32 %v2856, %v1527
  %v2859 = vsub.f32 %v2847, %v2857
  %v2860 = vsub.f32 %v2848, %v2858
  %v2861 = vmul.f32 %v2859, %v2859
  %v2862 = vmul.f32 %v2860, %v2860
  %v2863 = vsel %vm43, %v2861, 0.0
  %2864 = vadd.xlane.f32.xlu0 %v2863
  %v2865 = vpop.xlane.xlu0 %2864
  %v2866 = vsel %vm43, %v2862, 0.0
  %2867 = vadd.xlane.f32.xlu0 %v2866
  %v2868 = vpop.xlane.xlu0 %2867
  %v2869 = vmul.f32 %v2865, %v1527
  %v2870 = vmul.f32 %v2868, %v1527
  %v2871 = vadd.f32 %v2869, 1e-05
  %v2872 = vadd.f32 %v2870, 1e-05
  %v2873 = vrsqrt.pop %v2871
  %v2874 = vrsqrt.pop %v2872
  %v2875 = vmul.f32 %v2859, %v2873
  %v2876 = vmul.f32 %v2860, %v2874
  %v2877 = vlaneseq
  %v2878 = vshrl.u32 %v2877, 7
  %v2879 = vsub.s32 0, %v2878
  %v2880 = vrot.slane %v2849, %v2879
  %v2881 = vmul.f32 %v2875, %v2880
  %v2882 = vmul.f32 %v2876, %v2880
  %v2883 = vlaneseq
  %v2884 = vshrl.u32 %v2883, 7
  %v2885 = vsub.s32 0, %v2884
  %v2886 = vrot.slane %v2850, %v2885
  %v2887 = vadd.f32 %v2881, %v2886
  %v2888 = vadd.f32 %v2882, %v2886
  %s2889 = scalar_lea.vmem %s7, 16
  %v2890 = vld [vmem:[%s2889] sm:$0x1]
  %v2891 = vld [vmem:[%s2889 + $0x1] sm:$0x1]
  %s2892 = scalar_lea.vmem %s5, 384
  %v2893 = vld [vmem:[%s2892] sm:$0xf]
  %v2894 = vld [vmem:[%s2892 + $0x4] sm:$0xf]
  %v2895 = vld [vmem:[%s2892 + $0x8] sm:$0xf]
  %v2896 = vld [vmem:[%s2892 + $0xc] sm:$0xf]
  %v2897 = vld [vmem:[%s2892 + $0x10] sm:$0xf]
  %v2898 = vld [vmem:[%s2892 + $0x14] sm:$0xf]
  %v2899 = vld [vmem:[%s2892 + $0x18] sm:$0xf]
  %v2900 = vld [vmem:[%s2892 + $0x1c] sm:$0xf]
  %v2901 = vpack.c.bf16 %v2888, %v2887
  %v2910 = vunpack.c.l.b16 %v2893
  %v2911 = vunpack.c.l.b16 %v2894
  %v2912 = vunpack.c.l.b16 %v2895
  %v2913 = vunpack.c.l.b16 %v2896
  %v2914 = vunpack.c.l.b16 %v2897
  %v2915 = vunpack.c.l.b16 %v2898
  %v2916 = vunpack.c.l.b16 %v2899
  %v2917 = vunpack.c.l.b16 %v2900
  %v2918 = vpack.c.b16 %v2911, %v2910
  %v2919 = vpack.c.b16 %v2913, %v2912
  %v2920 = vpack.c.b16 %v2915, %v2914
  %v2921 = vpack.c.b16 %v2917, %v2916
  %v2927 = vsel %vm43, %v2901, 0
  %2929 = vmatprep.subr.bf16.mxu0 0
  %2930 = vmatpush1.bf16.msra.mxu0 %v2918
  %2931 = vmatprep.subr.bf16.mxu0 0
  %2932 = vmatpush1.bf16.msra.mxu0 %v2919
  %2933 = vmatprep.subr.bf16.mxu0 0
  %2934 = vmatpush1.bf16.msra.mxu0 %v2920
  %2935 = vmatprep.subr.bf16.mxu0 0
  %2936 = vmatpush1.bf16.msra.mxu0 %v2921
  %2937 = vmatprep.subr.bf16.mxu0 0
  %2938 = vmatpush1.bf16.msra.mxu0 0
  %2939 = vmatprep.subr.bf16.mxu0 0
  %2940 = vmatpush1.bf16.msra.mxu0 0
  %2941 = vmatprep.subr.bf16.mxu0 0
  %2942 = vmatpush1.bf16.msra.mxu0 0
  %2943 = vmatprep.subr.bf16.mxu0 0
  %2944 = vmatpush1.bf16.msra.mxu0 0
  %2945 = vmatprep.subr.bf16.mxu0 0
  %2946 = vmatpush1.bf16.msra.mxu0 0
  %2947 = vmatprep.subr.bf16.mxu0 0
  %2948 = vmatpush1.bf16.msra.mxu0 0
  %2949 = vmatprep.subr.bf16.mxu0 0
  %2950 = vmatpush1.bf16.msra.mxu0 0
  %2951 = vmatprep.subr.bf16.mxu0 0
  %2952 = vmatpush1.bf16.msra.mxu0 0
  %2953 = vmatprep.subr.bf16.mxu0 0
  %2954 = vmatpush1.bf16.msra.mxu0 0
  %2955 = vmatprep.subr.bf16.mxu0 0
  %2956 = vmatpush1.bf16.msra.mxu0 0
  %2957 = vmatprep.subr.bf16.mxu0 0
  %2958 = vmatpush1.bf16.msra.mxu0 0
  %2959 = vmatprep.subr.bf16.mxu0 0
  %2960 = vmatpush1.bf16.msra.mxu0 0
  %2961 = vmatprep.mubr.bf16.mxu0 0
  %2962 = vmatmul.mubr.bf16.gmra.mrb[0].mxu0 %v2927
  %v2963 = vpop.f32.mrb[0].mxu0
  %v2964 = vadd.f32 0.0, %v2963
  %v2965 = vpop.f32.mrb[0].mxu0
  %v2966 = vpop.f32.mrb[0].mxu0
  %v2967 = vadd.f32 0.0, %v2966
  %v2968 = vpop.f32.mrb[0].mxu0
  %2969 = vdwg.mxu0
  %v2970 = vld [vmem:[%s2892 + $0x40] sm:$0xf]
  %v2971 = vld [vmem:[%s2892 + $0x44] sm:$0xf]
  %v2972 = vld [vmem:[%s2892 + $0x48] sm:$0xf]
  %v2973 = vld [vmem:[%s2892 + $0x4c] sm:$0xf]
  %v2974 = vld [vmem:[%s2892 + $0x50] sm:$0xf]
  %v2975 = vld [vmem:[%s2892 + $0x54] sm:$0xf]
  %v2976 = vld [vmem:[%s2892 + $0x58] sm:$0xf]
  %v2977 = vld [vmem:[%s2892 + $0x5c] sm:$0xf]
  %v2986 = vunpack.c.l.b16 %v2970
  %v2987 = vunpack.c.l.b16 %v2971
  %v2988 = vunpack.c.l.b16 %v2972
  %v2989 = vunpack.c.l.b16 %v2973
  %v2990 = vunpack.c.l.b16 %v2974
  %v2991 = vunpack.c.l.b16 %v2975
  %v2992 = vunpack.c.l.b16 %v2976
  %v2993 = vunpack.c.l.b16 %v2977
  %v2994 = vpack.c.b16 %v2987, %v2986
  %v2995 = vpack.c.b16 %v2989, %v2988
  %v2996 = vpack.c.b16 %v2991, %v2990
  %v2997 = vpack.c.b16 %v2993, %v2992
  %3002 = vmatprep.subr.bf16.mxu0 0
  %3003 = vmatpush1.bf16.msra.mxu0 %v2994
  %3004 = vmatprep.subr.bf16.mxu0 0
  %3005 = vmatpush1.bf16.msra.mxu0 %v2995
  %3006 = vmatprep.subr.bf16.mxu0 0
  %3007 = vmatpush1.bf16.msra.mxu0 %v2996
  %3008 = vmatprep.subr.bf16.mxu0 0
  %3009 = vmatpush1.bf16.msra.mxu0 %v2997
  %3010 = vmatprep.subr.bf16.mxu0 0
  %3011 = vmatpush1.bf16.msra.mxu0 0
  %3012 = vmatprep.subr.bf16.mxu0 0
  %3013 = vmatpush1.bf16.msra.mxu0 0
  %3014 = vmatprep.subr.bf16.mxu0 0
  %3015 = vmatpush1.bf16.msra.mxu0 0
  %3016 = vmatprep.subr.bf16.mxu0 0
  %3017 = vmatpush1.bf16.msra.mxu0 0
  %3018 = vmatprep.subr.bf16.mxu0 0
  %3019 = vmatpush1.bf16.msra.mxu0 0
  %3020 = vmatprep.subr.bf16.mxu0 0
  %3021 = vmatpush1.bf16.msra.mxu0 0
  %3022 = vmatprep.subr.bf16.mxu0 0
  %3023 = vmatpush1.bf16.msra.mxu0 0
  %3024 = vmatprep.subr.bf16.mxu0 0
  %3025 = vmatpush1.bf16.msra.mxu0 0
  %3026 = vmatprep.subr.bf16.mxu0 0
  %3027 = vmatpush1.bf16.msra.mxu0 0
  %3028 = vmatprep.subr.bf16.mxu0 0
  %3029 = vmatpush1.bf16.msra.mxu0 0
  %3030 = vmatprep.subr.bf16.mxu0 0
  %3031 = vmatpush1.bf16.msra.mxu0 0
  %3032 = vmatprep.subr.bf16.mxu0 0
  %3033 = vmatpush1.bf16.msra.mxu0 0
  %3034 = vmatprep.mubr.bf16.mxu0 0
  %3035 = vmatmul.mubr.bf16.gmra.mrb[0].mxu0 %v2927
  %v3036 = vpop.f32.mrb[0].mxu0
  %v3037 = vadd.f32 0.0, %v3036
  %v3038 = vpop.f32.mrb[0].mxu0
  %v3039 = vpop.f32.mrb[0].mxu0
  %v3040 = vadd.f32 0.0, %v3039
  %v3041 = vpop.f32.mrb[0].mxu0
  %3042 = vdwg.mxu0
  %v3043 = vld [vmem:[%s2892 + $0x20] sm:$0xf]
  %v3044 = vld [vmem:[%s2892 + $0x24] sm:$0xf]
  %v3045 = vld [vmem:[%s2892 + $0x28] sm:$0xf]
  %v3046 = vld [vmem:[%s2892 + $0x2c] sm:$0xf]
  %v3047 = vld [vmem:[%s2892 + $0x30] sm:$0xf]
  %v3048 = vld [vmem:[%s2892 + $0x34] sm:$0xf]
  %v3049 = vld [vmem:[%s2892 + $0x38] sm:$0xf]
  %v3050 = vld [vmem:[%s2892 + $0x3c] sm:$0xf]
  %v3059 = vunpack.c.l.b16 %v3043
  %v3060 = vunpack.c.l.b16 %v3044
  %v3061 = vunpack.c.l.b16 %v3045
  %v3062 = vunpack.c.l.b16 %v3046
  %v3063 = vunpack.c.l.b16 %v3047
  %v3064 = vunpack.c.l.b16 %v3048
  %v3065 = vunpack.c.l.b16 %v3049
  %v3066 = vunpack.c.l.b16 %v3050
  %v3067 = vpack.c.b16 %v3060, %v3059
  %v3068 = vpack.c.b16 %v3062, %v3061
  %v3069 = vpack.c.b16 %v3064, %v3063
  %v3070 = vpack.c.b16 %v3066, %v3065
  %3075 = vxpose.xlu0.c.b16.start [1/8] %v3067, 128
  %3076 = vxpose.xlu0.c.b16.cont [2/8] %v3068, 128
  %3077 = vxpose.xlu0.c.b16.cont [3/8] %v3069, 128
  %3078 = vxpose.xlu0.c.b16.cont [4/8] %v3070, 128
  %3079 = vxpose.xlu0.c.b16.cont [5/8] 0, 128
  %3080 = vxpose.xlu0.c.b16.cont [6/8] 0, 128
  %3081 = vxpose.xlu0.c.b16.cont [7/8] 0, 128
  %3082 = vxpose.xlu0.c.b16.end [8/8] 0, 128
  %v3083 = vpop.trf.xlu0
  %v3084 = vpop.trf.xlu0
  %v3085 = vpop.trf.xlu0
  %v3086 = vpop.trf.xlu0
  %v3087 = vpop.trf.xlu0
  %v3088 = vpop.trf.xlu0
  %v3089 = vpop.trf.xlu0
  %v3090 = vpop.trf.xlu0
  %v3092 = vsel %vm43, %v3083, 0
  %v3095 = vsel %vm43, %v3084, 0
  %v3098 = vsel %vm43, %v3085, 0
  %v3101 = vsel %vm43, %v3086, 0
  %3103 = vmatprep.subr.bf16.mxu0 0
  %3104 = vmatpush1.bf16.xpose.msra.mxu0 %v2927
  %3105 = vmatprep.subr.bf16.mxu0 0
  %3106 = vmatpush1.bf16.xpose.msra.mxu0 0
  %3107 = vmatprep.subr.bf16.mxu0 0
  %3108 = vmatpush1.bf16.xpose.msra.mxu0 0
  %3109 = vmatprep.subr.bf16.mxu0 0
  %3110 = vmatpush1.bf16.xpose.msra.mxu0 0
  %3111 = vmatprep.subr.bf16.mxu0 0
  %3112 = vmatpush1.bf16.xpose.msra.mxu0 0
  %3113 = vmatprep.subr.bf16.mxu0 0
  %3114 = vmatpush1.bf16.xpose.msra.mxu0 0
  %3115 = vmatprep.subr.bf16.mxu0 0
  %3116 = vmatpush1.bf16.xpose.msra.mxu0 0
  %3117 = vmatprep.subr.bf16.mxu0 0
  %3118 = vmatpush1.bf16.xpose.msra.mxu0 0
  %3119 = vmatprep.subr.bf16.mxu0 0
  %3120 = vmatpush1.bf16.xpose.msra.mxu0 0
  %3121 = vmatprep.subr.bf16.mxu0 0
  %3122 = vmatpush1.bf16.xpose.msra.mxu0 0
  %3123 = vmatprep.subr.bf16.mxu0 0
  %3124 = vmatpush1.bf16.xpose.msra.mxu0 0
  %3125 = vmatprep.subr.bf16.mxu0 0
  %3126 = vmatpush1.bf16.xpose.msra.mxu0 0
  %3127 = vmatprep.subr.bf16.mxu0 0
  %3128 = vmatpush1.bf16.xpose.msra.mxu0 0
  %3129 = vmatprep.subr.bf16.mxu0 0
  %3130 = vmatpush1.bf16.xpose.msra.mxu0 0
  %3131 = vmatprep.subr.bf16.mxu0 0
  %3132 = vmatpush1.bf16.xpose.msra.mxu0 0
  %3133 = vmatprep.subr.bf16.mxu0 0
  %3134 = vmatpush1.bf16.xpose.msra.mxu0 0
  %3135 = vmatprep.mubr.bf16.mxu0 0
  %3136 = vmatmul.mubr.bf16.gmra.mrb[0].mxu0 %v3092
  %v3137 = vpop.f32.mrb[0].mxu0
  %v3138 = vadd.f32 0.0, %v3137
  %v3139 = vpop.f32.mrb[0].mxu0
  %v3140 = vpop.f32.mrb[0].mxu0
  %v3141 = vadd.f32 0.0, %v3140
  %v3142 = vpop.f32.mrb[0].mxu0
  %3143 = vmatprep.mubr.bf16.mxu0 0
  %3144 = vmatmul.mubr.bf16.gmra.mrb[0].mxu0 %v3095
  %v3145 = vpop.f32.mrb[0].mxu0
  %v3146 = vadd.f32 0.0, %v3145
  %v3147 = vpop.f32.mrb[0].mxu0
  %v3148 = vpop.f32.mrb[0].mxu0
  %v3149 = vadd.f32 0.0, %v3148
  %v3150 = vpop.f32.mrb[0].mxu0
  %3151 = vmatprep.mubr.bf16.mxu0 0
  %3152 = vmatmul.mubr.bf16.gmra.mrb[0].mxu0 %v3098
  %v3153 = vpop.f32.mrb[0].mxu0
  %v3154 = vadd.f32 0.0, %v3153
  %v3155 = vpop.f32.mrb[0].mxu0
  %v3156 = vpop.f32.mrb[0].mxu0
  %v3157 = vadd.f32 0.0, %v3156
  %v3158 = vpop.f32.mrb[0].mxu0
  %3159 = vmatprep.mubr.bf16.mxu0 0
  %3160 = vmatmul.mubr.bf16.gmra.mrb[0].mxu0 %v3101
  %v3161 = vpop.f32.mrb[0].mxu0
  %v3162 = vadd.f32 0.0, %v3161
  %v3163 = vpop.f32.mrb[0].mxu0
  %v3164 = vpop.f32.mrb[0].mxu0
  %v3165 = vadd.f32 0.0, %v3164
  %v3166 = vpop.f32.mrb[0].mxu0
  %3167 = vdwg.mxu0
  %v3168 = vpack.c.bf16 %v3141, %v3138
  %v3169 = vpack.c.bf16 %v3149, %v3146
  %v3170 = vpack.c.bf16 %v3157, %v3154
  %v3171 = vpack.c.bf16 %v3165, %v3162
  %v3173 = vsel %vm468, %v3168, 0
  %v3176 = vsel %vm468, %v3169, 0
  %v3179 = vsel %vm468, %v3170, 0
  %v3182 = vsel %vm468, %v3171, 0
  %3184 = vmatprep.subr.bf16.mxu0 %v465
  %3185 = vmatpush1.bf16.msra.mxu0 %v464
  %3186 = vmatprep.subr.bf16.mxu0 0
  %3187 = vmatpush1.bf16.msra.mxu0 0
  %3188 = vmatprep.subr.bf16.mxu0 0
  %3189 = vmatpush1.bf16.msra.mxu0 0
  %3190 = vmatprep.subr.bf16.mxu0 0
  %3191 = vmatpush1.bf16.msra.mxu0 0
  %3192 = vmatprep.subr.bf16.mxu0 0
  %3193 = vmatpush1.bf16.msra.mxu0 0
  %3194 = vmatprep.subr.bf16.mxu0 0
  %3195 = vmatpush1.bf16.msra.mxu0 0
  %3196 = vmatprep.subr.bf16.mxu0 0
  %3197 = vmatpush1.bf16.msra.mxu0 0
  %3198 = vmatprep.subr.bf16.mxu0 0
  %3199 = vmatpush1.bf16.msra.mxu0 0
  %3200 = vmatprep.subr.bf16.mxu0 0
  %3201 = vmatpush1.bf16.msra.mxu0 0
  %3202 = vmatprep.subr.bf16.mxu0 0
  %3203 = vmatpush1.bf16.msra.mxu0 0
  %3204 = vmatprep.subr.bf16.mxu0 0
  %3205 = vmatpush1.bf16.msra.mxu0 0
  %3206 = vmatprep.subr.bf16.mxu0 0
  %3207 = vmatpush1.bf16.msra.mxu0 0
  %3208 = vmatprep.subr.bf16.mxu0 0
  %3209 = vmatpush1.bf16.msra.mxu0 0
  %3210 = vmatprep.subr.bf16.mxu0 0
  %3211 = vmatpush1.bf16.msra.mxu0 0
  %3212 = vmatprep.subr.bf16.mxu0 0
  %3213 = vmatpush1.bf16.msra.mxu0 0
  %3214 = vmatprep.subr.bf16.mxu0 0
  %3215 = vmatpush1.bf16.msra.mxu0 0
  %3216 = vmatprep.mubr.bf16.mxu0 0
  %3217 = vmatmul.mubr.bf16.gmra.mrb[0].mxu0 %v3173
  %v3218 = vpop.f32.mrb[0].mxu0
  %v3219 = vadd.f32 0.0, %v3218
  %v3220 = vpop.f32.mrb[0].mxu0
  %v3221 = vadd.f32 0.0, %v3220
  %v3222 = vpop.f32.mrb[0].mxu0
  %v3223 = vadd.f32 0.0, %v3222
  %v3224 = vpop.f32.mrb[0].mxu0
  %v3225 = vadd.f32 0.0, %v3224
  %3226 = vmatprep.mubr.bf16.mxu0 0
  %3227 = vmatmul.mubr.bf16.gmra.mrb[0].mxu0 %v3176
  %v3228 = vpop.f32.mrb[0].mxu0
  %v3229 = vadd.f32 0.0, %v3228
  %v3230 = vpop.f32.mrb[0].mxu0
  %v3231 = vadd.f32 0.0, %v3230
  %v3232 = vpop.f32.mrb[0].mxu0
  %v3233 = vadd.f32 0.0, %v3232
  %v3234 = vpop.f32.mrb[0].mxu0
  %v3235 = vadd.f32 0.0, %v3234
  %3236 = vmatprep.mubr.bf16.mxu0 0
  %3237 = vmatmul.mubr.bf16.gmra.mrb[0].mxu0 %v3179
  %v3238 = vpop.f32.mrb[0].mxu0
  %v3239 = vadd.f32 0.0, %v3238
  %v3240 = vpop.f32.mrb[0].mxu0
  %v3241 = vadd.f32 0.0, %v3240
  %v3242 = vpop.f32.mrb[0].mxu0
  %v3243 = vadd.f32 0.0, %v3242
  %v3244 = vpop.f32.mrb[0].mxu0
  %v3245 = vadd.f32 0.0, %v3244
  %3246 = vmatprep.mubr.bf16.mxu0 0
  %3247 = vmatmul.mubr.bf16.gmra.mrb[0].mxu0 %v3182
  %v3248 = vpop.f32.mrb[0].mxu0
  %v3249 = vadd.f32 0.0, %v3248
  %v3250 = vpop.f32.mrb[0].mxu0
  %v3251 = vadd.f32 0.0, %v3250
  %v3252 = vpop.f32.mrb[0].mxu0
  %v3253 = vadd.f32 0.0, %v3252
  %v3254 = vpop.f32.mrb[0].mxu0
  %v3255 = vadd.f32 0.0, %v3254
  %3256 = vdwg.mxu0
  %v3257 = vmul.f32 %v3219, %v129
  %v3258 = vmul.f32 %v3221, %v130
  %v3259 = vmul.f32 %v3223, %v131
  %v3260 = vmul.f32 %v3225, %v132
  %v3261 = vmul.f32 %v3229, %v133
  %v3262 = vmul.f32 %v3231, %v134
  %v3263 = vmul.f32 %v3233, %v135
  %v3264 = vmul.f32 %v3235, %v136
  %v3265 = vmul.f32 %v3239, %v137
  %v3266 = vmul.f32 %v3241, %v138
  %v3267 = vmul.f32 %v3243, %v139
  %v3268 = vmul.f32 %v3245, %v140
  %v3269 = vmul.f32 %v3249, %v141
  %v3270 = vmul.f32 %v3251, %v142
  %v3271 = vmul.f32 %v3253, %v143
  %v3272 = vmul.f32 %v3255, %v144
  %v3273 = vlaneseq
  %v3274 = vshrl.u32 %v3273, 7
  %v3275 = vsub.s32 0, %v3274
  %v3276 = vrot.slane %v2890, %v3275
  %v3277 = vadd.f32 %v2964, %v3276
  %v3278 = vadd.f32 %v2967, %v3276
  %v3279 = vpack.c.bf16 %v3278, %v3277
  %v3280 = vpack.c.bf16 %v3259, %v3257
  %v3281 = vpack.c.bf16 %v3260, %v3258
  %v3282 = vpack.c.bf16 %v3263, %v3261
  %v3283 = vpack.c.bf16 %v3264, %v3262
  %v3284 = vpack.c.bf16 %v3267, %v3265
  %v3285 = vpack.c.bf16 %v3268, %v3266
  %v3286 = vpack.c.bf16 %v3271, %v3269
  %v3287 = vpack.c.bf16 %v3272, %v3270
  %v3288 = vlaneseq
  %v3289 = vshrl.u32 %v3288, 7
  %v3290 = vsub.s32 0, %v3289
  %v3291 = vrot.slane %v2891, %v3290
  %v3292 = vadd.f32 %v2964, %v3291
  %v3293 = vadd.f32 %v2967, %v3291
  %s3294 = scalar_lea.vmem %s6, 128
  %v3295 = vld [vmem:[%s3294 + $0x40] sm:$0xff]
  %v3296 = vld [vmem:[%s3294 + $0x48] sm:$0xff]
  %v3297 = vld [vmem:[%s3294 + $0x50] sm:$0xff]
  %v3298 = vld [vmem:[%s3294 + $0x58] sm:$0xff]
  %v3299 = vld [vmem:[%s3294 + $0x60] sm:$0xff]
  %v3300 = vld [vmem:[%s3294 + $0x68] sm:$0xff]
  %v3301 = vld [vmem:[%s3294 + $0x70] sm:$0xff]
  %v3302 = vld [vmem:[%s3294 + $0x78] sm:$0xff]
  %v3303 = vpack.c.bf16 %v3293, %v3292
  %v3312 = vunpack.c.l.b16 %v3295
  %v3313 = vunpack.c.h.b16 %v3295
  %v3314 = vunpack.c.l.b16 %v3296
  %v3315 = vunpack.c.h.b16 %v3296
  %v3316 = vunpack.c.l.b16 %v3297
  %v3317 = vunpack.c.h.b16 %v3297
  %v3318 = vunpack.c.l.b16 %v3298
  %v3319 = vunpack.c.h.b16 %v3298
  %v3320 = vunpack.c.l.b16 %v3299
  %v3321 = vunpack.c.h.b16 %v3299
  %v3322 = vunpack.c.l.b16 %v3300
  %v3323 = vunpack.c.h.b16 %v3300
  %v3324 = vunpack.c.l.b16 %v3301
  %v3325 = vunpack.c.h.b16 %v3301
  %v3326 = vunpack.c.l.b16 %v3302
  %v3327 = vunpack.c.h.b16 %v3302
  %v3328 = vpack.c.b16 %v3314, %v3312
  %v3329 = vpack.c.b16 %v3315, %v3313
  %v3330 = vpack.c.b16 %v3318, %v3316
  %v3331 = vpack.c.b16 %v3319, %v3317
  %v3332 = vpack.c.b16 %v3322, %v3320
  %v3333 = vpack.c.b16 %v3323, %v3321
  %v3334 = vpack.c.b16 %v3326, %v3324
  %v3335 = vpack.c.b16 %v3327, %v3325
  %v3345 = vsel %vm43, %v3303, 0
  %3347 = vmatprep.subr.bf16.mxu0 %v3329
  %3348 = vmatpush1.bf16.msra.mxu0 %v3328
  %3349 = vmatprep.subr.bf16.mxu0 %v3331
  %3350 = vmatpush1.bf16.msra.mxu0 %v3330
  %3351 = vmatprep.subr.bf16.mxu0 %v3333
  %3352 = vmatpush1.bf16.msra.mxu0 %v3332
  %3353 = vmatprep.subr.bf16.mxu0 %v3335
  %3354 = vmatpush1.bf16.msra.mxu0 %v3334
  %3355 = vmatprep.subr.bf16.mxu0 0
  %3356 = vmatpush1.bf16.msra.mxu0 0
  %3357 = vmatprep.subr.bf16.mxu0 0
  %3358 = vmatpush1.bf16.msra.mxu0 0
  %3359 = vmatprep.subr.bf16.mxu0 0
  %3360 = vmatpush1.bf16.msra.mxu0 0
  %3361 = vmatprep.subr.bf16.mxu0 0
  %3362 = vmatpush1.bf16.msra.mxu0 0
  %3363 = vmatprep.subr.bf16.mxu0 0
  %3364 = vmatpush1.bf16.msra.mxu0 0
  %3365 = vmatprep.subr.bf16.mxu0 0
  %3366 = vmatpush1.bf16.msra.mxu0 0
  %3367 = vmatprep.subr.bf16.mxu0 0
  %3368 = vmatpush1.bf16.msra.mxu0 0
  %3369 = vmatprep.subr.bf16.mxu0 0
  %3370 = vmatpush1.bf16.msra.mxu0 0
  %3371 = vmatprep.subr.bf16.mxu0 0
  %3372 = vmatpush1.bf16.msra.mxu0 0
  %3373 = vmatprep.subr.bf16.mxu0 0
  %3374 = vmatpush1.bf16.msra.mxu0 0
  %3375 = vmatprep.subr.bf16.mxu0 0
  %3376 = vmatpush1.bf16.msra.mxu0 0
  %3377 = vmatprep.subr.bf16.mxu0 0
  %3378 = vmatpush1.bf16.msra.mxu0 0
  %3379 = vmatprep.mubr.bf16.mxu0 0
  %3380 = vmatmul.mubr.bf16.gmra.mrb[0].mxu0 %v3345
  %v3381 = vpop.f32.mrb[0].mxu0
  %v3382 = vadd.f32 0.0, %v3381
  %v3383 = vpop.f32.mrb[0].mxu0
  %v3384 = vadd.f32 0.0, %v3383
  %v3385 = vpop.f32.mrb[0].mxu0
  %v3386 = vadd.f32 0.0, %v3385
  %v3387 = vpop.f32.mrb[0].mxu0
  %v3388 = vadd.f32 0.0, %v3387
  %3389 = vdwg.mxu0
  %s3391 = sor.u32 256, 121
  %3392 = vrot.lane.b32.xlu0 %v3382, %s3391
  %v3393 = vpop.permute.xlu0 %3392
  %s3395 = sor.u32 256, 1
  %3396 = vrot.lane.b32.xlu0 %v3386, %s3395
  %v3397 = vpop.permute.xlu0 %3396
  %s3399 = sor.u32 256, 113
  %3400 = vrot.lane.b32.xlu0 %v3384, %s3399
  %v3401 = vpop.permute.xlu0 %3400
  %s3403 = sor.u32 256, 121
  %3404 = vrot.lane.b32.xlu0 %v3388, %s3403
  %v3405 = vpop.permute.xlu0 %3404
  %v3407 = vsel %vm43, %v3279, 0
  %3409 = vmatprep.subr.bf16.mxu0 %v3281
  %3410 = vmatpush1.bf16.msra.mxu0 %v3280
  %3411 = vmatprep.subr.bf16.mxu0 %v3283
  %3412 = vmatpush1.bf16.msra.mxu0 %v3282
  %3413 = vmatprep.subr.bf16.mxu0 %v3285
  %3414 = vmatpush1.bf16.msra.mxu0 %v3284
  %3415 = vmatprep.subr.bf16.mxu0 %v3287
  %3416 = vmatpush1.bf16.msra.mxu0 %v3286
  %3417 = vmatprep.subr.bf16.mxu0 0
  %3418 = vmatpush1.bf16.msra.mxu0 0
  %3419 = vmatprep.subr.bf16.mxu0 0
  %3420 = vmatpush1.bf16.msra.mxu0 0
  %3421 = vmatprep.subr.bf16.mxu0 0
  %3422 = vmatpush1.bf16.msra.mxu0 0
  %3423 = vmatprep.subr.bf16.mxu0 0
  %3424 = vmatpush1.bf16.msra.mxu0 0
  %3425 = vmatprep.subr.bf16.mxu0 0
  %3426 = vmatpush1.bf16.msra.mxu0 0
  %3427 = vmatprep.subr.bf16.mxu0 0
  %3428 = vmatpush1.bf16.msra.mxu0 0
  %3429 = vmatprep.subr.bf16.mxu0 0
  %3430 = vmatpush1.bf16.msra.mxu0 0
  %3431 = vmatprep.subr.bf16.mxu0 0
  %3432 = vmatpush1.bf16.msra.mxu0 0
  %3433 = vmatprep.subr.bf16.mxu0 0
  %3434 = vmatpush1.bf16.msra.mxu0 0
  %3435 = vmatprep.subr.bf16.mxu0 0
  %3436 = vmatpush1.bf16.msra.mxu0 0
  %3437 = vmatprep.subr.bf16.mxu0 0
  %3438 = vmatpush1.bf16.msra.mxu0 0
  %3439 = vmatprep.subr.bf16.mxu0 0
  %3440 = vmatpush1.bf16.msra.mxu0 0
  %3441 = vmatprep.mubr.bf16.mxu0 0
  %3442 = vmatmul.mubr.bf16.gmra.mrb[0].mxu0 %v3407
  %v3443 = vpop.f32.mrb[0].mxu0
  %v3444 = vadd.f32 %v3393, %v3443
  %v3445 = vpop.f32.mrb[0].mxu0
  %v3446 = vadd.f32 %v3401, %v3445
  %v3447 = vpop.f32.mrb[0].mxu0
  %v3448 = vadd.f32 %v3397, %v3447
  %v3449 = vpop.f32.mrb[0].mxu0
  %v3450 = vadd.f32 %v3405, %v3449
  %3451 = vdwg.mxu0
  %v3452 = vmul.f32 %v3444, 0.5
  %v3453 = vmul.f32 %v3446, 0.5
  %v3454 = vmul.f32 %v3448, 0.5
  %v3455 = vmul.f32 %v3450, 0.5
  %v3456 = vadd.f32 %v3452, %v752
  %v3457 = vadd.f32 %v3453, %v753
  %v3458 = vadd.f32 %v3454, %v754
  %v3459 = vadd.f32 %v3455, %v755
  %v3460 = vmax.f32 %v3456, %v3457
  %3461 = vmax.xlane.f32.xlu0 %v3460
  %v3462 = vpop.xlane.xlu0 %3461
  %v3463 = vmax.f32 %v3458, %v3459
  %3464 = vmax.xlane.f32.xlu0 %v3463
  %v3465 = vpop.xlane.xlu0 %3464
  %v3466 = vsub.f32 %v3456, %v3462
  %v3467 = vsub.f32 %v3457, %v3462
  %v3468 = vsub.f32 %v3458, %v3465
  %v3469 = vsub.f32 %v3459, %v3465
  %v3470 = vmul.f32 %v3466, 1.442695
  %v3471 = vpow.pop %v3470
  %v3472 = vmul.f32 %v3467, 1.442695
  %v3473 = vpow.pop %v3472
  %v3474 = vmul.f32 %v3468, 1.442695
  %v3475 = vpow.pop %v3474
  %v3476 = vmul.f32 %v3469, 1.442695
  %v3477 = vpow.pop %v3476
  %v3478 = vpack.c.bf16 %v3475, %v3471
  %v3479 = vpack.c.bf16 %v3477, %v3473
  %3480 = vmatprep.subr.bf16.mxu0 %v909
  %3481 = vmatpush1.bf16.msra.mxu0 %v908
  %3482 = vmatprep.subr.bf16.mxu0 %v911
  %3483 = vmatpush1.bf16.msra.mxu0 %v910
  %3484 = vmatprep.subr.bf16.mxu0 %v913
  %3485 = vmatpush1.bf16.msra.mxu0 %v912
  %3486 = vmatprep.subr.bf16.mxu0 %v915
  %3487 = vmatpush1.bf16.msra.mxu0 %v914
  %3488 = vmatprep.subr.bf16.mxu0 %v917
  %3489 = vmatpush1.bf16.msra.mxu0 %v916
  %3490 = vmatprep.subr.bf16.mxu0 %v919
  %3491 = vmatpush1.bf16.msra.mxu0 %v918
  %3492 = vmatprep.subr.bf16.mxu0 %v921
  %3493 = vmatpush1.bf16.msra.mxu0 %v920
  %3494 = vmatprep.subr.bf16.mxu0 %v923
  %3495 = vmatpush1.bf16.msra.mxu0 %v922
  %3496 = vmatprep.subr.bf16.mxu0 %v925
  %3497 = vmatpush1.bf16.msra.mxu0 %v924
  %3498 = vmatprep.subr.bf16.mxu0 %v927
  %3499 = vmatpush1.bf16.msra.mxu0 %v926
  %3500 = vmatprep.subr.bf16.mxu0 %v929
  %3501 = vmatpush1.bf16.msra.mxu0 %v928
  %3502 = vmatprep.subr.bf16.mxu0 %v931
  %3503 = vmatpush1.bf16.msra.mxu0 %v930
  %3504 = vmatprep.subr.bf16.mxu0 %v933
  %3505 = vmatpush1.bf16.msra.mxu0 %v932
  %3506 = vmatprep.subr.bf16.mxu0 %v935
  %3507 = vmatpush1.bf16.msra.mxu0 %v934
  %3508 = vmatprep.subr.bf16.mxu0 %v937
  %3509 = vmatpush1.bf16.msra.mxu0 %v936
  %3510 = vmatprep.subr.bf16.mxu0 %v939
  %3511 = vmatpush1.bf16.msra.mxu0 %v938
  %3512 = vmatprep.mubr.bf16.mxu0 %v3479
  %3513 = vmatmul.mubr.bf16.gmra.mrb[0].mxu0 %v3478
  %v3514 = vpop.f32.mrb[0].mxu0
  %v3515 = vadd.f32 0.0, %v3514
  %v3516 = vpop.f32.mrb[0].mxu0
  %v3517 = vadd.f32 0.0, %v3516
  %v3518 = vpop.f32.mrb[0].mxu0
  %v3519 = vadd.f32 0.0, %v3518
  %v3520 = vpop.f32.mrb[0].mxu0
  %v3521 = vadd.f32 0.0, %v3520
  %3522 = vdwg.mxu0
  %v3523 = vmax.f32 %v3515, 1e-30
  %v3524 = vmax.f32 %v3517, 1e-30
  %v3525 = vmax.f32 %v3519, 1e-30
  %v3526 = vmax.f32 %v3521, 1e-30
  %v3527 = vrcp.pop %v3523
  %v3528 = vrcp.pop %v3524
  %v3529 = vrcp.pop %v3525
  %v3530 = vrcp.pop %v3526
  %v3531 = vmul.f32 %v3471, %v3527
  %v3532 = vmul.f32 %v3473, %v3528
  %v3533 = vmul.f32 %v3475, %v3529
  %v3534 = vmul.f32 %v3477, %v3530
  %v3535 = vpack.c.bf16 %v3040, %v3037
  %3536 = vmatprep.subr.bf16.mxu0 0
  %3537 = vmatpush1.bf16.msra.mxu0 %v3535
  %3538 = vmatprep.subr.bf16.mxu0 0
  %3539 = vmatpush1.bf16.msra.mxu0 0
  %3540 = vmatprep.subr.bf16.mxu0 0
  %3541 = vmatpush1.bf16.msra.mxu0 0
  %3542 = vmatprep.subr.bf16.mxu0 0
  %3543 = vmatpush1.bf16.msra.mxu0 0
  %3544 = vmatprep.subr.bf16.mxu0 0
  %3545 = vmatpush1.bf16.msra.mxu0 0
  %3546 = vmatprep.subr.bf16.mxu0 0
  %3547 = vmatpush1.bf16.msra.mxu0 0
  %3548 = vmatprep.subr.bf16.mxu0 0
  %3549 = vmatpush1.bf16.msra.mxu0 0
  %3550 = vmatprep.subr.bf16.mxu0 0
  %3551 = vmatpush1.bf16.msra.mxu0 0
  %3552 = vmatprep.subr.bf16.mxu0 0
  %3553 = vmatpush1.bf16.msra.mxu0 0
  %3554 = vmatprep.subr.bf16.mxu0 0
  %3555 = vmatpush1.bf16.msra.mxu0 0
  %3556 = vmatprep.subr.bf16.mxu0 0
  %3557 = vmatpush1.bf16.msra.mxu0 0
  %3558 = vmatprep.subr.bf16.mxu0 0
  %3559 = vmatpush1.bf16.msra.mxu0 0
  %3560 = vmatprep.subr.bf16.mxu0 0
  %3561 = vmatpush1.bf16.msra.mxu0 0
  %3562 = vmatprep.subr.bf16.mxu0 0
  %3563 = vmatpush1.bf16.msra.mxu0 0
  %3564 = vmatprep.subr.bf16.mxu0 0
  %3565 = vmatpush1.bf16.msra.mxu0 0
  %3566 = vmatprep.subr.bf16.mxu0 0
  %3567 = vmatpush1.bf16.msra.mxu0 0
  %3568 = vmatprep.mubr.bf16.mxu0 0
  %3569 = vmatmul.mubr.bf16.gmra.mrb[0].mxu0 %v1141
  %v3570 = vpop.f32.mrb[0].mxu0
  %v3571 = vadd.f32 0.0, %v3570
  %v3572 = vpop.f32.mrb[0].mxu0
  %v3573 = vpop.f32.mrb[0].mxu0
  %v3574 = vadd.f32 0.0, %v3573
  %v3575 = vpop.f32.mrb[0].mxu0
  %3576 = vmatprep.mubr.bf16.mxu0 0
  %3577 = vmatmul.mubr.bf16.gmra.mrb[0].mxu0 %v1144
  %v3578 = vpop.f32.mrb[0].mxu0
  %v3579 = vadd.f32 0.0, %v3578
  %v3580 = vpop.f32.mrb[0].mxu0
  %v3581 = vpop.f32.mrb[0].mxu0
  %v3582 = vadd.f32 0.0, %v3581
  %v3583 = vpop.f32.mrb[0].mxu0
  %3584 = vmatprep.mubr.bf16.mxu0 0
  %3585 = vmatmul.mubr.bf16.gmra.mrb[0].mxu0 %v1147
  %v3586 = vpop.f32.mrb[0].mxu0
  %v3587 = vadd.f32 0.0, %v3586
  %v3588 = vpop.f32.mrb[0].mxu0
  %v3589 = vpop.f32.mrb[0].mxu0
  %v3590 = vadd.f32 0.0, %v3589
  %v3591 = vpop.f32.mrb[0].mxu0
  %3592 = vmatprep.mubr.bf16.mxu0 0
  %3593 = vmatmul.mubr.bf16.gmra.mrb[0].mxu0 %v1150
  %v3594 = vpop.f32.mrb[0].mxu0
  %v3595 = vadd.f32 0.0, %v3594
  %v3596 = vpop.f32.mrb[0].mxu0
  %v3597 = vpop.f32.mrb[0].mxu0
  %v3598 = vadd.f32 0.0, %v3597
  %v3599 = vpop.f32.mrb[0].mxu0
  %3600 = vmatprep.mubr.bf16.mxu0 0
  %3601 = vmatmul.mubr.bf16.gmra.mrb[0].mxu0 %v1153
  %v3602 = vpop.f32.mrb[0].mxu0
  %v3603 = vadd.f32 0.0, %v3602
  %v3604 = vpop.f32.mrb[0].mxu0
  %v3605 = vpop.f32.mrb[0].mxu0
  %v3606 = vadd.f32 0.0, %v3605
  %v3607 = vpop.f32.mrb[0].mxu0
  %3608 = vmatprep.mubr.bf16.mxu0 0
  %3609 = vmatmul.mubr.bf16.gmra.mrb[0].mxu0 %v1156
  %v3610 = vpop.f32.mrb[0].mxu0
  %v3611 = vadd.f32 0.0, %v3610
  %v3612 = vpop.f32.mrb[0].mxu0
  %v3613 = vpop.f32.mrb[0].mxu0
  %v3614 = vadd.f32 0.0, %v3613
  %v3615 = vpop.f32.mrb[0].mxu0
  %3616 = vmatprep.mubr.bf16.mxu0 0
  %3617 = vmatmul.mubr.bf16.gmra.mrb[0].mxu0 %v1159
  %v3618 = vpop.f32.mrb[0].mxu0
  %v3619 = vadd.f32 0.0, %v3618
  %v3620 = vpop.f32.mrb[0].mxu0
  %v3621 = vpop.f32.mrb[0].mxu0
  %v3622 = vadd.f32 0.0, %v3621
  %v3623 = vpop.f32.mrb[0].mxu0
  %3624 = vmatprep.mubr.bf16.mxu0 0
  %3625 = vmatmul.mubr.bf16.gmra.mrb[0].mxu0 %v1162
  %v3626 = vpop.f32.mrb[0].mxu0
  %v3627 = vadd.f32 0.0, %v3626
  %v3628 = vpop.f32.mrb[0].mxu0
  %v3629 = vpop.f32.mrb[0].mxu0
  %v3630 = vadd.f32 0.0, %v3629
  %v3631 = vpop.f32.mrb[0].mxu0
  %3632 = vmatprep.mubr.bf16.mxu0 0
  %3633 = vmatmul.mubr.bf16.gmra.mrb[0].mxu0 %v1165
  %v3634 = vpop.f32.mrb[0].mxu0
  %v3635 = vadd.f32 0.0, %v3634
  %v3636 = vpop.f32.mrb[0].mxu0
  %v3637 = vpop.f32.mrb[0].mxu0
  %v3638 = vadd.f32 0.0, %v3637
  %v3639 = vpop.f32.mrb[0].mxu0
  %3640 = vmatprep.mubr.bf16.mxu0 0
  %3641 = vmatmul.mubr.bf16.gmra.mrb[0].mxu0 %v1168
  %v3642 = vpop.f32.mrb[0].mxu0
  %v3643 = vadd.f32 0.0, %v3642
  %v3644 = vpop.f32.mrb[0].mxu0
  %v3645 = vpop.f32.mrb[0].mxu0
  %v3646 = vadd.f32 0.0, %v3645
  %v3647 = vpop.f32.mrb[0].mxu0
  %3648 = vmatprep.mubr.bf16.mxu0 0
  %3649 = vmatmul.mubr.bf16.gmra.mrb[0].mxu0 %v1171
  %v3650 = vpop.f32.mrb[0].mxu0
  %v3651 = vadd.f32 0.0, %v3650
  %v3652 = vpop.f32.mrb[0].mxu0
  %v3653 = vpop.f32.mrb[0].mxu0
  %v3654 = vadd.f32 0.0, %v3653
  %v3655 = vpop.f32.mrb[0].mxu0
  %3656 = vmatprep.mubr.bf16.mxu0 0
  %3657 = vmatmul.mubr.bf16.gmra.mrb[0].mxu0 %v1174
  %v3658 = vpop.f32.mrb[0].mxu0
  %v3659 = vadd.f32 0.0, %v3658
  %v3660 = vpop.f32.mrb[0].mxu0
  %v3661 = vpop.f32.mrb[0].mxu0
  %v3662 = vadd.f32 0.0, %v3661
  %v3663 = vpop.f32.mrb[0].mxu0
  %3664 = vmatprep.mubr.bf16.mxu0 0
  %3665 = vmatmul.mubr.bf16.gmra.mrb[0].mxu0 %v1177
  %v3666 = vpop.f32.mrb[0].mxu0
  %v3667 = vadd.f32 0.0, %v3666
  %v3668 = vpop.f32.mrb[0].mxu0
  %v3669 = vpop.f32.mrb[0].mxu0
  %v3670 = vadd.f32 0.0, %v3669
  %v3671 = vpop.f32.mrb[0].mxu0
  %3672 = vmatprep.mubr.bf16.mxu0 0
  %3673 = vmatmul.mubr.bf16.gmra.mrb[0].mxu0 %v1180
  %v3674 = vpop.f32.mrb[0].mxu0
  %v3675 = vadd.f32 0.0, %v3674
  %v3676 = vpop.f32.mrb[0].mxu0
  %v3677 = vpop.f32.mrb[0].mxu0
  %v3678 = vadd.f32 0.0, %v3677
  %v3679 = vpop.f32.mrb[0].mxu0
  %3680 = vmatprep.mubr.bf16.mxu0 0
  %3681 = vmatmul.mubr.bf16.gmra.mrb[0].mxu0 %v1183
  %v3682 = vpop.f32.mrb[0].mxu0
  %v3683 = vadd.f32 0.0, %v3682
  %v3684 = vpop.f32.mrb[0].mxu0
  %v3685 = vpop.f32.mrb[0].mxu0
  %v3686 = vadd.f32 0.0, %v3685
  %v3687 = vpop.f32.mrb[0].mxu0
  %3688 = vmatprep.mubr.bf16.mxu0 0
  %3689 = vmatmul.mubr.bf16.gmra.mrb[0].mxu0 %v1186
  %v3690 = vpop.f32.mrb[0].mxu0
  %v3691 = vadd.f32 0.0, %v3690
  %v3692 = vpop.f32.mrb[0].mxu0
  %v3693 = vpop.f32.mrb[0].mxu0
  %v3694 = vadd.f32 0.0, %v3693
  %v3695 = vpop.f32.mrb[0].mxu0
  %3696 = vdwg.mxu0
  %v3697 = vmul.f32 %v3571, %v145
  %v3698 = vmul.f32 %v3574, %v146
  %v3699 = vmul.f32 %v3579, %v147
  %v3700 = vmul.f32 %v3582, %v148
  %v3701 = vmul.f32 %v3587, %v149
  %v3702 = vmul.f32 %v3590, %v150
  %v3703 = vmul.f32 %v3595, %v151
  %v3704 = vmul.f32 %v3598, %v152
  %v3705 = vmul.f32 %v3603, %v153
  %v3706 = vmul.f32 %v3606, %v154
  %v3707 = vmul.f32 %v3611, %v155
  %v3708 = vmul.f32 %v3614, %v156
  %v3709 = vmul.f32 %v3619, %v157
  %v3710 = vmul.f32 %v3622, %v158
  %v3711 = vmul.f32 %v3627, %v159
  %v3712 = vmul.f32 %v3630, %v160
  %v3713 = vmul.f32 %v3635, %v161
  %v3714 = vmul.f32 %v3638, %v162
  %v3715 = vmul.f32 %v3643, %v163
  %v3716 = vmul.f32 %v3646, %v164
  %v3717 = vmul.f32 %v3651, %v165
  %v3718 = vmul.f32 %v3654, %v166
  %v3719 = vmul.f32 %v3659, %v167
  %v3720 = vmul.f32 %v3662, %v168
  %v3721 = vmul.f32 %v3667, %v169
  %v3722 = vmul.f32 %v3670, %v170
  %v3723 = vmul.f32 %v3675, %v171
  %v3724 = vmul.f32 %v3678, %v172
  %v3725 = vmul.f32 %v3683, %v173
  %v3726 = vmul.f32 %v3686, %v174
  %v3727 = vmul.f32 %v3691, %v175
  %v3728 = vmul.f32 %v3694, %v176
  %v3729 = vpack.c.bf16 %v3533, %v3531
  %v3730 = vpack.c.bf16 %v3534, %v3532
  %v3731 = vpack.c.bf16 %v3698, %v3697
  %v3732 = vpack.c.bf16 %v3700, %v3699
  %v3733 = vpack.c.bf16 %v3702, %v3701
  %v3734 = vpack.c.bf16 %v3704, %v3703
  %v3735 = vpack.c.bf16 %v3706, %v3705
  %v3736 = vpack.c.bf16 %v3708, %v3707
  %v3737 = vpack.c.bf16 %v3710, %v3709
  %v3738 = vpack.c.bf16 %v3712, %v3711
  %v3739 = vpack.c.bf16 %v3714, %v3713
  %v3740 = vpack.c.bf16 %v3716, %v3715
  %v3741 = vpack.c.bf16 %v3718, %v3717
  %v3742 = vpack.c.bf16 %v3720, %v3719
  %v3743 = vpack.c.bf16 %v3722, %v3721
  %v3744 = vpack.c.bf16 %v3724, %v3723
  %v3745 = vpack.c.bf16 %v3726, %v3725
  %v3746 = vpack.c.bf16 %v3728, %v3727
  %3747 = vmatprep.subr.bf16.mxu0 0
  %3748 = vmatpush1.bf16.msra.mxu0 %v3731
  %3749 = vmatprep.subr.bf16.mxu0 0
  %3750 = vmatpush1.bf16.msra.mxu0 %v3732
  %3751 = vmatprep.subr.bf16.mxu0 0
  %3752 = vmatpush1.bf16.msra.mxu0 %v3733
  %3753 = vmatprep.subr.bf16.mxu0 0
  %3754 = vmatpush1.bf16.msra.mxu0 %v3734
  %3755 = vmatprep.subr.bf16.mxu0 0
  %3756 = vmatpush1.bf16.msra.mxu0 %v3735
  %3757 = vmatprep.subr.bf16.mxu0 0
  %3758 = vmatpush1.bf16.msra.mxu0 %v3736
  %3759 = vmatprep.subr.bf16.mxu0 0
  %3760 = vmatpush1.bf16.msra.mxu0 %v3737
  %3761 = vmatprep.subr.bf16.mxu0 0
  %3762 = vmatpush1.bf16.msra.mxu0 %v3738
  %3763 = vmatprep.subr.bf16.mxu0 0
  %3764 = vmatpush1.bf16.msra.mxu0 %v3739
  %3765 = vmatprep.subr.bf16.mxu0 0
  %3766 = vmatpush1.bf16.msra.mxu0 %v3740
  %3767 = vmatprep.subr.bf16.mxu0 0
  %3768 = vmatpush1.bf16.msra.mxu0 %v3741
  %3769 = vmatprep.subr.bf16.mxu0 0
  %3770 = vmatpush1.bf16.msra.mxu0 %v3742
  %3771 = vmatprep.subr.bf16.mxu0 0
  %3772 = vmatpush1.bf16.msra.mxu0 %v3743
  %3773 = vmatprep.subr.bf16.mxu0 0
  %3774 = vmatpush1.bf16.msra.mxu0 %v3744
  %3775 = vmatprep.subr.bf16.mxu0 0
  %3776 = vmatpush1.bf16.msra.mxu0 %v3745
  %3777 = vmatprep.subr.bf16.mxu0 0
  %3778 = vmatpush1.bf16.msra.mxu0 %v3746
  %3779 = vmatprep.mubr.bf16.mxu0 %v3730
  %3780 = vmatmul.mubr.bf16.gmra.mrb[0].mxu0 %v3729
  %v3781 = vpop.f32.mrb[0].mxu0
  %v3782 = vadd.f32 0.0, %v3781
  %v3783 = vpop.f32.mrb[0].mxu0
  %v3784 = vpop.f32.mrb[0].mxu0
  %v3785 = vadd.f32 0.0, %v3784
  %v3786 = vpop.f32.mrb[0].mxu0
  %3787 = vdwg.mxu0
  %v3788 = vld [vmem:[%s2892 + $0x60] sm:$0xf]
  %v3789 = vld [vmem:[%s2892 + $0x64] sm:$0xf]
  %v3790 = vld [vmem:[%s2892 + $0x68] sm:$0xf]
  %v3791 = vld [vmem:[%s2892 + $0x6c] sm:$0xf]
  %v3792 = vld [vmem:[%s2892 + $0x70] sm:$0xf]
  %v3793 = vld [vmem:[%s2892 + $0x74] sm:$0xf]
  %v3794 = vld [vmem:[%s2892 + $0x78] sm:$0xf]
  %v3795 = vld [vmem:[%s2892 + $0x7c] sm:$0xf]
  %v3796 = vpack.c.bf16 %v3785, %v3782
  %v3805 = vunpack.c.l.b16 %v3788
  %v3806 = vunpack.c.l.b16 %v3789
  %v3807 = vunpack.c.l.b16 %v3790
  %v3808 = vunpack.c.l.b16 %v3791
  %v3809 = vunpack.c.l.b16 %v3792
  %v3810 = vunpack.c.l.b16 %v3793
  %v3811 = vunpack.c.l.b16 %v3794
  %v3812 = vunpack.c.l.b16 %v3795
  %v3813 = vpack.c.b16 %v3806, %v3805
  %v3814 = vpack.c.b16 %v3808, %v3807
  %v3815 = vpack.c.b16 %v3810, %v3809
  %v3816 = vpack.c.b16 %v3812, %v3811
  %v3822 = vsel %vm43, %v3796, 0
  %3824 = vmatprep.subr.bf16.mxu0 0
  %3825 = vmatpush1.bf16.msra.mxu0 %v3813
  %3826 = vmatprep.subr.bf16.mxu0 0
  %3827 = vmatpush1.bf16.msra.mxu0 %v3814
  %3828 = vmatprep.subr.bf16.mxu0 0
  %3829 = vmatpush1.bf16.msra.mxu0 %v3815
  %3830 = vmatprep.subr.bf16.mxu0 0
  %3831 = vmatpush1.bf16.msra.mxu0 %v3816
  %3832 = vmatprep.subr.bf16.mxu0 0
  %3833 = vmatpush1.bf16.msra.mxu0 0
  %3834 = vmatprep.subr.bf16.mxu0 0
  %3835 = vmatpush1.bf16.msra.mxu0 0
  %3836 = vmatprep.subr.bf16.mxu0 0
  %3837 = vmatpush1.bf16.msra.mxu0 0
  %3838 = vmatprep.subr.bf16.mxu0 0
  %3839 = vmatpush1.bf16.msra.mxu0 0
  %3840 = vmatprep.subr.bf16.mxu0 0
  %3841 = vmatpush1.bf16.msra.mxu0 0
  %3842 = vmatprep.subr.bf16.mxu0 0
  %3843 = vmatpush1.bf16.msra.mxu0 0
  %3844 = vmatprep.subr.bf16.mxu0 0
  %3845 = vmatpush1.bf16.msra.mxu0 0
  %3846 = vmatprep.subr.bf16.mxu0 0
  %3847 = vmatpush1.bf16.msra.mxu0 0
  %3848 = vmatprep.subr.bf16.mxu0 0
  %3849 = vmatpush1.bf16.msra.mxu0 0
  %3850 = vmatprep.subr.bf16.mxu0 0
  %3851 = vmatpush1.bf16.msra.mxu0 0
  %3852 = vmatprep.subr.bf16.mxu0 0
  %3853 = vmatpush1.bf16.msra.mxu0 0
  %3854 = vmatprep.subr.bf16.mxu0 0
  %3855 = vmatpush1.bf16.msra.mxu0 0
  %3856 = vmatprep.mubr.bf16.mxu0 0
  %3857 = vmatmul.mubr.bf16.gmra.mrb[0].mxu0 %v3822
  %v3858 = vpop.f32.mrb[0].mxu0
  %v3859 = vadd.f32 0.0, %v3858
  %v3860 = vpop.f32.mrb[0].mxu0
  %v3861 = vpop.f32.mrb[0].mxu0
  %v3862 = vadd.f32 0.0, %v3861
  %v3863 = vpop.f32.mrb[0].mxu0
  %3864 = vdwg.mxu0
  %v3865 = vadd.f32 %v2887, %v3859
  %v3866 = vadd.f32 %v2888, %v3862
  %v3867 = vld [vmem:[%s2889 + $0x2] sm:$0x1]
  %v3868 = vld [vmem:[%s2889 + $0x3] sm:$0x1]
  %v3869 = vsel %vm43, %v3865, 0.0
  %3870 = vadd.xlane.f32.xlu0 %v3869
  %v3871 = vpop.xlane.xlu0 %3870
  %v3872 = vsel %vm43, %v3866, 0.0
  %3873 = vadd.xlane.f32.xlu0 %v3872
  %v3874 = vpop.xlane.xlu0 %3873
  %v3875 = vmul.f32 %v3871, %v1527
  %v3876 = vmul.f32 %v3874, %v1527
  %v3877 = vsub.f32 %v3865, %v3875
  %v3878 = vsub.f32 %v3866, %v3876
  %v3879 = vmul.f32 %v3877, %v3877
  %v3880 = vmul.f32 %v3878, %v3878
  %v3881 = vsel %vm43, %v3879, 0.0
  %3882 = vadd.xlane.f32.xlu0 %v3881
  %v3883 = vpop.xlane.xlu0 %3882
  %v3884 = vsel %vm43, %v3880, 0.0
  %3885 = vadd.xlane.f32.xlu0 %v3884
  %v3886 = vpop.xlane.xlu0 %3885
  %v3887 = vmul.f32 %v3883, %v1527
  %v3888 = vmul.f32 %v3886, %v1527
  %v3889 = vadd.f32 %v3887, 1e-05
  %v3890 = vadd.f32 %v3888, 1e-05
  %v3891 = vrsqrt.pop %v3889
  %v3892 = vrsqrt.pop %v3890
  %v3893 = vmul.f32 %v3877, %v3891
  %v3894 = vmul.f32 %v3878, %v3892
  %v3895 = vlaneseq
  %v3896 = vshrl.u32 %v3895, 7
  %v3897 = vsub.s32 0, %v3896
  %v3898 = vrot.slane %v3867, %v3897
  %v3899 = vmul.f32 %v3893, %v3898
  %v3900 = vmul.f32 %v3894, %v3898
  %v3901 = vlaneseq
  %v3902 = vshrl.u32 %v3901, 7
  %v3903 = vsub.s32 0, %v3902
  %v3904 = vrot.slane %v3868, %v3903
  %v3905 = vadd.f32 %v3899, %v3904
  %v3906 = vadd.f32 %v3900, %v3904
  %v3907 = vld [vmem:[%s2892 + $0x80] sm:$0xf]
  %v3908 = vld [vmem:[%s2892 + $0x84] sm:$0xf]
  %v3909 = vld [vmem:[%s2892 + $0x88] sm:$0xf]
  %v3910 = vld [vmem:[%s2892 + $0x8c] sm:$0xf]
  %v3911 = vld [vmem:[%s2892 + $0x90] sm:$0xf]
  %v3912 = vld [vmem:[%s2892 + $0x94] sm:$0xf]
  %v3913 = vld [vmem:[%s2892 + $0x98] sm:$0xf]
  %v3914 = vld [vmem:[%s2892 + $0x9c] sm:$0xf]
  %v3915 = vpack.c.bf16 %v3906, %v3905
  %v3924 = vunpack.c.l.b16 %v3907
  %v3925 = vunpack.c.l.b16 %v3908
  %v3926 = vunpack.c.l.b16 %v3909
  %v3927 = vunpack.c.l.b16 %v3910
  %v3928 = vunpack.c.l.b16 %v3911
  %v3929 = vunpack.c.l.b16 %v3912
  %v3930 = vunpack.c.l.b16 %v3913
  %v3931 = vunpack.c.l.b16 %v3914
  %v3932 = vpack.c.b16 %v3925, %v3924
  %v3933 = vpack.c.b16 %v3927, %v3926
  %v3934 = vpack.c.b16 %v3929, %v3928
  %v3935 = vpack.c.b16 %v3931, %v3930
  %v3941 = vsel %vm43, %v3915, 0
  %3943 = vmatprep.subr.bf16.mxu0 0
  %3944 = vmatpush1.bf16.msra.mxu0 %v3932
  %3945 = vmatprep.subr.bf16.mxu0 0
  %3946 = vmatpush1.bf16.msra.mxu0 %v3933
  %3947 = vmatprep.subr.bf16.mxu0 0
  %3948 = vmatpush1.bf16.msra.mxu0 %v3934
  %3949 = vmatprep.subr.bf16.mxu0 0
  %3950 = vmatpush1.bf16.msra.mxu0 %v3935
  %3951 = vmatprep.subr.bf16.mxu0 0
  %3952 = vmatpush1.bf16.msra.mxu0 0
  %3953 = vmatprep.subr.bf16.mxu0 0
  %3954 = vmatpush1.bf16.msra.mxu0 0
  %3955 = vmatprep.subr.bf16.mxu0 0
  %3956 = vmatpush1.bf16.msra.mxu0 0
  %3957 = vmatprep.subr.bf16.mxu0 0
  %3958 = vmatpush1.bf16.msra.mxu0 0
  %3959 = vmatprep.subr.bf16.mxu0 0
  %3960 = vmatpush1.bf16.msra.mxu0 0
  %3961 = vmatprep.subr.bf16.mxu0 0
  %3962 = vmatpush1.bf16.msra.mxu0 0
  %3963 = vmatprep.subr.bf16.mxu0 0
  %3964 = vmatpush1.bf16.msra.mxu0 0
  %3965 = vmatprep.subr.bf16.mxu0 0
  %3966 = vmatpush1.bf16.msra.mxu0 0
  %3967 = vmatprep.subr.bf16.mxu0 0
  %3968 = vmatpush1.bf16.msra.mxu0 0
  %3969 = vmatprep.subr.bf16.mxu0 0
  %3970 = vmatpush1.bf16.msra.mxu0 0
  %3971 = vmatprep.subr.bf16.mxu0 0
  %3972 = vmatpush1.bf16.msra.mxu0 0
  %3973 = vmatprep.subr.bf16.mxu0 0
  %3974 = vmatpush1.bf16.msra.mxu0 0
  %3975 = vmatprep.mubr.bf16.mxu0 0
  %3976 = vmatmul.mubr.bf16.gmra.mrb[0].mxu0 %v3941
  %v3977 = vpop.f32.mrb[0].mxu0
  %v3978 = vadd.f32 0.0, %v3977
  %v3979 = vpop.f32.mrb[0].mxu0
  %v3980 = vpop.f32.mrb[0].mxu0
  %v3981 = vadd.f32 0.0, %v3980
  %v3982 = vpop.f32.mrb[0].mxu0
  %3983 = vdwg.mxu0
  %v3984 = vld [vmem:[%s2892 + $0xc0] sm:$0xf]
  %v3985 = vld [vmem:[%s2892 + $0xc4] sm:$0xf]
  %v3986 = vld [vmem:[%s2892 + $0xc8] sm:$0xf]
  %v3987 = vld [vmem:[%s2892 + $0xcc] sm:$0xf]
  %v3988 = vld [vmem:[%s2892 + $0xd0] sm:$0xf]
  %v3989 = vld [vmem:[%s2892 + $0xd4] sm:$0xf]
  %v3990 = vld [vmem:[%s2892 + $0xd8] sm:$0xf]
  %v3991 = vld [vmem:[%s2892 + $0xdc] sm:$0xf]
  %v4000 = vunpack.c.l.b16 %v3984
  %v4001 = vunpack.c.l.b16 %v3985
  %v4002 = vunpack.c.l.b16 %v3986
  %v4003 = vunpack.c.l.b16 %v3987
  %v4004 = vunpack.c.l.b16 %v3988
  %v4005 = vunpack.c.l.b16 %v3989
  %v4006 = vunpack.c.l.b16 %v3990
  %v4007 = vunpack.c.l.b16 %v3991
  %v4008 = vpack.c.b16 %v4001, %v4000
  %v4009 = vpack.c.b16 %v4003, %v4002
  %v4010 = vpack.c.b16 %v4005, %v4004
  %v4011 = vpack.c.b16 %v4007, %v4006
  %4016 = vmatprep.subr.bf16.mxu0 0
  %4017 = vmatpush1.bf16.msra.mxu0 %v4008
  %4018 = vmatprep.subr.bf16.mxu0 0
  %4019 = vmatpush1.bf16.msra.mxu0 %v4009
  %4020 = vmatprep.subr.bf16.mxu0 0
  %4021 = vmatpush1.bf16.msra.mxu0 %v4010
  %4022 = vmatprep.subr.bf16.mxu0 0
  %4023 = vmatpush1.bf16.msra.mxu0 %v4011
  %4024 = vmatprep.subr.bf16.mxu0 0
  %4025 = vmatpush1.bf16.msra.mxu0 0
  %4026 = vmatprep.subr.bf16.mxu0 0
  %4027 = vmatpush1.bf16.msra.mxu0 0
  %4028 = vmatprep.subr.bf16.mxu0 0
  %4029 = vmatpush1.bf16.msra.mxu0 0
  %4030 = vmatprep.subr.bf16.mxu0 0
  %4031 = vmatpush1.bf16.msra.mxu0 0
  %4032 = vmatprep.subr.bf16.mxu0 0
  %4033 = vmatpush1.bf16.msra.mxu0 0
  %4034 = vmatprep.subr.bf16.mxu0 0
  %4035 = vmatpush1.bf16.msra.mxu0 0
  %4036 = vmatprep.subr.bf16.mxu0 0
  %4037 = vmatpush1.bf16.msra.mxu0 0
  %4038 = vmatprep.subr.bf16.mxu0 0
  %4039 = vmatpush1.bf16.msra.mxu0 0
  %4040 = vmatprep.subr.bf16.mxu0 0
  %4041 = vmatpush1.bf16.msra.mxu0 0
  %4042 = vmatprep.subr.bf16.mxu0 0
  %4043 = vmatpush1.bf16.msra.mxu0 0
  %4044 = vmatprep.subr.bf16.mxu0 0
  %4045 = vmatpush1.bf16.msra.mxu0 0
  %4046 = vmatprep.subr.bf16.mxu0 0
  %4047 = vmatpush1.bf16.msra.mxu0 0
  %4048 = vmatprep.mubr.bf16.mxu0 0
  %4049 = vmatmul.mubr.bf16.gmra.mrb[0].mxu0 %v1671
  %v4050 = vpop.f32.mrb[0].mxu0
  %v4051 = vadd.f32 0.0, %v4050
  %v4052 = vpop.f32.mrb[0].mxu0
  %v4053 = vpop.f32.mrb[0].mxu0
  %v4054 = vadd.f32 0.0, %v4053
  %v4055 = vpop.f32.mrb[0].mxu0
  %4056 = vdwg.mxu0
  %v4057 = vld [vmem:[%s2892 + $0xa0] sm:$0xf]
  %v4058 = vld [vmem:[%s2892 + $0xa4] sm:$0xf]
  %v4059 = vld [vmem:[%s2892 + $0xa8] sm:$0xf]
  %v4060 = vld [vmem:[%s2892 + $0xac] sm:$0xf]
  %v4061 = vld [vmem:[%s2892 + $0xb0] sm:$0xf]
  %v4062 = vld [vmem:[%s2892 + $0xb4] sm:$0xf]
  %v4063 = vld [vmem:[%s2892 + $0xb8] sm:$0xf]
  %v4064 = vld [vmem:[%s2892 + $0xbc] sm:$0xf]
  %v4073 = vunpack.c.l.b16 %v4057
  %v4074 = vunpack.c.l.b16 %v4058
  %v4075 = vunpack.c.l.b16 %v4059
  %v4076 = vunpack.c.l.b16 %v4060
  %v4077 = vunpack.c.l.b16 %v4061
  %v4078 = vunpack.c.l.b16 %v4062
  %v4079 = vunpack.c.l.b16 %v4063
  %v4080 = vunpack.c.l.b16 %v4064
  %v4081 = vpack.c.b16 %v4074, %v4073
  %v4082 = vpack.c.b16 %v4076, %v4075
  %v4083 = vpack.c.b16 %v4078, %v4077
  %v4084 = vpack.c.b16 %v4080, %v4079
  %4089 = vxpose.xlu0.c.b16.start [1/8] %v4081, 128
  %4090 = vxpose.xlu0.c.b16.cont [2/8] %v4082, 128
  %4091 = vxpose.xlu0.c.b16.cont [3/8] %v4083, 128
  %4092 = vxpose.xlu0.c.b16.cont [4/8] %v4084, 128
  %4093 = vxpose.xlu0.c.b16.cont [5/8] 0, 128
  %4094 = vxpose.xlu0.c.b16.cont [6/8] 0, 128
  %4095 = vxpose.xlu0.c.b16.cont [7/8] 0, 128
  %4096 = vxpose.xlu0.c.b16.end [8/8] 0, 128
  %v4097 = vpop.trf.xlu0
  %v4098 = vpop.trf.xlu0
  %v4099 = vpop.trf.xlu0
  %v4100 = vpop.trf.xlu0
  %v4101 = vpop.trf.xlu0
  %v4102 = vpop.trf.xlu0
  %v4103 = vpop.trf.xlu0
  %v4104 = vpop.trf.xlu0
  %v4106 = vsel %vm43, %v4097, 0
  %v4109 = vsel %vm43, %v4098, 0
  %v4112 = vsel %vm43, %v4099, 0
  %v4115 = vsel %vm43, %v4100, 0
  %4117 = vmatprep.subr.bf16.mxu0 0
  %4118 = vmatpush1.bf16.xpose.msra.mxu0 %v1671
  %4119 = vmatprep.subr.bf16.mxu0 0
  %4120 = vmatpush1.bf16.xpose.msra.mxu0 0
  %4121 = vmatprep.subr.bf16.mxu0 0
  %4122 = vmatpush1.bf16.xpose.msra.mxu0 0
  %4123 = vmatprep.subr.bf16.mxu0 0
  %4124 = vmatpush1.bf16.xpose.msra.mxu0 0
  %4125 = vmatprep.subr.bf16.mxu0 0
  %4126 = vmatpush1.bf16.xpose.msra.mxu0 0
  %4127 = vmatprep.subr.bf16.mxu0 0
  %4128 = vmatpush1.bf16.xpose.msra.mxu0 0
  %4129 = vmatprep.subr.bf16.mxu0 0
  %4130 = vmatpush1.bf16.xpose.msra.mxu0 0
  %4131 = vmatprep.subr.bf16.mxu0 0
  %4132 = vmatpush1.bf16.xpose.msra.mxu0 0
  %4133 = vmatprep.subr.bf16.mxu0 0
  %4134 = vmatpush1.bf16.xpose.msra.mxu0 0
  %4135 = vmatprep.subr.bf16.mxu0 0
  %4136 = vmatpush1.bf16.xpose.msra.mxu0 0
  %4137 = vmatprep.subr.bf16.mxu0 0
  %4138 = vmatpush1.bf16.xpose.msra.mxu0 0
  %4139 = vmatprep.subr.bf16.mxu0 0
  %4140 = vmatpush1.bf16.xpose.msra.mxu0 0
  %4141 = vmatprep.subr.bf16.mxu0 0
  %4142 = vmatpush1.bf16.xpose.msra.mxu0 0
  %4143 = vmatprep.subr.bf16.mxu0 0
  %4144 = vmatpush1.bf16.xpose.msra.mxu0 0
  %4145 = vmatprep.subr.bf16.mxu0 0
  %4146 = vmatpush1.bf16.xpose.msra.mxu0 0
  %4147 = vmatprep.subr.bf16.mxu0 0
  %4148 = vmatpush1.bf16.xpose.msra.mxu0 0
  %4149 = vmatprep.mubr.bf16.mxu0 0
  %4150 = vmatmul.mubr.bf16.gmra.mrb[0].mxu0 %v4106
  %v4151 = vpop.f32.mrb[0].mxu0
  %v4152 = vadd.f32 0.0, %v4151
  %v4153 = vpop.f32.mrb[0].mxu0
  %v4154 = vpop.f32.mrb[0].mxu0
  %v4155 = vadd.f32 0.0, %v4154
  %v4156 = vpop.f32.mrb[0].mxu0
  %4157 = vmatprep.mubr.bf16.mxu0 0
  %4158 = vmatmul.mubr.bf16.gmra.mrb[0].mxu0 %v4109
  %v4159 = vpop.f32.mrb[0].mxu0
  %v4160 = vadd.f32 0.0, %v4159
  %v4161 = vpop.f32.mrb[0].mxu0
  %v4162 = vpop.f32.mrb[0].mxu0
  %v4163 = vadd.f32 0.0, %v4162
  %v4164 = vpop.f32.mrb[0].mxu0
  %4165 = vmatprep.mubr.bf16.mxu0 0
  %4166 = vmatmul.mubr.bf16.gmra.mrb[0].mxu0 %v4112
  %v4167 = vpop.f32.mrb[0].mxu0
  %v4168 = vadd.f32 0.0, %v4167
  %v4169 = vpop.f32.mrb[0].mxu0
  %v4170 = vpop.f32.mrb[0].mxu0
  %v4171 = vadd.f32 0.0, %v4170
  %v4172 = vpop.f32.mrb[0].mxu0
  %4173 = vmatprep.mubr.bf16.mxu0 0
  %4174 = vmatmul.mubr.bf16.gmra.mrb[0].mxu0 %v4115
  %v4175 = vpop.f32.mrb[0].mxu0
  %v4176 = vadd.f32 0.0, %v4175
  %v4177 = vpop.f32.mrb[0].mxu0
  %v4178 = vpop.f32.mrb[0].mxu0
  %v4179 = vadd.f32 0.0, %v4178
  %v4180 = vpop.f32.mrb[0].mxu0
  %4181 = vdwg.mxu0
  %v4182 = vpack.c.bf16 %v4155, %v4152
  %v4183 = vpack.c.bf16 %v4163, %v4160
  %v4184 = vpack.c.bf16 %v4171, %v4168
  %v4185 = vpack.c.bf16 %v4179, %v4176
  %v4187 = vsel %vm468, %v4182, 0
  %v4190 = vsel %vm468, %v4183, 0
  %v4193 = vsel %vm468, %v4184, 0
  %v4196 = vsel %vm468, %v4185, 0
  %4198 = vmatprep.subr.bf16.mxu0 %v465
  %4199 = vmatpush1.bf16.msra.mxu0 %v464
  %4200 = vmatprep.subr.bf16.mxu0 0
  %4201 = vmatpush1.bf16.msra.mxu0 0
  %4202 = vmatprep.subr.bf16.mxu0 0
  %4203 = vmatpush1.bf16.msra.mxu0 0
  %4204 = vmatprep.subr.bf16.mxu0 0
  %4205 = vmatpush1.bf16.msra.mxu0 0
  %4206 = vmatprep.subr.bf16.mxu0 0
  %4207 = vmatpush1.bf16.msra.mxu0 0
  %4208 = vmatprep.subr.bf16.mxu0 0
  %4209 = vmatpush1.bf16.msra.mxu0 0
  %4210 = vmatprep.subr.bf16.mxu0 0
  %4211 = vmatpush1.bf16.msra.mxu0 0
  %4212 = vmatprep.subr.bf16.mxu0 0
  %4213 = vmatpush1.bf16.msra.mxu0 0
  %4214 = vmatprep.subr.bf16.mxu0 0
  %4215 = vmatpush1.bf16.msra.mxu0 0
  %4216 = vmatprep.subr.bf16.mxu0 0
  %4217 = vmatpush1.bf16.msra.mxu0 0
  %4218 = vmatprep.subr.bf16.mxu0 0
  %4219 = vmatpush1.bf16.msra.mxu0 0
  %4220 = vmatprep.subr.bf16.mxu0 0
  %4221 = vmatpush1.bf16.msra.mxu0 0
  %4222 = vmatprep.subr.bf16.mxu0 0
  %4223 = vmatpush1.bf16.msra.mxu0 0
  %4224 = vmatprep.subr.bf16.mxu0 0
  %4225 = vmatpush1.bf16.msra.mxu0 0
  %4226 = vmatprep.subr.bf16.mxu0 0
  %4227 = vmatpush1.bf16.msra.mxu0 0
  %4228 = vmatprep.subr.bf16.mxu0 0
  %4229 = vmatpush1.bf16.msra.mxu0 0
  %4230 = vmatprep.mubr.bf16.mxu0 0
  %4231 = vmatmul.mubr.bf16.gmra.mrb[0].mxu0 %v4187
  %v4232 = vpop.f32.mrb[0].mxu0
  %v4233 = vadd.f32 0.0, %v4232
  %v4234 = vpop.f32.mrb[0].mxu0
  %v4235 = vadd.f32 0.0, %v4234
  %v4236 = vpop.f32.mrb[0].mxu0
  %v4237 = vadd.f32 0.0, %v4236
  %v4238 = vpop.f32.mrb[0].mxu0
  %v4239 = vadd.f32 0.0, %v4238
  %4240 = vmatprep.mubr.bf16.mxu0 0
  %4241 = vmatmul.mubr.bf16.gmra.mrb[0].mxu0 %v4190
  %v4242 = vpop.f32.mrb[0].mxu0
  %v4243 = vadd.f32 0.0, %v4242
  %v4244 = vpop.f32.mrb[0].mxu0
  %v4245 = vadd.f32 0.0, %v4244
  %v4246 = vpop.f32.mrb[0].mxu0
  %v4247 = vadd.f32 0.0, %v4246
  %v4248 = vpop.f32.mrb[0].mxu0
  %v4249 = vadd.f32 0.0, %v4248
  %4250 = vmatprep.mubr.bf16.mxu0 0
  %4251 = vmatmul.mubr.bf16.gmra.mrb[0].mxu0 %v4193
  %v4252 = vpop.f32.mrb[0].mxu0
  %v4253 = vadd.f32 0.0, %v4252
  %v4254 = vpop.f32.mrb[0].mxu0
  %v4255 = vadd.f32 0.0, %v4254
  %v4256 = vpop.f32.mrb[0].mxu0
  %v4257 = vadd.f32 0.0, %v4256
  %v4258 = vpop.f32.mrb[0].mxu0
  %v4259 = vadd.f32 0.0, %v4258
  %4260 = vmatprep.mubr.bf16.mxu0 0
  %4261 = vmatmul.mubr.bf16.gmra.mrb[0].mxu0 %v4196
  %v4262 = vpop.f32.mrb[0].mxu0
  %v4263 = vadd.f32 0.0, %v4262
  %v4264 = vpop.f32.mrb[0].mxu0
  %v4265 = vadd.f32 0.0, %v4264
  %v4266 = vpop.f32.mrb[0].mxu0
  %v4267 = vadd.f32 0.0, %v4266
  %v4268 = vpop.f32.mrb[0].mxu0
  %v4269 = vadd.f32 0.0, %v4268
  %4270 = vdwg.mxu0
  %v4271 = vmul.f32 %v4233, %v129
  %v4272 = vmul.f32 %v4235, %v130
  %v4273 = vmul.f32 %v4237, %v131
  %v4274 = vmul.f32 %v4239, %v132
  %v4275 = vmul.f32 %v4243, %v133
  %v4276 = vmul.f32 %v4245, %v134
  %v4277 = vmul.f32 %v4247, %v135
  %v4278 = vmul.f32 %v4249, %v136
  %v4279 = vmul.f32 %v4253, %v137
  %v4280 = vmul.f32 %v4255, %v138
  %v4281 = vmul.f32 %v4257, %v139
  %v4282 = vmul.f32 %v4259, %v140
  %v4283 = vmul.f32 %v4263, %v141
  %v4284 = vmul.f32 %v4265, %v142
  %v4285 = vmul.f32 %v4267, %v143
  %v4286 = vmul.f32 %v4269, %v144
  %v4287 = vpack.c.bf16 %v3981, %v3978
  %v4288 = vpack.c.bf16 %v4273, %v4271
  %v4289 = vpack.c.bf16 %v4274, %v4272
  %v4290 = vpack.c.bf16 %v4277, %v4275
  %v4291 = vpack.c.bf16 %v4278, %v4276
  %v4292 = vpack.c.bf16 %v4281, %v4279
  %v4293 = vpack.c.bf16 %v4282, %v4280
  %v4294 = vpack.c.bf16 %v4285, %v4283
  %v4295 = vpack.c.bf16 %v4286, %v4284
  %v4297 = vsel %vm43, %v4287, 0
  %4299 = vmatprep.subr.bf16.mxu0 %v4289
  %4300 = vmatpush1.bf16.msra.mxu0 %v4288
  %4301 = vmatprep.subr.bf16.mxu0 %v4291
  %4302 = vmatpush1.bf16.msra.mxu0 %v4290
  %4303 = vmatprep.subr.bf16.mxu0 %v4293
  %4304 = vmatpush1.bf16.msra.mxu0 %v4292
  %4305 = vmatprep.subr.bf16.mxu0 %v4295
  %4306 = vmatpush1.bf16.msra.mxu0 %v4294
  %4307 = vmatprep.subr.bf16.mxu0 0
  %4308 = vmatpush1.bf16.msra.mxu0 0
  %4309 = vmatprep.subr.bf16.mxu0 0
  %4310 = vmatpush1.bf16.msra.mxu0 0
  %4311 = vmatprep.subr.bf16.mxu0 0
  %4312 = vmatpush1.bf16.msra.mxu0 0
  %4313 = vmatprep.subr.bf16.mxu0 0
  %4314 = vmatpush1.bf16.msra.mxu0 0
  %4315 = vmatprep.subr.bf16.mxu0 0
  %4316 = vmatpush1.bf16.msra.mxu0 0
  %4317 = vmatprep.subr.bf16.mxu0 0
  %4318 = vmatpush1.bf16.msra.mxu0 0
  %4319 = vmatprep.subr.bf16.mxu0 0
  %4320 = vmatpush1.bf16.msra.mxu0 0
  %4321 = vmatprep.subr.bf16.mxu0 0
  %4322 = vmatpush1.bf16.msra.mxu0 0
  %4323 = vmatprep.subr.bf16.mxu0 0
  %4324 = vmatpush1.bf16.msra.mxu0 0
  %4325 = vmatprep.subr.bf16.mxu0 0
  %4326 = vmatpush1.bf16.msra.mxu0 0
  %4327 = vmatprep.subr.bf16.mxu0 0
  %4328 = vmatpush1.bf16.msra.mxu0 0
  %4329 = vmatprep.subr.bf16.mxu0 0
  %4330 = vmatpush1.bf16.msra.mxu0 0
  %4331 = vmatprep.mubr.bf16.mxu0 0
  %4332 = vmatmul.mubr.bf16.gmra.mrb[0].mxu0 %v4297
  %v4333 = vpop.f32.mrb[0].mxu0
  %v4334 = vadd.f32 0.0, %v4333
  %v4335 = vpop.f32.mrb[0].mxu0
  %v4336 = vadd.f32 0.0, %v4335
  %v4337 = vpop.f32.mrb[0].mxu0
  %v4338 = vadd.f32 0.0, %v4337
  %v4339 = vpop.f32.mrb[0].mxu0
  %v4340 = vadd.f32 0.0, %v4339
  %4341 = vdwg.mxu0
  %v4342 = vmul.f32 %v4334, 0.5
  %v4343 = vmul.f32 %v4336, 0.5
  %v4344 = vmul.f32 %v4338, 0.5
  %v4345 = vmul.f32 %v4340, 0.5
  %v4346 = vadd.f32 %v4342, %v2003
  %v4347 = vadd.f32 %v4343, %v2004
  %v4348 = vadd.f32 %v4344, %v2005
  %v4349 = vadd.f32 %v4345, %v2006
  %v4350 = vmax.f32 %v4346, %v4347
  %4351 = vmax.xlane.f32.xlu0 %v4350
  %v4352 = vpop.xlane.xlu0 %4351
  %v4353 = vmax.f32 %v4348, %v4349
  %4354 = vmax.xlane.f32.xlu0 %v4353
  %v4355 = vpop.xlane.xlu0 %4354
  %v4356 = vsub.f32 %v4346, %v4352
  %v4357 = vsub.f32 %v4347, %v4352
  %v4358 = vsub.f32 %v4348, %v4355
  %v4359 = vsub.f32 %v4349, %v4355
  %v4360 = vmul.f32 %v4356, 1.442695
  %v4361 = vpow.pop %v4360
  %v4362 = vmul.f32 %v4357, 1.442695
  %v4363 = vpow.pop %v4362
  %v4364 = vmul.f32 %v4358, 1.442695
  %v4365 = vpow.pop %v4364
  %v4366 = vmul.f32 %v4359, 1.442695
  %v4367 = vpow.pop %v4366
  %v4368 = vpack.c.bf16 %v4365, %v4361
  %v4369 = vpack.c.bf16 %v4367, %v4363
  %4370 = vmatprep.subr.bf16.mxu0 %v909
  %4371 = vmatpush1.bf16.msra.mxu0 %v908
  %4372 = vmatprep.subr.bf16.mxu0 %v911
  %4373 = vmatpush1.bf16.msra.mxu0 %v910
  %4374 = vmatprep.subr.bf16.mxu0 %v913
  %4375 = vmatpush1.bf16.msra.mxu0 %v912
  %4376 = vmatprep.subr.bf16.mxu0 %v915
  %4377 = vmatpush1.bf16.msra.mxu0 %v914
  %4378 = vmatprep.subr.bf16.mxu0 %v917
  %4379 = vmatpush1.bf16.msra.mxu0 %v916
  %4380 = vmatprep.subr.bf16.mxu0 %v919
  %4381 = vmatpush1.bf16.msra.mxu0 %v918
  %4382 = vmatprep.subr.bf16.mxu0 %v921
  %4383 = vmatpush1.bf16.msra.mxu0 %v920
  %4384 = vmatprep.subr.bf16.mxu0 %v923
  %4385 = vmatpush1.bf16.msra.mxu0 %v922
  %4386 = vmatprep.subr.bf16.mxu0 %v925
  %4387 = vmatpush1.bf16.msra.mxu0 %v924
  %4388 = vmatprep.subr.bf16.mxu0 %v927
  %4389 = vmatpush1.bf16.msra.mxu0 %v926
  %4390 = vmatprep.subr.bf16.mxu0 %v929
  %4391 = vmatpush1.bf16.msra.mxu0 %v928
  %4392 = vmatprep.subr.bf16.mxu0 %v931
  %4393 = vmatpush1.bf16.msra.mxu0 %v930
  %4394 = vmatprep.subr.bf16.mxu0 %v933
  %4395 = vmatpush1.bf16.msra.mxu0 %v932
  %4396 = vmatprep.subr.bf16.mxu0 %v935
  %4397 = vmatpush1.bf16.msra.mxu0 %v934
  %4398 = vmatprep.subr.bf16.mxu0 %v937
  %4399 = vmatpush1.bf16.msra.mxu0 %v936
  %4400 = vmatprep.subr.bf16.mxu0 %v939
  %4401 = vmatpush1.bf16.msra.mxu0 %v938
  %4402 = vmatprep.mubr.bf16.mxu0 %v4369
  %4403 = vmatmul.mubr.bf16.gmra.mrb[0].mxu0 %v4368
  %v4404 = vpop.f32.mrb[0].mxu0
  %v4405 = vadd.f32 0.0, %v4404
  %v4406 = vpop.f32.mrb[0].mxu0
  %v4407 = vadd.f32 0.0, %v4406
  %v4408 = vpop.f32.mrb[0].mxu0
  %v4409 = vadd.f32 0.0, %v4408
  %v4410 = vpop.f32.mrb[0].mxu0
  %v4411 = vadd.f32 0.0, %v4410
  %4412 = vdwg.mxu0
  %v4413 = vmax.f32 %v4405, 1e-30
  %v4414 = vmax.f32 %v4407, 1e-30
  %v4415 = vmax.f32 %v4409, 1e-30
  %v4416 = vmax.f32 %v4411, 1e-30
  %v4417 = vrcp.pop %v4413
  %v4418 = vrcp.pop %v4414
  %v4419 = vrcp.pop %v4415
  %v4420 = vrcp.pop %v4416
  %v4421 = vmul.f32 %v4361, %v4417
  %v4422 = vmul.f32 %v4363, %v4418
  %v4423 = vmul.f32 %v4365, %v4419
  %v4424 = vmul.f32 %v4367, %v4420
  %v4425 = vpack.c.bf16 %v4054, %v4051
  %4426 = vmatprep.subr.bf16.mxu0 0
  %4427 = vmatpush1.bf16.msra.mxu0 %v4425
  %4428 = vmatprep.subr.bf16.mxu0 0
  %4429 = vmatpush1.bf16.msra.mxu0 0
  %4430 = vmatprep.subr.bf16.mxu0 0
  %4431 = vmatpush1.bf16.msra.mxu0 0
  %4432 = vmatprep.subr.bf16.mxu0 0
  %4433 = vmatpush1.bf16.msra.mxu0 0
  %4434 = vmatprep.subr.bf16.mxu0 0
  %4435 = vmatpush1.bf16.msra.mxu0 0
  %4436 = vmatprep.subr.bf16.mxu0 0
  %4437 = vmatpush1.bf16.msra.mxu0 0
  %4438 = vmatprep.subr.bf16.mxu0 0
  %4439 = vmatpush1.bf16.msra.mxu0 0
  %4440 = vmatprep.subr.bf16.mxu0 0
  %4441 = vmatpush1.bf16.msra.mxu0 0
  %4442 = vmatprep.subr.bf16.mxu0 0
  %4443 = vmatpush1.bf16.msra.mxu0 0
  %4444 = vmatprep.subr.bf16.mxu0 0
  %4445 = vmatpush1.bf16.msra.mxu0 0
  %4446 = vmatprep.subr.bf16.mxu0 0
  %4447 = vmatpush1.bf16.msra.mxu0 0
  %4448 = vmatprep.subr.bf16.mxu0 0
  %4449 = vmatpush1.bf16.msra.mxu0 0
  %4450 = vmatprep.subr.bf16.mxu0 0
  %4451 = vmatpush1.bf16.msra.mxu0 0
  %4452 = vmatprep.subr.bf16.mxu0 0
  %4453 = vmatpush1.bf16.msra.mxu0 0
  %4454 = vmatprep.subr.bf16.mxu0 0
  %4455 = vmatpush1.bf16.msra.mxu0 0
  %4456 = vmatprep.subr.bf16.mxu0 0
  %4457 = vmatpush1.bf16.msra.mxu0 0
  %4458 = vmatprep.mubr.bf16.mxu0 0
  %4459 = vmatmul.mubr.bf16.gmra.mrb[0].mxu0 %v1141
  %v4460 = vpop.f32.mrb[0].mxu0
  %v4461 = vadd.f32 0.0, %v4460
  %v4462 = vpop.f32.mrb[0].mxu0
  %v4463 = vpop.f32.mrb[0].mxu0
  %v4464 = vadd.f32 0.0, %v4463
  %v4465 = vpop.f32.mrb[0].mxu0
  %4466 = vmatprep.mubr.bf16.mxu0 0
  %4467 = vmatmul.mubr.bf16.gmra.mrb[0].mxu0 %v1144
  %v4468 = vpop.f32.mrb[0].mxu0
  %v4469 = vadd.f32 0.0, %v4468
  %v4470 = vpop.f32.mrb[0].mxu0
  %v4471 = vpop.f32.mrb[0].mxu0
  %v4472 = vadd.f32 0.0, %v4471
  %v4473 = vpop.f32.mrb[0].mxu0
  %4474 = vmatprep.mubr.bf16.mxu0 0
  %4475 = vmatmul.mubr.bf16.gmra.mrb[0].mxu0 %v1147
  %v4476 = vpop.f32.mrb[0].mxu0
  %v4477 = vadd.f32 0.0, %v4476
  %v4478 = vpop.f32.mrb[0].mxu0
  %v4479 = vpop.f32.mrb[0].mxu0
  %v4480 = vadd.f32 0.0, %v4479
  %v4481 = vpop.f32.mrb[0].mxu0
  %4482 = vmatprep.mubr.bf16.mxu0 0
  %4483 = vmatmul.mubr.bf16.gmra.mrb[0].mxu0 %v1150
  %v4484 = vpop.f32.mrb[0].mxu0
  %v4485 = vadd.f32 0.0, %v4484
  %v4486 = vpop.f32.mrb[0].mxu0
  %v4487 = vpop.f32.mrb[0].mxu0
  %v4488 = vadd.f32 0.0, %v4487
  %v4489 = vpop.f32.mrb[0].mxu0
  %4490 = vmatprep.mubr.bf16.mxu0 0
  %4491 = vmatmul.mubr.bf16.gmra.mrb[0].mxu0 %v1153
  %v4492 = vpop.f32.mrb[0].mxu0
  %v4493 = vadd.f32 0.0, %v4492
  %v4494 = vpop.f32.mrb[0].mxu0
  %v4495 = vpop.f32.mrb[0].mxu0
  %v4496 = vadd.f32 0.0, %v4495
  %v4497 = vpop.f32.mrb[0].mxu0
  %4498 = vmatprep.mubr.bf16.mxu0 0
  %4499 = vmatmul.mubr.bf16.gmra.mrb[0].mxu0 %v1156
  %v4500 = vpop.f32.mrb[0].mxu0
  %v4501 = vadd.f32 0.0, %v4500
  %v4502 = vpop.f32.mrb[0].mxu0
  %v4503 = vpop.f32.mrb[0].mxu0
  %v4504 = vadd.f32 0.0, %v4503
  %v4505 = vpop.f32.mrb[0].mxu0
  %4506 = vmatprep.mubr.bf16.mxu0 0
  %4507 = vmatmul.mubr.bf16.gmra.mrb[0].mxu0 %v1159
  %v4508 = vpop.f32.mrb[0].mxu0
  %v4509 = vadd.f32 0.0, %v4508
  %v4510 = vpop.f32.mrb[0].mxu0
  %v4511 = vpop.f32.mrb[0].mxu0
  %v4512 = vadd.f32 0.0, %v4511
  %v4513 = vpop.f32.mrb[0].mxu0
  %4514 = vmatprep.mubr.bf16.mxu0 0
  %4515 = vmatmul.mubr.bf16.gmra.mrb[0].mxu0 %v1162
  %v4516 = vpop.f32.mrb[0].mxu0
  %v4517 = vadd.f32 0.0, %v4516
  %v4518 = vpop.f32.mrb[0].mxu0
  %v4519 = vpop.f32.mrb[0].mxu0
  %v4520 = vadd.f32 0.0, %v4519
  %v4521 = vpop.f32.mrb[0].mxu0
  %4522 = vmatprep.mubr.bf16.mxu0 0
  %4523 = vmatmul.mubr.bf16.gmra.mrb[0].mxu0 %v1165
  %v4524 = vpop.f32.mrb[0].mxu0
  %v4525 = vadd.f32 0.0, %v4524
  %v4526 = vpop.f32.mrb[0].mxu0
  %v4527 = vpop.f32.mrb[0].mxu0
  %v4528 = vadd.f32 0.0, %v4527
  %v4529 = vpop.f32.mrb[0].mxu0
  %4530 = vmatprep.mubr.bf16.mxu0 0
  %4531 = vmatmul.mubr.bf16.gmra.mrb[0].mxu0 %v1168
  %v4532 = vpop.f32.mrb[0].mxu0
  %v4533 = vadd.f32 0.0, %v4532
  %v4534 = vpop.f32.mrb[0].mxu0
  %v4535 = vpop.f32.mrb[0].mxu0
  %v4536 = vadd.f32 0.0, %v4535
  %v4537 = vpop.f32.mrb[0].mxu0
  %4538 = vmatprep.mubr.bf16.mxu0 0
  %4539 = vmatmul.mubr.bf16.gmra.mrb[0].mxu0 %v1171
  %v4540 = vpop.f32.mrb[0].mxu0
  %v4541 = vadd.f32 0.0, %v4540
  %v4542 = vpop.f32.mrb[0].mxu0
  %v4543 = vpop.f32.mrb[0].mxu0
  %v4544 = vadd.f32 0.0, %v4543
  %v4545 = vpop.f32.mrb[0].mxu0
  %4546 = vmatprep.mubr.bf16.mxu0 0
  %4547 = vmatmul.mubr.bf16.gmra.mrb[0].mxu0 %v1174
  %v4548 = vpop.f32.mrb[0].mxu0
  %v4549 = vadd.f32 0.0, %v4548
  %v4550 = vpop.f32.mrb[0].mxu0
  %v4551 = vpop.f32.mrb[0].mxu0
  %v4552 = vadd.f32 0.0, %v4551
  %v4553 = vpop.f32.mrb[0].mxu0
  %4554 = vmatprep.mubr.bf16.mxu0 0
  %4555 = vmatmul.mubr.bf16.gmra.mrb[0].mxu0 %v1177
  %v4556 = vpop.f32.mrb[0].mxu0
  %v4557 = vadd.f32 0.0, %v4556
  %v4558 = vpop.f32.mrb[0].mxu0
  %v4559 = vpop.f32.mrb[0].mxu0
  %v4560 = vadd.f32 0.0, %v4559
  %v4561 = vpop.f32.mrb[0].mxu0
  %4562 = vmatprep.mubr.bf16.mxu0 0
  %4563 = vmatmul.mubr.bf16.gmra.mrb[0].mxu0 %v1180
  %v4564 = vpop.f32.mrb[0].mxu0
  %v4565 = vadd.f32 0.0, %v4564
  %v4566 = vpop.f32.mrb[0].mxu0
  %v4567 = vpop.f32.mrb[0].mxu0
  %v4568 = vadd.f32 0.0, %v4567
  %v4569 = vpop.f32.mrb[0].mxu0
  %4570 = vmatprep.mubr.bf16.mxu0 0
  %4571 = vmatmul.mubr.bf16.gmra.mrb[0].mxu0 %v1183
  %v4572 = vpop.f32.mrb[0].mxu0
  %v4573 = vadd.f32 0.0, %v4572
  %v4574 = vpop.f32.mrb[0].mxu0
  %v4575 = vpop.f32.mrb[0].mxu0
  %v4576 = vadd.f32 0.0, %v4575
  %v4577 = vpop.f32.mrb[0].mxu0
  %4578 = vmatprep.mubr.bf16.mxu0 0
  %4579 = vmatmul.mubr.bf16.gmra.mrb[0].mxu0 %v1186
  %v4580 = vpop.f32.mrb[0].mxu0
  %v4581 = vadd.f32 0.0, %v4580
  %v4582 = vpop.f32.mrb[0].mxu0
  %v4583 = vpop.f32.mrb[0].mxu0
  %v4584 = vadd.f32 0.0, %v4583
  %v4585 = vpop.f32.mrb[0].mxu0
  %4586 = vdwg.mxu0
  %v4587 = vmul.f32 %v4461, %v145
  %v4588 = vmul.f32 %v4464, %v146
  %v4589 = vmul.f32 %v4469, %v147
  %v4590 = vmul.f32 %v4472, %v148
  %v4591 = vmul.f32 %v4477, %v149
  %v4592 = vmul.f32 %v4480, %v150
  %v4593 = vmul.f32 %v4485, %v151
  %v4594 = vmul.f32 %v4488, %v152
  %v4595 = vmul.f32 %v4493, %v153
  %v4596 = vmul.f32 %v4496, %v154
  %v4597 = vmul.f32 %v4501, %v155
  %v4598 = vmul.f32 %v4504, %v156
  %v4599 = vmul.f32 %v4509, %v157
  %v4600 = vmul.f32 %v4512, %v158
  %v4601 = vmul.f32 %v4517, %v159
  %v4602 = vmul.f32 %v4520, %v160
  %v4603 = vmul.f32 %v4525, %v161
  %v4604 = vmul.f32 %v4528, %v162
  %v4605 = vmul.f32 %v4533, %v163
  %v4606 = vmul.f32 %v4536, %v164
  %v4607 = vmul.f32 %v4541, %v165
  %v4608 = vmul.f32 %v4544, %v166
  %v4609 = vmul.f32 %v4549, %v167
  %v4610 = vmul.f32 %v4552, %v168
  %v4611 = vmul.f32 %v4557, %v169
  %v4612 = vmul.f32 %v4560, %v170
  %v4613 = vmul.f32 %v4565, %v171
  %v4614 = vmul.f32 %v4568, %v172
  %v4615 = vmul.f32 %v4573, %v173
  %v4616 = vmul.f32 %v4576, %v174
  %v4617 = vmul.f32 %v4581, %v175
  %v4618 = vmul.f32 %v4584, %v176
  %v4619 = vpack.c.bf16 %v4423, %v4421
  %v4620 = vpack.c.bf16 %v4424, %v4422
  %v4621 = vpack.c.bf16 %v4588, %v4587
  %v4622 = vpack.c.bf16 %v4590, %v4589
  %v4623 = vpack.c.bf16 %v4592, %v4591
  %v4624 = vpack.c.bf16 %v4594, %v4593
  %v4625 = vpack.c.bf16 %v4596, %v4595
  %v4626 = vpack.c.bf16 %v4598, %v4597
  %v4627 = vpack.c.bf16 %v4600, %v4599
  %v4628 = vpack.c.bf16 %v4602, %v4601
  %v4629 = vpack.c.bf16 %v4604, %v4603
  %v4630 = vpack.c.bf16 %v4606, %v4605
  %v4631 = vpack.c.bf16 %v4608, %v4607
  %v4632 = vpack.c.bf16 %v4610, %v4609
  %v4633 = vpack.c.bf16 %v4612, %v4611
  %v4634 = vpack.c.bf16 %v4614, %v4613
  %v4635 = vpack.c.bf16 %v4616, %v4615
  %v4636 = vpack.c.bf16 %v4618, %v4617
  %4637 = vmatprep.subr.bf16.mxu0 0
  %4638 = vmatpush1.bf16.msra.mxu0 %v4621
  %4639 = vmatprep.subr.bf16.mxu0 0
  %4640 = vmatpush1.bf16.msra.mxu0 %v4622
  %4641 = vmatprep.subr.bf16.mxu0 0
  %4642 = vmatpush1.bf16.msra.mxu0 %v4623
  %4643 = vmatprep.subr.bf16.mxu0 0
  %4644 = vmatpush1.bf16.msra.mxu0 %v4624
  %4645 = vmatprep.subr.bf16.mxu0 0
  %4646 = vmatpush1.bf16.msra.mxu0 %v4625
  %4647 = vmatprep.subr.bf16.mxu0 0
  %4648 = vmatpush1.bf16.msra.mxu0 %v4626
  %4649 = vmatprep.subr.bf16.mxu0 0
  %4650 = vmatpush1.bf16.msra.mxu0 %v4627
  %4651 = vmatprep.subr.bf16.mxu0 0
  %4652 = vmatpush1.bf16.msra.mxu0 %v4628
  %4653 = vmatprep.subr.bf16.mxu0 0
  %4654 = vmatpush1.bf16.msra.mxu0 %v4629
  %4655 = vmatprep.subr.bf16.mxu0 0
  %4656 = vmatpush1.bf16.msra.mxu0 %v4630
  %4657 = vmatprep.subr.bf16.mxu0 0
  %4658 = vmatpush1.bf16.msra.mxu0 %v4631
  %4659 = vmatprep.subr.bf16.mxu0 0
  %4660 = vmatpush1.bf16.msra.mxu0 %v4632
  %4661 = vmatprep.subr.bf16.mxu0 0
  %4662 = vmatpush1.bf16.msra.mxu0 %v4633
  %4663 = vmatprep.subr.bf16.mxu0 0
  %4664 = vmatpush1.bf16.msra.mxu0 %v4634
  %4665 = vmatprep.subr.bf16.mxu0 0
  %4666 = vmatpush1.bf16.msra.mxu0 %v4635
  %4667 = vmatprep.subr.bf16.mxu0 0
  %4668 = vmatpush1.bf16.msra.mxu0 %v4636
  %4669 = vmatprep.mubr.bf16.mxu0 %v4620
  %4670 = vmatmul.mubr.bf16.gmra.mrb[0].mxu0 %v4619
  %v4671 = vpop.f32.mrb[0].mxu0
  %v4672 = vadd.f32 0.0, %v4671
  %v4673 = vpop.f32.mrb[0].mxu0
  %v4674 = vpop.f32.mrb[0].mxu0
  %v4675 = vadd.f32 0.0, %v4674
  %v4676 = vpop.f32.mrb[0].mxu0
  %4677 = vdwg.mxu0
  %v4678 = vld [vmem:[%s2892 + $0xe0] sm:$0xf]
  %v4679 = vld [vmem:[%s2892 + $0xe4] sm:$0xf]
  %v4680 = vld [vmem:[%s2892 + $0xe8] sm:$0xf]
  %v4681 = vld [vmem:[%s2892 + $0xec] sm:$0xf]
  %v4682 = vld [vmem:[%s2892 + $0xf0] sm:$0xf]
  %v4683 = vld [vmem:[%s2892 + $0xf4] sm:$0xf]
  %v4684 = vld [vmem:[%s2892 + $0xf8] sm:$0xf]
  %v4685 = vld [vmem:[%s2892 + $0xfc] sm:$0xf]
  %v4686 = vpack.c.bf16 %v4675, %v4672
  %v4695 = vunpack.c.l.b16 %v4678
  %v4696 = vunpack.c.l.b16 %v4679
  %v4697 = vunpack.c.l.b16 %v4680
  %v4698 = vunpack.c.l.b16 %v4681
  %v4699 = vunpack.c.l.b16 %v4682
  %v4700 = vunpack.c.l.b16 %v4683
  %v4701 = vunpack.c.l.b16 %v4684
  %v4702 = vunpack.c.l.b16 %v4685
  %v4703 = vpack.c.b16 %v4696, %v4695
  %v4704 = vpack.c.b16 %v4698, %v4697
  %v4705 = vpack.c.b16 %v4700, %v4699
  %v4706 = vpack.c.b16 %v4702, %v4701
  %v4712 = vsel %vm43, %v4686, 0
  %4714 = vmatprep.subr.bf16.mxu0 0
  %4715 = vmatpush1.bf16.msra.mxu0 %v4703
  %4716 = vmatprep.subr.bf16.mxu0 0
  %4717 = vmatpush1.bf16.msra.mxu0 %v4704
  %4718 = vmatprep.subr.bf16.mxu0 0
  %4719 = vmatpush1.bf16.msra.mxu0 %v4705
  %4720 = vmatprep.subr.bf16.mxu0 0
  %4721 = vmatpush1.bf16.msra.mxu0 %v4706
  %4722 = vmatprep.subr.bf16.mxu0 0
  %4723 = vmatpush1.bf16.msra.mxu0 0
  %4724 = vmatprep.subr.bf16.mxu0 0
  %4725 = vmatpush1.bf16.msra.mxu0 0
  %4726 = vmatprep.subr.bf16.mxu0 0
  %4727 = vmatpush1.bf16.msra.mxu0 0
  %4728 = vmatprep.subr.bf16.mxu0 0
  %4729 = vmatpush1.bf16.msra.mxu0 0
  %4730 = vmatprep.subr.bf16.mxu0 0
  %4731 = vmatpush1.bf16.msra.mxu0 0
  %4732 = vmatprep.subr.bf16.mxu0 0
  %4733 = vmatpush1.bf16.msra.mxu0 0
  %4734 = vmatprep.subr.bf16.mxu0 0
  %4735 = vmatpush1.bf16.msra.mxu0 0
  %4736 = vmatprep.subr.bf16.mxu0 0
  %4737 = vmatpush1.bf16.msra.mxu0 0
  %4738 = vmatprep.subr.bf16.mxu0 0
  %4739 = vmatpush1.bf16.msra.mxu0 0
  %4740 = vmatprep.subr.bf16.mxu0 0
  %4741 = vmatpush1.bf16.msra.mxu0 0
  %4742 = vmatprep.subr.bf16.mxu0 0
  %4743 = vmatpush1.bf16.msra.mxu0 0
  %4744 = vmatprep.subr.bf16.mxu0 0
  %4745 = vmatpush1.bf16.msra.mxu0 0
  %4746 = vmatprep.mubr.bf16.mxu0 0
  %4747 = vmatmul.mubr.bf16.gmra.mrb[0].mxu0 %v4712
  %v4748 = vpop.f32.mrb[0].mxu0
  %v4749 = vadd.f32 %v3905, %v4748
  %v4750 = vpop.f32.mrb[0].mxu0
  %v4751 = vpop.f32.mrb[0].mxu0
  %v4752 = vadd.f32 %v3906, %v4751
  %v4753 = vpop.f32.mrb[0].mxu0
  %4754 = vdwg.mxu0
  %v4755 = vld [vmem:[%s2889 + $0x4] sm:$0x1]
  %v4756 = vld [vmem:[%s2889 + $0x5] sm:$0x1]
  %v4757 = vsel %vm43, %v4749, 0.0
  %4758 = vadd.xlane.f32.xlu0 %v4757
  %v4759 = vpop.xlane.xlu0 %4758
  %v4760 = vsel %vm43, %v4752, 0.0
  %4761 = vadd.xlane.f32.xlu0 %v4760
  %v4762 = vpop.xlane.xlu0 %4761
  %v4763 = vmul.f32 %v4759, %v1527
  %v4764 = vmul.f32 %v4762, %v1527
  %v4765 = vsub.f32 %v4749, %v4763
  %v4766 = vsub.f32 %v4752, %v4764
  %v4767 = vmul.f32 %v4765, %v4765
  %v4768 = vmul.f32 %v4766, %v4766
  %v4769 = vsel %vm43, %v4767, 0.0
  %4770 = vadd.xlane.f32.xlu0 %v4769
  %v4771 = vpop.xlane.xlu0 %4770
  %v4772 = vsel %vm43, %v4768, 0.0
  %4773 = vadd.xlane.f32.xlu0 %v4772
  %v4774 = vpop.xlane.xlu0 %4773
  %v4775 = vmul.f32 %v4771, %v1527
  %v4776 = vmul.f32 %v4774, %v1527
  %v4777 = vadd.f32 %v4775, 1e-05
  %v4778 = vadd.f32 %v4776, 1e-05
  %v4779 = vrsqrt.pop %v4777
  %v4780 = vrsqrt.pop %v4778
  %v4781 = vmul.f32 %v4765, %v4779
  %v4782 = vmul.f32 %v4766, %v4780
  %v4783 = vlaneseq
  %v4784 = vshrl.u32 %v4783, 7
  %v4785 = vsub.s32 0, %v4784
  %v4786 = vrot.slane %v4755, %v4785
  %v4787 = vmul.f32 %v4781, %v4786
  %v4788 = vmul.f32 %v4782, %v4786
  %v4789 = vlaneseq
  %v4790 = vshrl.u32 %v4789, 7
  %v4791 = vsub.s32 0, %v4790
  %v4792 = vrot.slane %v4756, %v4791
  %v4793 = vadd.f32 %v4787, %v4792
  %v4794 = vadd.f32 %v4788, %v4792
  %v4795 = vld [vmem:[%s3294] sm:$0xff]
  %v4796 = vld [vmem:[%s3294 + $0x8] sm:$0xff]
  %v4797 = vld [vmem:[%s3294 + $0x10] sm:$0xff]
  %v4798 = vld [vmem:[%s3294 + $0x18] sm:$0xff]
  %v4799 = vld [vmem:[%s3294 + $0x20] sm:$0xff]
  %v4800 = vld [vmem:[%s3294 + $0x28] sm:$0xff]
  %v4801 = vld [vmem:[%s3294 + $0x30] sm:$0xff]
  %v4802 = vld [vmem:[%s3294 + $0x38] sm:$0xff]
  %v4803 = vpack.c.bf16 %v4794, %v4793
  %s4804 = scalar_lea.vmem %s8, 2
  %v4805 = vld [vmem:[%s4804] sm:$0x3]
  %v4807 = vlaneseq
  %v4808 = vshrl.u32 %v4807, 7
  %v4809 = vsub.s32 0, %v4808
  %v4810 = vrot.slane %v4805, %v4809
  %v4811 = vlaneseq
  %v4812 = vshrl.u32 %v4811, 7
  %v4813 = vsub.s32 1, %v4812
  %v4814 = vrot.slane %v4805, %v4813
  %v4825 = vunpack.c.l.b16 %v4795
  %v4826 = vunpack.c.h.b16 %v4795
  %v4827 = vunpack.c.l.b16 %v4796
  %v4828 = vunpack.c.h.b16 %v4796
  %v4829 = vunpack.c.l.b16 %v4797
  %v4830 = vunpack.c.h.b16 %v4797
  %v4831 = vunpack.c.l.b16 %v4798
  %v4832 = vunpack.c.h.b16 %v4798
  %v4833 = vunpack.c.l.b16 %v4799
  %v4834 = vunpack.c.h.b16 %v4799
  %v4835 = vunpack.c.l.b16 %v4800
  %v4836 = vunpack.c.h.b16 %v4800
  %v4837 = vunpack.c.l.b16 %v4801
  %v4838 = vunpack.c.h.b16 %v4801
  %v4839 = vunpack.c.l.b16 %v4802
  %v4840 = vunpack.c.h.b16 %v4802
  %v4841 = vpack.c.b16 %v4827, %v4825
  %v4842 = vpack.c.b16 %v4828, %v4826
  %v4843 = vpack.c.b16 %v4831, %v4829
  %v4844 = vpack.c.b16 %v4832, %v4830
  %v4845 = vpack.c.b16 %v4835, %v4833
  %v4846 = vpack.c.b16 %v4836, %v4834
  %v4847 = vpack.c.b16 %v4839, %v4837
  %v4848 = vpack.c.b16 %v4840, %v4838
  %v4858 = vsel %vm43, %v4803, 0
  %4860 = vmatprep.subr.bf16.mxu0 %v4842
  %4861 = vmatpush1.bf16.msra.mxu0 %v4841
  %4862 = vmatprep.subr.bf16.mxu0 %v4844
  %4863 = vmatpush1.bf16.msra.mxu0 %v4843
  %4864 = vmatprep.subr.bf16.mxu0 %v4846
  %4865 = vmatpush1.bf16.msra.mxu0 %v4845
  %4866 = vmatprep.subr.bf16.mxu0 %v4848
  %4867 = vmatpush1.bf16.msra.mxu0 %v4847
  %4868 = vmatprep.subr.bf16.mxu0 0
  %4869 = vmatpush1.bf16.msra.mxu0 0
  %4870 = vmatprep.subr.bf16.mxu0 0
  %4871 = vmatpush1.bf16.msra.mxu0 0
  %4872 = vmatprep.subr.bf16.mxu0 0
  %4873 = vmatpush1.bf16.msra.mxu0 0
  %4874 = vmatprep.subr.bf16.mxu0 0
  %4875 = vmatpush1.bf16.msra.mxu0 0
  %4876 = vmatprep.subr.bf16.mxu0 0
  %4877 = vmatpush1.bf16.msra.mxu0 0
  %4878 = vmatprep.subr.bf16.mxu0 0
  %4879 = vmatpush1.bf16.msra.mxu0 0
  %4880 = vmatprep.subr.bf16.mxu0 0
  %4881 = vmatpush1.bf16.msra.mxu0 0
  %4882 = vmatprep.subr.bf16.mxu0 0
  %4883 = vmatpush1.bf16.msra.mxu0 0
  %4884 = vmatprep.subr.bf16.mxu0 0
  %4885 = vmatpush1.bf16.msra.mxu0 0
  %4886 = vmatprep.subr.bf16.mxu0 0
  %4887 = vmatpush1.bf16.msra.mxu0 0
  %4888 = vmatprep.subr.bf16.mxu0 0
  %4889 = vmatpush1.bf16.msra.mxu0 0
  %4890 = vmatprep.subr.bf16.mxu0 0
  %4891 = vmatpush1.bf16.msra.mxu0 0
  %4892 = vmatprep.mubr.bf16.mxu0 0
  %4893 = vmatmul.mubr.bf16.gmra.mrb[0].mxu0 %v4858
  %v4894 = vpop.f32.mrb[0].mxu0
  %v4895 = vadd.f32 %v4810, %v4894
  %v4896 = vpop.f32.mrb[0].mxu0
  %v4897 = vadd.f32 %v4814, %v4896
  %v4898 = vpop.f32.mrb[0].mxu0
  %v4899 = vadd.f32 %v4810, %v4898
  %v4900 = vpop.f32.mrb[0].mxu0
  %v4901 = vadd.f32 %v4814, %v4900
  %4902 = vdwg.mxu0
  %v4903 = vmul.f32 %v4895, 0.5
  %v4904 = vmul.f32 %v4897, 0.5
  %v4905 = vmul.f32 %v4899, 0.5
  %v4906 = vmul.f32 %v4901, 0.5
  %v4907 = vmul.f32 %v4895, 0.70710677
  %v4908 = vmul.f32 %v4897, 0.70710677
  %v4909 = vmul.f32 %v4899, 0.70710677
  %v4910 = vmul.f32 %v4901, 0.70710677
  %vm4911 = vcmp.ge.f32.partialorder %v4907, 0.0
  %vm4912 = vcmp.ge.f32.partialorder %v4908, 0.0
  %vm4913 = vcmp.ge.f32.partialorder %v4909, 0.0
  %vm4914 = vcmp.ge.f32.partialorder %v4910, 0.0
  %v4915 = vsel %vm4911, 1.0, -1.0
  %v4916 = vsel %vm4912, 1.0, -1.0
  %v4917 = vsel %vm4913, 1.0, -1.0
  %v4918 = vsel %vm4914, 1.0, -1.0
  %v4919 = vand.u32 2147483647, %v4907
  %v4920 = vand.u32 2147483647, %v4908
  %v4921 = vand.u32 2147483647, %v4909
  %v4922 = vand.u32 2147483647, %v4910
  %v4923 = vmul.f32 %v4919, 0.3275911
  %v4924 = vmul.f32 %v4920, 0.3275911
  %v4925 = vmul.f32 %v4921, 0.3275911
  %v4926 = vmul.f32 %v4922, 0.3275911
  %v4927 = vadd.f32 %v4923, 1.0
  %v4928 = vadd.f32 %v4924, 1.0
  %v4929 = vadd.f32 %v4925, 1.0
  %v4930 = vadd.f32 %v4926, 1.0
  %v4931 = vrcp.pop %v4927
  %v4932 = vmul.f32 1.0, %v4931
  %v4933 = vrcp.pop %v4928
  %v4934 = vmul.f32 1.0, %v4933
  %v4935 = vrcp.pop %v4929
  %v4936 = vmul.f32 1.0, %v4935
  %v4937 = vrcp.pop %v4930
  %v4938 = vmul.f32 1.0, %v4937
  %v4939 = vmul.f32 %v4932, 1.0614054
  %v4940 = vmul.f32 %v4934, 1.0614054
  %v4941 = vmul.f32 %v4936, 1.0614054
  %v4942 = vmul.f32 %v4938, 1.0614054
  %v4943 = vadd.f32 %v4939, -1.4531521
  %v4944 = vadd.f32 %v4940, -1.4531521
  %v4945 = vadd.f32 %v4941, -1.4531521
  %v4946 = vadd.f32 %v4942, -1.4531521
  %v4947 = vmul.f32 %v4943, %v4932
  %v4948 = vmul.f32 %v4944, %v4934
  %v4949 = vmul.f32 %v4945, %v4936
  %v4950 = vmul.f32 %v4946, %v4938
  %v4951 = vadd.f32 %v4947, 1.4214138
  %v4952 = vadd.f32 %v4948, 1.4214138
  %v4953 = vadd.f32 %v4949, 1.4214138
  %v4954 = vadd.f32 %v4950, 1.4214138
  %v4955 = vmul.f32 %v4951, %v4932
  %v4956 = vmul.f32 %v4952, %v4934
  %v4957 = vmul.f32 %v4953, %v4936
  %v4958 = vmul.f32 %v4954, %v4938
  %v4959 = vadd.f32 %v4955, -0.28449672
  %v4960 = vadd.f32 %v4956, -0.28449672
  %v4961 = vadd.f32 %v4957, -0.28449672
  %v4962 = vadd.f32 %v4958, -0.28449672
  %v4963 = vmul.f32 %v4959, %v4932
  %v4964 = vmul.f32 %v4960, %v4934
  %v4965 = vmul.f32 %v4961, %v4936
  %v4966 = vmul.f32 %v4962, %v4938
  %v4967 = vadd.f32 %v4963, 0.2548296
  %v4968 = vadd.f32 %v4964, 0.2548296
  %v4969 = vadd.f32 %v4965, 0.2548296
  %v4970 = vadd.f32 %v4966, 0.2548296
  %v4971 = vmul.f32 %v4967, %v4932
  %v4972 = vmul.f32 %v4968, %v4934
  %v4973 = vmul.f32 %v4969, %v4936
  %v4974 = vmul.f32 %v4970, %v4938
  %v4975 = vsub.f32 0.0, %v4919
  %v4976 = vsub.f32 0.0, %v4920
  %v4977 = vsub.f32 0.0, %v4921
  %v4978 = vsub.f32 0.0, %v4922
  %v4979 = vmul.f32 %v4975, %v4919
  %v4980 = vmul.f32 %v4976, %v4920
  %v4981 = vmul.f32 %v4977, %v4921
  %v4982 = vmul.f32 %v4978, %v4922
  %v4983 = vmul.f32 %v4979, 1.442695
  %v4984 = vpow.pop %v4983
  %v4985 = vmul.f32 %v4980, 1.442695
  %v4986 = vpow.pop %v4985
  %v4987 = vmul.f32 %v4981, 1.442695
  %v4988 = vpow.pop %v4987
  %v4989 = vmul.f32 %v4982, 1.442695
  %v4990 = vpow.pop %v4989
  %v4991 = vmul.f32 %v4971, %v4984
  %v4992 = vmul.f32 %v4972, %v4986
  %v4993 = vmul.f32 %v4973, %v4988
  %v4994 = vmul.f32 %v4974, %v4990
  %v4995 = vsub.f32 1.0, %v4991
  %v4996 = vsub.f32 1.0, %v4992
  %v4997 = vsub.f32 1.0, %v4993
  %v4998 = vsub.f32 1.0, %v4994
  %v4999 = vmul.f32 %v4915, %v4995
  %v5000 = vmul.f32 %v4916, %v4996
  %v5001 = vmul.f32 %v4917, %v4997
  %v5002 = vmul.f32 %v4918, %v4998
  %v5003 = vadd.f32 %v4999, 1.0
  %v5004 = vadd.f32 %v5000, 1.0
  %v5005 = vadd.f32 %v5001, 1.0
  %v5006 = vadd.f32 %v5002, 1.0
  %v5007 = vmul.f32 %v4903, %v5003
  %v5008 = vmul.f32 %v4904, %v5004
  %v5009 = vmul.f32 %v4905, %v5005
  %v5010 = vmul.f32 %v4906, %v5006
  %v5011 = vld [vmem:[%s2892 + $0x100] sm:$0xf]
  %v5012 = vld [vmem:[%s2892 + $0x104] sm:$0xf]
  %v5013 = vld [vmem:[%s2892 + $0x108] sm:$0xf]
  %v5014 = vld [vmem:[%s2892 + $0x10c] sm:$0xf]
  %v5015 = vld [vmem:[%s2892 + $0x110] sm:$0xf]
  %v5016 = vld [vmem:[%s2892 + $0x114] sm:$0xf]
  %v5017 = vld [vmem:[%s2892 + $0x118] sm:$0xf]
  %v5018 = vld [vmem:[%s2892 + $0x11c] sm:$0xf]
  %v5019 = vld [vmem:[%s2892 + $0x120] sm:$0xf]
  %v5020 = vld [vmem:[%s2892 + $0x124] sm:$0xf]
  %v5021 = vld [vmem:[%s2892 + $0x128] sm:$0xf]
  %v5022 = vld [vmem:[%s2892 + $0x12c] sm:$0xf]
  %v5023 = vld [vmem:[%s2892 + $0x130] sm:$0xf]
  %v5024 = vld [vmem:[%s2892 + $0x134] sm:$0xf]
  %v5025 = vld [vmem:[%s2892 + $0x138] sm:$0xf]
  %v5026 = vld [vmem:[%s2892 + $0x13c] sm:$0xf]
  %v5027 = vld [vmem:[%s2892 + $0x140] sm:$0xf]
  %v5028 = vld [vmem:[%s2892 + $0x144] sm:$0xf]
  %v5029 = vld [vmem:[%s2892 + $0x148] sm:$0xf]
  %v5030 = vld [vmem:[%s2892 + $0x14c] sm:$0xf]
  %v5031 = vld [vmem:[%s2892 + $0x150] sm:$0xf]
  %v5032 = vld [vmem:[%s2892 + $0x154] sm:$0xf]
  %v5033 = vld [vmem:[%s2892 + $0x158] sm:$0xf]
  %v5034 = vld [vmem:[%s2892 + $0x15c] sm:$0xf]
  %v5035 = vld [vmem:[%s2892 + $0x160] sm:$0xf]
  %v5036 = vld [vmem:[%s2892 + $0x164] sm:$0xf]
  %v5037 = vld [vmem:[%s2892 + $0x168] sm:$0xf]
  %v5038 = vld [vmem:[%s2892 + $0x16c] sm:$0xf]
  %v5039 = vld [vmem:[%s2892 + $0x170] sm:$0xf]
  %v5040 = vld [vmem:[%s2892 + $0x174] sm:$0xf]
  %v5041 = vld [vmem:[%s2892 + $0x178] sm:$0xf]
  %v5042 = vld [vmem:[%s2892 + $0x17c] sm:$0xf]
  %v5043 = vpack.c.bf16 %v5009, %v5007
  %v5044 = vpack.c.bf16 %v5010, %v5008
  %v5045 = vld [vmem:[%s2889 + $0x8] sm:$0x1]
  %v5046 = vlaneseq
  %v5047 = vshrl.u32 %v5046, 7
  %v5048 = vsub.s32 0, %v5047
  %v5049 = vrot.slane %v5045, %v5048
  %v5082 = vunpack.c.l.b16 %v5011
  %v5083 = vunpack.c.l.b16 %v5012
  %v5084 = vunpack.c.l.b16 %v5013
  %v5085 = vunpack.c.l.b16 %v5014
  %v5086 = vunpack.c.l.b16 %v5015
  %v5087 = vunpack.c.l.b16 %v5016
  %v5088 = vunpack.c.l.b16 %v5017
  %v5089 = vunpack.c.l.b16 %v5018
  %v5090 = vunpack.c.l.b16 %v5019
  %v5091 = vunpack.c.l.b16 %v5020
  %v5092 = vunpack.c.l.b16 %v5021
  %v5093 = vunpack.c.l.b16 %v5022
  %v5094 = vunpack.c.l.b16 %v5023
  %v5095 = vunpack.c.l.b16 %v5024
  %v5096 = vunpack.c.l.b16 %v5025
  %v5097 = vunpack.c.l.b16 %v5026
  %v5098 = vunpack.c.l.b16 %v5027
  %v5099 = vunpack.c.l.b16 %v5028
  %v5100 = vunpack.c.l.b16 %v5029
  %v5101 = vunpack.c.l.b16 %v5030
  %v5102 = vunpack.c.l.b16 %v5031
  %v5103 = vunpack.c.l.b16 %v5032
  %v5104 = vunpack.c.l.b16 %v5033
  %v5105 = vunpack.c.l.b16 %v5034
  %v5106 = vunpack.c.l.b16 %v5035
  %v5107 = vunpack.c.l.b16 %v5036
  %v5108 = vunpack.c.l.b16 %v5037
  %v5109 = vunpack.c.l.b16 %v5038
  %v5110 = vunpack.c.l.b16 %v5039
  %v5111 = vunpack.c.l.b16 %v5040
  %v5112 = vunpack.c.l.b16 %v5041
  %v5113 = vunpack.c.l.b16 %v5042
  %v5114 = vpack.c.b16 %v5083, %v5082
  %v5115 = vpack.c.b16 %v5085, %v5084
  %v5116 = vpack.c.b16 %v5087, %v5086
  %v5117 = vpack.c.b16 %v5089, %v5088
  %v5118 = vpack.c.b16 %v5091, %v5090
  %v5119 = vpack.c.b16 %v5093, %v5092
  %v5120 = vpack.c.b16 %v5095, %v5094
  %v5121 = vpack.c.b16 %v5097, %v5096
  %v5122 = vpack.c.b16 %v5099, %v5098
  %v5123 = vpack.c.b16 %v5101, %v5100
  %v5124 = vpack.c.b16 %v5103, %v5102
  %v5125 = vpack.c.b16 %v5105, %v5104
  %v5126 = vpack.c.b16 %v5107, %v5106
  %v5127 = vpack.c.b16 %v5109, %v5108
  %v5128 = vpack.c.b16 %v5111, %v5110
  %v5129 = vpack.c.b16 %v5113, %v5112
  %5146 = vmatprep.subr.bf16.mxu0 0
  %5147 = vmatpush1.bf16.msra.mxu0 %v5114
  %5148 = vmatprep.subr.bf16.mxu0 0
  %5149 = vmatpush1.bf16.msra.mxu0 %v5115
  %5150 = vmatprep.subr.bf16.mxu0 0
  %5151 = vmatpush1.bf16.msra.mxu0 %v5116
  %5152 = vmatprep.subr.bf16.mxu0 0
  %5153 = vmatpush1.bf16.msra.mxu0 %v5117
  %5154 = vmatprep.subr.bf16.mxu0 0
  %5155 = vmatpush1.bf16.msra.mxu0 %v5118
  %5156 = vmatprep.subr.bf16.mxu0 0
  %5157 = vmatpush1.bf16.msra.mxu0 %v5119
  %5158 = vmatprep.subr.bf16.mxu0 0
  %5159 = vmatpush1.bf16.msra.mxu0 %v5120
  %5160 = vmatprep.subr.bf16.mxu0 0
  %5161 = vmatpush1.bf16.msra.mxu0 %v5121
  %5162 = vmatprep.subr.bf16.mxu0 0
  %5163 = vmatpush1.bf16.msra.mxu0 %v5122
  %5164 = vmatprep.subr.bf16.mxu0 0
  %5165 = vmatpush1.bf16.msra.mxu0 %v5123
  %5166 = vmatprep.subr.bf16.mxu0 0
  %5167 = vmatpush1.bf16.msra.mxu0 %v5124
  %5168 = vmatprep.subr.bf16.mxu0 0
  %5169 = vmatpush1.bf16.msra.mxu0 %v5125
  %5170 = vmatprep.subr.bf16.mxu0 0
  %5171 = vmatpush1.bf16.msra.mxu0 %v5126
  %5172 = vmatprep.subr.bf16.mxu0 0
  %5173 = vmatpush1.bf16.msra.mxu0 %v5127
  %5174 = vmatprep.subr.bf16.mxu0 0
  %5175 = vmatpush1.bf16.msra.mxu0 %v5128
  %5176 = vmatprep.subr.bf16.mxu0 0
  %5177 = vmatpush1.bf16.msra.mxu0 %v5129
  %5178 = vmatprep.mubr.bf16.mxu0 %v5044
  %5179 = vmatmul.mubr.bf16.gmra.mrb[0].mxu0 %v5043
  %v5180 = vpop.f32.mrb[0].mxu0
  %v5181 = vadd.f32 %v5049, %v5180
  %v5182 = vpop.f32.mrb[0].mxu0
  %v5183 = vpop.f32.mrb[0].mxu0
  %v5184 = vadd.f32 %v5049, %v5183
  %v5185 = vpop.f32.mrb[0].mxu0
  %5186 = vdwg.mxu0
  %v5187 = vadd.f32 %v4793, %v5181
  %v5188 = vadd.f32 %v4794, %v5184
  %v5189 = vld [vmem:[%s2889 + $0x6] sm:$0x1]
  %v5190 = vld [vmem:[%s2889 + $0x7] sm:$0x1]
  %v5191 = vsel %vm43, %v5187, 0.0
  %5192 = vadd.xlane.f32.xlu0 %v5191
  %v5193 = vpop.xlane.xlu0 %5192
  %v5194 = vsel %vm43, %v5188, 0.0
  %5195 = vadd.xlane.f32.xlu0 %v5194
  %v5196 = vpop.xlane.xlu0 %5195
  %v5197 = vmul.f32 %v5193, %v1527
  %v5198 = vmul.f32 %v5196, %v1527
  %v5199 = vsub.f32 %v5187, %v5197
  %v5200 = vsub.f32 %v5188, %v5198
  %v5201 = vmul.f32 %v5199, %v5199
  %v5202 = vmul.f32 %v5200, %v5200
  %v5203 = vsel %vm43, %v5201, 0.0
  %5204 = vadd.xlane.f32.xlu0 %v5203
  %v5205 = vpop.xlane.xlu0 %5204
  %v5206 = vsel %vm43, %v5202, 0.0
  %5207 = vadd.xlane.f32.xlu0 %v5206
  %v5208 = vpop.xlane.xlu0 %5207
  %v5209 = vmul.f32 %v5205, %v1527
  %v5210 = vmul.f32 %v5208, %v1527
  %v5211 = vadd.f32 %v5209, 1e-05
  %v5212 = vadd.f32 %v5210, 1e-05
  %v5213 = vrsqrt.pop %v5211
  %v5214 = vrsqrt.pop %v5212
  %v5215 = vmul.f32 %v5199, %v5213
  %v5216 = vmul.f32 %v5200, %v5214
  %v5217 = vlaneseq
  %v5218 = vshrl.u32 %v5217, 7
  %v5219 = vsub.s32 0, %v5218
  %v5220 = vrot.slane %v5189, %v5219
  %v5221 = vmul.f32 %v5215, %v5220
  %v5222 = vmul.f32 %v5216, %v5220
  %v5223 = vlaneseq
  %v5224 = vshrl.u32 %v5223, 7
  %v5225 = vsub.s32 0, %v5224
  %v5226 = vrot.slane %v5190, %v5225
  %v5227 = vadd.f32 %v5221, %v5226
  %v5228 = vadd.f32 %v5222, %v5226
  %v5229 = vld [vmem:[%s0 + $0x100] sm:$0xf]
  %v5230 = vld [vmem:[%s0 + $0x80] sm:$0xff]
  %v5231 = vld [vmem:[%s0 + $0x88] sm:$0xff]
  %v5232 = vld [vmem:[%s0 + $0x90] sm:$0xff]
  %v5233 = vld [vmem:[%s0 + $0x98] sm:$0xff]
  %v5234 = vld [vmem:[%s0 + $0xa0] sm:$0xff]
  %v5235 = vld [vmem:[%s0 + $0xa8] sm:$0xff]
  %v5236 = vld [vmem:[%s0 + $0xb0] sm:$0xff]
  %v5237 = vld [vmem:[%s0 + $0xb8] sm:$0xff]
  %v5238 = vlaneseq
  %v5239 = vshrl.u32 %v5238, 7
  %v5240 = vsub.s32 0, %v5239
  %v5241 = vrot.slane %v5229, %v5240
  %v5243 = vsel %vm43, %v5227, 0
  %v5246 = vsel %vm43, %v5228, 0
  %5248 = vmatprep.subr.mxu0 0.0
  %5249 = vmatpush1.msra.mxu0 %v5230
  %5250 = vmatprep.subr.mxu0 0.0
  %5251 = vmatpush1.msra.mxu0 %v5231
  %5252 = vmatprep.subr.mxu0 0.0
  %5253 = vmatpush1.msra.mxu0 %v5232
  %5254 = vmatprep.subr.mxu0 0.0
  %5255 = vmatpush1.msra.mxu0 %v5233
  %5256 = vmatprep.subr.mxu0 0.0
  %5257 = vmatpush1.msra.mxu0 %v5234
  %5258 = vmatprep.subr.mxu0 0.0
  %5259 = vmatpush1.msra.mxu0 %v5235
  %5260 = vmatprep.subr.mxu0 0.0
  %5261 = vmatpush1.msra.mxu0 %v5236
  %5262 = vmatprep.subr.mxu0 0.0
  %5263 = vmatpush1.msra.mxu0 %v5237
  %5264 = vmatprep.subr.mxu0 0.0
  %5265 = vmatpush1.msra.mxu0 0.0
  %5266 = vmatprep.subr.mxu0 0.0
  %5267 = vmatpush1.msra.mxu0 0.0
  %5268 = vmatprep.subr.mxu0 0.0
  %5269 = vmatpush1.msra.mxu0 0.0
  %5270 = vmatprep.subr.mxu0 0.0
  %5271 = vmatpush1.msra.mxu0 0.0
  %5272 = vmatprep.subr.mxu0 0.0
  %5273 = vmatpush1.msra.mxu0 0.0
  %5274 = vmatprep.subr.mxu0 0.0
  %5275 = vmatpush1.msra.mxu0 0.0
  %5276 = vmatprep.subr.mxu0 0.0
  %5277 = vmatpush1.msra.mxu0 0.0
  %5278 = vmatprep.subr.mxu0 0.0
  %5279 = vmatpush1.msra.mxu0 0.0
  %5280 = vmatprep.subr.mxu0 0.0
  %5281 = vmatpush1.msra.mxu0 0.0
  %5282 = vmatprep.subr.mxu0 0.0
  %5283 = vmatpush1.msra.mxu0 0.0
  %5284 = vmatprep.subr.mxu0 0.0
  %5285 = vmatpush1.msra.mxu0 0.0
  %5286 = vmatprep.subr.mxu0 0.0
  %5287 = vmatpush1.msra.mxu0 0.0
  %5288 = vmatprep.subr.mxu0 0.0
  %5289 = vmatpush1.msra.mxu0 0.0
  %5290 = vmatprep.subr.mxu0 0.0
  %5291 = vmatpush1.msra.mxu0 0.0
  %5292 = vmatprep.subr.mxu0 0.0
  %5293 = vmatpush1.msra.mxu0 0.0
  %5294 = vmatprep.subr.mxu0 0.0
  %5295 = vmatpush1.msra.mxu0 0.0
  %5296 = vmatprep.subr.mxu0 0.0
  %5297 = vmatpush1.msra.mxu0 0.0
  %5298 = vmatprep.subr.mxu0 0.0
  %5299 = vmatpush1.msra.mxu0 0.0
  %5300 = vmatprep.subr.mxu0 0.0
  %5301 = vmatpush1.msra.mxu0 0.0
  %5302 = vmatprep.subr.mxu0 0.0
  %5303 = vmatpush1.msra.mxu0 0.0
  %5304 = vmatprep.subr.mxu0 0.0
  %5305 = vmatpush1.msra.mxu0 0.0
  %5306 = vmatprep.subr.mxu0 0.0
  %5307 = vmatpush1.msra.mxu0 0.0
  %5308 = vmatprep.subr.mxu0 0.0
  %5309 = vmatpush1.msra.mxu0 0.0
  %5310 = vmatprep.subr.mxu0 0.0
  %5311 = vmatpush1.msra.mxu0 0.0
  %5312 = vmatprep.mubr.f32.mxu0 0.0
  %5313 = vmatmul.mubr.f32.gmra.mrb[0].mxu0 %v5243
  %v5314 = vpop.f32.mrb[0].mxu0
  %v5315 = vadd.f32 %v5241, %v5314
  %v5316 = vpop.f32.mrb[0].mxu0
  %5317 = vmatprep.mubr.f32.mxu0 0.0
  %5318 = vmatmul.mubr.f32.gmra.mrb[0].mxu0 %v5246
  %v5319 = vpop.f32.mrb[0].mxu0
  %v5320 = vadd.f32 %v5241, %v5319
  %v5321 = vpop.f32.mrb[0].mxu0
  %5322 = vdwg.mxu0
  %v5324 = vsel %vm43, %v5315, 0
  %v5327 = vsel %vm43, %v5320, 0
  %v5330 = vsel %vm43, %v35, 0
  %v5333 = vsel %vm43, %v36, 0
  %v5336 = vsel %vm43, %v37, 0
  %v5339 = vsel %vm43, %v38, 0
  %v5342 = vsel %vm43, %v39, 0
  %v5345 = vsel %vm43, %v40, 0
  %v5348 = vsel %vm43, %v41, 0
  %v5351 = vsel %vm43, %v42, 0
  %5353 = vmatprep.subr.mxu0 0.0
  %5354 = vmatpush1.xpose.msra.mxu0 %v5330
  %5355 = vmatprep.subr.mxu0 0.0
  %5356 = vmatpush1.xpose.msra.mxu0 %v5333
  %5357 = vmatprep.subr.mxu0 0.0
  %5358 = vmatpush1.xpose.msra.mxu0 %v5336
  %5359 = vmatprep.subr.mxu0 0.0
  %5360 = vmatpush1.xpose.msra.mxu0 %v5339
  %5361 = vmatprep.subr.mxu0 0.0
  %5362 = vmatpush1.xpose.msra.mxu0 %v5342
  %5363 = vmatprep.subr.mxu0 0.0
  %5364 = vmatpush1.xpose.msra.mxu0 %v5345
  %5365 = vmatprep.subr.mxu0 0.0
  %5366 = vmatpush1.xpose.msra.mxu0 %v5348
  %5367 = vmatprep.subr.mxu0 0.0
  %5368 = vmatpush1.xpose.msra.mxu0 %v5351
  %5369 = vmatprep.subr.mxu0 0.0
  %5370 = vmatpush1.xpose.msra.mxu0 0.0
  %5371 = vmatprep.subr.mxu0 0.0
  %5372 = vmatpush1.xpose.msra.mxu0 0.0
  %5373 = vmatprep.subr.mxu0 0.0
  %5374 = vmatpush1.xpose.msra.mxu0 0.0
  %5375 = vmatprep.subr.mxu0 0.0
  %5376 = vmatpush1.xpose.msra.mxu0 0.0
  %5377 = vmatprep.subr.mxu0 0.0
  %5378 = vmatpush1.xpose.msra.mxu0 0.0
  %5379 = vmatprep.subr.mxu0 0.0
  %5380 = vmatpush1.xpose.msra.mxu0 0.0
  %5381 = vmatprep.subr.mxu0 0.0
  %5382 = vmatpush1.xpose.msra.mxu0 0.0
  %5383 = vmatprep.subr.mxu0 0.0
  %5384 = vmatpush1.xpose.msra.mxu0 0.0
  %5385 = vmatprep.subr.mxu0 0.0
  %5386 = vmatpush1.xpose.msra.mxu0 0.0
  %5387 = vmatprep.subr.mxu0 0.0
  %5388 = vmatpush1.xpose.msra.mxu0 0.0
  %5389 = vmatprep.subr.mxu0 0.0
  %5390 = vmatpush1.xpose.msra.mxu0 0.0
  %5391 = vmatprep.subr.mxu0 0.0
  %5392 = vmatpush1.xpose.msra.mxu0 0.0
  %5393 = vmatprep.subr.mxu0 0.0
  %5394 = vmatpush1.xpose.msra.mxu0 0.0
  %5395 = vmatprep.subr.mxu0 0.0
  %5396 = vmatpush1.xpose.msra.mxu0 0.0
  %5397 = vmatprep.subr.mxu0 0.0
  %5398 = vmatpush1.xpose.msra.mxu0 0.0
  %5399 = vmatprep.subr.mxu0 0.0
  %5400 = vmatpush1.xpose.msra.mxu0 0.0
  %5401 = vmatprep.subr.mxu0 0.0
  %5402 = vmatpush1.xpose.msra.mxu0 0.0
  %5403 = vmatprep.subr.mxu0 0.0
  %5404 = vmatpush1.xpose.msra.mxu0 0.0
  %5405 = vmatprep.subr.mxu0 0.0
  %5406 = vmatpush1.xpose.msra.mxu0 0.0
  %5407 = vmatprep.subr.mxu0 0.0
  %5408 = vmatpush1.xpose.msra.mxu0 0.0
  %5409 = vmatprep.subr.mxu0 0.0
  %5410 = vmatpush1.xpose.msra.mxu0 0.0
  %5411 = vmatprep.subr.mxu0 0.0
  %5412 = vmatpush1.xpose.msra.mxu0 0.0
  %5413 = vmatprep.subr.mxu0 0.0
  %5414 = vmatpush1.xpose.msra.mxu0 0.0
  %5415 = vmatprep.subr.mxu0 0.0
  %5416 = vmatpush1.xpose.msra.mxu0 0.0
  %5417 = vmatprep.mubr.f32.mxu0 0.0
  %5418 = vmatmul.mubr.f32.gmra.mrb[0].mxu0 %v5324
  %v5419 = vpop.f32.mrb[0].mxu0
  %v5420 = vadd.f32 0.0, %v5419
  %v5421 = vpop.f32.mrb[0].mxu0
  %5422 = vmatprep.mubr.f32.mxu0 0.0
  %5423 = vmatmul.mubr.f32.gmra.mrb[0].mxu0 %v5327
  %v5424 = vpop.f32.mrb[0].mxu0
  %v5425 = vadd.f32 0.0, %v5424
  %v5426 = vpop.f32.mrb[0].mxu0
  %5427 = vdwg.mxu0
  %v5428 = vsel %vm43, %v5420, -inf
  %5429 = vmax.xlane.f32.xlu0 %v5428
  %v5430 = vpop.xlane.xlu0 %5429
  %v5431 = vsel %vm43, %v5425, -inf
  %5432 = vmax.xlane.f32.xlu0 %v5431
  %v5433 = vpop.xlane.xlu0 %5432
  %v5434 = vsub.f32 %v5420, %v5430
  %v5435 = vsub.f32 %v5425, %v5433
  %v5436 = vmul.f32 %v5434, 1.442695
  %v5437 = vpow.pop %v5436
  %v5438 = vmul.f32 %v5435, 1.442695
  %v5439 = vpow.pop %v5438
  %v5440 = vsel %vm43, %v5437, 0.0
  %5441 = vadd.xlane.f32.xlu0 %v5440
  %v5442 = vpop.xlane.xlu0 %5441
  %v5443 = vsel %vm43, %v5439, 0.0
  %5444 = vadd.xlane.f32.xlu0 %v5443
  %v5445 = vpop.xlane.xlu0 %5444
  %v5446 = vrcp.pop %v5442
  %v5447 = vmul.f32 %v5437, %v5446
  %v5448 = vrcp.pop %v5445
  %v5449 = vmul.f32 %v5439, %v5448
  %v5450 = vld [vmem:[%s0 + $0xc0] sm:$0xff]
  %v5451 = vld [vmem:[%s0 + $0xc8] sm:$0xff]
  %v5452 = vld [vmem:[%s0 + $0xd0] sm:$0xff]
  %v5453 = vld [vmem:[%s0 + $0xd8] sm:$0xff]
  %v5454 = vld [vmem:[%s0 + $0xe0] sm:$0xff]
  %v5455 = vld [vmem:[%s0 + $0xe8] sm:$0xff]
  %v5456 = vld [vmem:[%s0 + $0xf0] sm:$0xff]
  %v5457 = vld [vmem:[%s0 + $0xf8] sm:$0xff]
  %v5458 = vlaneseq
  %v5459 = vshrl.u32 %v5458, 7
  %v5460 = vsub.s32 1, %v5459
  %v5461 = vrot.slane %v5229, %v5460
  %5462 = vmatprep.subr.mxu0 0.0
  %5463 = vmatpush1.msra.mxu0 %v5450
  %5464 = vmatprep.subr.mxu0 0.0
  %5465 = vmatpush1.msra.mxu0 %v5451
  %5466 = vmatprep.subr.mxu0 0.0
  %5467 = vmatpush1.msra.mxu0 %v5452
  %5468 = vmatprep.subr.mxu0 0.0
  %5469 = vmatpush1.msra.mxu0 %v5453
  %5470 = vmatprep.subr.mxu0 0.0
  %5471 = vmatpush1.msra.mxu0 %v5454
  %5472 = vmatprep.subr.mxu0 0.0
  %5473 = vmatpush1.msra.mxu0 %v5455
  %5474 = vmatprep.subr.mxu0 0.0
  %5475 = vmatpush1.msra.mxu0 %v5456
  %5476 = vmatprep.subr.mxu0 0.0
  %5477 = vmatpush1.msra.mxu0 %v5457
  %5478 = vmatprep.subr.mxu0 0.0
  %5479 = vmatpush1.msra.mxu0 0.0
  %5480 = vmatprep.subr.mxu0 0.0
  %5481 = vmatpush1.msra.mxu0 0.0
  %5482 = vmatprep.subr.mxu0 0.0
  %5483 = vmatpush1.msra.mxu0 0.0
  %5484 = vmatprep.subr.mxu0 0.0
  %5485 = vmatpush1.msra.mxu0 0.0
  %5486 = vmatprep.subr.mxu0 0.0
  %5487 = vmatpush1.msra.mxu0 0.0
  %5488 = vmatprep.subr.mxu0 0.0
  %5489 = vmatpush1.msra.mxu0 0.0
  %5490 = vmatprep.subr.mxu0 0.0
  %5491 = vmatpush1.msra.mxu0 0.0
  %5492 = vmatprep.subr.mxu0 0.0
  %5493 = vmatpush1.msra.mxu0 0.0
  %5494 = vmatprep.subr.mxu0 0.0
  %5495 = vmatpush1.msra.mxu0 0.0
  %5496 = vmatprep.subr.mxu0 0.0
  %5497 = vmatpush1.msra.mxu0 0.0
  %5498 = vmatprep.subr.mxu0 0.0
  %5499 = vmatpush1.msra.mxu0 0.0
  %5500 = vmatprep.subr.mxu0 0.0
  %5501 = vmatpush1.msra.mxu0 0.0
  %5502 = vmatprep.subr.mxu0 0.0
  %5503 = vmatpush1.msra.mxu0 0.0
  %5504 = vmatprep.subr.mxu0 0.0
  %5505 = vmatpush1.msra.mxu0 0.0
  %5506 = vmatprep.subr.mxu0 0.0
  %5507 = vmatpush1.msra.mxu0 0.0
  %5508 = vmatprep.subr.mxu0 0.0
  %5509 = vmatpush1.msra.mxu0 0.0
  %5510 = vmatprep.subr.mxu0 0.0
  %5511 = vmatpush1.msra.mxu0 0.0
  %5512 = vmatprep.subr.mxu0 0.0
  %5513 = vmatpush1.msra.mxu0 0.0
  %5514 = vmatprep.subr.mxu0 0.0
  %5515 = vmatpush1.msra.mxu0 0.0
  %5516 = vmatprep.subr.mxu0 0.0
  %5517 = vmatpush1.msra.mxu0 0.0
  %5518 = vmatprep.subr.mxu0 0.0
  %5519 = vmatpush1.msra.mxu0 0.0
  %5520 = vmatprep.subr.mxu0 0.0
  %5521 = vmatpush1.msra.mxu0 0.0
  %5522 = vmatprep.subr.mxu0 0.0
  %5523 = vmatpush1.msra.mxu0 0.0
  %5524 = vmatprep.subr.mxu0 0.0
  %5525 = vmatpush1.msra.mxu0 0.0
  %5526 = vmatprep.mubr.f32.mxu0 0.0
  %5527 = vmatmul.mubr.f32.gmra.mrb[0].mxu0 %v5243
  %v5528 = vpop.f32.mrb[0].mxu0
  %v5529 = vadd.f32 %v5461, %v5528
  %v5530 = vpop.f32.mrb[0].mxu0
  %5531 = vmatprep.mubr.f32.mxu0 0.0
  %5532 = vmatmul.mubr.f32.gmra.mrb[0].mxu0 %v5246
  %v5533 = vpop.f32.mrb[0].mxu0
  %v5534 = vadd.f32 %v5461, %v5533
  %v5535 = vpop.f32.mrb[0].mxu0
  %5536 = vdwg.mxu0
  %v5537 = vlaneseq
  %v5538 = vshrl.u32 %v5537, 7
  %v5539 = vsub.s32 2, %v5538
  %v5540 = vrot.slane %v5229, %v5539
  %v5541 = vmul.f32 %v5227, %v5540
  %v5542 = vmul.f32 %v5228, %v5540
  %v5543 = vsel %vm43, %v5541, 0.0
  %5544 = vadd.xlane.f32.xlu0 %v5543
  %v5545 = vpop.xlane.xlu0 %5544
  %v5546 = vsel %vm43, %v5542, 0.0
  %5547 = vadd.xlane.f32.xlu0 %v5546
  %v5548 = vpop.xlane.xlu0 %5547
  %v5549 = vlaneseq
  %v5550 = vshrl.u32 %v5549, 7
  %v5551 = vsub.s32 3, %v5550
  %v5552 = vrot.slane %v5229, %v5551
  %v5553 = vadd.f32 %v5545, %v5552
  %v5554 = vadd.f32 %v5548, %v5552
  %v5555 = vxor.u32 %v5553, 2147483648
  %v5556 = vxor.u32 %v5554, 2147483648
  %v5557 = vmul.f32 %v5555, 1.442695
  %v5558 = vpow.pop %v5557
  %v5559 = vmul.f32 %v5556, 1.442695
  %v5560 = vpow.pop %v5559
  %v5561 = vadd.f32 %v5558, 1.0
  %v5562 = vadd.f32 %v5560, 1.0
  %v5563 = vrcp.pop %v5561
  %v5564 = vmul.f32 1.0, %v5563
  %v5565 = vrcp.pop %v5562
  %v5566 = vmul.f32 1.0, %v5565
  %5568 = vset.pattern.permute.xlu0 0
  %5569 = vperm.xlu0 %5568, %v5564
  %v5570 = vpop.permute.xlu0 %5569
  %5573 = vset.pattern.permute.xlu0 0
  %5574 = vperm.xlu0 %5573, %v5566
  %v5575 = vpop.permute.xlu0 %5574
  %v5577 = vmul.f32 %v5447, %v5570
  %v5578 = vmul.f32 %v5449, %v5575
  %v5579 = vld [vmem:[%s4] sm:$0xff]
  %v5580 = vld [vmem:[%s4 + $0x8] sm:$0xff]
  %v5582 = vsel %vm43, %v5529, 0
  %v5585 = vsel %vm43, %v5534, 0
  %v5588 = vsel %vm43, %v125, 0
  %v5591 = vsel %vm43, %v126, 0
  %5593 = vmatprep.subr.mxu0 0.0
  %5594 = vmatpush1.xpose.msra.mxu0 %v5588
  %5595 = vmatprep.subr.mxu0 0.0
  %5596 = vmatpush1.xpose.msra.mxu0 %v5591
  %5597 = vmatprep.subr.mxu0 0.0
  %5598 = vmatpush1.xpose.msra.mxu0 0.0
  %5599 = vmatprep.subr.mxu0 0.0
  %5600 = vmatpush1.xpose.msra.mxu0 0.0
  %5601 = vmatprep.subr.mxu0 0.0
  %5602 = vmatpush1.xpose.msra.mxu0 0.0
  %5603 = vmatprep.subr.mxu0 0.0
  %5604 = vmatpush1.xpose.msra.mxu0 0.0
  %5605 = vmatprep.subr.mxu0 0.0
  %5606 = vmatpush1.xpose.msra.mxu0 0.0
  %5607 = vmatprep.subr.mxu0 0.0
  %5608 = vmatpush1.xpose.msra.mxu0 0.0
  %5609 = vmatprep.subr.mxu0 0.0
  %5610 = vmatpush1.xpose.msra.mxu0 0.0
  %5611 = vmatprep.subr.mxu0 0.0
  %5612 = vmatpush1.xpose.msra.mxu0 0.0
  %5613 = vmatprep.subr.mxu0 0.0
  %5614 = vmatpush1.xpose.msra.mxu0 0.0
  %5615 = vmatprep.subr.mxu0 0.0
  %5616 = vmatpush1.xpose.msra.mxu0 0.0
  %5617 = vmatprep.subr.mxu0 0.0
  %5618 = vmatpush1.xpose.msra.mxu0 0.0
  %5619 = vmatprep.subr.mxu0 0.0
  %5620 = vmatpush1.xpose.msra.mxu0 0.0
  %5621 = vmatprep.subr.mxu0 0.0
  %5622 = vmatpush1.xpose.msra.mxu0 0.0
  %5623 = vmatprep.subr.mxu0 0.0
  %5624 = vmatpush1.xpose.msra.mxu0 0.0
  %5625 = vmatprep.subr.mxu0 0.0
  %5626 = vmatpush1.xpose.msra.mxu0 0.0
  %5627 = vmatprep.subr.mxu0 0.0
  %5628 = vmatpush1.xpose.msra.mxu0 0.0
  %5629 = vmatprep.subr.mxu0 0.0
  %5630 = vmatpush1.xpose.msra.mxu0 0.0
  %5631 = vmatprep.subr.mxu0 0.0
  %5632 = vmatpush1.xpose.msra.mxu0 0.0
  %5633 = vmatprep.subr.mxu0 0.0
  %5634 = vmatpush1.xpose.msra.mxu0 0.0
  %5635 = vmatprep.subr.mxu0 0.0
  %5636 = vmatpush1.xpose.msra.mxu0 0.0
  %5637 = vmatprep.subr.mxu0 0.0
  %5638 = vmatpush1.xpose.msra.mxu0 0.0
  %5639 = vmatprep.subr.mxu0 0.0
  %5640 = vmatpush1.xpose.msra.mxu0 0.0
  %5641 = vmatprep.subr.mxu0 0.0
  %5642 = vmatpush1.xpose.msra.mxu0 0.0
  %5643 = vmatprep.subr.mxu0 0.0
  %5644 = vmatpush1.xpose.msra.mxu0 0.0
  %5645 = vmatprep.subr.mxu0 0.0
  %5646 = vmatpush1.xpose.msra.mxu0 0.0
  %5647 = vmatprep.subr.mxu0 0.0
  %5648 = vmatpush1.xpose.msra.mxu0 0.0
  %5649 = vmatprep.subr.mxu0 0.0
  %5650 = vmatpush1.xpose.msra.mxu0 0.0
  %5651 = vmatprep.subr.mxu0 0.0
  %5652 = vmatpush1.xpose.msra.mxu0 0.0
  %5653 = vmatprep.subr.mxu0 0.0
  %5654 = vmatpush1.xpose.msra.mxu0 0.0
  %5655 = vmatprep.subr.mxu0 0.0
  %5656 = vmatpush1.xpose.msra.mxu0 0.0
  %5657 = vmatprep.mubr.f32.mxu0 0.0
  %5658 = vmatmul.mubr.f32.gmra.mrb[0].mxu0 %v5582
  %v5659 = vpop.f32.mrb[0].mxu0
  %v5660 = vadd.f32 %v5579, %v5659
  %v5661 = vpop.f32.mrb[0].mxu0
  %5662 = vmatprep.mubr.f32.mxu0 0.0
  %5663 = vmatmul.mubr.f32.gmra.mrb[0].mxu0 %v5585
  %v5664 = vpop.f32.mrb[0].mxu0
  %v5665 = vadd.f32 %v5580, %v5664
  %v5666 = vpop.f32.mrb[0].mxu0
  %5667 = vdwg.mxu0
  %v5668 = vsub.f32 1.0, %v5564
  %v5669 = vsub.f32 1.0, %v5566
  %v5670 = vsel %vm468, %v5660, -inf
  %5671 = vmax.xlane.f32.xlu0 %v5670
  %v5672 = vpop.xlane.xlu0 %5671
  %v5673 = vsel %vm468, %v5665, -inf
  %5674 = vmax.xlane.f32.xlu0 %v5673
  %v5675 = vpop.xlane.xlu0 %5674
  %v5676 = vsub.f32 %v5660, %v5672
  %v5677 = vsub.f32 %v5665, %v5675
  %v5678 = vmul.f32 %v5676, 1.442695
  %v5679 = vpow.pop %v5678
  %v5680 = vmul.f32 %v5677, 1.442695
  %v5681 = vpow.pop %v5680
  %v5682 = vsel %vm468, %v5679, 0.0
  %5683 = vadd.xlane.f32.xlu0 %v5682
  %v5684 = vpop.xlane.xlu0 %5683
  %v5685 = vsel %vm468, %v5681, 0.0
  %5686 = vadd.xlane.f32.xlu0 %v5685
  %v5687 = vpop.xlane.xlu0 %5686
  %v5688 = vrcp.pop %v5684
  %v5689 = vmul.f32 %v5679, %v5688
  %v5690 = vrcp.pop %v5687
  %v5691 = vmul.f32 %v5681, %v5690
  %5693 = vset.pattern.permute.xlu0 0
  %5694 = vperm.xlu0 %5693, %v5668
  %v5695 = vpop.permute.xlu0 %5694
  %5698 = vset.pattern.permute.xlu0 0
  %5699 = vperm.xlu0 %5698, %v5669
  %v5700 = vpop.permute.xlu0 %5699
  %v5702 = vmul.f32 %v5695, %v5689
  %v5703 = vmul.f32 %v5700, %v5691
  %v5704 = vld [vmem:[%s0 + $0x60] sm:$0xff]
  %v5705 = vld [vmem:[%s0 + $0x68] sm:$0xff]
  %v5707 = vsel %vm468, %v5702, 0
  %v5710 = vsel %vm468, %v5703, 0
  %5712 = vmatprep.subr.mxu0 0.0
  %5713 = vmatpush1.msra.mxu0 %v5704
  %5714 = vmatprep.subr.mxu0 0.0
  %5715 = vmatpush1.msra.mxu0 %v5705
  %5716 = vmatprep.subr.mxu0 0.0
  %5717 = vmatpush1.msra.mxu0 0.0
  %5718 = vmatprep.subr.mxu0 0.0
  %5719 = vmatpush1.msra.mxu0 0.0
  %5720 = vmatprep.subr.mxu0 0.0
  %5721 = vmatpush1.msra.mxu0 0.0
  %5722 = vmatprep.subr.mxu0 0.0
  %5723 = vmatpush1.msra.mxu0 0.0
  %5724 = vmatprep.subr.mxu0 0.0
  %5725 = vmatpush1.msra.mxu0 0.0
  %5726 = vmatprep.subr.mxu0 0.0
  %5727 = vmatpush1.msra.mxu0 0.0
  %5728 = vmatprep.subr.mxu0 0.0
  %5729 = vmatpush1.msra.mxu0 0.0
  %5730 = vmatprep.subr.mxu0 0.0
  %5731 = vmatpush1.msra.mxu0 0.0
  %5732 = vmatprep.subr.mxu0 0.0
  %5733 = vmatpush1.msra.mxu0 0.0
  %5734 = vmatprep.subr.mxu0 0.0
  %5735 = vmatpush1.msra.mxu0 0.0
  %5736 = vmatprep.subr.mxu0 0.0
  %5737 = vmatpush1.msra.mxu0 0.0
  %5738 = vmatprep.subr.mxu0 0.0
  %5739 = vmatpush1.msra.mxu0 0.0
  %5740 = vmatprep.subr.mxu0 0.0
  %5741 = vmatpush1.msra.mxu0 0.0
  %5742 = vmatprep.subr.mxu0 0.0
  %5743 = vmatpush1.msra.mxu0 0.0
  %5744 = vmatprep.subr.mxu0 0.0
  %5745 = vmatpush1.msra.mxu0 0.0
  %5746 = vmatprep.subr.mxu0 0.0
  %5747 = vmatpush1.msra.mxu0 0.0
  %5748 = vmatprep.subr.mxu0 0.0
  %5749 = vmatpush1.msra.mxu0 0.0
  %5750 = vmatprep.subr.mxu0 0.0
  %5751 = vmatpush1.msra.mxu0 0.0
  %5752 = vmatprep.subr.mxu0 0.0
  %5753 = vmatpush1.msra.mxu0 0.0
  %5754 = vmatprep.subr.mxu0 0.0
  %5755 = vmatpush1.msra.mxu0 0.0
  %5756 = vmatprep.subr.mxu0 0.0
  %5757 = vmatpush1.msra.mxu0 0.0
  %5758 = vmatprep.subr.mxu0 0.0
  %5759 = vmatpush1.msra.mxu0 0.0
  %5760 = vmatprep.subr.mxu0 0.0
  %5761 = vmatpush1.msra.mxu0 0.0
  %5762 = vmatprep.subr.mxu0 0.0
  %5763 = vmatpush1.msra.mxu0 0.0
  %5764 = vmatprep.subr.mxu0 0.0
  %5765 = vmatpush1.msra.mxu0 0.0
  %5766 = vmatprep.subr.mxu0 0.0
  %5767 = vmatpush1.msra.mxu0 0.0
  %5768 = vmatprep.subr.mxu0 0.0
  %5769 = vmatpush1.msra.mxu0 0.0
  %5770 = vmatprep.subr.mxu0 0.0
  %5771 = vmatpush1.msra.mxu0 0.0
  %5772 = vmatprep.subr.mxu0 0.0
  %5773 = vmatpush1.msra.mxu0 0.0
  %5774 = vmatprep.subr.mxu0 0.0
  %5775 = vmatpush1.msra.mxu0 0.0
  %5776 = vmatprep.mubr.f32.mxu0 0.0
  %5777 = vmatmul.mubr.f32.gmra.mrb[0].mxu0 %v5707
  %v5778 = vpop.f32.mrb[0].mxu0
  %v5779 = vadd.f32 0.0, %v5778
  %v5780 = vpop.f32.mrb[0].mxu0
  %5781 = vmatprep.mubr.f32.mxu0 0.0
  %5782 = vmatmul.mubr.f32.gmra.mrb[0].mxu0 %v5710
  %v5783 = vpop.f32.mrb[0].mxu0
  %v5784 = vadd.f32 0.0, %v5783
  %v5785 = vpop.f32.mrb[0].mxu0
  %5786 = vdwg.mxu0
  %v5787 = vadd.f32 %v5577, %v5779
  %v5788 = vadd.f32 %v5578, %v5784
  %v5789 = vld [vmem:[%s0 + $0x70] sm:$0xff]
  %v5790 = vld [vmem:[%s0 + $0x78] sm:$0xff]
  %v5791 = vmul.f32 %v5787, %v5789
  %v5792 = vmul.f32 %v5788, %v5790
  %v5793 = vsel %vm43, %v5791, 0.0
  %5794 = vadd.xlane.f32.xlu0 %v5793
  %v5795 = vpop.xlane.xlu0 %5794
  %v5796 = vsel %vm43, %v5792, 0.0
  %5797 = vadd.xlane.f32.xlu0 %v5796
  %v5798 = vpop.xlane.xlu0 %5797
  %v5799 = vsub.f32 1.0, %v5789
  %v5800 = vsub.f32 1.0, %v5790
  %v5801 = vadd.f32 %v5795, 1e-06
  %v5802 = vadd.f32 %v5798, 1e-06
  %v5803 = vlog2.pop %v5801
  %v5804 = vmul.f32 %v5803, 0.6931472
  %v5805 = vlog2.pop %v5802
  %v5806 = vmul.f32 %v5805, 0.6931472
  %v5807 = vsub.f32 0.0, %v5804
  %v5808 = vsub.f32 0.0, %v5806
  %v5809 = vmul.f32 %v5807, %v5799
  %v5810 = vmul.f32 %v5808, %v5800
  %vm5811 = vcmask 7168
  %v5812 = vsel %vm5811, %v5809, 0.0
  %v5813 = vsel %vm5811, %v5810, 0.0
  %v5814 = vadd.f32 %v5812, %v5813
  %v5815 = vrot.slane %v5814, 4
  %v5816 = vadd.f32 %v5814, %v5815
  %v5817 = vrot.slane %v5816, 2
  %v5818 = vadd.f32 %v5816, %v5817
  %v5819 = vrot.slane %v5818, 1
  %v5820 = vadd.f32 %v5818, %v5819
  %v5821 = vsel %vm5811, %v5799, 0.0
  %v5822 = vsel %vm5811, %v5800, 0.0
  %v5823 = vadd.f32 %v5821, %v5822
  %v5824 = vrot.slane %v5823, 4
  %v5825 = vadd.f32 %v5823, %v5824
  %v5826 = vrot.slane %v5825, 2
  %v5827 = vadd.f32 %v5825, %v5826
  %v5828 = vrot.slane %v5827, 1
  %v5829 = vadd.f32 %v5827, %v5828
  %v5830 = vmax.f32 %v5829, 1.0
  %v5831 = vrcp.pop %v5830
  %v5832 = vmul.f32 %v5820, %v5831
  %5834 = vset.pattern.permute.xlu0 0
  %5835 = vperm.xlu0 %5834, %v5832
  %v5836 = vpop.permute.xlu0 %5835
  %5838 = vst [vmem:[%s9] sm:$0x1] %v5836
  // Predicated region
  $region38: #{xl_decoder_forward.1} parent=0 // pred_check
    _
  $region39: #{xl_decoder_forward.1} parent=0 // pred_check_branch
    %5840 = sbr.rel (0) target = $region41
  $region40: #{xl_decoder_forward.1} parent=0 // pred_region
    _
  $region41: #{xl_decoder_forward.1} parent=0 // pred_fallthru
    _
  // Predicated region
  $region42: #{xl_decoder_forward.1} parent=0 // pred_check
    _
  $region43: #{xl_decoder_forward.1} parent=0 // pred_check_branch
    %5842 = sbr.rel (0) target = $region45
  $region44: #{xl_decoder_forward.1} parent=0 // pred_region
    _
  $region45: #{xl_decoder_forward.1} parent=0 // pred_fallthru
    _

</llo_original>
